<compile_context>
chip_gen: v6e
topology: v6e:2x2x1
jax: 0.10.0
libtpu: 0.0.40
codegen_flags: <defaults>
</compile_context>

<pallas_src>
import functools

import numpy as np
import jax
import jax.numpy as jnp
from jax.experimental import pallas as pl
from jax.experimental.pallas import tpu as pltpu

_LANE = 128

# Ordered input list shared by the wrapper and the kernel unpack.
_IN_NAMES = (
    # runtime tensors
    "cond", "x_nodes", "edge_attr",
    # static graph / sequence structure (precomputed once on host)
    "gather_m", "scatter_m", "pool_m", "place_m", "mask",
    # ft_layer + cond_2_hid
    "ft_w1", "ft_b1", "ft_w2", "ft_b2", "c2h_w", "c2h_b",
    # edge linears
    "el0_w", "el0_b", "el1_w", "el1_b",
    # GINE conv MLPs (BatchNorm eval stats folded into the first Linear)
    "c0_w1", "c0_b1", "c0_w2", "c0_b2",
    "c1_w1", "c1_b1", "c1_w2", "c1_b2",
    # out_lin
    "out_w1", "out_b1", "out_w2", "out_b2",
    # GRU layer 0 (gate-split r/z/n; input weights split into frag / cond halves)
    "wif_r", "wif_z", "wif_n", "wic_r", "wic_z", "wic_n",
    "bih0_r", "bih0_z", "bih0_n",
    "whh0_r", "whh0_z", "whh0_n", "bhh0_r", "bhh0_z", "bhh0_n",
    # GRU layer 1 (gate-split)
    "wih1_r", "wih1_z", "wih1_n", "bih1_r", "bih1_z", "bih1_n",
    "whh1_r", "whh1_z", "whh1_n", "bhh1_r", "bhh1_z", "bhh1_n",
    # decode (lane-padded to a multiple of 128)
    "dec_w", "dec_b",
)


# ----------------------------- fused Pallas kernel -----------------------------

def _fused_forward_kernel(*args, n_steps, batch):
    *in_refs, out_ref, ys_sc = args
    assert len(in_refs) == len(_IN_NAMES)
    r = dict(zip(_IN_NAMES, in_refs))

    def dot(a, b):
        return jnp.dot(a, b, preferred_element_type=jnp.float32)

    # ---------------- ft_layer: Linear -> LeakyReLU(0.01) -> Linear ----------------
    c = dot(r["cond"][...], r["ft_w1"][...]) + r["ft_b1"][...]
    c = jnp.where(c > 0.0, c, 0.01 * c)
    cond_pt = dot(c, r["ft_w2"][...]) + r["ft_b2"][...]                 # [B, COND_PT]

    # ---------------- cond_2_hid: shared initial hidden of both GRU layers ---------
    h0 = dot(cond_pt, r["c2h_w"][...]) + r["c2h_b"][...]                # [B, H]

    # ------------- GraphEncoder: 2x (edge Linear + GINEConv(MLP) + ReLU) -----------
    x = r["x_nodes"][...]
    gat = r["gather_m"][...]            # [E, N]  one-hot(edge_src)    -> gather x_j
    sca = r["scatter_m"][...]           # [N, E]  one-hot(edge_dst)^T  -> scatter-add
    ea = r["edge_attr"][...]
    for names in (("el0_w", "el0_b", "c0_w1", "c0_b1", "c0_w2", "c0_b2"),
                  ("el1_w", "el1_b", "c1_w1", "c1_b1", "c1_w2", "c1_b2")):
        el_w, el_b, w1, b1, w2, b2 = [r[n][...] for n in names]
        e_t = dot(ea, el_w) + el_b                                      # edge_lin
        msg = jnp.maximum(dot(gat, x) + e_t, 0.0)                       # ReLU(x_j + e)
        h = x + dot(sca, msg)                                           # (1+eps)*x + aggr (eps=0)
        h = jnp.maximum(dot(h, w1) + b1, 0.0)                           # Lin1+BN(folded)+ReLU
        x = jnp.maximum(dot(h, w2) + b2, 0.0)                           # Lin2, dropout(eval)=id, ReLU
    g = dot(r["pool_m"][...], x)                                        # scatter-mean by graph id
    g = jnp.maximum(dot(g, r["out_w1"][...]) + r["out_b1"][...], 0.0)
    frag_emb = dot(g, r["out_w2"][...]) + r["out_b2"][...]              # [G, EMB]

    # ---- teacher-forcing placement (time-major rows t*B+b) and hoisted GRU-layer-0
    # ---- input projections: one [T*B, *] matmul per gate, cond term constant in t.
    frag_seq = dot(r["place_m"][...], frag_emb)                         # [T*B, EMB]
    gi_all = tuple(dot(frag_seq, r[k][...]) for k in ("wif_r", "wif_z", "wif_n"))
    gc = tuple(dot(cond_pt, r[k][...]) + r[bk][...]
               for k, bk in (("wic_r", "bih0_r"), ("wic_z", "bih0_z"), ("wic_n", "bih0_n")))

    whh0 = tuple(r[k][...] for k in ("whh0_r", "whh0_z", "whh0_n"))
    bhh0 = tuple(r[k][...] for k in ("bhh0_r", "bhh0_z", "bhh0_n"))
    wih1 = tuple(r[k][...] for k in ("wih1_r", "wih1_z", "wih1_n"))
    bih1 = tuple(r[k][...] for k in ("bih1_r", "bih1_z", "bih1_n"))
    whh1 = tuple(r[k][...] for k in ("whh1_r", "whh1_z", "whh1_n"))
    bhh1 = tuple(r[k][...] for k in ("bhh1_r", "bhh1_z", "bhh1_n"))
    mask = r["mask"][...]                                               # [T*B, 1]

    def cell(gi, h, whh, bhh):
        gr = jax.nn.sigmoid(gi[0] + dot(h, whh[0]) + bhh[0])
        gz = jax.nn.sigmoid(gi[1] + dot(h, whh[1]) + bhh[1])
        gn = jnp.tanh(gi[2] + gr * (dot(h, whh[2]) + bhh[2]))
        return (1.0 - gz) * gn + gz * h

    # ---- T-step 2-layer GRU recurrence, fully unrolled in one kernel invocation ----
    h1 = h0
    h2 = h0
    for t in range(n_steps):
        lo = t * batch
        gi0 = tuple(g_all[lo:lo + batch, :] + g_c for g_all, g_c in zip(gi_all, gc))
        h1 = cell(gi0, h1, whh0, bhh0)
        gi1 = tuple(dot(h1, w) + b for w, b in zip(wih1, bih1))         # inter-layer dropout = id (eval)
        h2 = cell(gi1, h2, whh1, bhh1)
        # pack_padded/pad_packed semantics: zero hidden past the sequence length.
        ys_sc[lo:lo + batch, :] = h2 * mask[lo:lo + batch, :]

    # ---- single batched decode matmul + one lane-dense (128-wide) output store ----
    out_ref[...] = dot(ys_sc[...], r["dec_w"][...]) + r["dec_b"][...]


# ----------------------------- host-side preparation -----------------------------

def _round_up(n, m):
    return ((n + m - 1) // m) * m


def prepare_inputs(p, edge_src, edge_dst, node_batch, lengths, n_fragment, n_batch):
    """One-time host-side prep: static structure matrices, GRU gate splits,
    bias reshapes and lane padding of the decode Linear."""
    edge_src = np.asarray(edge_src)
    edge_dst = np.asarray(edge_dst)
    node_batch = np.asarray(node_batch)
    N = node_batch.shape[0]
    E = edge_src.shape[0]
    G = int(np.sum(lengths))
    T, B = n_fragment, n_batch

    gather_m = np.zeros((E, N), np.float32)
    gather_m[np.arange(E), edge_src] = 1.0
    scatter_m = np.zeros((N, E), np.float32)
    scatter_m[edge_dst, np.arange(E)] = 1.0
    counts = np.zeros((G,), np.float32)
    np.add.at(counts, node_batch, 1.0)
    pool_m = np.zeros((G, N), np.float32)
    pool_m[node_batch, np.arange(N)] = 1.0
    pool_m /= np.maximum(counts, 1.0)[:, None]          # guard empty graphs (NaN otherwise)

    # teacher forcing: frag_seq[t, b] = frag_emb[offset_b + t - 1] for 1 <= t <= len_b
    place_m = np.zeros((T * B, G), np.float32)
    mask = np.zeros((T * B, 1), np.float32)             # valid positions: t < length[b]
    off = 0
    for b, L in enumerate(lengths):
        for t in range(1, min(L + 1, T)):
            place_m[t * B + b, off + t - 1] = 1.0
        for t in range(min(L, T)):
            mask[t * B + b, 0] = 1.0
        off += L

    H = p["c2h_b"].shape[0]
    EMB = p["out_w2"].shape[1]
    OUT = p["dec_w"].shape[1]
    OUT_PAD = _round_up(OUT, _LANE)

    def gate(w, i):                      # column block i of a [*, 3H] (r, z, n) matrix
        return w[:, i * H:(i + 1) * H]

    def bgate(v, i):
        return v[i * H:(i + 1) * H].reshape(1, -1)

    prep = {
        "gather_m": gather_m, "scatter_m": scatter_m, "pool_m": pool_m,
        "place_m": place_m, "mask": mask,
        "ft_w1": p["ft_w1"], "ft_b1": p["ft_b1"].reshape(1, -1),
        "ft_w2": p["ft_w2"], "ft_b2": p["ft_b2"].reshape(1, -1),
        "c2h_w": p["c2h_w"], "c2h_b": p["c2h_b"].reshape(1, -1),
        "el0_w": p["el0_w"], "el0_b": p["el0_b"].reshape(1, -1),
        "el1_w": p["el1_w"], "el1_b": p["el1_b"].reshape(1, -1),
        "c0_w1": p["conv0_w1f"], "c0_b1": p["conv0_b1f"].reshape(1, -1),
        "c0_w2": p["conv0_w2"], "c0_b2": p["conv0_b2"].reshape(1, -1),
        "c1_w1": p["conv1_w1f"], "c1_b1": p["conv1_b1f"].reshape(1, -1),
        "c1_w2": p["conv1_w2"], "c1_b2": p["conv1_b2"].reshape(1, -1),
        "out_w1": p["out_w1"], "out_b1": p["out_b1"].reshape(1, -1),
        "out_w2": p["out_w2"], "out_b2": p["out_b2"].reshape(1, -1),
        # decode weights zero-padded on the lane axis for a lane-dense output store
        "dec_w": jnp.pad(p["dec_w"], ((0, 0), (0, OUT_PAD - OUT))),
        "dec_b": jnp.pad(p["dec_b"], (0, OUT_PAD - OUT)).reshape(1, -1),
    }
    for i, gname in enumerate(("r", "z", "n")):
        wih0_g = gate(p["gru_wih0"], i)
        prep[f"wif_{gname}"] = wih0_g[:EMB]              # fragment-embedding half
        prep[f"wic_{gname}"] = wih0_g[EMB:]              # condition half
        prep[f"bih0_{gname}"] = bgate(p["gru_bih0"], i)
        prep[f"whh0_{gname}"] = gate(p["gru_whh0"], i)
        prep[f"bhh0_{gname}"] = bgate(p["gru_bhh0"], i)
        prep[f"wih1_{gname}"] = gate(p["gru_wih1"], i)
        prep[f"bih1_{gname}"] = bgate(p["gru_bih1"], i)
        prep[f"whh1_{gname}"] = gate(p["gru_whh1"], i)
        prep[f"bhh1_{gname}"] = bgate(p["gru_bhh1"], i)
    prep = {k: jnp.asarray(v, jnp.float32) for k, v in prep.items()}
    prep["_dims"] = (T, B, H, OUT, OUT_PAD)
    return prep


def graph_decoder_ft_forward(prep, x_nodes, edge_attr, cond):
    T, B, H, OUT, OUT_PAD = prep["_dims"]
    tensors = {k: v for k, v in prep.items() if k != "_dims"}
    tensors.update(cond=cond, x_nodes=x_nodes, edge_attr=edge_attr)
    inputs = [tensors[name] for name in _IN_NAMES]

    out_flat = pl.pallas_call(
        functools.partial(_fused_forward_kernel, n_steps=T, batch=B),
        out_shape=jax.ShapeDtypeStruct((T * B, OUT_PAD), jnp.float32),
        scratch_shapes=[pltpu.VMEM((T * B, H), jnp.float32)],
    )(*inputs)
    # cheap one-time glue: drop lane padding, time-major -> batch-first [B, T, OUT]
    return jnp.transpose(out_flat[:, :OUT].reshape(T, B, OUT), (1, 0, 2))


# ----------------------------- pure-JAX reference -----------------------------

def reference_forward(p, x_nodes, edge_src, edge_dst, edge_attr,
                      node_batch, lengths_py, cond, n_fragment):
    lin = lambda x, w, b: x @ w + b
    c = lin(cond, p["ft_w1"], p["ft_b1"])
    c = jnp.where(c > 0, c, 0.01 * c)
    cond_pt = lin(c, p["ft_w2"], p["ft_b2"])
    h0 = lin(cond_pt, p["c2h_w"], p["c2h_b"])

    x = x_nodes
    N = x.shape[0]
    for i in range(2):
        e_t = lin(edge_attr, p[f"el{i}_w"], p[f"el{i}_b"])
        msg = jax.nn.relu(x[edge_src] + e_t)
        aggr = jnp.zeros((N, x.shape[1]), jnp.float32).at[edge_dst].add(msg)
        h = x + aggr
        h = jax.nn.relu(lin(h, p[f"conv{i}_w1f"], p[f"conv{i}_b1f"]))
        x = jax.nn.relu(lin(h, p[f"conv{i}_w2"], p[f"conv{i}_b2"]))
    G = int(np.sum(lengths_py))
    counts = jnp.zeros((G,), jnp.float32).at[node_batch].add(1.0)
    pooled = jnp.zeros((G, x.shape[1]), jnp.float32).at[node_batch].add(x) / counts[:, None]
    frag_emb = lin(jax.nn.relu(lin(pooled, p["out_w1"], p["out_b1"])), p["out_w2"], p["out_b2"])

    B = cond.shape[0]
    EMB = frag_emb.shape[1]
    padded = jnp.zeros((B, n_fragment + 1, EMB), jnp.float32)
    cnt = 0
    for i, L in enumerate(lengths_py):
        padded = padded.at[i, 1:1 + L, :].set(frag_emb[cnt:cnt + L])
        cnt += L
    seq = jnp.concatenate(
        [padded[:, :-1, :],
         jnp.broadcast_to(cond_pt[:, None, :], (B, n_fragment, cond_pt.shape[1]))], -1)

    H = p["c2h_b"].shape[0]

    def cell(x, h, wih, whh, bih, bhh):
        gi = x @ wih + bih
        gh = h @ whh + bhh
        r = jax.nn.sigmoid(gi[:, :H] + gh[:, :H])
        z = jax.nn.sigmoid(gi[:, H:2 * H] + gh[:, H:2 * H])
        n = jnp.tanh(gi[:, 2 * H:] + r * gh[:, 2 * H:])
        return (1.0 - z) * n + z * h

    def step(carry, x_t):
        h1, h2 = carry
        h1 = cell(x_t, h1, p["gru_wih0"], p["gru_whh0"], p["gru_bih0"], p["gru_bhh0"])
        h2 = cell(h1, h2, p["gru_wih1"], p["gru_whh1"], p["gru_bih1"], p["gru_bhh1"])
        return (h1, h2), h2

    _, ys = jax.lax.scan(step, (h0, h0), jnp.transpose(seq, (1, 0, 2)))
    lengths_arr = jnp.asarray(lengths_py, jnp.int32)
    mask = (jnp.arange(n_fragment)[:, None] < lengths_arr[None, :]).astype(jnp.float32)[..., None]
    out = (ys * mask) @ p["dec_w"] + p["dec_b"]
    return jnp.transpose(out, (1, 0, 2))


# ----------------------------- parameter init -----------------------------

def init_params(key):
    NODE_F, EDGE_F, GNN_HID, EMB = 8, 4, 32, 16
    COND, COND_PT, RNN_HID, OUT = 10, 12, 32, 20
    keys = iter(jax.random.split(key, 64))

    def w(shape, scale=0.1):
        return (jax.random.normal(next(keys), shape, jnp.float32) * scale)

    def b(shape, scale=0.01):
        return (jax.random.normal(next(keys), shape, jnp.float32) * scale)

    p = {}
    # ft_layer
    p["ft_w1"], p["ft_b1"] = w((COND, 64)), b((64,))
    p["ft_w2"], p["ft_b2"] = w((64, COND_PT)), b((COND_PT,))
    # cond_2_hid
    p["c2h_w"], p["c2h_b"] = w((COND_PT, RNN_HID)), b((RNN_HID,))
    # edge lins
    p["el0_w"], p["el0_b"] = w((EDGE_F, NODE_F)), b((NODE_F,))
    p["el1_w"], p["el1_b"] = w((EDGE_F, GNN_HID)), b((GNN_HID,))
    # GINE MLPs, BatchNorm (eval, running_mean=0, running_var=1) folded into Lin1
    in_dims = [NODE_F, GNN_HID]
    for i in range(2):
        w1, b1 = w((in_dims[i], GNN_HID)), b((GNN_HID,))
        gamma = 1.0 + jax.random.normal(next(keys), (GNN_HID,), jnp.float32) * 0.05
        beta = b((GNN_HID,))
        scale = gamma / jnp.sqrt(1.0 + 1e-5)
        p[f"conv{i}_w1f"] = w1 * scale[None, :]
        p[f"conv{i}_b1f"] = b1 * scale + beta
        p[f"conv{i}_w2"], p[f"conv{i}_b2"] = w((GNN_HID, GNN_HID)), b((GNN_HID,))
    # out_lin
    p["out_w1"], p["out_b1"] = w((GNN_HID, EMB)), b((EMB,))
    p["out_w2"], p["out_b2"] = w((EMB, EMB)), b((EMB,))
    # GRU (2 layers), weights stored transposed: [in, 3H] with gate order (r, z, n)
    in_dim = EMB + COND_PT
    p["gru_wih0"], p["gru_whh0"] = w((in_dim, 3 * RNN_HID)), w((RNN_HID, 3 * RNN_HID))
    p["gru_bih0"], p["gru_bhh0"] = b((3 * RNN_HID,)), b((3 * RNN_HID,))
    p["gru_wih1"], p["gru_whh1"] = w((RNN_HID, 3 * RNN_HID)), w((RNN_HID, 3 * RNN_HID))
    p["gru_bih1"], p["gru_bhh1"] = b((3 * RNN_HID,)), b((3 * RNN_HID,))
    # decode
    p["dec_w"], p["dec_b"] = w((RNN_HID, OUT)), b((OUT,))
    return p


# ----------------------------- main -----------------------------

if __name__ == "__main__":
    key = jax.random.PRNGKey(0)
    params = init_params(key)

    # small synthetic batch of 5 fragment graphs (sum(length) = 5)
    node_batch = np.array([0, 0, 0, 1, 1, 1, 2, 2, 3, 3, 4, 4], np.int32)
    edge_src = np.array([0, 1, 1, 2, 3, 4, 4, 5, 6, 7, 8, 9, 10, 11], np.int32)
    edge_dst = np.array([1, 0, 2, 1, 4, 3, 5, 4, 7, 6, 9, 8, 11, 10], np.int32)

    k1, k2, k3 = jax.random.split(jax.random.PRNGKey(0), 3)
    x_nodes = jax.random.normal(k1, (12, 8), jnp.float32)     # num_node_features = 8
    edge_attr = jax.random.normal(k2, (14, 4), jnp.float32)   # num_edge_features = 4
    cond = jax.random.normal(k3, (2, 10), jnp.float32)        # cond_dim = 10

    n_batch, n_fragment = 2, 5                                # label.shape
    lengths_py = [3, 2]                                       # length (static, sums to #graphs)

    prep = prepare_inputs(params, edge_src, edge_dst, node_batch,
                          lengths_py, n_fragment, n_batch)    # one-time host-side prep
    out = graph_decoder_ft_forward(prep, x_nodes, edge_attr, cond)
    out = jax.block_until_ready(out)
    assert out.shape == (n_batch, n_fragment, 20)

    ref = reference_forward(params, x_nodes, edge_src, edge_dst, edge_attr,
                            node_batch, lengths_py, cond, n_fragment)
    np.testing.assert_allclose(np.asarray(out), np.asarray(ref), rtol=1e-4, atol=1e-4)

    # TODO(synk): `sample()` (autoregressive decoding with RDKit molecule construction,
    # random.choice and Categorical sampling) is host-side logic with no Pallas equivalent.
    print("KERNEL_OK")
</pallas_src>

<mosaic_0001>
module attributes {stable_mosaic.version = 11 : i64} {
  func.func @_fused_forward_kernel(%arg0: memref<2x10xf32, #tpu.memory_space<vmem>>, %arg1: memref<12x8xf32, #tpu.memory_space<vmem>>, %arg2: memref<14x4xf32, #tpu.memory_space<vmem>>, %arg3: memref<14x12xf32, #tpu.memory_space<vmem>>, %arg4: memref<12x14xf32, #tpu.memory_space<vmem>>, %arg5: memref<5x12xf32, #tpu.memory_space<vmem>>, %arg6: memref<10x5xf32, #tpu.memory_space<vmem>>, %arg7: memref<10x1xf32, #tpu.memory_space<vmem>>, %arg8: memref<10x64xf32, #tpu.memory_space<vmem>>, %arg9: memref<1x64xf32, #tpu.memory_space<vmem>>, %arg10: memref<64x12xf32, #tpu.memory_space<vmem>>, %arg11: memref<1x12xf32, #tpu.memory_space<vmem>>, %arg12: memref<12x32xf32, #tpu.memory_space<vmem>>, %arg13: memref<1x32xf32, #tpu.memory_space<vmem>>, %arg14: memref<4x8xf32, #tpu.memory_space<vmem>>, %arg15: memref<1x8xf32, #tpu.memory_space<vmem>>, %arg16: memref<4x32xf32, #tpu.memory_space<vmem>>, %arg17: memref<1x32xf32, #tpu.memory_space<vmem>>, %arg18: memref<8x32xf32, #tpu.memory_space<vmem>>, %arg19: memref<1x32xf32, #tpu.memory_space<vmem>>, %arg20: memref<32x32xf32, #tpu.memory_space<vmem>>, %arg21: memref<1x32xf32, #tpu.memory_space<vmem>>, %arg22: memref<32x32xf32, #tpu.memory_space<vmem>>, %arg23: memref<1x32xf32, #tpu.memory_space<vmem>>, %arg24: memref<32x32xf32, #tpu.memory_space<vmem>>, %arg25: memref<1x32xf32, #tpu.memory_space<vmem>>, %arg26: memref<32x16xf32, #tpu.memory_space<vmem>>, %arg27: memref<1x16xf32, #tpu.memory_space<vmem>>, %arg28: memref<16x16xf32, #tpu.memory_space<vmem>>, %arg29: memref<1x16xf32, #tpu.memory_space<vmem>>, %arg30: memref<16x32xf32, #tpu.memory_space<vmem>>, %arg31: memref<16x32xf32, #tpu.memory_space<vmem>>, %arg32: memref<16x32xf32, #tpu.memory_space<vmem>>, %arg33: memref<12x32xf32, #tpu.memory_space<vmem>>, %arg34: memref<12x32xf32, #tpu.memory_space<vmem>>, %arg35: memref<12x32xf32, #tpu.memory_space<vmem>>, %arg36: memref<1x32xf32, #tpu.memory_space<vmem>>, %arg37: memref<1x32xf32, #tpu.memory_space<vmem>>, %arg38: memref<1x32xf32, #tpu.memory_space<vmem>>, %arg39: memref<32x32xf32, #tpu.memory_space<vmem>>, %arg40: memref<32x32xf32, #tpu.memory_space<vmem>>, %arg41: memref<32x32xf32, #tpu.memory_space<vmem>>, %arg42: memref<1x32xf32, #tpu.memory_space<vmem>>, %arg43: memref<1x32xf32, #tpu.memory_space<vmem>>, %arg44: memref<1x32xf32, #tpu.memory_space<vmem>>, %arg45: memref<32x32xf32, #tpu.memory_space<vmem>>, %arg46: memref<32x32xf32, #tpu.memory_space<vmem>>, %arg47: memref<32x32xf32, #tpu.memory_space<vmem>>, %arg48: memref<1x32xf32, #tpu.memory_space<vmem>>, %arg49: memref<1x32xf32, #tpu.memory_space<vmem>>, %arg50: memref<1x32xf32, #tpu.memory_space<vmem>>, %arg51: memref<32x32xf32, #tpu.memory_space<vmem>>, %arg52: memref<32x32xf32, #tpu.memory_space<vmem>>, %arg53: memref<32x32xf32, #tpu.memory_space<vmem>>, %arg54: memref<1x32xf32, #tpu.memory_space<vmem>>, %arg55: memref<1x32xf32, #tpu.memory_space<vmem>>, %arg56: memref<1x32xf32, #tpu.memory_space<vmem>>, %arg57: memref<32x128xf32, #tpu.memory_space<vmem>>, %arg58: memref<1x128xf32, #tpu.memory_space<vmem>>, %arg59: memref<10x128xf32, #tpu.memory_space<vmem>>, %arg60: memref<10x32xf32, #tpu.memory_space<vmem>>) attributes {dimension_semantics = [], scalar_prefetch = 0 : i64, scratch_operands = 1 : i64, tpu.core_type = #tpu.core_type<tc>} {
    %c0 = arith.constant 0 : index
    %c0_0 = arith.constant 0 : index
    %0 = vector.load %arg0[%c0, %c0_0] : memref<2x10xf32, #tpu.memory_space<vmem>>, vector<2x10xf32>
    %c0_1 = arith.constant 0 : index
    %c0_2 = arith.constant 0 : index
    %1 = vector.load %arg8[%c0_1, %c0_2] : memref<10x64xf32, #tpu.memory_space<vmem>>, vector<10x64xf32>
    %cst = arith.constant dense<0.000000e+00> : vector<2x64xf32>
    %2 = tpu.matmul %0, %1, %cst {dimension_numbers = #tpu.dot_dimension_numbers<[1], [0], [0], [1], [0, 0, 1, 1], [], []>} : vector<2x10xf32>, vector<10x64xf32>, vector<2x64xf32> -> vector<2x64xf32>
    %c0_3 = arith.constant 0 : index
    %c0_4 = arith.constant 0 : index
    %3 = vector.load %arg9[%c0_3, %c0_4] : memref<1x64xf32, #tpu.memory_space<vmem>>, vector<1x64xf32>
    %4 = vector.broadcast %3 : vector<1x64xf32> to vector<2x64xf32>
    %5 = arith.addf %2, %4 : vector<2x64xf32>
    %cst_5 = arith.constant 0.000000e+00 : f32
    %6 = vector.broadcast %cst_5 : f32 to vector<2x64xf32>
    %7 = arith.cmpf ogt, %5, %6 : vector<2x64xf32>
    %cst_6 = arith.constant 0.00999999977 : f32
    %8 = vector.broadcast %cst_6 : f32 to vector<2x64xf32>
    %9 = arith.mulf %8, %5 : vector<2x64xf32>
    %10 = arith.select %7, %5, %9 : vector<2x64xi1>, vector<2x64xf32>
    %c0_7 = arith.constant 0 : index
    %c0_8 = arith.constant 0 : index
    %11 = vector.load %arg10[%c0_7, %c0_8] : memref<64x12xf32, #tpu.memory_space<vmem>>, vector<64x12xf32>
    %cst_9 = arith.constant dense<0.000000e+00> : vector<2x12xf32>
    %12 = tpu.matmul %10, %11, %cst_9 {dimension_numbers = #tpu.dot_dimension_numbers<[1], [0], [0], [1], [0, 0, 1, 1], [], []>} : vector<2x64xf32>, vector<64x12xf32>, vector<2x12xf32> -> vector<2x12xf32>
    %c0_10 = arith.constant 0 : index
    %c0_11 = arith.constant 0 : index
    %13 = vector.load %arg11[%c0_10, %c0_11] : memref<1x12xf32, #tpu.memory_space<vmem>>, vector<1x12xf32>
    %14 = vector.broadcast %13 : vector<1x12xf32> to vector<2x12xf32>
    %15 = arith.addf %12, %14 : vector<2x12xf32>
    %c0_12 = arith.constant 0 : index
    %c0_13 = arith.constant 0 : index
    %16 = vector.load %arg12[%c0_12, %c0_13] : memref<12x32xf32, #tpu.memory_space<vmem>>, vector<12x32xf32>
    %cst_14 = arith.constant dense<0.000000e+00> : vector<2x32xf32>
    %17 = tpu.matmul %15, %16, %cst_14 {dimension_numbers = #tpu.dot_dimension_numbers<[1], [0], [0], [1], [0, 0, 1, 1], [], []>} : vector<2x12xf32>, vector<12x32xf32>, vector<2x32xf32> -> vector<2x32xf32>
    %c0_15 = arith.constant 0 : index
    %c0_16 = arith.constant 0 : index
    %18 = vector.load %arg13[%c0_15, %c0_16] : memref<1x32xf32, #tpu.memory_space<vmem>>, vector<1x32xf32>
    %19 = vector.broadcast %18 : vector<1x32xf32> to vector<2x32xf32>
    %20 = arith.addf %17, %19 : vector<2x32xf32>
    %c0_17 = arith.constant 0 : index
    %c0_18 = arith.constant 0 : index
    %21 = vector.load %arg1[%c0_17, %c0_18] : memref<12x8xf32, #tpu.memory_space<vmem>>, vector<12x8xf32>
    %c0_19 = arith.constant 0 : index
    %c0_20 = arith.constant 0 : index
    %22 = vector.load %arg3[%c0_19, %c0_20] : memref<14x12xf32, #tpu.memory_space<vmem>>, vector<14x12xf32>
    %c0_21 = arith.constant 0 : index
    %c0_22 = arith.constant 0 : index
    %23 = vector.load %arg4[%c0_21, %c0_22] : memref<12x14xf32, #tpu.memory_space<vmem>>, vector<12x14xf32>
    %c0_23 = arith.constant 0 : index
    %c0_24 = arith.constant 0 : index
    %24 = vector.load %arg2[%c0_23, %c0_24] : memref<14x4xf32, #tpu.memory_space<vmem>>, vector<14x4xf32>
    %c0_25 = arith.constant 0 : index
    %c0_26 = arith.constant 0 : index
    %25 = vector.load %arg14[%c0_25, %c0_26] : memref<4x8xf32, #tpu.memory_space<vmem>>, vector<4x8xf32>
    %c0_27 = arith.constant 0 : index
    %c0_28 = arith.constant 0 : index
    %26 = vector.load %arg15[%c0_27, %c0_28] : memref<1x8xf32, #tpu.memory_space<vmem>>, vector<1x8xf32>
    %c0_29 = arith.constant 0 : index
    %c0_30 = arith.constant 0 : index
    %27 = vector.load %arg18[%c0_29, %c0_30] : memref<8x32xf32, #tpu.memory_space<vmem>>, vector<8x32xf32>
    %c0_31 = arith.constant 0 : index
    %c0_32 = arith.constant 0 : index
    %28 = vector.load %arg19[%c0_31, %c0_32] : memref<1x32xf32, #tpu.memory_space<vmem>>, vector<1x32xf32>
    %c0_33 = arith.constant 0 : index
    %c0_34 = arith.constant 0 : index
    %29 = vector.load %arg20[%c0_33, %c0_34] : memref<32x32xf32, #tpu.memory_space<vmem>>, vector<32x32xf32>
    %c0_35 = arith.constant 0 : index
    %c0_36 = arith.constant 0 : index
    %30 = vector.load %arg21[%c0_35, %c0_36] : memref<1x32xf32, #tpu.memory_space<vmem>>, vector<1x32xf32>
    %cst_37 = arith.constant dense<0.000000e+00> : vector<14x8xf32>
    %31 = tpu.matmul %24, %25, %cst_37 {dimension_numbers = #tpu.dot_dimension_numbers<[1], [0], [0], [1], [0, 0, 1, 1], [], []>} : vector<14x4xf32>, vector<4x8xf32>, vector<14x8xf32> -> vector<14x8xf32>
    %32 = vector.broadcast %26 : vector<1x8xf32> to vector<14x8xf32>
    %33 = arith.addf %31, %32 : vector<14x8xf32>
    %cst_38 = arith.constant dense<0.000000e+00> : vector<14x8xf32>
    %34 = tpu.matmul %22, %21, %cst_38 {dimension_numbers = #tpu.dot_dimension_numbers<[1], [0], [0], [1], [0, 0, 1, 1], [], []>} : vector<14x12xf32>, vector<12x8xf32>, vector<14x8xf32> -> vector<14x8xf32>
    %35 = arith.addf %34, %33 : vector<14x8xf32>
    %cst_39 = arith.constant 0.000000e+00 : f32
    %36 = vector.broadcast %cst_39 : f32 to vector<14x8xf32>
    %37 = arith.maximumf %35, %36 : vector<14x8xf32>
    %cst_40 = arith.constant dense<0.000000e+00> : vector<12x8xf32>
    %38 = tpu.matmul %23, %37, %cst_40 {dimension_numbers = #tpu.dot_dimension_numbers<[1], [0], [0], [1], [0, 0, 1, 1], [], []>} : vector<12x14xf32>, vector<14x8xf32>, vector<12x8xf32> -> vector<12x8xf32>
    %39 = arith.addf %21, %38 : vector<12x8xf32>
    %cst_41 = arith.constant dense<0.000000e+00> : vector<12x32xf32>
    %40 = tpu.matmul %39, %27, %cst_41 {dimension_numbers = #tpu.dot_dimension_numbers<[1], [0], [0], [1], [0, 0, 1, 1], [], []>} : vector<12x8xf32>, vector<8x32xf32>, vector<12x32xf32> -> vector<12x32xf32>
    %41 = vector.broadcast %28 : vector<1x32xf32> to vector<12x32xf32>
    %42 = arith.addf %40, %41 : vector<12x32xf32>
    %cst_42 = arith.constant 0.000000e+00 : f32
    %43 = vector.broadcast %cst_42 : f32 to vector<12x32xf32>
    %44 = arith.maximumf %42, %43 : vector<12x32xf32>
    %cst_43 = arith.constant dense<0.000000e+00> : vector<12x32xf32>
    %45 = tpu.matmul %44, %29, %cst_43 {dimension_numbers = #tpu.dot_dimension_numbers<[1], [0], [0], [1], [0, 0, 1, 1], [], []>} : vector<12x32xf32>, vector<32x32xf32>, vector<12x32xf32> -> vector<12x32xf32>
    %46 = vector.broadcast %30 : vector<1x32xf32> to vector<12x32xf32>
    %47 = arith.addf %45, %46 : vector<12x32xf32>
    %cst_44 = arith.constant 0.000000e+00 : f32
    %48 = vector.broadcast %cst_44 : f32 to vector<12x32xf32>
    %49 = arith.maximumf %47, %48 : vector<12x32xf32>
    %c0_45 = arith.constant 0 : index
    %c0_46 = arith.constant 0 : index
    %50 = vector.load %arg16[%c0_45, %c0_46] : memref<4x32xf32, #tpu.memory_space<vmem>>, vector<4x32xf32>
    %c0_47 = arith.constant 0 : index
    %c0_48 = arith.constant 0 : index
    %51 = vector.load %arg17[%c0_47, %c0_48] : memref<1x32xf32, #tpu.memory_space<vmem>>, vector<1x32xf32>
    %c0_49 = arith.constant 0 : index
    %c0_50 = arith.constant 0 : index
    %52 = vector.load %arg22[%c0_49, %c0_50] : memref<32x32xf32, #tpu.memory_space<vmem>>, vector<32x32xf32>
    %c0_51 = arith.constant 0 : index
    %c0_52 = arith.constant 0 : index
    %53 = vector.load %arg23[%c0_51, %c0_52] : memref<1x32xf32, #tpu.memory_space<vmem>>, vector<1x32xf32>
    %c0_53 = arith.constant 0 : index
    %c0_54 = arith.constant 0 : index
    %54 = vector.load %arg24[%c0_53, %c0_54] : memref<32x32xf32, #tpu.memory_space<vmem>>, vector<32x32xf32>
    %c0_55 = arith.constant 0 : index
    %c0_56 = arith.constant 0 : index
    %55 = vector.load %arg25[%c0_55, %c0_56] : memref<1x32xf32, #tpu.memory_space<vmem>>, vector<1x32xf32>
    %cst_57 = arith.constant dense<0.000000e+00> : vector<14x32xf32>
    %56 = tpu.matmul %24, %50, %cst_57 {dimension_numbers = #tpu.dot_dimension_numbers<[1], [0], [0], [1], [0, 0, 1, 1], [], []>} : vector<14x4xf32>, vector<4x32xf32>, vector<14x32xf32> -> vector<14x32xf32>
    %57 = vector.broadcast %51 : vector<1x32xf32> to vector<14x32xf32>
    %58 = arith.addf %56, %57 : vector<14x32xf32>
    %cst_58 = arith.constant dense<0.000000e+00> : vector<14x32xf32>
    %59 = tpu.matmul %22, %49, %cst_58 {dimension_numbers = #tpu.dot_dimension_numbers<[1], [0], [0], [1], [0, 0, 1, 1], [], []>} : vector<14x12xf32>, vector<12x32xf32>, vector<14x32xf32> -> vector<14x32xf32>
    %60 = arith.addf %59, %58 : vector<14x32xf32>
    %cst_59 = arith.constant 0.000000e+00 : f32
    %61 = vector.broadcast %cst_59 : f32 to vector<14x32xf32>
    %62 = arith.maximumf %60, %61 : vector<14x32xf32>
    %cst_60 = arith.constant dense<0.000000e+00> : vector<12x32xf32>
    %63 = tpu.matmul %23, %62, %cst_60 {dimension_numbers = #tpu.dot_dimension_numbers<[1], [0], [0], [1], [0, 0, 1, 1], [], []>} : vector<12x14xf32>, vector<14x32xf32>, vector<12x32xf32> -> vector<12x32xf32>
    %64 = arith.addf %49, %63 : vector<12x32xf32>
    %cst_61 = arith.constant dense<0.000000e+00> : vector<12x32xf32>
    %65 = tpu.matmul %64, %52, %cst_61 {dimension_numbers = #tpu.dot_dimension_numbers<[1], [0], [0], [1], [0, 0, 1, 1], [], []>} : vector<12x32xf32>, vector<32x32xf32>, vector<12x32xf32> -> vector<12x32xf32>
    %66 = vector.broadcast %53 : vector<1x32xf32> to vector<12x32xf32>
    %67 = arith.addf %65, %66 : vector<12x32xf32>
    %cst_62 = arith.constant 0.000000e+00 : f32
    %68 = vector.broadcast %cst_62 : f32 to vector<12x32xf32>
    %69 = arith.maximumf %67, %68 : vector<12x32xf32>
    %cst_63 = arith.constant dense<0.000000e+00> : vector<12x32xf32>
    %70 = tpu.matmul %69, %54, %cst_63 {dimension_numbers = #tpu.dot_dimension_numbers<[1], [0], [0], [1], [0, 0, 1, 1], [], []>} : vector<12x32xf32>, vector<32x32xf32>, vector<12x32xf32> -> vector<12x32xf32>
    %71 = vector.broadcast %55 : vector<1x32xf32> to vector<12x32xf32>
    %72 = arith.addf %70, %71 : vector<12x32xf32>
    %cst_64 = arith.constant 0.000000e+00 : f32
    %73 = vector.broadcast %cst_64 : f32 to vector<12x32xf32>
    %74 = arith.maximumf %72, %73 : vector<12x32xf32>
    %c0_65 = arith.constant 0 : index
    %c0_66 = arith.constant 0 : index
    %75 = vector.load %arg5[%c0_65, %c0_66] : memref<5x12xf32, #tpu.memory_space<vmem>>, vector<5x12xf32>
    %cst_67 = arith.constant dense<0.000000e+00> : vector<5x32xf32>
    %76 = tpu.matmul %75, %74, %cst_67 {dimension_numbers = #tpu.dot_dimension_numbers<[1], [0], [0], [1], [0, 0, 1, 1], [], []>} : vector<5x12xf32>, vector<12x32xf32>, vector<5x32xf32> -> vector<5x32xf32>
    %c0_68 = arith.constant 0 : index
    %c0_69 = arith.constant 0 : index
    %77 = vector.load %arg26[%c0_68, %c0_69] : memref<32x16xf32, #tpu.memory_space<vmem>>, vector<32x16xf32>
    %cst_70 = arith.constant dense<0.000000e+00> : vector<5x16xf32>
    %78 = tpu.matmul %76, %77, %cst_70 {dimension_numbers = #tpu.dot_dimension_numbers<[1], [0], [0], [1], [0, 0, 1, 1], [], []>} : vector<5x32xf32>, vector<32x16xf32>, vector<5x16xf32> -> vector<5x16xf32>
    %c0_71 = arith.constant 0 : index
    %c0_72 = arith.constant 0 : index
    %79 = vector.load %arg27[%c0_71, %c0_72] : memref<1x16xf32, #tpu.memory_space<vmem>>, vector<1x16xf32>
    %80 = vector.broadcast %79 : vector<1x16xf32> to vector<5x16xf32>
    %81 = arith.addf %78, %80 : vector<5x16xf32>
    %cst_73 = arith.constant 0.000000e+00 : f32
    %82 = vector.broadcast %cst_73 : f32 to vector<5x16xf32>
    %83 = arith.maximumf %81, %82 : vector<5x16xf32>
    %c0_74 = arith.constant 0 : index
    %c0_75 = arith.constant 0 : index
    %84 = vector.load %arg28[%c0_74, %c0_75] : memref<16x16xf32, #tpu.memory_space<vmem>>, vector<16x16xf32>
    %cst_76 = arith.constant dense<0.000000e+00> : vector<5x16xf32>
    %85 = tpu.matmul %83, %84, %cst_76 {dimension_numbers = #tpu.dot_dimension_numbers<[1], [0], [0], [1], [0, 0, 1, 1], [], []>} : vector<5x16xf32>, vector<16x16xf32>, vector<5x16xf32> -> vector<5x16xf32>
    %c0_77 = arith.constant 0 : index
    %c0_78 = arith.constant 0 : index
    %86 = vector.load %arg29[%c0_77, %c0_78] : memref<1x16xf32, #tpu.memory_space<vmem>>, vector<1x16xf32>
    %87 = vector.broadcast %86 : vector<1x16xf32> to vector<5x16xf32>
    %88 = arith.addf %85, %87 : vector<5x16xf32>
    %c0_79 = arith.constant 0 : index
    %c0_80 = arith.constant 0 : index
    %89 = vector.load %arg6[%c0_79, %c0_80] : memref<10x5xf32, #tpu.memory_space<vmem>>, vector<10x5xf32>
    %cst_81 = arith.constant dense<0.000000e+00> : vector<10x16xf32>
    %90 = tpu.matmul %89, %88, %cst_81 {dimension_numbers = #tpu.dot_dimension_numbers<[1], [0], [0], [1], [0, 0, 1, 1], [], []>} : vector<10x5xf32>, vector<5x16xf32>, vector<10x16xf32> -> vector<10x16xf32>
    %c0_82 = arith.constant 0 : index
    %c0_83 = arith.constant 0 : index
    %91 = vector.load %arg30[%c0_82, %c0_83] : memref<16x32xf32, #tpu.memory_space<vmem>>, vector<16x32xf32>
    %cst_84 = arith.constant dense<0.000000e+00> : vector<10x32xf32>
    %92 = tpu.matmul %90, %91, %cst_84 {dimension_numbers = #tpu.dot_dimension_numbers<[1], [0], [0], [1], [0, 0, 1, 1], [], []>} : vector<10x16xf32>, vector<16x32xf32>, vector<10x32xf32> -> vector<10x32xf32>
    %c0_85 = arith.constant 0 : index
    %c0_86 = arith.constant 0 : index
    %93 = vector.load %arg31[%c0_85, %c0_86] : memref<16x32xf32, #tpu.memory_space<vmem>>, vector<16x32xf32>
    %cst_87 = arith.constant dense<0.000000e+00> : vector<10x32xf32>
    %94 = tpu.matmul %90, %93, %cst_87 {dimension_numbers = #tpu.dot_dimension_numbers<[1], [0], [0], [1], [0, 0, 1, 1], [], []>} : vector<10x16xf32>, vector<16x32xf32>, vector<10x32xf32> -> vector<10x32xf32>
    %c0_88 = arith.constant 0 : index
    %c0_89 = arith.constant 0 : index
    %95 = vector.load %arg32[%c0_88, %c0_89] : memref<16x32xf32, #tpu.memory_space<vmem>>, vector<16x32xf32>
    %cst_90 = arith.constant dense<0.000000e+00> : vector<10x32xf32>
    %96 = tpu.matmul %90, %95, %cst_90 {dimension_numbers = #tpu.dot_dimension_numbers<[1], [0], [0], [1], [0, 0, 1, 1], [], []>} : vector<10x16xf32>, vector<16x32xf32>, vector<10x32xf32> -> vector<10x32xf32>
    %c0_91 = arith.constant 0 : index
    %c0_92 = arith.constant 0 : index
    %97 = vector.load %arg33[%c0_91, %c0_92] : memref<12x32xf32, #tpu.memory_space<vmem>>, vector<12x32xf32>
    %cst_93 = arith.constant dense<0.000000e+00> : vector<2x32xf32>
    %98 = tpu.matmul %15, %97, %cst_93 {dimension_numbers = #tpu.dot_dimension_numbers<[1], [0], [0], [1], [0, 0, 1, 1], [], []>} : vector<2x12xf32>, vector<12x32xf32>, vector<2x32xf32> -> vector<2x32xf32>
    %c0_94 = arith.constant 0 : index
    %c0_95 = arith.constant 0 : index
    %99 = vector.load %arg36[%c0_94, %c0_95] : memref<1x32xf32, #tpu.memory_space<vmem>>, vector<1x32xf32>
    %100 = vector.broadcast %99 : vector<1x32xf32> to vector<2x32xf32>
    %101 = arith.addf %98, %100 : vector<2x32xf32>
    %c0_96 = arith.constant 0 : index
    %c0_97 = arith.constant 0 : index
    %102 = vector.load %arg34[%c0_96, %c0_97] : memref<12x32xf32, #tpu.memory_space<vmem>>, vector<12x32xf32>
    %cst_98 = arith.constant dense<0.000000e+00> : vector<2x32xf32>
    %103 = tpu.matmul %15, %102, %cst_98 {dimension_numbers = #tpu.dot_dimension_numbers<[1], [0], [0], [1], [0, 0, 1, 1], [], []>} : vector<2x12xf32>, vector<12x32xf32>, vector<2x32xf32> -> vector<2x32xf32>
    %c0_99 = arith.constant 0 : index
    %c0_100 = arith.constant 0 : index
    %104 = vector.load %arg37[%c0_99, %c0_100] : memref<1x32xf32, #tpu.memory_space<vmem>>, vector<1x32xf32>
    %105 = vector.broadcast %104 : vector<1x32xf32> to vector<2x32xf32>
    %106 = arith.addf %103, %105 : vector<2x32xf32>
    %c0_101 = arith.constant 0 : index
    %c0_102 = arith.constant 0 : index
    %107 = vector.load %arg35[%c0_101, %c0_102] : memref<12x32xf32, #tpu.memory_space<vmem>>, vector<12x32xf32>
    %cst_103 = arith.constant dense<0.000000e+00> : vector<2x32xf32>
    %108 = tpu.matmul %15, %107, %cst_103 {dimension_numbers = #tpu.dot_dimension_numbers<[1], [0], [0], [1], [0, 0, 1, 1], [], []>} : vector<2x12xf32>, vector<12x32xf32>, vector<2x32xf32> -> vector<2x32xf32>
    %c0_104 = arith.constant 0 : index
    %c0_105 = arith.constant 0 : index
    %109 = vector.load %arg38[%c0_104, %c0_105] : memref<1x32xf32, #tpu.memory_space<vmem>>, vector<1x32xf32>
    %110 = vector.broadcast %109 : vector<1x32xf32> to vector<2x32xf32>
    %111 = arith.addf %108, %110 : vector<2x32xf32>
    %c0_106 = arith.constant 0 : index
    %c0_107 = arith.constant 0 : index
    %112 = vector.load %arg39[%c0_106, %c0_107] : memref<32x32xf32, #tpu.memory_space<vmem>>, vector<32x32xf32>
    %c0_108 = arith.constant 0 : index
    %c0_109 = arith.constant 0 : index
    %113 = vector.load %arg40[%c0_108, %c0_109] : memref<32x32xf32, #tpu.memory_space<vmem>>, vector<32x32xf32>
    %c0_110 = arith.constant 0 : index
    %c0_111 = arith.constant 0 : index
    %114 = vector.load %arg41[%c0_110, %c0_111] : memref<32x32xf32, #tpu.memory_space<vmem>>, vector<32x32xf32>
    %c0_112 = arith.constant 0 : index
    %c0_113 = arith.constant 0 : index
    %115 = vector.load %arg42[%c0_112, %c0_113] : memref<1x32xf32, #tpu.memory_space<vmem>>, vector<1x32xf32>
    %c0_114 = arith.constant 0 : index
    %c0_115 = arith.constant 0 : index
    %116 = vector.load %arg43[%c0_114, %c0_115] : memref<1x32xf32, #tpu.memory_space<vmem>>, vector<1x32xf32>
    %c0_116 = arith.constant 0 : index
    %c0_117 = arith.constant 0 : index
    %117 = vector.load %arg44[%c0_116, %c0_117] : memref<1x32xf32, #tpu.memory_space<vmem>>, vector<1x32xf32>
    %c0_118 = arith.constant 0 : index
    %c0_119 = arith.constant 0 : index
    %118 = vector.load %arg45[%c0_118, %c0_119] : memref<32x32xf32, #tpu.memory_space<vmem>>, vector<32x32xf32>
    %c0_120 = arith.constant 0 : index
    %c0_121 = arith.constant 0 : index
    %119 = vector.load %arg46[%c0_120, %c0_121] : memref<32x32xf32, #tpu.memory_space<vmem>>, vector<32x32xf32>
    %c0_122 = arith.constant 0 : index
    %c0_123 = arith.constant 0 : index
    %120 = vector.load %arg47[%c0_122, %c0_123] : memref<32x32xf32, #tpu.memory_space<vmem>>, vector<32x32xf32>
    %c0_124 = arith.constant 0 : index
    %c0_125 = arith.constant 0 : index
    %121 = vector.load %arg48[%c0_124, %c0_125] : memref<1x32xf32, #tpu.memory_space<vmem>>, vector<1x32xf32>
    %c0_126 = arith.constant 0 : index
    %c0_127 = arith.constant 0 : index
    %122 = vector.load %arg49[%c0_126, %c0_127] : memref<1x32xf32, #tpu.memory_space<vmem>>, vector<1x32xf32>
    %c0_128 = arith.constant 0 : index
    %c0_129 = arith.constant 0 : index
    %123 = vector.load %arg50[%c0_128, %c0_129] : memref<1x32xf32, #tpu.memory_space<vmem>>, vector<1x32xf32>
    %c0_130 = arith.constant 0 : index
    %c0_131 = arith.constant 0 : index
    %124 = vector.load %arg51[%c0_130, %c0_131] : memref<32x32xf32, #tpu.memory_space<vmem>>, vector<32x32xf32>
    %c0_132 = arith.constant 0 : index
    %c0_133 = arith.constant 0 : index
    %125 = vector.load %arg52[%c0_132, %c0_133] : memref<32x32xf32, #tpu.memory_space<vmem>>, vector<32x32xf32>
    %c0_134 = arith.constant 0 : index
    %c0_135 = arith.constant 0 : index
    %126 = vector.load %arg53[%c0_134, %c0_135] : memref<32x32xf32, #tpu.memory_space<vmem>>, vector<32x32xf32>
    %c0_136 = arith.constant 0 : index
    %c0_137 = arith.constant 0 : index
    %127 = vector.load %arg54[%c0_136, %c0_137] : memref<1x32xf32, #tpu.memory_space<vmem>>, vector<1x32xf32>
    %c0_138 = arith.constant 0 : index
    %c0_139 = arith.constant 0 : index
    %128 = vector.load %arg55[%c0_138, %c0_139] : memref<1x32xf32, #tpu.memory_space<vmem>>, vector<1x32xf32>
    %c0_140 = arith.constant 0 : index
    %c0_141 = arith.constant 0 : index
    %129 = vector.load %arg56[%c0_140, %c0_141] : memref<1x32xf32, #tpu.memory_space<vmem>>, vector<1x32xf32>
    %c0_142 = arith.constant 0 : index
    %c0_143 = arith.constant 0 : index
    %130 = vector.load %arg7[%c0_142, %c0_143] : memref<10x1xf32, #tpu.memory_space<vmem>>, vector<10x1xf32>
    %131 = vector.extract_strided_slice %92 {offsets = [0, 0], sizes = [2, 32], strides = [1, 1]} : vector<10x32xf32> to vector<2x32xf32>
    %132 = arith.addf %131, %101 : vector<2x32xf32>
    %133 = vector.extract_strided_slice %94 {offsets = [0, 0], sizes = [2, 32], strides = [1, 1]} : vector<10x32xf32> to vector<2x32xf32>
    %134 = arith.addf %133, %106 : vector<2x32xf32>
    %135 = vector.extract_strided_slice %96 {offsets = [0, 0], sizes = [2, 32], strides = [1, 1]} : vector<10x32xf32> to vector<2x32xf32>
    %136 = arith.addf %135, %111 : vector<2x32xf32>
    %cst_144 = arith.constant dense<0.000000e+00> : vector<2x32xf32>
    %137 = tpu.matmul %20, %112, %cst_144 {dimension_numbers = #tpu.dot_dimension_numbers<[1], [0], [0], [1], [0, 0, 1, 1], [], []>} : vector<2x32xf32>, vector<32x32xf32>, vector<2x32xf32> -> vector<2x32xf32>
    %138 = arith.addf %132, %137 : vector<2x32xf32>
    %139 = vector.broadcast %115 : vector<1x32xf32> to vector<2x32xf32>
    %140 = arith.addf %138, %139 : vector<2x32xf32>
    %141 = arith.negf %140 : vector<2x32xf32>
    %142 = math.exp %141 : vector<2x32xf32>
    %cst_145 = arith.constant 1.000000e+00 : f32
    %143 = vector.broadcast %cst_145 : f32 to vector<2x32xf32>
    %144 = arith.addf %143, %142 : vector<2x32xf32>
    %145 = arith.divf %143, %144 : vector<2x32xf32>
    %cst_146 = arith.constant dense<0.000000e+00> : vector<2x32xf32>
    %146 = tpu.matmul %20, %113, %cst_146 {dimension_numbers = #tpu.dot_dimension_numbers<[1], [0], [0], [1], [0, 0, 1, 1], [], []>} : vector<2x32xf32>, vector<32x32xf32>, vector<2x32xf32> -> vector<2x32xf32>
    %147 = arith.addf %134, %146 : vector<2x32xf32>
    %148 = vector.broadcast %116 : vector<1x32xf32> to vector<2x32xf32>
    %149 = arith.addf %147, %148 : vector<2x32xf32>
    %150 = arith.negf %149 : vector<2x32xf32>
    %151 = math.exp %150 : vector<2x32xf32>
    %cst_147 = arith.constant 1.000000e+00 : f32
    %152 = vector.broadcast %cst_147 : f32 to vector<2x32xf32>
    %153 = arith.addf %152, %151 : vector<2x32xf32>
    %154 = arith.divf %152, %153 : vector<2x32xf32>
    %cst_148 = arith.constant dense<0.000000e+00> : vector<2x32xf32>
    %155 = tpu.matmul %20, %114, %cst_148 {dimension_numbers = #tpu.dot_dimension_numbers<[1], [0], [0], [1], [0, 0, 1, 1], [], []>} : vector<2x32xf32>, vector<32x32xf32>, vector<2x32xf32> -> vector<2x32xf32>
    %156 = vector.broadcast %117 : vector<1x32xf32> to vector<2x32xf32>
    %157 = arith.addf %155, %156 : vector<2x32xf32>
    %158 = arith.mulf %145, %157 : vector<2x32xf32>
    %159 = arith.addf %136, %158 : vector<2x32xf32>
    %160 = math.tanh %159 : vector<2x32xf32>
    %cst_149 = arith.constant 1.000000e+00 : f32
    %161 = vector.broadcast %cst_149 : f32 to vector<2x32xf32>
    %162 = arith.subf %161, %154 : vector<2x32xf32>
    %163 = arith.mulf %162, %160 : vector<2x32xf32>
    %164 = arith.mulf %154, %20 : vector<2x32xf32>
    %165 = arith.addf %163, %164 : vector<2x32xf32>
    %cst_150 = arith.constant dense<0.000000e+00> : vector<2x32xf32>
    %166 = tpu.matmul %165, %118, %cst_150 {dimension_numbers = #tpu.dot_dimension_numbers<[1], [0], [0], [1], [0, 0, 1, 1], [], []>} : vector<2x32xf32>, vector<32x32xf32>, vector<2x32xf32> -> vector<2x32xf32>
    %167 = vector.broadcast %121 : vector<1x32xf32> to vector<2x32xf32>
    %168 = arith.addf %166, %167 : vector<2x32xf32>
    %cst_151 = arith.constant dense<0.000000e+00> : vector<2x32xf32>
    %169 = tpu.matmul %165, %119, %cst_151 {dimension_numbers = #tpu.dot_dimension_numbers<[1], [0], [0], [1], [0, 0, 1, 1], [], []>} : vector<2x32xf32>, vector<32x32xf32>, vector<2x32xf32> -> vector<2x32xf32>
    %170 = vector.broadcast %122 : vector<1x32xf32> to vector<2x32xf32>
    %171 = arith.addf %169, %170 : vector<2x32xf32>
    %cst_152 = arith.constant dense<0.000000e+00> : vector<2x32xf32>
    %172 = tpu.matmul %165, %120, %cst_152 {dimension_numbers = #tpu.dot_dimension_numbers<[1], [0], [0], [1], [0, 0, 1, 1], [], []>} : vector<2x32xf32>, vector<32x32xf32>, vector<2x32xf32> -> vector<2x32xf32>
    %173 = vector.broadcast %123 : vector<1x32xf32> to vector<2x32xf32>
    %174 = arith.addf %172, %173 : vector<2x32xf32>
    %cst_153 = arith.constant dense<0.000000e+00> : vector<2x32xf32>
    %175 = tpu.matmul %20, %124, %cst_153 {dimension_numbers = #tpu.dot_dimension_numbers<[1], [0], [0], [1], [0, 0, 1, 1], [], []>} : vector<2x32xf32>, vector<32x32xf32>, vector<2x32xf32> -> vector<2x32xf32>
    %176 = arith.addf %168, %175 : vector<2x32xf32>
    %177 = vector.broadcast %127 : vector<1x32xf32> to vector<2x32xf32>
    %178 = arith.addf %176, %177 : vector<2x32xf32>
    %179 = arith.negf %178 : vector<2x32xf32>
    %180 = math.exp %179 : vector<2x32xf32>
    %cst_154 = arith.constant 1.000000e+00 : f32
    %181 = vector.broadcast %cst_154 : f32 to vector<2x32xf32>
    %182 = arith.addf %181, %180 : vector<2x32xf32>
    %183 = arith.divf %181, %182 : vector<2x32xf32>
    %cst_155 = arith.constant dense<0.000000e+00> : vector<2x32xf32>
    %184 = tpu.matmul %20, %125, %cst_155 {dimension_numbers = #tpu.dot_dimension_numbers<[1], [0], [0], [1], [0, 0, 1, 1], [], []>} : vector<2x32xf32>, vector<32x32xf32>, vector<2x32xf32> -> vector<2x32xf32>
    %185 = arith.addf %171, %184 : vector<2x32xf32>
    %186 = vector.broadcast %128 : vector<1x32xf32> to vector<2x32xf32>
    %187 = arith.addf %185, %186 : vector<2x32xf32>
    %188 = arith.negf %187 : vector<2x32xf32>
    %189 = math.exp %188 : vector<2x32xf32>
    %cst_156 = arith.constant 1.000000e+00 : f32
    %190 = vector.broadcast %cst_156 : f32 to vector<2x32xf32>
    %191 = arith.addf %190, %189 : vector<2x32xf32>
    %192 = arith.divf %190, %191 : vector<2x32xf32>
    %cst_157 = arith.constant dense<0.000000e+00> : vector<2x32xf32>
    %193 = tpu.matmul %20, %126, %cst_157 {dimension_numbers = #tpu.dot_dimension_numbers<[1], [0], [0], [1], [0, 0, 1, 1], [], []>} : vector<2x32xf32>, vector<32x32xf32>, vector<2x32xf32> -> vector<2x32xf32>
    %194 = vector.broadcast %129 : vector<1x32xf32> to vector<2x32xf32>
    %195 = arith.addf %193, %194 : vector<2x32xf32>
    %196 = arith.mulf %183, %195 : vector<2x32xf32>
    %197 = arith.addf %174, %196 : vector<2x32xf32>
    %198 = math.tanh %197 : vector<2x32xf32>
    %cst_158 = arith.constant 1.000000e+00 : f32
    %199 = vector.broadcast %cst_158 : f32 to vector<2x32xf32>
    %200 = arith.subf %199, %192 : vector<2x32xf32>
    %201 = arith.mulf %200, %198 : vector<2x32xf32>
    %202 = arith.mulf %192, %20 : vector<2x32xf32>
    %203 = arith.addf %201, %202 : vector<2x32xf32>
    %204 = vector.extract_strided_slice %130 {offsets = [0, 0], sizes = [2, 1], strides = [1, 1]} : vector<10x1xf32> to vector<2x1xf32>
    %205 = vector.broadcast %204 : vector<2x1xf32> to vector<2x32xf32>
    %206 = arith.mulf %203, %205 : vector<2x32xf32>
    %c0_159 = arith.constant 0 : index
    %c0_160 = arith.constant 0 : index
    %207 = vector.load %arg60[%c0_159, %c0_160] : memref<10x32xf32, #tpu.memory_space<vmem>>, vector<2x32xf32>
    tpu.vector_store %arg60[%c0_159, %c0_160], %206 {strides = array<i32>} : memref<10x32xf32, #tpu.memory_space<vmem>>, vector<2x32xf32>,
    %208 = vector.extract_strided_slice %92 {offsets = [2, 0], sizes = [2, 32], strides = [1, 1]} : vector<10x32xf32> to vector<2x32xf32>
    %209 = arith.addf %208, %101 : vector<2x32xf32>
    %210 = vector.extract_strided_slice %94 {offsets = [2, 0], sizes = [2, 32], strides = [1, 1]} : vector<10x32xf32> to vector<2x32xf32>
    %211 = arith.addf %210, %106 : vector<2x32xf32>
    %212 = vector.extract_strided_slice %96 {offsets = [2, 0], sizes = [2, 32], strides = [1, 1]} : vector<10x32xf32> to vector<2x32xf32>
    %213 = arith.addf %212, %111 : vector<2x32xf32>
    %cst_161 = arith.constant dense<0.000000e+00> : vector<2x32xf32>
    %214 = tpu.matmul %165, %112, %cst_161 {dimension_numbers = #tpu.dot_dimension_numbers<[1], [0], [0], [1], [0, 0, 1, 1], [], []>} : vector<2x32xf32>, vector<32x32xf32>, vector<2x32xf32> -> vector<2x32xf32>
    %215 = arith.addf %209, %214 : vector<2x32xf32>
    %216 = vector.broadcast %115 : vector<1x32xf32> to vector<2x32xf32>
    %217 = arith.addf %215, %216 : vector<2x32xf32>
    %218 = arith.negf %217 : vector<2x32xf32>
    %219 = math.exp %218 : vector<2x32xf32>
    %cst_162 = arith.constant 1.000000e+00 : f32
    %220 = vector.broadcast %cst_162 : f32 to vector<2x32xf32>
    %221 = arith.addf %220, %219 : vector<2x32xf32>
    %222 = arith.divf %220, %221 : vector<2x32xf32>
    %cst_163 = arith.constant dense<0.000000e+00> : vector<2x32xf32>
    %223 = tpu.matmul %165, %113, %cst_163 {dimension_numbers = #tpu.dot_dimension_numbers<[1], [0], [0], [1], [0, 0, 1, 1], [], []>} : vector<2x32xf32>, vector<32x32xf32>, vector<2x32xf32> -> vector<2x32xf32>
    %224 = arith.addf %211, %223 : vector<2x32xf32>
    %225 = vector.broadcast %116 : vector<1x32xf32> to vector<2x32xf32>
    %226 = arith.addf %224, %225 : vector<2x32xf32>
    %227 = arith.negf %226 : vector<2x32xf32>
    %228 = math.exp %227 : vector<2x32xf32>
    %cst_164 = arith.constant 1.000000e+00 : f32
    %229 = vector.broadcast %cst_164 : f32 to vector<2x32xf32>
    %230 = arith.addf %229, %228 : vector<2x32xf32>
    %231 = arith.divf %229, %230 : vector<2x32xf32>
    %cst_165 = arith.constant dense<0.000000e+00> : vector<2x32xf32>
    %232 = tpu.matmul %165, %114, %cst_165 {dimension_numbers = #tpu.dot_dimension_numbers<[1], [0], [0], [1], [0, 0, 1, 1], [], []>} : vector<2x32xf32>, vector<32x32xf32>, vector<2x32xf32> -> vector<2x32xf32>
    %233 = vector.broadcast %117 : vector<1x32xf32> to vector<2x32xf32>
    %234 = arith.addf %232, %233 : vector<2x32xf32>
    %235 = arith.mulf %222, %234 : vector<2x32xf32>
    %236 = arith.addf %213, %235 : vector<2x32xf32>
    %237 = math.tanh %236 : vector<2x32xf32>
    %cst_166 = arith.constant 1.000000e+00 : f32
    %238 = vector.broadcast %cst_166 : f32 to vector<2x32xf32>
    %239 = arith.subf %238, %231 : vector<2x32xf32>
    %240 = arith.mulf %239, %237 : vector<2x32xf32>
    %241 = arith.mulf %231, %165 : vector<2x32xf32>
    %242 = arith.addf %240, %241 : vector<2x32xf32>
    %cst_167 = arith.constant dense<0.000000e+00> : vector<2x32xf32>
    %243 = tpu.matmul %242, %118, %cst_167 {dimension_numbers = #tpu.dot_dimension_numbers<[1], [0], [0], [1], [0, 0, 1, 1], [], []>} : vector<2x32xf32>, vector<32x32xf32>, vector<2x32xf32> -> vector<2x32xf32>
    %244 = vector.broadcast %121 : vector<1x32xf32> to vector<2x32xf32>
    %245 = arith.addf %243, %244 : vector<2x32xf32>
    %cst_168 = arith.constant dense<0.000000e+00> : vector<2x32xf32>
    %246 = tpu.matmul %242, %119, %cst_168 {dimension_numbers = #tpu.dot_dimension_numbers<[1], [0], [0], [1], [0, 0, 1, 1], [], []>} : vector<2x32xf32>, vector<32x32xf32>, vector<2x32xf32> -> vector<2x32xf32>
    %247 = vector.broadcast %122 : vector<1x32xf32> to vector<2x32xf32>
    %248 = arith.addf %246, %247 : vector<2x32xf32>
    %cst_169 = arith.constant dense<0.000000e+00> : vector<2x32xf32>
    %249 = tpu.matmul %242, %120, %cst_169 {dimension_numbers = #tpu.dot_dimension_numbers<[1], [0], [0], [1], [0, 0, 1, 1], [], []>} : vector<2x32xf32>, vector<32x32xf32>, vector<2x32xf32> -> vector<2x32xf32>
    %250 = vector.broadcast %123 : vector<1x32xf32> to vector<2x32xf32>
    %251 = arith.addf %249, %250 : vector<2x32xf32>
    %cst_170 = arith.constant dense<0.000000e+00> : vector<2x32xf32>
    %252 = tpu.matmul %203, %124, %cst_170 {dimension_numbers = #tpu.dot_dimension_numbers<[1], [0], [0], [1], [0, 0, 1, 1], [], []>} : vector<2x32xf32>, vector<32x32xf32>, vector<2x32xf32> -> vector<2x32xf32>
    %253 = arith.addf %245, %252 : vector<2x32xf32>
    %254 = vector.broadcast %127 : vector<1x32xf32> to vector<2x32xf32>
    %255 = arith.addf %253, %254 : vector<2x32xf32>
    %256 = arith.negf %255 : vector<2x32xf32>
    %257 = math.exp %256 : vector<2x32xf32>
    %cst_171 = arith.constant 1.000000e+00 : f32
    %258 = vector.broadcast %cst_171 : f32 to vector<2x32xf32>
    %259 = arith.addf %258, %257 : vector<2x32xf32>
    %260 = arith.divf %258, %259 : vector<2x32xf32>
    %cst_172 = arith.constant dense<0.000000e+00> : vector<2x32xf32>
    %261 = tpu.matmul %203, %125, %cst_172 {dimension_numbers = #tpu.dot_dimension_numbers<[1], [0], [0], [1], [0, 0, 1, 1], [], []>} : vector<2x32xf32>, vector<32x32xf32>, vector<2x32xf32> -> vector<2x32xf32>
    %262 = arith.addf %248, %261 : vector<2x32xf32>
    %263 = vector.broadcast %128 : vector<1x32xf32> to vector<2x32xf32>
    %264 = arith.addf %262, %263 : vector<2x32xf32>
    %265 = arith.negf %264 : vector<2x32xf32>
    %266 = math.exp %265 : vector<2x32xf32>
    %cst_173 = arith.constant 1.000000e+00 : f32
    %267 = vector.broadcast %cst_173 : f32 to vector<2x32xf32>
    %268 = arith.addf %267, %266 : vector<2x32xf32>
    %269 = arith.divf %267, %268 : vector<2x32xf32>
    %cst_174 = arith.constant dense<0.000000e+00> : vector<2x32xf32>
    %270 = tpu.matmul %203, %126, %cst_174 {dimension_numbers = #tpu.dot_dimension_numbers<[1], [0], [0], [1], [0, 0, 1, 1], [], []>} : vector<2x32xf32>, vector<32x32xf32>, vector<2x32xf32> -> vector<2x32xf32>
    %271 = vector.broadcast %129 : vector<1x32xf32> to vector<2x32xf32>
    %272 = arith.addf %270, %271 : vector<2x32xf32>
    %273 = arith.mulf %260, %272 : vector<2x32xf32>
    %274 = arith.addf %251, %273 : vector<2x32xf32>
    %275 = math.tanh %274 : vector<2x32xf32>
    %cst_175 = arith.constant 1.000000e+00 : f32
    %276 = vector.broadcast %cst_175 : f32 to vector<2x32xf32>
    %277 = arith.subf %276, %269 : vector<2x32xf32>
    %278 = arith.mulf %277, %275 : vector<2x32xf32>
    %279 = arith.mulf %269, %203 : vector<2x32xf32>
    %280 = arith.addf %278, %279 : vector<2x32xf32>
    %281 = vector.extract_strided_slice %130 {offsets = [2, 0], sizes = [2, 1], strides = [1, 1]} : vector<10x1xf32> to vector<2x1xf32>
    %282 = vector.broadcast %281 : vector<2x1xf32> to vector<2x32xf32>
    %283 = arith.mulf %280, %282 : vector<2x32xf32>
    %c2 = arith.constant 2 : index
    %c0_176 = arith.constant 0 : index
    %284 = vector.load %arg60[%c2, %c0_176] : memref<10x32xf32, #tpu.memory_space<vmem>>, vector<2x32xf32>
    tpu.vector_store %arg60[%c2, %c0_176], %283 {strides = array<i32>} : memref<10x32xf32, #tpu.memory_space<vmem>>, vector<2x32xf32>,
    %285 = vector.extract_strided_slice %92 {offsets = [4, 0], sizes = [2, 32], strides = [1, 1]} : vector<10x32xf32> to vector<2x32xf32>
    %286 = arith.addf %285, %101 : vector<2x32xf32>
    %287 = vector.extract_strided_slice %94 {offsets = [4, 0], sizes = [2, 32], strides = [1, 1]} : vector<10x32xf32> to vector<2x32xf32>
    %288 = arith.addf %287, %106 : vector<2x32xf32>
    %289 = vector.extract_strided_slice %96 {offsets = [4, 0], sizes = [2, 32], strides = [1, 1]} : vector<10x32xf32> to vector<2x32xf32>
    %290 = arith.addf %289, %111 : vector<2x32xf32>
    %cst_177 = arith.constant dense<0.000000e+00> : vector<2x32xf32>
    %291 = tpu.matmul %242, %112, %cst_177 {dimension_numbers = #tpu.dot_dimension_numbers<[1], [0], [0], [1], [0, 0, 1, 1], [], []>} : vector<2x32xf32>, vector<32x32xf32>, vector<2x32xf32> -> vector<2x32xf32>
    %292 = arith.addf %286, %291 : vector<2x32xf32>
    %293 = vector.broadcast %115 : vector<1x32xf32> to vector<2x32xf32>
    %294 = arith.addf %292, %293 : vector<2x32xf32>
    %295 = arith.negf %294 : vector<2x32xf32>
    %296 = math.exp %295 : vector<2x32xf32>
    %cst_178 = arith.constant 1.000000e+00 : f32
    %297 = vector.broadcast %cst_178 : f32 to vector<2x32xf32>
    %298 = arith.addf %297, %296 : vector<2x32xf32>
    %299 = arith.divf %297, %298 : vector<2x32xf32>
    %cst_179 = arith.constant dense<0.000000e+00> : vector<2x32xf32>
    %300 = tpu.matmul %242, %113, %cst_179 {dimension_numbers = #tpu.dot_dimension_numbers<[1], [0], [0], [1], [0, 0, 1, 1], [], []>} : vector<2x32xf32>, vector<32x32xf32>, vector<2x32xf32> -> vector<2x32xf32>
    %301 = arith.addf %288, %300 : vector<2x32xf32>
    %302 = vector.broadcast %116 : vector<1x32xf32> to vector<2x32xf32>
    %303 = arith.addf %301, %302 : vector<2x32xf32>
    %304 = arith.negf %303 : vector<2x32xf32>
    %305 = math.exp %304 : vector<2x32xf32>
    %cst_180 = arith.constant 1.000000e+00 : f32
    %306 = vector.broadcast %cst_180 : f32 to vector<2x32xf32>
    %307 = arith.addf %306, %305 : vector<2x32xf32>
    %308 = arith.divf %306, %307 : vector<2x32xf32>
    %cst_181 = arith.constant dense<0.000000e+00> : vector<2x32xf32>
    %309 = tpu.matmul %242, %114, %cst_181 {dimension_numbers = #tpu.dot_dimension_numbers<[1], [0], [0], [1], [0, 0, 1, 1], [], []>} : vector<2x32xf32>, vector<32x32xf32>, vector<2x32xf32> -> vector<2x32xf32>
    %310 = vector.broadcast %117 : vector<1x32xf32> to vector<2x32xf32>
    %311 = arith.addf %309, %310 : vector<2x32xf32>
    %312 = arith.mulf %299, %311 : vector<2x32xf32>
    %313 = arith.addf %290, %312 : vector<2x32xf32>
    %314 = math.tanh %313 : vector<2x32xf32>
    %cst_182 = arith.constant 1.000000e+00 : f32
    %315 = vector.broadcast %cst_182 : f32 to vector<2x32xf32>
    %316 = arith.subf %315, %308 : vector<2x32xf32>
    %317 = arith.mulf %316, %314 : vector<2x32xf32>
    %318 = arith.mulf %308, %242 : vector<2x32xf32>
    %319 = arith.addf %317, %318 : vector<2x32xf32>
    %cst_183 = arith.constant dense<0.000000e+00> : vector<2x32xf32>
    %320 = tpu.matmul %319, %118, %cst_183 {dimension_numbers = #tpu.dot_dimension_numbers<[1], [0], [0], [1], [0, 0, 1, 1], [], []>} : vector<2x32xf32>, vector<32x32xf32>, vector<2x32xf32> -> vector<2x32xf32>
    %321 = vector.broadcast %121 : vector<1x32xf32> to vector<2x32xf32>
    %322 = arith.addf %320, %321 : vector<2x32xf32>
    %cst_184 = arith.constant dense<0.000000e+00> : vector<2x32xf32>
    %323 = tpu.matmul %319, %119, %cst_184 {dimension_numbers = #tpu.dot_dimension_numbers<[1], [0], [0], [1], [0, 0, 1, 1], [], []>} : vector<2x32xf32>, vector<32x32xf32>, vector<2x32xf32> -> vector<2x32xf32>
    %324 = vector.broadcast %122 : vector<1x32xf32> to vector<2x32xf32>
    %325 = arith.addf %323, %324 : vector<2x32xf32>
    %cst_185 = arith.constant dense<0.000000e+00> : vector<2x32xf32>
    %326 = tpu.matmul %319, %120, %cst_185 {dimension_numbers = #tpu.dot_dimension_numbers<[1], [0], [0], [1], [0, 0, 1, 1], [], []>} : vector<2x32xf32>, vector<32x32xf32>, vector<2x32xf32> -> vector<2x32xf32>
    %327 = vector.broadcast %123 : vector<1x32xf32> to vector<2x32xf32>
    %328 = arith.addf %326, %327 : vector<2x32xf32>
    %cst_186 = arith.constant dense<0.000000e+00> : vector<2x32xf32>
    %329 = tpu.matmul %280, %124, %cst_186 {dimension_numbers = #tpu.dot_dimension_numbers<[1], [0], [0], [1], [0, 0, 1, 1], [], []>} : vector<2x32xf32>, vector<32x32xf32>, vector<2x32xf32> -> vector<2x32xf32>
    %330 = arith.addf %322, %329 : vector<2x32xf32>
    %331 = vector.broadcast %127 : vector<1x32xf32> to vector<2x32xf32>
    %332 = arith.addf %330, %331 : vector<2x32xf32>
    %333 = arith.negf %332 : vector<2x32xf32>
    %334 = math.exp %333 : vector<2x32xf32>
    %cst_187 = arith.constant 1.000000e+00 : f32
    %335 = vector.broadcast %cst_187 : f32 to vector<2x32xf32>
    %336 = arith.addf %335, %334 : vector<2x32xf32>
    %337 = arith.divf %335, %336 : vector<2x32xf32>
    %cst_188 = arith.constant dense<0.000000e+00> : vector<2x32xf32>
    %338 = tpu.matmul %280, %125, %cst_188 {dimension_numbers = #tpu.dot_dimension_numbers<[1], [0], [0], [1], [0, 0, 1, 1], [], []>} : vector<2x32xf32>, vector<32x32xf32>, vector<2x32xf32> -> vector<2x32xf32>
    %339 = arith.addf %325, %338 : vector<2x32xf32>
    %340 = vector.broadcast %128 : vector<1x32xf32> to vector<2x32xf32>
    %341 = arith.addf %339, %340 : vector<2x32xf32>
    %342 = arith.negf %341 : vector<2x32xf32>
    %343 = math.exp %342 : vector<2x32xf32>
    %cst_189 = arith.constant 1.000000e+00 : f32
    %344 = vector.broadcast %cst_189 : f32 to vector<2x32xf32>
    %345 = arith.addf %344, %343 : vector<2x32xf32>
    %346 = arith.divf %344, %345 : vector<2x32xf32>
    %cst_190 = arith.constant dense<0.000000e+00> : vector<2x32xf32>
    %347 = tpu.matmul %280, %126, %cst_190 {dimension_numbers = #tpu.dot_dimension_numbers<[1], [0], [0], [1], [0, 0, 1, 1], [], []>} : vector<2x32xf32>, vector<32x32xf32>, vector<2x32xf32> -> vector<2x32xf32>
    %348 = vector.broadcast %129 : vector<1x32xf32> to vector<2x32xf32>
    %349 = arith.addf %347, %348 : vector<2x32xf32>
    %350 = arith.mulf %337, %349 : vector<2x32xf32>
    %351 = arith.addf %328, %350 : vector<2x32xf32>
    %352 = math.tanh %351 : vector<2x32xf32>
    %cst_191 = arith.constant 1.000000e+00 : f32
    %353 = vector.broadcast %cst_191 : f32 to vector<2x32xf32>
    %354 = arith.subf %353, %346 : vector<2x32xf32>
    %355 = arith.mulf %354, %352 : vector<2x32xf32>
    %356 = arith.mulf %346, %280 : vector<2x32xf32>
    %357 = arith.addf %355, %356 : vector<2x32xf32>
    %358 = vector.extract_strided_slice %130 {offsets = [4, 0], sizes = [2, 1], strides = [1, 1]} : vector<10x1xf32> to vector<2x1xf32>
    %359 = vector.broadcast %358 : vector<2x1xf32> to vector<2x32xf32>
    %360 = arith.mulf %357, %359 : vector<2x32xf32>
    %c4 = arith.constant 4 : index
    %c0_192 = arith.constant 0 : index
    %361 = vector.load %arg60[%c4, %c0_192] : memref<10x32xf32, #tpu.memory_space<vmem>>, vector<2x32xf32>
    tpu.vector_store %arg60[%c4, %c0_192], %360 {strides = array<i32>} : memref<10x32xf32, #tpu.memory_space<vmem>>, vector<2x32xf32>,
    %362 = vector.extract_strided_slice %92 {offsets = [6, 0], sizes = [2, 32], strides = [1, 1]} : vector<10x32xf32> to vector<2x32xf32>
    %363 = arith.addf %362, %101 : vector<2x32xf32>
    %364 = vector.extract_strided_slice %94 {offsets = [6, 0], sizes = [2, 32], strides = [1, 1]} : vector<10x32xf32> to vector<2x32xf32>
    %365 = arith.addf %364, %106 : vector<2x32xf32>
    %366 = vector.extract_strided_slice %96 {offsets = [6, 0], sizes = [2, 32], strides = [1, 1]} : vector<10x32xf32> to vector<2x32xf32>
    %367 = arith.addf %366, %111 : vector<2x32xf32>
    %cst_193 = arith.constant dense<0.000000e+00> : vector<2x32xf32>
    %368 = tpu.matmul %319, %112, %cst_193 {dimension_numbers = #tpu.dot_dimension_numbers<[1], [0], [0], [1], [0, 0, 1, 1], [], []>} : vector<2x32xf32>, vector<32x32xf32>, vector<2x32xf32> -> vector<2x32xf32>
    %369 = arith.addf %363, %368 : vector<2x32xf32>
    %370 = vector.broadcast %115 : vector<1x32xf32> to vector<2x32xf32>
    %371 = arith.addf %369, %370 : vector<2x32xf32>
    %372 = arith.negf %371 : vector<2x32xf32>
    %373 = math.exp %372 : vector<2x32xf32>
    %cst_194 = arith.constant 1.000000e+00 : f32
    %374 = vector.broadcast %cst_194 : f32 to vector<2x32xf32>
    %375 = arith.addf %374, %373 : vector<2x32xf32>
    %376 = arith.divf %374, %375 : vector<2x32xf32>
    %cst_195 = arith.constant dense<0.000000e+00> : vector<2x32xf32>
    %377 = tpu.matmul %319, %113, %cst_195 {dimension_numbers = #tpu.dot_dimension_numbers<[1], [0], [0], [1], [0, 0, 1, 1], [], []>} : vector<2x32xf32>, vector<32x32xf32>, vector<2x32xf32> -> vector<2x32xf32>
    %378 = arith.addf %365, %377 : vector<2x32xf32>
    %379 = vector.broadcast %116 : vector<1x32xf32> to vector<2x32xf32>
    %380 = arith.addf %378, %379 : vector<2x32xf32>
    %381 = arith.negf %380 : vector<2x32xf32>
    %382 = math.exp %381 : vector<2x32xf32>
    %cst_196 = arith.constant 1.000000e+00 : f32
    %383 = vector.broadcast %cst_196 : f32 to vector<2x32xf32>
    %384 = arith.addf %383, %382 : vector<2x32xf32>
    %385 = arith.divf %383, %384 : vector<2x32xf32>
    %cst_197 = arith.constant dense<0.000000e+00> : vector<2x32xf32>
    %386 = tpu.matmul %319, %114, %cst_197 {dimension_numbers = #tpu.dot_dimension_numbers<[1], [0], [0], [1], [0, 0, 1, 1], [], []>} : vector<2x32xf32>, vector<32x32xf32>, vector<2x32xf32> -> vector<2x32xf32>
    %387 = vector.broadcast %117 : vector<1x32xf32> to vector<2x32xf32>
    %388 = arith.addf %386, %387 : vector<2x32xf32>
    %389 = arith.mulf %376, %388 : vector<2x32xf32>
    %390 = arith.addf %367, %389 : vector<2x32xf32>
    %391 = math.tanh %390 : vector<2x32xf32>
    %cst_198 = arith.constant 1.000000e+00 : f32
    %392 = vector.broadcast %cst_198 : f32 to vector<2x32xf32>
    %393 = arith.subf %392, %385 : vector<2x32xf32>
    %394 = arith.mulf %393, %391 : vector<2x32xf32>
    %395 = arith.mulf %385, %319 : vector<2x32xf32>
    %396 = arith.addf %394, %395 : vector<2x32xf32>
    %cst_199 = arith.constant dense<0.000000e+00> : vector<2x32xf32>
    %397 = tpu.matmul %396, %118, %cst_199 {dimension_numbers = #tpu.dot_dimension_numbers<[1], [0], [0], [1], [0, 0, 1, 1], [], []>} : vector<2x32xf32>, vector<32x32xf32>, vector<2x32xf32> -> vector<2x32xf32>
    %398 = vector.broadcast %121 : vector<1x32xf32> to vector<2x32xf32>
    %399 = arith.addf %397, %398 : vector<2x32xf32>
    %cst_200 = arith.constant dense<0.000000e+00> : vector<2x32xf32>
    %400 = tpu.matmul %396, %119, %cst_200 {dimension_numbers = #tpu.dot_dimension_numbers<[1], [0], [0], [1], [0, 0, 1, 1], [], []>} : vector<2x32xf32>, vector<32x32xf32>, vector<2x32xf32> -> vector<2x32xf32>
    %401 = vector.broadcast %122 : vector<1x32xf32> to vector<2x32xf32>
    %402 = arith.addf %400, %401 : vector<2x32xf32>
    %cst_201 = arith.constant dense<0.000000e+00> : vector<2x32xf32>
    %403 = tpu.matmul %396, %120, %cst_201 {dimension_numbers = #tpu.dot_dimension_numbers<[1], [0], [0], [1], [0, 0, 1, 1], [], []>} : vector<2x32xf32>, vector<32x32xf32>, vector<2x32xf32> -> vector<2x32xf32>
    %404 = vector.broadcast %123 : vector<1x32xf32> to vector<2x32xf32>
    %405 = arith.addf %403, %404 : vector<2x32xf32>
    %cst_202 = arith.constant dense<0.000000e+00> : vector<2x32xf32>
    %406 = tpu.matmul %357, %124, %cst_202 {dimension_numbers = #tpu.dot_dimension_numbers<[1], [0], [0], [1], [0, 0, 1, 1], [], []>} : vector<2x32xf32>, vector<32x32xf32>, vector<2x32xf32> -> vector<2x32xf32>
    %407 = arith.addf %399, %406 : vector<2x32xf32>
    %408 = vector.broadcast %127 : vector<1x32xf32> to vector<2x32xf32>
    %409 = arith.addf %407, %408 : vector<2x32xf32>
    %410 = arith.negf %409 : vector<2x32xf32>
    %411 = math.exp %410 : vector<2x32xf32>
    %cst_203 = arith.constant 1.000000e+00 : f32
    %412 = vector.broadcast %cst_203 : f32 to vector<2x32xf32>
    %413 = arith.addf %412, %411 : vector<2x32xf32>
    %414 = arith.divf %412, %413 : vector<2x32xf32>
    %cst_204 = arith.constant dense<0.000000e+00> : vector<2x32xf32>
    %415 = tpu.matmul %357, %125, %cst_204 {dimension_numbers = #tpu.dot_dimension_numbers<[1], [0], [0], [1], [0, 0, 1, 1], [], []>} : vector<2x32xf32>, vector<32x32xf32>, vector<2x32xf32> -> vector<2x32xf32>
    %416 = arith.addf %402, %415 : vector<2x32xf32>
    %417 = vector.broadcast %128 : vector<1x32xf32> to vector<2x32xf32>
    %418 = arith.addf %416, %417 : vector<2x32xf32>
    %419 = arith.negf %418 : vector<2x32xf32>
    %420 = math.exp %419 : vector<2x32xf32>
    %cst_205 = arith.constant 1.000000e+00 : f32
    %421 = vector.broadcast %cst_205 : f32 to vector<2x32xf32>
    %422 = arith.addf %421, %420 : vector<2x32xf32>
    %423 = arith.divf %421, %422 : vector<2x32xf32>
    %cst_206 = arith.constant dense<0.000000e+00> : vector<2x32xf32>
    %424 = tpu.matmul %357, %126, %cst_206 {dimension_numbers = #tpu.dot_dimension_numbers<[1], [0], [0], [1], [0, 0, 1, 1], [], []>} : vector<2x32xf32>, vector<32x32xf32>, vector<2x32xf32> -> vector<2x32xf32>
    %425 = vector.broadcast %129 : vector<1x32xf32> to vector<2x32xf32>
    %426 = arith.addf %424, %425 : vector<2x32xf32>
    %427 = arith.mulf %414, %426 : vector<2x32xf32>
    %428 = arith.addf %405, %427 : vector<2x32xf32>
    %429 = math.tanh %428 : vector<2x32xf32>
    %cst_207 = arith.constant 1.000000e+00 : f32
    %430 = vector.broadcast %cst_207 : f32 to vector<2x32xf32>
    %431 = arith.subf %430, %423 : vector<2x32xf32>
    %432 = arith.mulf %431, %429 : vector<2x32xf32>
    %433 = arith.mulf %423, %357 : vector<2x32xf32>
    %434 = arith.addf %432, %433 : vector<2x32xf32>
    %435 = vector.extract_strided_slice %130 {offsets = [6, 0], sizes = [2, 1], strides = [1, 1]} : vector<10x1xf32> to vector<2x1xf32>
    %436 = vector.broadcast %435 : vector<2x1xf32> to vector<2x32xf32>
    %437 = arith.mulf %434, %436 : vector<2x32xf32>
    %c6 = arith.constant 6 : index
    %c0_208 = arith.constant 0 : index
    %438 = vector.load %arg60[%c6, %c0_208] : memref<10x32xf32, #tpu.memory_space<vmem>>, vector<2x32xf32>
    tpu.vector_store %arg60[%c6, %c0_208], %437 {strides = array<i32>} : memref<10x32xf32, #tpu.memory_space<vmem>>, vector<2x32xf32>,
    %439 = vector.extract_strided_slice %92 {offsets = [8, 0], sizes = [2, 32], strides = [1, 1]} : vector<10x32xf32> to vector<2x32xf32>
    %440 = arith.addf %439, %101 : vector<2x32xf32>
    %441 = vector.extract_strided_slice %94 {offsets = [8, 0], sizes = [2, 32], strides = [1, 1]} : vector<10x32xf32> to vector<2x32xf32>
    %442 = arith.addf %441, %106 : vector<2x32xf32>
    %443 = vector.extract_strided_slice %96 {offsets = [8, 0], sizes = [2, 32], strides = [1, 1]} : vector<10x32xf32> to vector<2x32xf32>
    %444 = arith.addf %443, %111 : vector<2x32xf32>
    %cst_209 = arith.constant dense<0.000000e+00> : vector<2x32xf32>
    %445 = tpu.matmul %396, %112, %cst_209 {dimension_numbers = #tpu.dot_dimension_numbers<[1], [0], [0], [1], [0, 0, 1, 1], [], []>} : vector<2x32xf32>, vector<32x32xf32>, vector<2x32xf32> -> vector<2x32xf32>
    %446 = arith.addf %440, %445 : vector<2x32xf32>
    %447 = vector.broadcast %115 : vector<1x32xf32> to vector<2x32xf32>
    %448 = arith.addf %446, %447 : vector<2x32xf32>
    %449 = arith.negf %448 : vector<2x32xf32>
    %450 = math.exp %449 : vector<2x32xf32>
    %cst_210 = arith.constant 1.000000e+00 : f32
    %451 = vector.broadcast %cst_210 : f32 to vector<2x32xf32>
    %452 = arith.addf %451, %450 : vector<2x32xf32>
    %453 = arith.divf %451, %452 : vector<2x32xf32>
    %cst_211 = arith.constant dense<0.000000e+00> : vector<2x32xf32>
    %454 = tpu.matmul %396, %113, %cst_211 {dimension_numbers = #tpu.dot_dimension_numbers<[1], [0], [0], [1], [0, 0, 1, 1], [], []>} : vector<2x32xf32>, vector<32x32xf32>, vector<2x32xf32> -> vector<2x32xf32>
    %455 = arith.addf %442, %454 : vector<2x32xf32>
    %456 = vector.broadcast %116 : vector<1x32xf32> to vector<2x32xf32>
    %457 = arith.addf %455, %456 : vector<2x32xf32>
    %458 = arith.negf %457 : vector<2x32xf32>
    %459 = math.exp %458 : vector<2x32xf32>
    %cst_212 = arith.constant 1.000000e+00 : f32
    %460 = vector.broadcast %cst_212 : f32 to vector<2x32xf32>
    %461 = arith.addf %460, %459 : vector<2x32xf32>
    %462 = arith.divf %460, %461 : vector<2x32xf32>
    %cst_213 = arith.constant dense<0.000000e+00> : vector<2x32xf32>
    %463 = tpu.matmul %396, %114, %cst_213 {dimension_numbers = #tpu.dot_dimension_numbers<[1], [0], [0], [1], [0, 0, 1, 1], [], []>} : vector<2x32xf32>, vector<32x32xf32>, vector<2x32xf32> -> vector<2x32xf32>
    %464 = vector.broadcast %117 : vector<1x32xf32> to vector<2x32xf32>
    %465 = arith.addf %463, %464 : vector<2x32xf32>
    %466 = arith.mulf %453, %465 : vector<2x32xf32>
    %467 = arith.addf %444, %466 : vector<2x32xf32>
    %468 = math.tanh %467 : vector<2x32xf32>
    %cst_214 = arith.constant 1.000000e+00 : f32
    %469 = vector.broadcast %cst_214 : f32 to vector<2x32xf32>
    %470 = arith.subf %469, %462 : vector<2x32xf32>
    %471 = arith.mulf %470, %468 : vector<2x32xf32>
    %472 = arith.mulf %462, %396 : vector<2x32xf32>
    %473 = arith.addf %471, %472 : vector<2x32xf32>
    %cst_215 = arith.constant dense<0.000000e+00> : vector<2x32xf32>
    %474 = tpu.matmul %473, %118, %cst_215 {dimension_numbers = #tpu.dot_dimension_numbers<[1], [0], [0], [1], [0, 0, 1, 1], [], []>} : vector<2x32xf32>, vector<32x32xf32>, vector<2x32xf32> -> vector<2x32xf32>
    %475 = vector.broadcast %121 : vector<1x32xf32> to vector<2x32xf32>
    %476 = arith.addf %474, %475 : vector<2x32xf32>
    %cst_216 = arith.constant dense<0.000000e+00> : vector<2x32xf32>
    %477 = tpu.matmul %473, %119, %cst_216 {dimension_numbers = #tpu.dot_dimension_numbers<[1], [0], [0], [1], [0, 0, 1, 1], [], []>} : vector<2x32xf32>, vector<32x32xf32>, vector<2x32xf32> -> vector<2x32xf32>
    %478 = vector.broadcast %122 : vector<1x32xf32> to vector<2x32xf32>
    %479 = arith.addf %477, %478 : vector<2x32xf32>
    %cst_217 = arith.constant dense<0.000000e+00> : vector<2x32xf32>
    %480 = tpu.matmul %473, %120, %cst_217 {dimension_numbers = #tpu.dot_dimension_numbers<[1], [0], [0], [1], [0, 0, 1, 1], [], []>} : vector<2x32xf32>, vector<32x32xf32>, vector<2x32xf32> -> vector<2x32xf32>
    %481 = vector.broadcast %123 : vector<1x32xf32> to vector<2x32xf32>
    %482 = arith.addf %480, %481 : vector<2x32xf32>
    %cst_218 = arith.constant dense<0.000000e+00> : vector<2x32xf32>
    %483 = tpu.matmul %434, %124, %cst_218 {dimension_numbers = #tpu.dot_dimension_numbers<[1], [0], [0], [1], [0, 0, 1, 1], [], []>} : vector<2x32xf32>, vector<32x32xf32>, vector<2x32xf32> -> vector<2x32xf32>
    %484 = arith.addf %476, %483 : vector<2x32xf32>
    %485 = vector.broadcast %127 : vector<1x32xf32> to vector<2x32xf32>
    %486 = arith.addf %484, %485 : vector<2x32xf32>
    %487 = arith.negf %486 : vector<2x32xf32>
    %488 = math.exp %487 : vector<2x32xf32>
    %cst_219 = arith.constant 1.000000e+00 : f32
    %489 = vector.broadcast %cst_219 : f32 to vector<2x32xf32>
    %490 = arith.addf %489, %488 : vector<2x32xf32>
    %491 = arith.divf %489, %490 : vector<2x32xf32>
    %cst_220 = arith.constant dense<0.000000e+00> : vector<2x32xf32>
    %492 = tpu.matmul %434, %125, %cst_220 {dimension_numbers = #tpu.dot_dimension_numbers<[1], [0], [0], [1], [0, 0, 1, 1], [], []>} : vector<2x32xf32>, vector<32x32xf32>, vector<2x32xf32> -> vector<2x32xf32>
    %493 = arith.addf %479, %492 : vector<2x32xf32>
    %494 = vector.broadcast %128 : vector<1x32xf32> to vector<2x32xf32>
    %495 = arith.addf %493, %494 : vector<2x32xf32>
    %496 = arith.negf %495 : vector<2x32xf32>
    %497 = math.exp %496 : vector<2x32xf32>
    %cst_221 = arith.constant 1.000000e+00 : f32
    %498 = vector.broadcast %cst_221 : f32 to vector<2x32xf32>
    %499 = arith.addf %498, %497 : vector<2x32xf32>
    %500 = arith.divf %498, %499 : vector<2x32xf32>
    %cst_222 = arith.constant dense<0.000000e+00> : vector<2x32xf32>
    %501 = tpu.matmul %434, %126, %cst_222 {dimension_numbers = #tpu.dot_dimension_numbers<[1], [0], [0], [1], [0, 0, 1, 1], [], []>} : vector<2x32xf32>, vector<32x32xf32>, vector<2x32xf32> -> vector<2x32xf32>
    %502 = vector.broadcast %129 : vector<1x32xf32> to vector<2x32xf32>
    %503 = arith.addf %501, %502 : vector<2x32xf32>
    %504 = arith.mulf %491, %503 : vector<2x32xf32>
    %505 = arith.addf %482, %504 : vector<2x32xf32>
    %506 = math.tanh %505 : vector<2x32xf32>
    %cst_223 = arith.constant 1.000000e+00 : f32
    %507 = vector.broadcast %cst_223 : f32 to vector<2x32xf32>
    %508 = arith.subf %507, %500 : vector<2x32xf32>
    %509 = arith.mulf %508, %506 : vector<2x32xf32>
    %510 = arith.mulf %500, %434 : vector<2x32xf32>
    %511 = arith.addf %509, %510 : vector<2x32xf32>
    %512 = vector.extract_strided_slice %130 {offsets = [8, 0], sizes = [2, 1], strides = [1, 1]} : vector<10x1xf32> to vector<2x1xf32>
    %513 = vector.broadcast %512 : vector<2x1xf32> to vector<2x32xf32>
    %514 = arith.mulf %511, %513 : vector<2x32xf32>
    %c8 = arith.constant 8 : index
    %c0_224 = arith.constant 0 : index
    %515 = vector.load %arg60[%c8, %c0_224] : memref<10x32xf32, #tpu.memory_space<vmem>>, vector<2x32xf32>
    tpu.vector_store %arg60[%c8, %c0_224], %514 {strides = array<i32>} : memref<10x32xf32, #tpu.memory_space<vmem>>, vector<2x32xf32>,
    %c0_225 = arith.constant 0 : index
    %c0_226 = arith.constant 0 : index
    %516 = vector.load %arg60[%c0_225, %c0_226] : memref<10x32xf32, #tpu.memory_space<vmem>>, vector<10x32xf32>
    %c0_227 = arith.constant 0 : index
    %c0_228 = arith.constant 0 : index
    %517 = vector.load %arg57[%c0_227, %c0_228] : memref<32x128xf32, #tpu.memory_space<vmem>>, vector<32x128xf32>
    %cst_229 = arith.constant dense<0.000000e+00> : vector<10x128xf32>
    %518 = tpu.matmul %516, %517, %cst_229 {dimension_numbers = #tpu.dot_dimension_numbers<[1], [0], [0], [1], [0, 0, 1, 1], [], []>} : vector<10x32xf32>, vector<32x128xf32>, vector<10x128xf32> -> vector<10x128xf32>
    %c0_230 = arith.constant 0 : index
    %c0_231 = arith.constant 0 : index
    %519 = vector.load %arg58[%c0_230, %c0_231] : memref<1x128xf32, #tpu.memory_space<vmem>>, vector<1x128xf32>
    %520 = vector.broadcast %519 : vector<1x128xf32> to vector<10x128xf32>
    %521 = arith.addf %518, %520 : vector<10x128xf32>
    %c0_232 = arith.constant 0 : index
    %c0_233 = arith.constant 0 : index
    %522 = vector.load %arg59[%c0_232, %c0_233] : memref<10x128xf32, #tpu.memory_space<vmem>>, vector<10x128xf32>
    tpu.vector_store %arg59[%c0_232, %c0_233], %521 {strides = array<i32>} : memref<10x128xf32, #tpu.memory_space<vmem>>, vector<10x128xf32>,
    return
  }
}

</mosaic_0001>

<llo_original>
// kernel: tpu_custom_call.1
$region0: #{tpu_custom_call.1}
  #allocation0 [shape = 'u32[]', space=smem, size = 0x4, offset = 0x4, fixed_abs, tag = 'smem constant byte address 0x4 - core index']
  #allocation1 [shape = 'u32[144,128]{1,0:T(1,128)}', space=vmem, size = 0x12000, scoped, tag = 'internal scratch']
  #allocation2 [shape = 'f32[10,32]{1,0:T(8,128)}', space=vmem, size = 0x2000, scoped, tag = 'scratch operand']
  %s0 = inlined_call_operand.smem [shape: u32[60], index: -1, kind: input, shape index: {}]
  %s1 = sld [smem:[%s0]]
  %s2 = scalar_lea.smem %s0, 1
  %s3 = sld [smem:[%s2]]
  %s4 = scalar_lea.smem %s0, 2
  %s5 = sld [smem:[%s4]]
  %s6 = scalar_lea.smem %s0, 3
  %s7 = sld [smem:[%s6]]
  %s8 = scalar_lea.smem %s0, 4
  %s9 = sld [smem:[%s8]]
  %s10 = scalar_lea.smem %s0, 5
  %s11 = sld [smem:[%s10]]
  %s12 = scalar_lea.smem %s0, 6
  %s13 = sld [smem:[%s12]]
  %s14 = scalar_lea.smem %s0, 7
  %s15 = sld [smem:[%s14]]
  %s16 = scalar_lea.smem %s0, 8
  %s17 = sld [smem:[%s16]]
  %s18 = scalar_lea.smem %s0, 9
  %s19 = sld [smem:[%s18]]
  %s20 = scalar_lea.smem %s0, 10
  %s21 = sld [smem:[%s20]]
  %s22 = scalar_lea.smem %s0, 11
  %s23 = sld [smem:[%s22]]
  %s24 = scalar_lea.smem %s0, 12
  %s25 = sld [smem:[%s24]]
  %s26 = scalar_lea.smem %s0, 13
  %s27 = sld [smem:[%s26]]
  %s28 = scalar_lea.smem %s0, 14
  %s29 = sld [smem:[%s28]]
  %s30 = scalar_lea.smem %s0, 15
  %s31 = sld [smem:[%s30]]
  %s32 = scalar_lea.smem %s0, 16
  %s33 = sld [smem:[%s32]]
  %s34 = scalar_lea.smem %s0, 17
  %s35 = sld [smem:[%s34]]
  %s36 = scalar_lea.smem %s0, 18
  %s37 = sld [smem:[%s36]]
  %s38 = scalar_lea.smem %s0, 19
  %s39 = sld [smem:[%s38]]
  %s40 = scalar_lea.smem %s0, 20
  %s41 = sld [smem:[%s40]]
  %s42 = scalar_lea.smem %s0, 21
  %s43 = sld [smem:[%s42]]
  %s44 = scalar_lea.smem %s0, 22
  %s45 = sld [smem:[%s44]]
  %s46 = scalar_lea.smem %s0, 23
  %s47 = sld [smem:[%s46]]
  %s48 = scalar_lea.smem %s0, 24
  %s49 = sld [smem:[%s48]]
  %s50 = scalar_lea.smem %s0, 25
  %s51 = sld [smem:[%s50]]
  %s52 = scalar_lea.smem %s0, 26
  %s53 = sld [smem:[%s52]]
  %s54 = scalar_lea.smem %s0, 27
  %s55 = sld [smem:[%s54]]
  %s56 = scalar_lea.smem %s0, 28
  %s57 = sld [smem:[%s56]]
  %s58 = scalar_lea.smem %s0, 29
  %s59 = sld [smem:[%s58]]
  %s60 = scalar_lea.smem %s0, 30
  %s61 = sld [smem:[%s60]]
  %s62 = scalar_lea.smem %s0, 31
  %s63 = sld [smem:[%s62]]
  %s64 = scalar_lea.smem %s0, 32
  %s65 = sld [smem:[%s64]]
  %s66 = scalar_lea.smem %s0, 33
  %s67 = sld [smem:[%s66]]
  %s68 = scalar_lea.smem %s0, 34
  %s69 = sld [smem:[%s68]]
  %s70 = scalar_lea.smem %s0, 35
  %s71 = sld [smem:[%s70]]
  %s72 = scalar_lea.smem %s0, 36
  %s73 = sld [smem:[%s72]]
  %s74 = scalar_lea.smem %s0, 37
  %s75 = sld [smem:[%s74]]
  %s76 = scalar_lea.smem %s0, 38
  %s77 = sld [smem:[%s76]]
  %s78 = scalar_lea.smem %s0, 39
  %s79 = sld [smem:[%s78]]
  %s80 = scalar_lea.smem %s0, 40
  %s81 = sld [smem:[%s80]]
  %s82 = scalar_lea.smem %s0, 41
  %s83 = sld [smem:[%s82]]
  %s84 = scalar_lea.smem %s0, 42
  %s85 = sld [smem:[%s84]]
  %s86 = scalar_lea.smem %s0, 43
  %s87 = sld [smem:[%s86]]
  %s88 = scalar_lea.smem %s0, 44
  %s89 = sld [smem:[%s88]]
  %s90 = scalar_lea.smem %s0, 45
  %s91 = sld [smem:[%s90]]
  %s92 = scalar_lea.smem %s0, 46
  %s93 = sld [smem:[%s92]]
  %s94 = scalar_lea.smem %s0, 47
  %s95 = sld [smem:[%s94]]
  %s96 = scalar_lea.smem %s0, 48
  %s97 = sld [smem:[%s96]]
  %s98 = scalar_lea.smem %s0, 49
  %s99 = sld [smem:[%s98]]
  %s100 = scalar_lea.smem %s0, 50
  %s101 = sld [smem:[%s100]]
  %s102 = scalar_lea.smem %s0, 51
  %s103 = sld [smem:[%s102]]
  %s104 = scalar_lea.smem %s0, 52
  %s105 = sld [smem:[%s104]]
  %s106 = scalar_lea.smem %s0, 53
  %s107 = sld [smem:[%s106]]
  %s108 = scalar_lea.smem %s0, 54
  %s109 = sld [smem:[%s108]]
  %s110 = scalar_lea.smem %s0, 55
  %s111 = sld [smem:[%s110]]
  %s112 = scalar_lea.smem %s0, 56
  %s113 = sld [smem:[%s112]]
  %s114 = scalar_lea.smem %s0, 57
  %s115 = sld [smem:[%s114]]
  %s116 = scalar_lea.smem %s0, 58
  %s117 = sld [smem:[%s116]]
  %s118 = scalar_lea.smem %s0, 59
  %s119 = sld [smem:[%s118]]
  %s120 = sld [smem:[#allocation0]]
  $region386: #{tpu_custom_call.1} parent=0
    _
  %s122 = ssub.s32 1, %s120
  %s123 = scalar_select 0, %s122, %s120
  $region1: #{tpu_custom_call.1} parent=0
    #allocation3 [shape = 'u8[1024]{0}', space=vmem, size = 0x400, scoped, tag = 'input window, operand 0, single buffered']
    #allocation4 [shape = 's32[1]{0}', space=sflag, size = 0x4, scoped, tag = 'scoped memory for tpu_custom_call.1']
    #allocation5 [shape = 's32[1]{0}', space=sflag, size = 0x4, scoped, tag = 'scoped memory for tpu_custom_call.1']
    #allocation6 [shape = 'u8[8192]{0}', space=vmem, size = 0x2000, scoped, tag = 'input window, operand 3, single buffered']
    #allocation7 [shape = 's32[1]{0}', space=sflag, size = 0x4, scoped, tag = 'scoped memory for tpu_custom_call.1']
    #allocation8 [shape = 'u8[8192]{0}', space=vmem, size = 0x2000, scoped, tag = 'input window, operand 4, single buffered']
    #allocation9 [shape = 'u8[4096]{0}', space=vmem, size = 0x1000, scoped, tag = 'input window, operand 5, single buffered']
    #allocation10 [shape = 's32[1]{0}', space=sflag, size = 0x4, scoped, tag = 'scoped memory for tpu_custom_call.1']
    #allocation11 [shape = 'u8[8192]{0}', space=vmem, size = 0x2000, scoped, tag = 'input window, operand 8, single buffered']
    #allocation12 [shape = 'u8[512]{0}', space=vmem, size = 0x400, scoped, tag = 'input window, operand 9, single buffered']
    #allocation13 [shape = 's32[1]{0}', space=sflag, size = 0x4, scoped, tag = 'scoped memory for tpu_custom_call.1']
    #allocation14 [shape = 'u8[512]{0}', space=vmem, size = 0x400, scoped, tag = 'input window, operand 11, single buffered']
    #allocation15 [shape = 'u8[8192]{0}', space=vmem, size = 0x2000, scoped, tag = 'input window, operand 12, single buffered']
    #allocation16 [shape = 's32[1]{0}', space=sflag, size = 0x4, scoped, tag = 'scoped memory for tpu_custom_call.1']
    #allocation17 [shape = 'u8[512]{0}', space=vmem, size = 0x400, scoped, tag = 'input window, operand 13, single buffered']
    #allocation18 [shape = 'u8[2048]{0}', space=vmem, size = 0x800, scoped, tag = 'input window, operand 14, single buffered']
    #allocation19 [shape = 's32[1]{0}', space=sflag, size = 0x4, scoped, tag = 'scoped memory for tpu_custom_call.1']
    #allocation20 [shape = 'u8[512]{0}', space=vmem, size = 0x400, scoped, tag = 'input window, operand 15, single buffered']
    #allocation21 [shape = 'u8[2048]{0}', space=vmem, size = 0x800, scoped, tag = 'input window, operand 16, single buffered']
    #allocation22 [shape = 's32[1]{0}', space=sflag, size = 0x4, scoped, tag = 'scoped memory for tpu_custom_call.1']
    #allocation23 [shape = 'u8[512]{0}', space=vmem, size = 0x400, scoped, tag = 'input window, operand 17, single buffered']
    #allocation24 [shape = 'u8[4096]{0}', space=vmem, size = 0x1000, scoped, tag = 'input window, operand 18, single buffered']
    #allocation25 [shape = 's32[1]{0}', space=sflag, size = 0x4, scoped, tag = 'scoped memory for tpu_custom_call.1']
    #allocation26 [shape = 'u8[512]{0}', space=vmem, size = 0x400, scoped, tag = 'input window, operand 19, single buffered']
    #allocation27 [shape = 'u8[512]{0}', space=vmem, size = 0x400, scoped, tag = 'input window, operand 21, single buffered']
    #allocation28 [shape = 's32[1]{0}', space=sflag, size = 0x4, scoped, tag = 'scoped memory for tpu_custom_call.1']
    #allocation29 [shape = 'u8[512]{0}', space=vmem, size = 0x400, scoped, tag = 'input window, operand 23, single buffered']
    #allocation30 [shape = 'u8[512]{0}', space=vmem, size = 0x400, scoped, tag = 'input window, operand 25, single buffered']
    #allocation31 [shape = 's32[1]{0}', space=sflag, size = 0x4, scoped, tag = 'scoped memory for tpu_custom_call.1']
    #allocation32 [shape = 'u8[8192]{0}', space=vmem, size = 0x2000, scoped, tag = 'input window, operand 28, single buffered']
    #allocation33 [shape = 'u8[512]{0}', space=vmem, size = 0x400, scoped, tag = 'input window, operand 29, single buffered']
    #allocation34 [shape = 's32[1]{0}', space=sflag, size = 0x4, scoped, tag = 'scoped memory for tpu_custom_call.1']
    #allocation35 [shape = 'u8[8192]{0}', space=vmem, size = 0x2000, scoped, tag = 'input window, operand 30, single buffered']
    #allocation36 [shape = 'u8[8192]{0}', space=vmem, size = 0x2000, scoped, tag = 'input window, operand 31, single buffered']
    #allocation37 [shape = 's32[1]{0}', space=sflag, size = 0x4, scoped, tag = 'scoped memory for tpu_custom_call.1']
    #allocation38 [shape = 'u8[8192]{0}', space=vmem, size = 0x2000, scoped, tag = 'input window, operand 32, single buffered']
    #allocation39 [shape = 'u8[8192]{0}', space=vmem, size = 0x2000, scoped, tag = 'input window, operand 33, single buffered']
    #allocation40 [shape = 's32[1]{0}', space=sflag, size = 0x4, scoped, tag = 'scoped memory for tpu_custom_call.1']
    #allocation41 [shape = 'u8[8192]{0}', space=vmem, size = 0x2000, scoped, tag = 'input window, operand 34, single buffered']
    #allocation42 [shape = 'u8[8192]{0}', space=vmem, size = 0x2000, scoped, tag = 'input window, operand 35, single buffered']
    #allocation43 [shape = 's32[1]{0}', space=sflag, size = 0x4, scoped, tag = 'scoped memory for tpu_custom_call.1']
    #allocation44 [shape = 'u8[512]{0}', space=vmem, size = 0x400, scoped, tag = 'input window, operand 36, single buffered']
    #allocation45 [shape = 'u8[512]{0}', space=vmem, size = 0x400, scoped, tag = 'input window, operand 37, single buffered']
    #allocation46 [shape = 's32[1]{0}', space=sflag, size = 0x4, scoped, tag = 'scoped memory for tpu_custom_call.1']
    #allocation47 [shape = 'u8[512]{0}', space=vmem, size = 0x400, scoped, tag = 'input window, operand 38, single buffered']
    #allocation48 [shape = 'u8[512]{0}', space=vmem, size = 0x400, scoped, tag = 'input window, operand 42, single buffered']
    #allocation49 [shape = 's32[1]{0}', space=sflag, size = 0x4, scoped, tag = 'scoped memory for tpu_custom_call.1']
    #allocation50 [shape = 'u8[512]{0}', space=vmem, size = 0x400, scoped, tag = 'input window, operand 43, single buffered']
    #allocation51 [shape = 'u8[16384]{0}', space=vmem, size = 0x4000, scoped, tag = 'input window, operand 51, single buffered']
    #allocation52 [shape = 's32[1]{0}', space=sflag, size = 0x4, scoped, tag = 'scoped memory for tpu_custom_call.1']
    #allocation53 [shape = 'u8[16384]{0}', space=vmem, size = 0x4000, scoped, tag = 'input window, operand 52, single buffered']
    #allocation54 [shape = 'u8[16384]{0}', space=vmem, size = 0x4000, scoped, tag = 'input window, operand 53, single buffered']
    #allocation55 [shape = 's32[1]{0}', space=sflag, size = 0x4, scoped, tag = 'scoped memory for tpu_custom_call.1']
    #allocation56 [shape = 'u8[16384]{0}', space=vmem, size = 0x4000, scoped, tag = 'input window, operand 57, single buffered']
    #allocation57 [shape = 'u8[8192]{0}', space=vmem, size = 0x2000, scoped, tag = 'output window, operand 0, single buffered']
    %124 = vsyncpa [#allocation4], 0
    %125 = vsyncpa [#allocation7], 0
    %126 = vsyncpa [#allocation10], 0
    %127 = vsyncpa [#allocation13], 0
    %128 = vsyncpa [#allocation16], 0
    %129 = vsyncpa [#allocation19], 0
    %130 = vsyncpa [#allocation22], 0
    %131 = vsyncpa [#allocation25], 0
    %132 = vsyncpa [#allocation28], 0
    %133 = vsyncpa [#allocation31], 0
    %134 = vsyncpa [#allocation34], 0
    %135 = vsyncpa [#allocation37], 0
    %136 = vsyncpa [#allocation40], 0
    %137 = vsyncpa [#allocation43], 0
    %138 = vsyncpa [#allocation46], 0
    %139 = vsyncpa [#allocation49], 0
    %140 = vsyncpa [#allocation52], 0
    %141 = vsyncpa [#allocation55], 0
    %142 = vsyncpa [#allocation5], 0
    // Predicated region
    $region2: #{tpu_custom_call.1} parent=1 // pred_check
      _
    $region3: #{tpu_custom_call.1} parent=1 // pred_check_branch
      %144 = sbr.rel (0) target = $region5
    $region4: #{tpu_custom_call.1} parent=1 // pred_region
      %s146 = ssub.s32 32, 32
      %147 = vsyncadd [#allocation4], %s146
      %s149 = sshll.u32 [#allocation3], 4
      %s150 = int_to_ptr.vmem [resolvable:$true] %s149
      %152 = dma.hbm_to_vmem [thread:$0]  %s1, 32, %s150, [#allocation4]
    $region5: #{tpu_custom_call.1} parent=1 // pred_fallthru
      _
    // Predicated region
    $region6: #{tpu_custom_call.1} parent=1 // pred_check
      _
    $region7: #{tpu_custom_call.1} parent=1 // pred_check_branch
      %154 = sbr.rel (0) target = $region9
    $region8: #{tpu_custom_call.1} parent=1 // pred_region
      _
    $region9: #{tpu_custom_call.1} parent=1 // pred_fallthru
      _
    // Predicated region
    $region10: #{tpu_custom_call.1} parent=1 // pred_check
      _
    $region11: #{tpu_custom_call.1} parent=1 // pred_check_branch
      %156 = sbr.rel (0) target = $region13
    $region12: #{tpu_custom_call.1} parent=1 // pred_region
      _
    $region13: #{tpu_custom_call.1} parent=1 // pred_fallthru
      _
    // Predicated region
    $region14: #{tpu_custom_call.1} parent=1 // pred_check
      _
    $region15: #{tpu_custom_call.1} parent=1 // pred_check_branch
      %158 = sbr.rel (0) target = $region17
    $region16: #{tpu_custom_call.1} parent=1 // pred_region
      %s160 = ssub.s32 256, 256
      %161 = vsyncadd [#allocation7], %s160
      %s162 = sshll.u32 [#allocation6], 4
      %s163 = int_to_ptr.vmem [resolvable:$true] %s162
      %168 = dma.hbm_to_vmem [thread:$0]  %s7, 256, %s163, [#allocation7], 128, 128, 8
    $region17: #{tpu_custom_call.1} parent=1 // pred_fallthru
      _
    // Predicated region
    $region18: #{tpu_custom_call.1} parent=1 // pred_check
      _
    $region19: #{tpu_custom_call.1} parent=1 // pred_check_branch
      %170 = sbr.rel (0) target = $region21
    $region20: #{tpu_custom_call.1} parent=1 // pred_region
      %s172 = ssub.s32 256, 256
      %173 = vsyncadd [#allocation7], %s172
      %s174 = sshll.u32 [#allocation8], 4
      %s175 = int_to_ptr.vmem [resolvable:$true] %s174
      %180 = dma.hbm_to_vmem [thread:$0]  %s9, 256, %s175, [#allocation7], 128, 128, 8
    $region21: #{tpu_custom_call.1} parent=1 // pred_fallthru
      _
    // Predicated region
    $region22: #{tpu_custom_call.1} parent=1 // pred_check
      _
    $region23: #{tpu_custom_call.1} parent=1 // pred_check_branch
      %182 = sbr.rel (0) target = $region25
    $region24: #{tpu_custom_call.1} parent=1 // pred_region
      %s184 = ssub.s32 128, 128
      %185 = vsyncadd [#allocation10], %s184
      %s187 = sshll.u32 [#allocation9], 4
      %s188 = int_to_ptr.vmem [resolvable:$true] %s187
      %190 = dma.hbm_to_vmem [thread:$0]  %s11, 128, %s188, [#allocation10]
    $region25: #{tpu_custom_call.1} parent=1 // pred_fallthru
      _
    // Predicated region
    $region26: #{tpu_custom_call.1} parent=1 // pred_check
      _
    $region27: #{tpu_custom_call.1} parent=1 // pred_check_branch
      %192 = sbr.rel (0) target = $region29
    $region28: #{tpu_custom_call.1} parent=1 // pred_region
      _
    $region29: #{tpu_custom_call.1} parent=1 // pred_fallthru
      _
    // Predicated region
    $region30: #{tpu_custom_call.1} parent=1 // pred_check
      _
    $region31: #{tpu_custom_call.1} parent=1 // pred_check_branch
      %194 = sbr.rel (0) target = $region33
    $region32: #{tpu_custom_call.1} parent=1 // pred_region
      _
    $region33: #{tpu_custom_call.1} parent=1 // pred_fallthru
      _
    // Predicated region
    $region34: #{tpu_custom_call.1} parent=1 // pred_check
      _
    $region35: #{tpu_custom_call.1} parent=1 // pred_check_branch
      %196 = sbr.rel (0) target = $region37
    $region36: #{tpu_custom_call.1} parent=1 // pred_region
      %s198 = ssub.s32 256, 256
      %199 = vsyncadd [#allocation10], %s198
      %s200 = sshll.u32 [#allocation11], 4
      %s201 = int_to_ptr.vmem [resolvable:$true] %s200
      %206 = dma.hbm_to_vmem [thread:$0]  %s17, 256, %s201, [#allocation10], 128, 128, 8
    $region37: #{tpu_custom_call.1} parent=1 // pred_fallthru
      _
    // Predicated region
    $region38: #{tpu_custom_call.1} parent=1 // pred_check
      _
    $region39: #{tpu_custom_call.1} parent=1 // pred_check_branch
      %208 = sbr.rel (0) target = $region41
    $region40: #{tpu_custom_call.1} parent=1 // pred_region
      %s210 = ssub.s32 16, 16
      %211 = vsyncadd [#allocation13], %s210
      %s213 = sshll.u32 [#allocation12], 4
      %s214 = int_to_ptr.vmem [resolvable:$true] %s213
      %216 = dma.hbm_to_vmem [thread:$0]  %s19, 16, %s214, [#allocation13]
    $region41: #{tpu_custom_call.1} parent=1 // pred_fallthru
      _
    // Predicated region
    $region42: #{tpu_custom_call.1} parent=1 // pred_check
      _
    $region43: #{tpu_custom_call.1} parent=1 // pred_check_branch
      %218 = sbr.rel (0) target = $region45
    $region44: #{tpu_custom_call.1} parent=1 // pred_region
      _
    $region45: #{tpu_custom_call.1} parent=1 // pred_fallthru
      _
    // Predicated region
    $region46: #{tpu_custom_call.1} parent=1 // pred_check
      _
    $region47: #{tpu_custom_call.1} parent=1 // pred_check_branch
      %220 = sbr.rel (0) target = $region49
    $region48: #{tpu_custom_call.1} parent=1 // pred_region
      %s222 = ssub.s32 16, 16
      %223 = vsyncadd [#allocation13], %s222
      %s225 = sshll.u32 [#allocation14], 4
      %s226 = int_to_ptr.vmem [resolvable:$true] %s225
      %228 = dma.hbm_to_vmem [thread:$0]  %s23, 16, %s226, [#allocation13]
    $region49: #{tpu_custom_call.1} parent=1 // pred_fallthru
      _
    // Predicated region
    $region50: #{tpu_custom_call.1} parent=1 // pred_check
      _
    $region51: #{tpu_custom_call.1} parent=1 // pred_check_branch
      %230 = sbr.rel (0) target = $region53
    $region52: #{tpu_custom_call.1} parent=1 // pred_region
      %s232 = ssub.s32 256, 256
      %233 = vsyncadd [#allocation16], %s232
      %s234 = sshll.u32 [#allocation15], 4
      %s235 = int_to_ptr.vmem [resolvable:$true] %s234
      %240 = dma.hbm_to_vmem [thread:$0]  %s25, 256, %s235, [#allocation16], 128, 128, 8
    $region53: #{tpu_custom_call.1} parent=1 // pred_fallthru
      _
    // Predicated region
    $region54: #{tpu_custom_call.1} parent=1 // pred_check
      _
    $region55: #{tpu_custom_call.1} parent=1 // pred_check_branch
      %242 = sbr.rel (0) target = $region57
    $region56: #{tpu_custom_call.1} parent=1 // pred_region
      %s244 = ssub.s32 16, 16
      %245 = vsyncadd [#allocation16], %s244
      %s247 = sshll.u32 [#allocation17], 4
      %s248 = int_to_ptr.vmem [resolvable:$true] %s247
      %250 = dma.hbm_to_vmem [thread:$0]  %s27, 16, %s248, [#allocation16]
    $region57: #{tpu_custom_call.1} parent=1 // pred_fallthru
      _
    // Predicated region
    $region58: #{tpu_custom_call.1} parent=1 // pred_check
      _
    $region59: #{tpu_custom_call.1} parent=1 // pred_check_branch
      %252 = sbr.rel (0) target = $region61
    $region60: #{tpu_custom_call.1} parent=1 // pred_region
      %s254 = ssub.s32 64, 64
      %255 = vsyncadd [#allocation19], %s254
      %s257 = sshll.u32 [#allocation18], 4
      %s258 = int_to_ptr.vmem [resolvable:$true] %s257
      %260 = dma.hbm_to_vmem [thread:$0]  %s29, 64, %s258, [#allocation19]
    $region61: #{tpu_custom_call.1} parent=1 // pred_fallthru
      _
    // Predicated region
    $region62: #{tpu_custom_call.1} parent=1 // pred_check
      _
    $region63: #{tpu_custom_call.1} parent=1 // pred_check_branch
      %262 = sbr.rel (0) target = $region65
    $region64: #{tpu_custom_call.1} parent=1 // pred_region
      %s264 = ssub.s32 16, 16
      %265 = vsyncadd [#allocation19], %s264
      %s267 = sshll.u32 [#allocation20], 4
      %s268 = int_to_ptr.vmem [resolvable:$true] %s267
      %270 = dma.hbm_to_vmem [thread:$0]  %s31, 16, %s268, [#allocation19]
    $region65: #{tpu_custom_call.1} parent=1 // pred_fallthru
      _
    // Predicated region
    $region66: #{tpu_custom_call.1} parent=1 // pred_check
      _
    $region67: #{tpu_custom_call.1} parent=1 // pred_check_branch
      %272 = sbr.rel (0) target = $region69
    $region68: #{tpu_custom_call.1} parent=1 // pred_region
      %s274 = ssub.s32 64, 64
      %275 = vsyncadd [#allocation22], %s274
      %s277 = sshll.u32 [#allocation21], 4
      %s278 = int_to_ptr.vmem [resolvable:$true] %s277
      %280 = dma.hbm_to_vmem [thread:$0]  %s33, 64, %s278, [#allocation22]
    $region69: #{tpu_custom_call.1} parent=1 // pred_fallthru
      _
    // Predicated region
    $region70: #{tpu_custom_call.1} parent=1 // pred_check
      _
    $region71: #{tpu_custom_call.1} parent=1 // pred_check_branch
      %282 = sbr.rel (0) target = $region73
    $region72: #{tpu_custom_call.1} parent=1 // pred_region
      %s284 = ssub.s32 16, 16
      %285 = vsyncadd [#allocation22], %s284
      %s287 = sshll.u32 [#allocation23], 4
      %s288 = int_to_ptr.vmem [resolvable:$true] %s287
      %290 = dma.hbm_to_vmem [thread:$0]  %s35, 16, %s288, [#allocation22]
    $region73: #{tpu_custom_call.1} parent=1 // pred_fallthru
      _
    // Predicated region
    $region74: #{tpu_custom_call.1} parent=1 // pred_check
      _
    $region75: #{tpu_custom_call.1} parent=1 // pred_check_branch
      %292 = sbr.rel (0) target = $region77
    $region76: #{tpu_custom_call.1} parent=1 // pred_region
      %s294 = ssub.s32 128, 128
      %295 = vsyncadd [#allocation25], %s294
      %s297 = sshll.u32 [#allocation24], 4
      %s298 = int_to_ptr.vmem [resolvable:$true] %s297
      %300 = dma.hbm_to_vmem [thread:$0]  %s37, 128, %s298, [#allocation25]
    $region77: #{tpu_custom_call.1} parent=1 // pred_fallthru
      _
    // Predicated region
    $region78: #{tpu_custom_call.1} parent=1 // pred_check
      _
    $region79: #{tpu_custom_call.1} parent=1 // pred_check_branch
      %302 = sbr.rel (0) target = $region81
    $region80: #{tpu_custom_call.1} parent=1 // pred_region
      %s304 = ssub.s32 16, 16
      %305 = vsyncadd [#allocation25], %s304
      %s307 = sshll.u32 [#allocation26], 4
      %s308 = int_to_ptr.vmem [resolvable:$true] %s307
      %310 = dma.hbm_to_vmem [thread:$0]  %s39, 16, %s308, [#allocation25]
    $region81: #{tpu_custom_call.1} parent=1 // pred_fallthru
      _
    // Predicated region
    $region82: #{tpu_custom_call.1} parent=1 // pred_check
      _
    $region83: #{tpu_custom_call.1} parent=1 // pred_check_branch
      %312 = sbr.rel (0) target = $region85
    $region84: #{tpu_custom_call.1} parent=1 // pred_region
      _
    $region85: #{tpu_custom_call.1} parent=1 // pred_fallthru
      _
    // Predicated region
    $region86: #{tpu_custom_call.1} parent=1 // pred_check
      _
    $region87: #{tpu_custom_call.1} parent=1 // pred_check_branch
      %314 = sbr.rel (0) target = $region89
    $region88: #{tpu_custom_call.1} parent=1 // pred_region
      %s316 = ssub.s32 16, 16
      %317 = vsyncadd [#allocation28], %s316
      %s319 = sshll.u32 [#allocation27], 4
      %s320 = int_to_ptr.vmem [resolvable:$true] %s319
      %322 = dma.hbm_to_vmem [thread:$0]  %s43, 16, %s320, [#allocation28]
    $region89: #{tpu_custom_call.1} parent=1 // pred_fallthru
      _
    // Predicated region
    $region90: #{tpu_custom_call.1} parent=1 // pred_check
      _
    $region91: #{tpu_custom_call.1} parent=1 // pred_check_branch
      %324 = sbr.rel (0) target = $region93
    $region92: #{tpu_custom_call.1} parent=1 // pred_region
      _
    $region93: #{tpu_custom_call.1} parent=1 // pred_fallthru
      _
    // Predicated region
    $region94: #{tpu_custom_call.1} parent=1 // pred_check
      _
    $region95: #{tpu_custom_call.1} parent=1 // pred_check_branch
      %326 = sbr.rel (0) target = $region97
    $region96: #{tpu_custom_call.1} parent=1 // pred_region
      %s328 = ssub.s32 16, 16
      %329 = vsyncadd [#allocation28], %s328
      %s331 = sshll.u32 [#allocation29], 4
      %s332 = int_to_ptr.vmem [resolvable:$true] %s331
      %334 = dma.hbm_to_vmem [thread:$0]  %s47, 16, %s332, [#allocation28]
    $region97: #{tpu_custom_call.1} parent=1 // pred_fallthru
      _
    // Predicated region
    $region98: #{tpu_custom_call.1} parent=1 // pred_check
      _
    $region99: #{tpu_custom_call.1} parent=1 // pred_check_branch
      %336 = sbr.rel (0) target = $region101
    $region100: #{tpu_custom_call.1} parent=1 // pred_region
      _
    $region101: #{tpu_custom_call.1} parent=1 // pred_fallthru
      _
    // Predicated region
    $region102: #{tpu_custom_call.1} parent=1 // pred_check
      _
    $region103: #{tpu_custom_call.1} parent=1 // pred_check_branch
      %338 = sbr.rel (0) target = $region105
    $region104: #{tpu_custom_call.1} parent=1 // pred_region
      %s340 = ssub.s32 16, 16
      %341 = vsyncadd [#allocation31], %s340
      %s343 = sshll.u32 [#allocation30], 4
      %s344 = int_to_ptr.vmem [resolvable:$true] %s343
      %346 = dma.hbm_to_vmem [thread:$0]  %s51, 16, %s344, [#allocation31]
    $region105: #{tpu_custom_call.1} parent=1 // pred_fallthru
      _
    // Predicated region
    $region106: #{tpu_custom_call.1} parent=1 // pred_check
      _
    $region107: #{tpu_custom_call.1} parent=1 // pred_check_branch
      %348 = sbr.rel (0) target = $region109
    $region108: #{tpu_custom_call.1} parent=1 // pred_region
      _
    $region109: #{tpu_custom_call.1} parent=1 // pred_fallthru
      _
    // Predicated region
    $region110: #{tpu_custom_call.1} parent=1 // pred_check
      _
    $region111: #{tpu_custom_call.1} parent=1 // pred_check_branch
      %350 = sbr.rel (0) target = $region113
    $region112: #{tpu_custom_call.1} parent=1 // pred_region
      _
    $region113: #{tpu_custom_call.1} parent=1 // pred_fallthru
      _
    // Predicated region
    $region114: #{tpu_custom_call.1} parent=1 // pred_check
      _
    $region115: #{tpu_custom_call.1} parent=1 // pred_check_branch
      %352 = sbr.rel (0) target = $region117
    $region116: #{tpu_custom_call.1} parent=1 // pred_region
      %s354 = ssub.s32 256, 256
      %355 = vsyncadd [#allocation31], %s354
      %s356 = sshll.u32 [#allocation32], 4
      %s357 = int_to_ptr.vmem [resolvable:$true] %s356
      %362 = dma.hbm_to_vmem [thread:$0]  %s57, 256, %s357, [#allocation31], 128, 128, 8
    $region117: #{tpu_custom_call.1} parent=1 // pred_fallthru
      _
    // Predicated region
    $region118: #{tpu_custom_call.1} parent=1 // pred_check
      _
    $region119: #{tpu_custom_call.1} parent=1 // pred_check_branch
      %364 = sbr.rel (0) target = $region121
    $region120: #{tpu_custom_call.1} parent=1 // pred_region
      %s366 = ssub.s32 16, 16
      %367 = vsyncadd [#allocation34], %s366
      %s369 = sshll.u32 [#allocation33], 4
      %s370 = int_to_ptr.vmem [resolvable:$true] %s369
      %372 = dma.hbm_to_vmem [thread:$0]  %s59, 16, %s370, [#allocation34]
    $region121: #{tpu_custom_call.1} parent=1 // pred_fallthru
      _
    // Predicated region
    $region122: #{tpu_custom_call.1} parent=1 // pred_check
      _
    $region123: #{tpu_custom_call.1} parent=1 // pred_check_branch
      %374 = sbr.rel (0) target = $region125
    $region124: #{tpu_custom_call.1} parent=1 // pred_region
      %s376 = ssub.s32 256, 256
      %377 = vsyncadd [#allocation34], %s376
      %s378 = sshll.u32 [#allocation35], 4
      %s379 = int_to_ptr.vmem [resolvable:$true] %s378
      %384 = dma.hbm_to_vmem [thread:$0]  %s61, 256, %s379, [#allocation34], 128, 128, 8
    $region125: #{tpu_custom_call.1} parent=1 // pred_fallthru
      _
    // Predicated region
    $region126: #{tpu_custom_call.1} parent=1 // pred_check
      _
    $region127: #{tpu_custom_call.1} parent=1 // pred_check_branch
      %386 = sbr.rel (0) target = $region129
    $region128: #{tpu_custom_call.1} parent=1 // pred_region
      %s388 = ssub.s32 256, 256
      %389 = vsyncadd [#allocation37], %s388
      %s390 = sshll.u32 [#allocation36], 4
      %s391 = int_to_ptr.vmem [resolvable:$true] %s390
      %396 = dma.hbm_to_vmem [thread:$0]  %s63, 256, %s391, [#allocation37], 128, 128, 8
    $region129: #{tpu_custom_call.1} parent=1 // pred_fallthru
      _
    // Predicated region
    $region130: #{tpu_custom_call.1} parent=1 // pred_check
      _
    $region131: #{tpu_custom_call.1} parent=1 // pred_check_branch
      %398 = sbr.rel (0) target = $region133
    $region132: #{tpu_custom_call.1} parent=1 // pred_region
      %s400 = ssub.s32 256, 256
      %401 = vsyncadd [#allocation37], %s400
      %s402 = sshll.u32 [#allocation38], 4
      %s403 = int_to_ptr.vmem [resolvable:$true] %s402
      %408 = dma.hbm_to_vmem [thread:$0]  %s65, 256, %s403, [#allocation37], 128, 128, 8
    $region133: #{tpu_custom_call.1} parent=1 // pred_fallthru
      _
    // Predicated region
    $region134: #{tpu_custom_call.1} parent=1 // pred_check
      _
    $region135: #{tpu_custom_call.1} parent=1 // pred_check_branch
      %410 = sbr.rel (0) target = $region137
    $region136: #{tpu_custom_call.1} parent=1 // pred_region
      %s412 = ssub.s32 256, 256
      %413 = vsyncadd [#allocation40], %s412
      %s414 = sshll.u32 [#allocation39], 4
      %s415 = int_to_ptr.vmem [resolvable:$true] %s414
      %420 = dma.hbm_to_vmem [thread:$0]  %s67, 256, %s415, [#allocation40], 128, 128, 8
    $region137: #{tpu_custom_call.1} parent=1 // pred_fallthru
      _
    // Predicated region
    $region138: #{tpu_custom_call.1} parent=1 // pred_check
      _
    $region139: #{tpu_custom_call.1} parent=1 // pred_check_branch
      %422 = sbr.rel (0) target = $region141
    $region140: #{tpu_custom_call.1} parent=1 // pred_region
      %s424 = ssub.s32 256, 256
      %425 = vsyncadd [#allocation40], %s424
      %s426 = sshll.u32 [#allocation41], 4
      %s427 = int_to_ptr.vmem [resolvable:$true] %s426
      %432 = dma.hbm_to_vmem [thread:$0]  %s69, 256, %s427, [#allocation40], 128, 128, 8
    $region141: #{tpu_custom_call.1} parent=1 // pred_fallthru
      _
    // Predicated region
    $region142: #{tpu_custom_call.1} parent=1 // pred_check
      _
    $region143: #{tpu_custom_call.1} parent=1 // pred_check_branch
      %434 = sbr.rel (0) target = $region145
    $region144: #{tpu_custom_call.1} parent=1 // pred_region
      %s436 = ssub.s32 256, 256
      %437 = vsyncadd [#allocation43], %s436
      %s438 = sshll.u32 [#allocation42], 4
      %s439 = int_to_ptr.vmem [resolvable:$true] %s438
      %444 = dma.hbm_to_vmem [thread:$0]  %s71, 256, %s439, [#allocation43], 128, 128, 8
    $region145: #{tpu_custom_call.1} parent=1 // pred_fallthru
      _
    // Predicated region
    $region146: #{tpu_custom_call.1} parent=1 // pred_check
      _
    $region147: #{tpu_custom_call.1} parent=1 // pred_check_branch
      %446 = sbr.rel (0) target = $region149
    $region148: #{tpu_custom_call.1} parent=1 // pred_region
      %s448 = ssub.s32 16, 16
      %449 = vsyncadd [#allocation43], %s448
      %s451 = sshll.u32 [#allocation44], 4
      %s452 = int_to_ptr.vmem [resolvable:$true] %s451
      %454 = dma.hbm_to_vmem [thread:$0]  %s73, 16, %s452, [#allocation43]
    $region149: #{tpu_custom_call.1} parent=1 // pred_fallthru
      _
    // Predicated region
    $region150: #{tpu_custom_call.1} parent=1 // pred_check
      _
    $region151: #{tpu_custom_call.1} parent=1 // pred_check_branch
      %456 = sbr.rel (0) target = $region153
    $region152: #{tpu_custom_call.1} parent=1 // pred_region
      %s458 = ssub.s32 16, 16
      %459 = vsyncadd [#allocation46], %s458
      %s461 = sshll.u32 [#allocation45], 4
      %s462 = int_to_ptr.vmem [resolvable:$true] %s461
      %464 = dma.hbm_to_vmem [thread:$0]  %s75, 16, %s462, [#allocation46]
    $region153: #{tpu_custom_call.1} parent=1 // pred_fallthru
      _
    // Predicated region
    $region154: #{tpu_custom_call.1} parent=1 // pred_check
      _
    $region155: #{tpu_custom_call.1} parent=1 // pred_check_branch
      %466 = sbr.rel (0) target = $region157
    $region156: #{tpu_custom_call.1} parent=1 // pred_region
      %s468 = ssub.s32 16, 16
      %469 = vsyncadd [#allocation46], %s468
      %s471 = sshll.u32 [#allocation47], 4
      %s472 = int_to_ptr.vmem [resolvable:$true] %s471
      %474 = dma.hbm_to_vmem [thread:$0]  %s77, 16, %s472, [#allocation46]
    $region157: #{tpu_custom_call.1} parent=1 // pred_fallthru
      _
    // Predicated region
    $region158: #{tpu_custom_call.1} parent=1 // pred_check
      _
    $region159: #{tpu_custom_call.1} parent=1 // pred_check_branch
      %476 = sbr.rel (0) target = $region161
    $region160: #{tpu_custom_call.1} parent=1 // pred_region
      _
    $region161: #{tpu_custom_call.1} parent=1 // pred_fallthru
      _
    // Predicated region
    $region162: #{tpu_custom_call.1} parent=1 // pred_check
      _
    $region163: #{tpu_custom_call.1} parent=1 // pred_check_branch
      %478 = sbr.rel (0) target = $region165
    $region164: #{tpu_custom_call.1} parent=1 // pred_region
      _
    $region165: #{tpu_custom_call.1} parent=1 // pred_fallthru
      _
    // Predicated region
    $region166: #{tpu_custom_call.1} parent=1 // pred_check
      _
    $region167: #{tpu_custom_call.1} parent=1 // pred_check_branch
      %480 = sbr.rel (0) target = $region169
    $region168: #{tpu_custom_call.1} parent=1 // pred_region
      _
    $region169: #{tpu_custom_call.1} parent=1 // pred_fallthru
      _
    // Predicated region
    $region170: #{tpu_custom_call.1} parent=1 // pred_check
      _
    $region171: #{tpu_custom_call.1} parent=1 // pred_check_branch
      %482 = sbr.rel (0) target = $region173
    $region172: #{tpu_custom_call.1} parent=1 // pred_region
      %s484 = ssub.s32 16, 16
      %485 = vsyncadd [#allocation49], %s484
      %s487 = sshll.u32 [#allocation48], 4
      %s488 = int_to_ptr.vmem [resolvable:$true] %s487
      %490 = dma.hbm_to_vmem [thread:$0]  %s85, 16, %s488, [#allocation49]
    $region173: #{tpu_custom_call.1} parent=1 // pred_fallthru
      _
    // Predicated region
    $region174: #{tpu_custom_call.1} parent=1 // pred_check
      _
    $region175: #{tpu_custom_call.1} parent=1 // pred_check_branch
      %492 = sbr.rel (0) target = $region177
    $region176: #{tpu_custom_call.1} parent=1 // pred_region
      %s494 = ssub.s32 16, 16
      %495 = vsyncadd [#allocation49], %s494
      %s497 = sshll.u32 [#allocation50], 4
      %s498 = int_to_ptr.vmem [resolvable:$true] %s497
      %500 = dma.hbm_to_vmem [thread:$0]  %s87, 16, %s498, [#allocation49]
    $region177: #{tpu_custom_call.1} parent=1 // pred_fallthru
      _
    // Predicated region
    $region178: #{tpu_custom_call.1} parent=1 // pred_check
      _
    $region179: #{tpu_custom_call.1} parent=1 // pred_check_branch
      %502 = sbr.rel (0) target = $region181
    $region180: #{tpu_custom_call.1} parent=1 // pred_region
      _
    $region181: #{tpu_custom_call.1} parent=1 // pred_fallthru
      _
    // Predicated region
    $region182: #{tpu_custom_call.1} parent=1 // pred_check
      _
    $region183: #{tpu_custom_call.1} parent=1 // pred_check_branch
      %504 = sbr.rel (0) target = $region185
    $region184: #{tpu_custom_call.1} parent=1 // pred_region
      _
    $region185: #{tpu_custom_call.1} parent=1 // pred_fallthru
      _
    // Predicated region
    $region186: #{tpu_custom_call.1} parent=1 // pred_check
      _
    $region187: #{tpu_custom_call.1} parent=1 // pred_check_branch
      %506 = sbr.rel (0) target = $region189
    $region188: #{tpu_custom_call.1} parent=1 // pred_region
      _
    $region189: #{tpu_custom_call.1} parent=1 // pred_fallthru
      _
    // Predicated region
    $region190: #{tpu_custom_call.1} parent=1 // pred_check
      _
    $region191: #{tpu_custom_call.1} parent=1 // pred_check_branch
      %508 = sbr.rel (0) target = $region193
    $region192: #{tpu_custom_call.1} parent=1 // pred_region
      _
    $region193: #{tpu_custom_call.1} parent=1 // pred_fallthru
      _
    // Predicated region
    $region194: #{tpu_custom_call.1} parent=1 // pred_check
      _
    $region195: #{tpu_custom_call.1} parent=1 // pred_check_branch
      %510 = sbr.rel (0) target = $region197
    $region196: #{tpu_custom_call.1} parent=1 // pred_region
      _
    $region197: #{tpu_custom_call.1} parent=1 // pred_fallthru
      _
    // Predicated region
    $region198: #{tpu_custom_call.1} parent=1 // pred_check
      _
    $region199: #{tpu_custom_call.1} parent=1 // pred_check_branch
      %512 = sbr.rel (0) target = $region201
    $region200: #{tpu_custom_call.1} parent=1 // pred_region
      _
    $region201: #{tpu_custom_call.1} parent=1 // pred_fallthru
      _
    // Predicated region
    $region202: #{tpu_custom_call.1} parent=1 // pred_check
      _
    $region203: #{tpu_custom_call.1} parent=1 // pred_check_branch
      %514 = sbr.rel (0) target = $region205
    $region204: #{tpu_custom_call.1} parent=1 // pred_region
      _
    $region205: #{tpu_custom_call.1} parent=1 // pred_fallthru
      _
    // Predicated region
    $region206: #{tpu_custom_call.1} parent=1 // pred_check
      _
    $region207: #{tpu_custom_call.1} parent=1 // pred_check_branch
      %516 = sbr.rel (0) target = $region209
    $region208: #{tpu_custom_call.1} parent=1 // pred_region
      %s518 = ssub.s32 512, 512
      %519 = vsyncadd [#allocation52], %s518
      %s520 = sshll.u32 [#allocation51], 4
      %s521 = int_to_ptr.vmem [resolvable:$true] %s520
      %526 = dma.hbm_to_vmem [thread:$0]  %s103, 512, %s521, [#allocation52], 128, 128, 8
    $region209: #{tpu_custom_call.1} parent=1 // pred_fallthru
      _
    // Predicated region
    $region210: #{tpu_custom_call.1} parent=1 // pred_check
      _
    $region211: #{tpu_custom_call.1} parent=1 // pred_check_branch
      %528 = sbr.rel (0) target = $region213
    $region212: #{tpu_custom_call.1} parent=1 // pred_region
      %s530 = ssub.s32 512, 512
      %531 = vsyncadd [#allocation52], %s530
      %s532 = sshll.u32 [#allocation53], 4
      %s533 = int_to_ptr.vmem [resolvable:$true] %s532
      %538 = dma.hbm_to_vmem [thread:$0]  %s105, 512, %s533, [#allocation52], 128, 128, 8
    $region213: #{tpu_custom_call.1} parent=1 // pred_fallthru
      _
    // Predicated region
    $region214: #{tpu_custom_call.1} parent=1 // pred_check
      _
    $region215: #{tpu_custom_call.1} parent=1 // pred_check_branch
      %540 = sbr.rel (0) target = $region217
    $region216: #{tpu_custom_call.1} parent=1 // pred_region
      %s542 = ssub.s32 512, 512
      %543 = vsyncadd [#allocation55], %s542
      %s544 = sshll.u32 [#allocation54], 4
      %s545 = int_to_ptr.vmem [resolvable:$true] %s544
      %550 = dma.hbm_to_vmem [thread:$0]  %s107, 512, %s545, [#allocation55], 128, 128, 8
    $region217: #{tpu_custom_call.1} parent=1 // pred_fallthru
      _
    // Predicated region
    $region218: #{tpu_custom_call.1} parent=1 // pred_check
      _
    $region219: #{tpu_custom_call.1} parent=1 // pred_check_branch
      %552 = sbr.rel (0) target = $region221
    $region220: #{tpu_custom_call.1} parent=1 // pred_region
      _
    $region221: #{tpu_custom_call.1} parent=1 // pred_fallthru
      _
    // Predicated region
    $region222: #{tpu_custom_call.1} parent=1 // pred_check
      _
    $region223: #{tpu_custom_call.1} parent=1 // pred_check_branch
      %554 = sbr.rel (0) target = $region225
    $region224: #{tpu_custom_call.1} parent=1 // pred_region
      _
    $region225: #{tpu_custom_call.1} parent=1 // pred_fallthru
      _
    // Predicated region
    $region226: #{tpu_custom_call.1} parent=1 // pred_check
      _
    $region227: #{tpu_custom_call.1} parent=1 // pred_check_branch
      %556 = sbr.rel (0) target = $region229
    $region228: #{tpu_custom_call.1} parent=1 // pred_region
      _
    $region229: #{tpu_custom_call.1} parent=1 // pred_fallthru
      _
    // Predicated region
    $region230: #{tpu_custom_call.1} parent=1 // pred_check
      _
    $region231: #{tpu_custom_call.1} parent=1 // pred_check_branch
      %558 = sbr.rel (0) target = $region233
    $region232: #{tpu_custom_call.1} parent=1 // pred_region
      %s560 = ssub.s32 512, 512
      %561 = vsyncadd [#allocation55], %s560
      %s562 = sshll.u32 [#allocation56], 4
      %s563 = int_to_ptr.vmem [resolvable:$true] %s562
      %568 = dma.hbm_to_vmem [thread:$0]  %s115, 512, %s563, [#allocation55], 128, 128, 8
    $region233: #{tpu_custom_call.1} parent=1 // pred_fallthru
      _
    // Predicated region
    $region234: #{tpu_custom_call.1} parent=1 // pred_check
      _
    $region235: #{tpu_custom_call.1} parent=1 // pred_check_branch
      %570 = sbr.rel (0) target = $region237
    $region236: #{tpu_custom_call.1} parent=1 // pred_region
      _
    $region237: #{tpu_custom_call.1} parent=1 // pred_fallthru
      _
    // Predicated region
    $region238: #{tpu_custom_call.1} parent=1 // pred_check
      _
    $region239: #{tpu_custom_call.1} parent=1 // pred_check_branch
      %572 = sbr.rel (0) target = $region241
    $region240: #{tpu_custom_call.1} parent=1 // pred_region
      %573 = dma.done [#allocation4], 32
    $region241: #{tpu_custom_call.1} parent=1 // pred_fallthru
      _
    // Predicated region
    $region242: #{tpu_custom_call.1} parent=1 // pred_check
      _
    $region243: #{tpu_custom_call.1} parent=1 // pred_check_branch
      %575 = sbr.rel (0) target = $region245
    $region244: #{tpu_custom_call.1} parent=1 // pred_region
      %576 = dma.done [#allocation7], 256
    $region245: #{tpu_custom_call.1} parent=1 // pred_fallthru
      _
    // Predicated region
    $region246: #{tpu_custom_call.1} parent=1 // pred_check
      _
    $region247: #{tpu_custom_call.1} parent=1 // pred_check_branch
      %578 = sbr.rel (0) target = $region249
    $region248: #{tpu_custom_call.1} parent=1 // pred_region
      %579 = dma.done [#allocation7], 256
    $region249: #{tpu_custom_call.1} parent=1 // pred_fallthru
      _
    // Predicated region
    $region250: #{tpu_custom_call.1} parent=1 // pred_check
      _
    $region251: #{tpu_custom_call.1} parent=1 // pred_check_branch
      %581 = sbr.rel (0) target = $region253
    $region252: #{tpu_custom_call.1} parent=1 // pred_region
      %582 = dma.done [#allocation10], 128
    $region253: #{tpu_custom_call.1} parent=1 // pred_fallthru
      _
    // Predicated region
    $region254: #{tpu_custom_call.1} parent=1 // pred_check
      _
    $region255: #{tpu_custom_call.1} parent=1 // pred_check_branch
      %584 = sbr.rel (0) target = $region257
    $region256: #{tpu_custom_call.1} parent=1 // pred_region
      %585 = dma.done [#allocation10], 256
    $region257: #{tpu_custom_call.1} parent=1 // pred_fallthru
      _
    // Predicated region
    $region258: #{tpu_custom_call.1} parent=1 // pred_check
      _
    $region259: #{tpu_custom_call.1} parent=1 // pred_check_branch
      %587 = sbr.rel (0) target = $region261
    $region260: #{tpu_custom_call.1} parent=1 // pred_region
      %588 = dma.done [#allocation13], 16
    $region261: #{tpu_custom_call.1} parent=1 // pred_fallthru
      _
    // Predicated region
    $region262: #{tpu_custom_call.1} parent=1 // pred_check
      _
    $region263: #{tpu_custom_call.1} parent=1 // pred_check_branch
      %590 = sbr.rel (0) target = $region265
    $region264: #{tpu_custom_call.1} parent=1 // pred_region
      %591 = dma.done [#allocation13], 16
    $region265: #{tpu_custom_call.1} parent=1 // pred_fallthru
      _
    // Predicated region
    $region266: #{tpu_custom_call.1} parent=1 // pred_check
      _
    $region267: #{tpu_custom_call.1} parent=1 // pred_check_branch
      %593 = sbr.rel (0) target = $region269
    $region268: #{tpu_custom_call.1} parent=1 // pred_region
      %594 = dma.done [#allocation16], 256
    $region269: #{tpu_custom_call.1} parent=1 // pred_fallthru
      _
    // Predicated region
    $region270: #{tpu_custom_call.1} parent=1 // pred_check
      _
    $region271: #{tpu_custom_call.1} parent=1 // pred_check_branch
      %596 = sbr.rel (0) target = $region273
    $region272: #{tpu_custom_call.1} parent=1 // pred_region
      %597 = dma.done [#allocation16], 16
    $region273: #{tpu_custom_call.1} parent=1 // pred_fallthru
      _
    // Predicated region
    $region274: #{tpu_custom_call.1} parent=1 // pred_check
      _
    $region275: #{tpu_custom_call.1} parent=1 // pred_check_branch
      %599 = sbr.rel (0) target = $region277
    $region276: #{tpu_custom_call.1} parent=1 // pred_region
      %600 = dma.done [#allocation19], 64
    $region277: #{tpu_custom_call.1} parent=1 // pred_fallthru
      _
    // Predicated region
    $region278: #{tpu_custom_call.1} parent=1 // pred_check
      _
    $region279: #{tpu_custom_call.1} parent=1 // pred_check_branch
      %602 = sbr.rel (0) target = $region281
    $region280: #{tpu_custom_call.1} parent=1 // pred_region
      %603 = dma.done [#allocation19], 16
    $region281: #{tpu_custom_call.1} parent=1 // pred_fallthru
      _
    // Predicated region
    $region282: #{tpu_custom_call.1} parent=1 // pred_check
      _
    $region283: #{tpu_custom_call.1} parent=1 // pred_check_branch
      %605 = sbr.rel (0) target = $region285
    $region284: #{tpu_custom_call.1} parent=1 // pred_region
      %606 = dma.done [#allocation22], 64
    $region285: #{tpu_custom_call.1} parent=1 // pred_fallthru
      _
    // Predicated region
    $region286: #{tpu_custom_call.1} parent=1 // pred_check
      _
    $region287: #{tpu_custom_call.1} parent=1 // pred_check_branch
      %608 = sbr.rel (0) target = $region289
    $region288: #{tpu_custom_call.1} parent=1 // pred_region
      %609 = dma.done [#allocation22], 16
    $region289: #{tpu_custom_call.1} parent=1 // pred_fallthru
      _
    // Predicated region
    $region290: #{tpu_custom_call.1} parent=1 // pred_check
      _
    $region291: #{tpu_custom_call.1} parent=1 // pred_check_branch
      %611 = sbr.rel (0) target = $region293
    $region292: #{tpu_custom_call.1} parent=1 // pred_region
      %612 = dma.done [#allocation25], 128
    $region293: #{tpu_custom_call.1} parent=1 // pred_fallthru
      _
    // Predicated region
    $region294: #{tpu_custom_call.1} parent=1 // pred_check
      _
    $region295: #{tpu_custom_call.1} parent=1 // pred_check_branch
      %614 = sbr.rel (0) target = $region297
    $region296: #{tpu_custom_call.1} parent=1 // pred_region
      %615 = dma.done [#allocation25], 16
    $region297: #{tpu_custom_call.1} parent=1 // pred_fallthru
      _
    // Predicated region
    $region298: #{tpu_custom_call.1} parent=1 // pred_check
      _
    $region299: #{tpu_custom_call.1} parent=1 // pred_check_branch
      %617 = sbr.rel (0) target = $region301
    $region300: #{tpu_custom_call.1} parent=1 // pred_region
      %618 = dma.done [#allocation28], 16
    $region301: #{tpu_custom_call.1} parent=1 // pred_fallthru
      _
    // Predicated region
    $region302: #{tpu_custom_call.1} parent=1 // pred_check
      _
    $region303: #{tpu_custom_call.1} parent=1 // pred_check_branch
      %620 = sbr.rel (0) target = $region305
    $region304: #{tpu_custom_call.1} parent=1 // pred_region
      %621 = dma.done [#allocation28], 16
    $region305: #{tpu_custom_call.1} parent=1 // pred_fallthru
      _
    // Predicated region
    $region306: #{tpu_custom_call.1} parent=1 // pred_check
      _
    $region307: #{tpu_custom_call.1} parent=1 // pred_check_branch
      %623 = sbr.rel (0) target = $region309
    $region308: #{tpu_custom_call.1} parent=1 // pred_region
      %624 = dma.done [#allocation31], 16
    $region309: #{tpu_custom_call.1} parent=1 // pred_fallthru
      _
    // Predicated region
    $region310: #{tpu_custom_call.1} parent=1 // pred_check
      _
    $region311: #{tpu_custom_call.1} parent=1 // pred_check_branch
      %626 = sbr.rel (0) target = $region313
    $region312: #{tpu_custom_call.1} parent=1 // pred_region
      %627 = dma.done [#allocation31], 256
    $region313: #{tpu_custom_call.1} parent=1 // pred_fallthru
      _
    // Predicated region
    $region314: #{tpu_custom_call.1} parent=1 // pred_check
      _
    $region315: #{tpu_custom_call.1} parent=1 // pred_check_branch
      %629 = sbr.rel (0) target = $region317
    $region316: #{tpu_custom_call.1} parent=1 // pred_region
      %630 = dma.done [#allocation34], 16
    $region317: #{tpu_custom_call.1} parent=1 // pred_fallthru
      _
    // Predicated region
    $region318: #{tpu_custom_call.1} parent=1 // pred_check
      _
    $region319: #{tpu_custom_call.1} parent=1 // pred_check_branch
      %632 = sbr.rel (0) target = $region321
    $region320: #{tpu_custom_call.1} parent=1 // pred_region
      %633 = dma.done [#allocation34], 256
    $region321: #{tpu_custom_call.1} parent=1 // pred_fallthru
      _
    // Predicated region
    $region322: #{tpu_custom_call.1} parent=1 // pred_check
      _
    $region323: #{tpu_custom_call.1} parent=1 // pred_check_branch
      %635 = sbr.rel (0) target = $region325
    $region324: #{tpu_custom_call.1} parent=1 // pred_region
      %636 = dma.done [#allocation37], 256
    $region325: #{tpu_custom_call.1} parent=1 // pred_fallthru
      _
    // Predicated region
    $region326: #{tpu_custom_call.1} parent=1 // pred_check
      _
    $region327: #{tpu_custom_call.1} parent=1 // pred_check_branch
      %638 = sbr.rel (0) target = $region329
    $region328: #{tpu_custom_call.1} parent=1 // pred_region
      %639 = dma.done [#allocation37], 256
    $region329: #{tpu_custom_call.1} parent=1 // pred_fallthru
      _
    // Predicated region
    $region330: #{tpu_custom_call.1} parent=1 // pred_check
      _
    $region331: #{tpu_custom_call.1} parent=1 // pred_check_branch
      %641 = sbr.rel (0) target = $region333
    $region332: #{tpu_custom_call.1} parent=1 // pred_region
      %642 = dma.done [#allocation40], 256
    $region333: #{tpu_custom_call.1} parent=1 // pred_fallthru
      _
    // Predicated region
    $region334: #{tpu_custom_call.1} parent=1 // pred_check
      _
    $region335: #{tpu_custom_call.1} parent=1 // pred_check_branch
      %644 = sbr.rel (0) target = $region337
    $region336: #{tpu_custom_call.1} parent=1 // pred_region
      %645 = dma.done [#allocation40], 256
    $region337: #{tpu_custom_call.1} parent=1 // pred_fallthru
      _
    // Predicated region
    $region338: #{tpu_custom_call.1} parent=1 // pred_check
      _
    $region339: #{tpu_custom_call.1} parent=1 // pred_check_branch
      %647 = sbr.rel (0) target = $region341
    $region340: #{tpu_custom_call.1} parent=1 // pred_region
      %648 = dma.done [#allocation43], 256
    $region341: #{tpu_custom_call.1} parent=1 // pred_fallthru
      _
    // Predicated region
    $region342: #{tpu_custom_call.1} parent=1 // pred_check
      _
    $region343: #{tpu_custom_call.1} parent=1 // pred_check_branch
      %650 = sbr.rel (0) target = $region345
    $region344: #{tpu_custom_call.1} parent=1 // pred_region
      %651 = dma.done [#allocation43], 16
    $region345: #{tpu_custom_call.1} parent=1 // pred_fallthru
      _
    // Predicated region
    $region346: #{tpu_custom_call.1} parent=1 // pred_check
      _
    $region347: #{tpu_custom_call.1} parent=1 // pred_check_branch
      %653 = sbr.rel (0) target = $region349
    $region348: #{tpu_custom_call.1} parent=1 // pred_region
      %654 = dma.done [#allocation46], 16
    $region349: #{tpu_custom_call.1} parent=1 // pred_fallthru
      _
    // Predicated region
    $region350: #{tpu_custom_call.1} parent=1 // pred_check
      _
    $region351: #{tpu_custom_call.1} parent=1 // pred_check_branch
      %656 = sbr.rel (0) target = $region353
    $region352: #{tpu_custom_call.1} parent=1 // pred_region
      %657 = dma.done [#allocation46], 16
    $region353: #{tpu_custom_call.1} parent=1 // pred_fallthru
      _
    // Predicated region
    $region354: #{tpu_custom_call.1} parent=1 // pred_check
      _
    $region355: #{tpu_custom_call.1} parent=1 // pred_check_branch
      %659 = sbr.rel (0) target = $region357
    $region356: #{tpu_custom_call.1} parent=1 // pred_region
      %660 = dma.done [#allocation49], 16
    $region357: #{tpu_custom_call.1} parent=1 // pred_fallthru
      _
    // Predicated region
    $region358: #{tpu_custom_call.1} parent=1 // pred_check
      _
    $region359: #{tpu_custom_call.1} parent=1 // pred_check_branch
      %662 = sbr.rel (0) target = $region361
    $region360: #{tpu_custom_call.1} parent=1 // pred_region
      %663 = dma.done [#allocation49], 16
    $region361: #{tpu_custom_call.1} parent=1 // pred_fallthru
      _
    // Predicated region
    $region362: #{tpu_custom_call.1} parent=1 // pred_check
      _
    $region363: #{tpu_custom_call.1} parent=1 // pred_check_branch
      %665 = sbr.rel (0) target = $region365
    $region364: #{tpu_custom_call.1} parent=1 // pred_region
      %666 = dma.done [#allocation52], 512
    $region365: #{tpu_custom_call.1} parent=1 // pred_fallthru
      _
    // Predicated region
    $region366: #{tpu_custom_call.1} parent=1 // pred_check
      _
    $region367: #{tpu_custom_call.1} parent=1 // pred_check_branch
      %668 = sbr.rel (0) target = $region369
    $region368: #{tpu_custom_call.1} parent=1 // pred_region
      %669 = dma.done [#allocation52], 512
    $region369: #{tpu_custom_call.1} parent=1 // pred_fallthru
      _
    // Predicated region
    $region370: #{tpu_custom_call.1} parent=1 // pred_check
      _
    $region371: #{tpu_custom_call.1} parent=1 // pred_check_branch
      %671 = sbr.rel (0) target = $region373
    $region372: #{tpu_custom_call.1} parent=1 // pred_region
      %672 = dma.done [#allocation55], 512
    $region373: #{tpu_custom_call.1} parent=1 // pred_fallthru
      _
    // Predicated region
    $region374: #{tpu_custom_call.1} parent=1 // pred_check
      _
    $region375: #{tpu_custom_call.1} parent=1 // pred_check_branch
      %674 = sbr.rel (0) target = $region377
    $region376: #{tpu_custom_call.1} parent=1 // pred_region
      %675 = dma.done [#allocation55], 512
    $region377: #{tpu_custom_call.1} parent=1 // pred_fallthru
      _
    %v676 = vld [vmem:[#allocation3] sm:$0x3]
    %v677 = vld [vmem:[#allocation11] sm:$0xff]
    %v678 = vld [vmem:[#allocation11 + $0x8] sm:$0x3]
    %v679 = vld [vmem:[#allocation12] sm:$0x1]
    %v681 = vlaneseq
    %v682 = vshrl.u32 %v681, 7
    %v683 = vsub.s32 0, %v682
    %v684 = vrot.slane %v679, %v683
    %vm686 = vcmask 80896
    %v688 = vsel %vm686, %v676, 0
    %vm690 = vcmask 1041408
    %v692 = vsel %vm690, %v678, 0
    %694 = vmatprep.subr.mxu0 0.0
    %695 = vmatpush1.msra.mxu0 0.0
    %696 = vmatprep.subr.mxu0 0.0
    %697 = vmatpush1.msra.mxu0 0.0
    %698 = vmatprep.subr.mxu0 0.0
    %699 = vmatpush1.msra.mxu0 0.0
    %700 = vmatprep.subr.mxu0 0.0
    %701 = vmatpush1.msra.mxu0 0.0
    %702 = vmatprep.subr.mxu0 0.0
    %703 = vmatpush1.msra.mxu0 0.0
    %704 = vmatprep.subr.mxu0 0.0
    %705 = vmatpush1.msra.mxu0 0.0
    %706 = vmatprep.subr.mxu0 0.0
    %707 = vmatpush1.msra.mxu0 0.0
    %708 = vmatprep.subr.mxu0 0.0
    %709 = vmatpush1.msra.mxu0 0.0
    %710 = vmatprep.subr.mxu0 0.0
    %711 = vmatpush1.msra.mxu0 0.0
    %712 = vmatprep.subr.mxu0 0.0
    %713 = vmatpush1.msra.mxu0 0.0
    %714 = vmatprep.subr.mxu0 0.0
    %715 = vmatpush1.msra.mxu0 0.0
    %716 = vmatprep.subr.mxu0 0.0
    %717 = vmatpush1.msra.mxu0 0.0
    %718 = vmatprep.subr.mxu0 0.0
    %719 = vmatpush1.msra.mxu0 0.0
    %720 = vmatprep.subr.mxu0 0.0
    %721 = vmatpush1.msra.mxu0 0.0
    %722 = vmatprep.subr.mxu0 0.0
    %723 = vmatpush1.msra.mxu0 %v692
    %724 = vmatprep.subr.mxu0 0.0
    %725 = vmatpush1.msra.mxu0 %v677
    %726 = vmatprep.subr.mxu0 0.0
    %727 = vmatpush2.msra.mxu0 0.0
    %728 = vmatprep.subr.mxu0 0.0
    %729 = vmatpush2.msra.mxu0 0.0
    %730 = vmatprep.subr.mxu0 0.0
    %731 = vmatpush2.msra.mxu0 0.0
    %732 = vmatprep.subr.mxu0 0.0
    %733 = vmatpush2.msra.mxu0 0.0
    %734 = vmatprep.subr.mxu0 0.0
    %735 = vmatpush2.msra.mxu0 0.0
    %736 = vmatprep.subr.mxu0 0.0
    %737 = vmatpush2.msra.mxu0 0.0
    %738 = vmatprep.subr.mxu0 0.0
    %739 = vmatpush2.msra.mxu0 0.0
    %740 = vmatprep.subr.mxu0 0.0
    %741 = vmatpush2.msra.mxu0 0.0
    %742 = vmatprep.subr.mxu0 0.0
    %743 = vmatpush2.msra.mxu0 0.0
    %744 = vmatprep.subr.mxu0 0.0
    %745 = vmatpush2.msra.mxu0 0.0
    %746 = vmatprep.subr.mxu0 0.0
    %747 = vmatpush2.msra.mxu0 0.0
    %748 = vmatprep.subr.mxu0 0.0
    %749 = vmatpush2.msra.mxu0 0.0
    %750 = vmatprep.subr.mxu0 0.0
    %751 = vmatpush2.msra.mxu0 0.0
    %752 = vmatprep.subr.mxu0 0.0
    %753 = vmatpush2.msra.mxu0 0.0
    %754 = vmatprep.subr.mxu0 0.0
    %755 = vmatpush2.msra.mxu0 0.0
    %756 = vmatprep.subr.mxu0 0.0
    %757 = vmatpush2.msra.mxu0 0.0
    %758 = vmatprep.mubr.f32.mxu0 0.0
    %759 = vmatmul.mubr.f32.gmra.mxu0 %v688
    %v760 = vpop.f32.mrf.mxu0
    %v761 = vadd.f32 %v684, %v760
    %v762 = vpop.f32.mrf.mxu0
    %763 = vdwg.mxu0
    %vm764 = vcmp.gt.f32.partialorder %v761, 0.0
    %v765 = vmul.f32 %v761, 0.01
    %v766 = vsel %vm764, %v761, %v765
    %v767 = vld [vmem:[%s21] sm:$0xff]
    %v768 = vld [vmem:[%s21 + $0x8] sm:$0xff]
    %v769 = vld [vmem:[%s21 + $0x10] sm:$0xff]
    %v770 = vld [vmem:[%s21 + $0x18] sm:$0xff]
    %v771 = vld [vmem:[%s21 + $0x20] sm:$0xff]
    %v772 = vld [vmem:[%s21 + $0x28] sm:$0xff]
    %v773 = vld [vmem:[%s21 + $0x30] sm:$0xff]
    %v774 = vld [vmem:[%s21 + $0x38] sm:$0xff]
    %v775 = vld [vmem:[#allocation14] sm:$0x1]
    %v777 = vlaneseq
    %v778 = vshrl.u32 %v777, 7
    %v779 = vsub.s32 0, %v778
    %v780 = vrot.slane %v775, %v779
    %vm782 = vcmask 523264
    %v784 = vsel %vm782, %v766, 0
    %786 = vmatprep.subr.mxu0 0.0
    %787 = vmatpush1.msra.mxu0 0.0
    %788 = vmatprep.subr.mxu0 0.0
    %789 = vmatpush1.msra.mxu0 0.0
    %790 = vmatprep.subr.mxu0 0.0
    %791 = vmatpush1.msra.mxu0 0.0
    %792 = vmatprep.subr.mxu0 0.0
    %793 = vmatpush1.msra.mxu0 0.0
    %794 = vmatprep.subr.mxu0 0.0
    %795 = vmatpush1.msra.mxu0 0.0
    %796 = vmatprep.subr.mxu0 0.0
    %797 = vmatpush1.msra.mxu0 0.0
    %798 = vmatprep.subr.mxu0 0.0
    %799 = vmatpush1.msra.mxu0 0.0
    %800 = vmatprep.subr.mxu0 0.0
    %801 = vmatpush1.msra.mxu0 0.0
    %802 = vmatprep.subr.mxu0 0.0
    %803 = vmatpush1.msra.mxu0 %v774
    %804 = vmatprep.subr.mxu0 0.0
    %805 = vmatpush1.msra.mxu0 %v773
    %806 = vmatprep.subr.mxu0 0.0
    %807 = vmatpush1.msra.mxu0 %v772
    %808 = vmatprep.subr.mxu0 0.0
    %809 = vmatpush1.msra.mxu0 %v771
    %810 = vmatprep.subr.mxu0 0.0
    %811 = vmatpush1.msra.mxu0 %v770
    %812 = vmatprep.subr.mxu0 0.0
    %813 = vmatpush1.msra.mxu0 %v769
    %814 = vmatprep.subr.mxu0 0.0
    %815 = vmatpush1.msra.mxu0 %v768
    %816 = vmatprep.subr.mxu0 0.0
    %817 = vmatpush1.msra.mxu0 %v767
    %818 = vmatprep.subr.mxu0 0.0
    %819 = vmatpush2.msra.mxu0 0.0
    %820 = vmatprep.subr.mxu0 0.0
    %821 = vmatpush2.msra.mxu0 0.0
    %822 = vmatprep.subr.mxu0 0.0
    %823 = vmatpush2.msra.mxu0 0.0
    %824 = vmatprep.subr.mxu0 0.0
    %825 = vmatpush2.msra.mxu0 0.0
    %826 = vmatprep.subr.mxu0 0.0
    %827 = vmatpush2.msra.mxu0 0.0
    %828 = vmatprep.subr.mxu0 0.0
    %829 = vmatpush2.msra.mxu0 0.0
    %830 = vmatprep.subr.mxu0 0.0
    %831 = vmatpush2.msra.mxu0 0.0
    %832 = vmatprep.subr.mxu0 0.0
    %833 = vmatpush2.msra.mxu0 0.0
    %834 = vmatprep.subr.mxu0 0.0
    %835 = vmatpush2.msra.mxu0 0.0
    %836 = vmatprep.subr.mxu0 0.0
    %837 = vmatpush2.msra.mxu0 0.0
    %838 = vmatprep.subr.mxu0 0.0
    %839 = vmatpush2.msra.mxu0 0.0
    %840 = vmatprep.subr.mxu0 0.0
    %841 = vmatpush2.msra.mxu0 0.0
    %842 = vmatprep.subr.mxu0 0.0
    %843 = vmatpush2.msra.mxu0 0.0
    %844 = vmatprep.subr.mxu0 0.0
    %845 = vmatpush2.msra.mxu0 0.0
    %846 = vmatprep.subr.mxu0 0.0
    %847 = vmatpush2.msra.mxu0 0.0
    %848 = vmatprep.subr.mxu0 0.0
    %849 = vmatpush2.msra.mxu0 0.0
    %850 = vmatprep.mubr.f32.mxu0 0.0
    %851 = vmatmul.mubr.f32.gmra.mxu0 %v784
    %v852 = vpop.f32.mrf.mxu0
    %v853 = vadd.f32 %v780, %v852
    %v854 = vpop.f32.mrf.mxu0
    %855 = vdwg.mxu0
    %v856 = vld [vmem:[#allocation15] sm:$0xff]
    %v857 = vld [vmem:[#allocation15 + $0x8] sm:$0xf]
    %v858 = vld [vmem:[#allocation17] sm:$0x1]
    %v860 = vlaneseq
    %v861 = vshrl.u32 %v860, 7
    %v862 = vsub.s32 0, %v861
    %v863 = vrot.slane %v858, %v862
    %vm865 = vcmask 97280
    %v867 = vsel %vm865, %v853, 0
    %vm869 = vcmask 1043456
    %v871 = vsel %vm869, %v857, 0
    %873 = vmatprep.subr.mxu0 0.0
    %874 = vmatpush1.msra.mxu0 0.0
    %875 = vmatprep.subr.mxu0 0.0
    %876 = vmatpush1.msra.mxu0 0.0
    %877 = vmatprep.subr.mxu0 0.0
    %878 = vmatpush1.msra.mxu0 0.0
    %879 = vmatprep.subr.mxu0 0.0
    %880 = vmatpush1.msra.mxu0 0.0
    %881 = vmatprep.subr.mxu0 0.0
    %882 = vmatpush1.msra.mxu0 0.0
    %883 = vmatprep.subr.mxu0 0.0
    %884 = vmatpush1.msra.mxu0 0.0
    %885 = vmatprep.subr.mxu0 0.0
    %886 = vmatpush1.msra.mxu0 0.0
    %887 = vmatprep.subr.mxu0 0.0
    %888 = vmatpush1.msra.mxu0 0.0
    %889 = vmatprep.subr.mxu0 0.0
    %890 = vmatpush1.msra.mxu0 0.0
    %891 = vmatprep.subr.mxu0 0.0
    %892 = vmatpush1.msra.mxu0 0.0
    %893 = vmatprep.subr.mxu0 0.0
    %894 = vmatpush1.msra.mxu0 0.0
    %895 = vmatprep.subr.mxu0 0.0
    %896 = vmatpush1.msra.mxu0 0.0
    %897 = vmatprep.subr.mxu0 0.0
    %898 = vmatpush1.msra.mxu0 0.0
    %899 = vmatprep.subr.mxu0 0.0
    %900 = vmatpush1.msra.mxu0 0.0
    %901 = vmatprep.subr.mxu0 0.0
    %902 = vmatpush1.msra.mxu0 %v871
    %903 = vmatprep.subr.mxu0 0.0
    %904 = vmatpush1.msra.mxu0 %v856
    %905 = vmatprep.subr.mxu0 0.0
    %906 = vmatpush2.msra.mxu0 0.0
    %907 = vmatprep.subr.mxu0 0.0
    %908 = vmatpush2.msra.mxu0 0.0
    %909 = vmatprep.subr.mxu0 0.0
    %910 = vmatpush2.msra.mxu0 0.0
    %911 = vmatprep.subr.mxu0 0.0
    %912 = vmatpush2.msra.mxu0 0.0
    %913 = vmatprep.subr.mxu0 0.0
    %914 = vmatpush2.msra.mxu0 0.0
    %915 = vmatprep.subr.mxu0 0.0
    %916 = vmatpush2.msra.mxu0 0.0
    %917 = vmatprep.subr.mxu0 0.0
    %918 = vmatpush2.msra.mxu0 0.0
    %919 = vmatprep.subr.mxu0 0.0
    %920 = vmatpush2.msra.mxu0 0.0
    %921 = vmatprep.subr.mxu0 0.0
    %922 = vmatpush2.msra.mxu0 0.0
    %923 = vmatprep.subr.mxu0 0.0
    %924 = vmatpush2.msra.mxu0 0.0
    %925 = vmatprep.subr.mxu0 0.0
    %926 = vmatpush2.msra.mxu0 0.0
    %927 = vmatprep.subr.mxu0 0.0
    %928 = vmatpush2.msra.mxu0 0.0
    %929 = vmatprep.subr.mxu0 0.0
    %930 = vmatpush2.msra.mxu0 0.0
    %931 = vmatprep.subr.mxu0 0.0
    %932 = vmatpush2.msra.mxu0 0.0
    %933 = vmatprep.subr.mxu0 0.0
    %934 = vmatpush2.msra.mxu0 0.0
    %935 = vmatprep.subr.mxu0 0.0
    %936 = vmatpush2.msra.mxu0 0.0
    %937 = vmatprep.mubr.f32.mxu0 0.0
    %938 = vmatmul.mubr.f32.gmra.mxu0 %v867
    %v939 = vpop.f32.mrf.mxu0
    %v940 = vadd.f32 %v863, %v939
    %v941 = vpop.f32.mrf.mxu0
    %942 = vdwg.mxu0
    %v943 = vld [vmem:[%s3] sm:$0xff]
    %v944 = vld [vmem:[%s3 + $0x8] sm:$0xf]
    %v945 = vld [vmem:[#allocation6] sm:$0xff]
    %v946 = vld [vmem:[#allocation6 + $0x8] sm:$0x3f]
    %v947 = vld [vmem:[#allocation8] sm:$0xff]
    %v948 = vld [vmem:[#allocation8 + $0x8] sm:$0xf]
    %v949 = vld [vmem:[%s5] sm:$0xff]
    %v950 = vld [vmem:[%s5 + $0x8] sm:$0x3f]
    %v951 = vld [vmem:[#allocation18] sm:$0xf]
    %v952 = vld [vmem:[#allocation20] sm:$0x1]
    %v953 = vld [vmem:[#allocation24] sm:$0xff]
    %v954 = vld [vmem:[#allocation26] sm:$0x1]
    %v955 = vld [vmem:[%s41] sm:$0xff]
    %v956 = vld [vmem:[%s41 + $0x8] sm:$0xff]
    %v957 = vld [vmem:[%s41 + $0x10] sm:$0xff]
    %v958 = vld [vmem:[%s41 + $0x18] sm:$0xff]
    %v959 = vld [vmem:[#allocation27] sm:$0x1]
    %v961 = vlaneseq
    %v962 = vshrl.u32 %v961, 7
    %v963 = vsub.s32 0, %v962
    %v964 = vrot.slane %v952, %v963
    %vm966 = vcmask 31744
    %v968 = vsel %vm966, %v949, 0
    %v971 = vsel %vm966, %v950, 0
    %v974 = vsel %vm869, %v951, 0
    %976 = vmatprep.subr.mxu0 0.0
    %977 = vmatpush1.msra.mxu0 0.0
    %978 = vmatprep.subr.mxu0 0.0
    %979 = vmatpush1.msra.mxu0 0.0
    %980 = vmatprep.subr.mxu0 0.0
    %981 = vmatpush1.msra.mxu0 0.0
    %982 = vmatprep.subr.mxu0 0.0
    %983 = vmatpush1.msra.mxu0 0.0
    %984 = vmatprep.subr.mxu0 0.0
    %985 = vmatpush1.msra.mxu0 0.0
    %986 = vmatprep.subr.mxu0 0.0
    %987 = vmatpush1.msra.mxu0 0.0
    %988 = vmatprep.subr.mxu0 0.0
    %989 = vmatpush1.msra.mxu0 0.0
    %990 = vmatprep.subr.mxu0 0.0
    %991 = vmatpush1.msra.mxu0 0.0
    %992 = vmatprep.subr.mxu0 0.0
    %993 = vmatpush1.msra.mxu0 0.0
    %994 = vmatprep.subr.mxu0 0.0
    %995 = vmatpush1.msra.mxu0 0.0
    %996 = vmatprep.subr.mxu0 0.0
    %997 = vmatpush1.msra.mxu0 0.0
    %998 = vmatprep.subr.mxu0 0.0
    %999 = vmatpush1.msra.mxu0 0.0
    %1000 = vmatprep.subr.mxu0 0.0
    %1001 = vmatpush1.msra.mxu0 0.0
    %1002 = vmatprep.subr.mxu0 0.0
    %1003 = vmatpush1.msra.mxu0 0.0
    %1004 = vmatprep.subr.mxu0 0.0
    %1005 = vmatpush1.msra.mxu0 0.0
    %1006 = vmatprep.subr.mxu0 0.0
    %1007 = vmatpush1.msra.mxu0 %v974
    %1008 = vmatprep.subr.mxu0 0.0
    %1009 = vmatpush2.msra.mxu0 0.0
    %1010 = vmatprep.subr.mxu0 0.0
    %1011 = vmatpush2.msra.mxu0 0.0
    %1012 = vmatprep.subr.mxu0 0.0
    %1013 = vmatpush2.msra.mxu0 0.0
    %1014 = vmatprep.subr.mxu0 0.0
    %1015 = vmatpush2.msra.mxu0 0.0
    %1016 = vmatprep.subr.mxu0 0.0
    %1017 = vmatpush2.msra.mxu0 0.0
    %1018 = vmatprep.subr.mxu0 0.0
    %1019 = vmatpush2.msra.mxu0 0.0
    %1020 = vmatprep.subr.mxu0 0.0
    %1021 = vmatpush2.msra.mxu0 0.0
    %1022 = vmatprep.subr.mxu0 0.0
    %1023 = vmatpush2.msra.mxu0 0.0
    %1024 = vmatprep.subr.mxu0 0.0
    %1025 = vmatpush2.msra.mxu0 0.0
    %1026 = vmatprep.subr.mxu0 0.0
    %1027 = vmatpush2.msra.mxu0 0.0
    %1028 = vmatprep.subr.mxu0 0.0
    %1029 = vmatpush2.msra.mxu0 0.0
    %1030 = vmatprep.subr.mxu0 0.0
    %1031 = vmatpush2.msra.mxu0 0.0
    %1032 = vmatprep.subr.mxu0 0.0
    %1033 = vmatpush2.msra.mxu0 0.0
    %1034 = vmatprep.subr.mxu0 0.0
    %1035 = vmatpush2.msra.mxu0 0.0
    %1036 = vmatprep.subr.mxu0 0.0
    %1037 = vmatpush2.msra.mxu0 0.0
    %1038 = vmatprep.subr.mxu0 0.0
    %1039 = vmatpush2.msra.mxu0 0.0
    %1040 = vmatprep.mubr.f32.mxu0 0.0
    %1041 = vmatmul.mubr.f32.gmra.mxu0 %v968
    %v1042 = vpop.f32.mrf.mxu0
    %v1043 = vadd.f32 %v964, %v1042
    %v1044 = vpop.f32.mrf.mxu0
    %1045 = vmatprep.mubr.f32.mxu0 0.0
    %1046 = vmatmul.mubr.f32.gmra.mxu0 %v971
    %v1047 = vpop.f32.mrf.mxu0
    %v1048 = vadd.f32 %v964, %v1047
    %v1049 = vpop.f32.mrf.mxu0
    %1050 = vdwg.mxu0
    %v1052 = vsel %vm865, %v945, 0
    %v1055 = vsel %vm865, %v946, 0
    %v1058 = vsel %vm869, %v944, 0
    %1060 = vmatprep.subr.mxu0 0.0
    %1061 = vmatpush1.msra.mxu0 0.0
    %1062 = vmatprep.subr.mxu0 0.0
    %1063 = vmatpush1.msra.mxu0 0.0
    %1064 = vmatprep.subr.mxu0 0.0
    %1065 = vmatpush1.msra.mxu0 0.0
    %1066 = vmatprep.subr.mxu0 0.0
    %1067 = vmatpush1.msra.mxu0 0.0
    %1068 = vmatprep.subr.mxu0 0.0
    %1069 = vmatpush1.msra.mxu0 0.0
    %1070 = vmatprep.subr.mxu0 0.0
    %1071 = vmatpush1.msra.mxu0 0.0
    %1072 = vmatprep.subr.mxu0 0.0
    %1073 = vmatpush1.msra.mxu0 0.0
    %1074 = vmatprep.subr.mxu0 0.0
    %1075 = vmatpush1.msra.mxu0 0.0
    %1076 = vmatprep.subr.mxu0 0.0
    %1077 = vmatpush1.msra.mxu0 0.0
    %1078 = vmatprep.subr.mxu0 0.0
    %1079 = vmatpush1.msra.mxu0 0.0
    %1080 = vmatprep.subr.mxu0 0.0
    %1081 = vmatpush1.msra.mxu0 0.0
    %1082 = vmatprep.subr.mxu0 0.0
    %1083 = vmatpush1.msra.mxu0 0.0
    %1084 = vmatprep.subr.mxu0 0.0
    %1085 = vmatpush1.msra.mxu0 0.0
    %1086 = vmatprep.subr.mxu0 0.0
    %1087 = vmatpush1.msra.mxu0 0.0
    %1088 = vmatprep.subr.mxu0 0.0
    %1089 = vmatpush1.msra.mxu0 %v1058
    %1090 = vmatprep.subr.mxu0 0.0
    %1091 = vmatpush1.msra.mxu0 %v943
    %1092 = vmatprep.subr.mxu0 0.0
    %1093 = vmatpush2.msra.mxu0 0.0
    %1094 = vmatprep.subr.mxu0 0.0
    %1095 = vmatpush2.msra.mxu0 0.0
    %1096 = vmatprep.subr.mxu0 0.0
    %1097 = vmatpush2.msra.mxu0 0.0
    %1098 = vmatprep.subr.mxu0 0.0
    %1099 = vmatpush2.msra.mxu0 0.0
    %1100 = vmatprep.subr.mxu0 0.0
    %1101 = vmatpush2.msra.mxu0 0.0
    %1102 = vmatprep.subr.mxu0 0.0
    %1103 = vmatpush2.msra.mxu0 0.0
    %1104 = vmatprep.subr.mxu0 0.0
    %1105 = vmatpush2.msra.mxu0 0.0
    %1106 = vmatprep.subr.mxu0 0.0
    %1107 = vmatpush2.msra.mxu0 0.0
    %1108 = vmatprep.subr.mxu0 0.0
    %1109 = vmatpush2.msra.mxu0 0.0
    %1110 = vmatprep.subr.mxu0 0.0
    %1111 = vmatpush2.msra.mxu0 0.0
    %1112 = vmatprep.subr.mxu0 0.0
    %1113 = vmatpush2.msra.mxu0 0.0
    %1114 = vmatprep.subr.mxu0 0.0
    %1115 = vmatpush2.msra.mxu0 0.0
    %1116 = vmatprep.subr.mxu0 0.0
    %1117 = vmatpush2.msra.mxu0 0.0
    %1118 = vmatprep.subr.mxu0 0.0
    %1119 = vmatpush2.msra.mxu0 0.0
    %1120 = vmatprep.subr.mxu0 0.0
    %1121 = vmatpush2.msra.mxu0 0.0
    %1122 = vmatprep.subr.mxu0 0.0
    %1123 = vmatpush2.msra.mxu0 0.0
    %1124 = vmatprep.mubr.f32.mxu0 0.0
    %1125 = vmatmul.mubr.f32.gmra.mxu0 %v1052
    %v1126 = vpop.f32.mrf.mxu0
    %v1127 = vadd.f32 %v1043, %v1126
    %v1128 = vpop.f32.mrf.mxu0
    %1129 = vmatprep.mubr.f32.mxu0 0.0
    %1130 = vmatmul.mubr.f32.gmra.mxu0 %v1055
    %v1131 = vpop.f32.mrf.mxu0
    %v1132 = vadd.f32 %v1048, %v1131
    %v1133 = vpop.f32.mrf.mxu0
    %1134 = vdwg.mxu0
    %v1135 = vmax.f32 %v1127, 0.0
    %v1136 = vmax.f32 %v1132, 0.0
    %vm1137 = vcmask 113664
    %v1139 = vsel %vm1137, %v947, 0
    %v1142 = vsel %vm1137, %v948, 0
    %vm1144 = vcmask 1045504
    %v1146 = vsel %vm1144, %v1136, 0
    %1148 = vmatprep.subr.mxu0 0.0
    %1149 = vmatpush1.msra.mxu0 0.0
    %1150 = vmatprep.subr.mxu0 0.0
    %1151 = vmatpush1.msra.mxu0 0.0
    %1152 = vmatprep.subr.mxu0 0.0
    %1153 = vmatpush1.msra.mxu0 0.0
    %1154 = vmatprep.subr.mxu0 0.0
    %1155 = vmatpush1.msra.mxu0 0.0
    %1156 = vmatprep.subr.mxu0 0.0
    %1157 = vmatpush1.msra.mxu0 0.0
    %1158 = vmatprep.subr.mxu0 0.0
    %1159 = vmatpush1.msra.mxu0 0.0
    %1160 = vmatprep.subr.mxu0 0.0
    %1161 = vmatpush1.msra.mxu0 0.0
    %1162 = vmatprep.subr.mxu0 0.0
    %1163 = vmatpush1.msra.mxu0 0.0
    %1164 = vmatprep.subr.mxu0 0.0
    %1165 = vmatpush1.msra.mxu0 0.0
    %1166 = vmatprep.subr.mxu0 0.0
    %1167 = vmatpush1.msra.mxu0 0.0
    %1168 = vmatprep.subr.mxu0 0.0
    %1169 = vmatpush1.msra.mxu0 0.0
    %1170 = vmatprep.subr.mxu0 0.0
    %1171 = vmatpush1.msra.mxu0 0.0
    %1172 = vmatprep.subr.mxu0 0.0
    %1173 = vmatpush1.msra.mxu0 0.0
    %1174 = vmatprep.subr.mxu0 0.0
    %1175 = vmatpush1.msra.mxu0 0.0
    %1176 = vmatprep.subr.mxu0 0.0
    %1177 = vmatpush1.msra.mxu0 %v1146
    %1178 = vmatprep.subr.mxu0 0.0
    %1179 = vmatpush1.msra.mxu0 %v1135
    %1180 = vmatprep.subr.mxu0 0.0
    %1181 = vmatpush2.msra.mxu0 0.0
    %1182 = vmatprep.subr.mxu0 0.0
    %1183 = vmatpush2.msra.mxu0 0.0
    %1184 = vmatprep.subr.mxu0 0.0
    %1185 = vmatpush2.msra.mxu0 0.0
    %1186 = vmatprep.subr.mxu0 0.0
    %1187 = vmatpush2.msra.mxu0 0.0
    %1188 = vmatprep.subr.mxu0 0.0
    %1189 = vmatpush2.msra.mxu0 0.0
    %1190 = vmatprep.subr.mxu0 0.0
    %1191 = vmatpush2.msra.mxu0 0.0
    %1192 = vmatprep.subr.mxu0 0.0
    %1193 = vmatpush2.msra.mxu0 0.0
    %1194 = vmatprep.subr.mxu0 0.0
    %1195 = vmatpush2.msra.mxu0 0.0
    %1196 = vmatprep.subr.mxu0 0.0
    %1197 = vmatpush2.msra.mxu0 0.0
    %1198 = vmatprep.subr.mxu0 0.0
    %1199 = vmatpush2.msra.mxu0 0.0
    %1200 = vmatprep.subr.mxu0 0.0
    %1201 = vmatpush2.msra.mxu0 0.0
    %1202 = vmatprep.subr.mxu0 0.0
    %1203 = vmatpush2.msra.mxu0 0.0
    %1204 = vmatprep.subr.mxu0 0.0
    %1205 = vmatpush2.msra.mxu0 0.0
    %1206 = vmatprep.subr.mxu0 0.0
    %1207 = vmatpush2.msra.mxu0 0.0
    %1208 = vmatprep.subr.mxu0 0.0
    %1209 = vmatpush2.msra.mxu0 0.0
    %1210 = vmatprep.subr.mxu0 0.0
    %1211 = vmatpush2.msra.mxu0 0.0
    %1212 = vmatprep.mubr.f32.mxu0 0.0
    %1213 = vmatmul.mubr.f32.gmra.mxu0 %v1139
    %v1214 = vpop.f32.mrf.mxu0
    %v1215 = vadd.f32 0.0, %v1214
    %v1216 = vpop.f32.mrf.mxu0
    %1217 = vmatprep.mubr.f32.mxu0 0.0
    %1218 = vmatmul.mubr.f32.gmra.mxu0 %v1142
    %v1219 = vpop.f32.mrf.mxu0
    %v1220 = vadd.f32 0.0, %v1219
    %v1221 = vpop.f32.mrf.mxu0
    %1222 = vdwg.mxu0
    %v1223 = vadd.f32 %v943, %v1215
    %v1224 = vadd.f32 %v944, %v1220
    %v1226 = vlaneseq
    %v1227 = vshrl.u32 %v1226, 7
    %v1228 = vsub.s32 0, %v1227
    %v1229 = vrot.slane %v954, %v1228
    %vm1231 = vcmask 64512
    %v1233 = vsel %vm1231, %v1223, 0
    %v1236 = vsel %vm1231, %v1224, 0
    %1238 = vmatprep.subr.mxu0 0.0
    %1239 = vmatpush1.msra.mxu0 0.0
    %1240 = vmatprep.subr.mxu0 0.0
    %1241 = vmatpush1.msra.mxu0 0.0
    %1242 = vmatprep.subr.mxu0 0.0
    %1243 = vmatpush1.msra.mxu0 0.0
    %1244 = vmatprep.subr.mxu0 0.0
    %1245 = vmatpush1.msra.mxu0 0.0
    %1246 = vmatprep.subr.mxu0 0.0
    %1247 = vmatpush1.msra.mxu0 0.0
    %1248 = vmatprep.subr.mxu0 0.0
    %1249 = vmatpush1.msra.mxu0 0.0
    %1250 = vmatprep.subr.mxu0 0.0
    %1251 = vmatpush1.msra.mxu0 0.0
    %1252 = vmatprep.subr.mxu0 0.0
    %1253 = vmatpush1.msra.mxu0 0.0
    %1254 = vmatprep.subr.mxu0 0.0
    %1255 = vmatpush1.msra.mxu0 0.0
    %1256 = vmatprep.subr.mxu0 0.0
    %1257 = vmatpush1.msra.mxu0 0.0
    %1258 = vmatprep.subr.mxu0 0.0
    %1259 = vmatpush1.msra.mxu0 0.0
    %1260 = vmatprep.subr.mxu0 0.0
    %1261 = vmatpush1.msra.mxu0 0.0
    %1262 = vmatprep.subr.mxu0 0.0
    %1263 = vmatpush1.msra.mxu0 0.0
    %1264 = vmatprep.subr.mxu0 0.0
    %1265 = vmatpush1.msra.mxu0 0.0
    %1266 = vmatprep.subr.mxu0 0.0
    %1267 = vmatpush1.msra.mxu0 0.0
    %1268 = vmatprep.subr.mxu0 0.0
    %1269 = vmatpush1.msra.mxu0 %v953
    %1270 = vmatprep.subr.mxu0 0.0
    %1271 = vmatpush2.msra.mxu0 0.0
    %1272 = vmatprep.subr.mxu0 0.0
    %1273 = vmatpush2.msra.mxu0 0.0
    %1274 = vmatprep.subr.mxu0 0.0
    %1275 = vmatpush2.msra.mxu0 0.0
    %1276 = vmatprep.subr.mxu0 0.0
    %1277 = vmatpush2.msra.mxu0 0.0
    %1278 = vmatprep.subr.mxu0 0.0
    %1279 = vmatpush2.msra.mxu0 0.0
    %1280 = vmatprep.subr.mxu0 0.0
    %1281 = vmatpush2.msra.mxu0 0.0
    %1282 = vmatprep.subr.mxu0 0.0
    %1283 = vmatpush2.msra.mxu0 0.0
    %1284 = vmatprep.subr.mxu0 0.0
    %1285 = vmatpush2.msra.mxu0 0.0
    %1286 = vmatprep.subr.mxu0 0.0
    %1287 = vmatpush2.msra.mxu0 0.0
    %1288 = vmatprep.subr.mxu0 0.0
    %1289 = vmatpush2.msra.mxu0 0.0
    %1290 = vmatprep.subr.mxu0 0.0
    %1291 = vmatpush2.msra.mxu0 0.0
    %1292 = vmatprep.subr.mxu0 0.0
    %1293 = vmatpush2.msra.mxu0 0.0
    %1294 = vmatprep.subr.mxu0 0.0
    %1295 = vmatpush2.msra.mxu0 0.0
    %1296 = vmatprep.subr.mxu0 0.0
    %1297 = vmatpush2.msra.mxu0 0.0
    %1298 = vmatprep.subr.mxu0 0.0
    %1299 = vmatpush2.msra.mxu0 0.0
    %1300 = vmatprep.subr.mxu0 0.0
    %1301 = vmatpush2.msra.mxu0 0.0
    %1302 = vmatprep.mubr.f32.mxu0 0.0
    %1303 = vmatmul.mubr.f32.gmra.mxu0 %v1233
    %v1304 = vpop.f32.mrf.mxu0
    %v1305 = vadd.f32 %v1229, %v1304
    %v1306 = vpop.f32.mrf.mxu0
    %1307 = vmatprep.mubr.f32.mxu0 0.0
    %1308 = vmatmul.mubr.f32.gmra.mxu0 %v1236
    %v1309 = vpop.f32.mrf.mxu0
    %v1310 = vadd.f32 %v1229, %v1309
    %v1311 = vpop.f32.mrf.mxu0
    %1312 = vdwg.mxu0
    %v1313 = vmax.f32 %v1305, 0.0
    %v1314 = vmax.f32 %v1310, 0.0
    %v1316 = vlaneseq
    %v1317 = vshrl.u32 %v1316, 7
    %v1318 = vsub.s32 0, %v1317
    %v1319 = vrot.slane %v959, %v1318
    %vm1321 = vcmask 261120
    %v1323 = vsel %vm1321, %v1313, 0
    %v1326 = vsel %vm1321, %v1314, 0
    %1328 = vmatprep.subr.mxu0 0.0
    %1329 = vmatpush1.msra.mxu0 0.0
    %1330 = vmatprep.subr.mxu0 0.0
    %1331 = vmatpush1.msra.mxu0 0.0
    %1332 = vmatprep.subr.mxu0 0.0
    %1333 = vmatpush1.msra.mxu0 0.0
    %1334 = vmatprep.subr.mxu0 0.0
    %1335 = vmatpush1.msra.mxu0 0.0
    %1336 = vmatprep.subr.mxu0 0.0
    %1337 = vmatpush1.msra.mxu0 0.0
    %1338 = vmatprep.subr.mxu0 0.0
    %1339 = vmatpush1.msra.mxu0 0.0
    %1340 = vmatprep.subr.mxu0 0.0
    %1341 = vmatpush1.msra.mxu0 0.0
    %1342 = vmatprep.subr.mxu0 0.0
    %1343 = vmatpush1.msra.mxu0 0.0
    %1344 = vmatprep.subr.mxu0 0.0
    %1345 = vmatpush1.msra.mxu0 0.0
    %1346 = vmatprep.subr.mxu0 0.0
    %1347 = vmatpush1.msra.mxu0 0.0
    %1348 = vmatprep.subr.mxu0 0.0
    %1349 = vmatpush1.msra.mxu0 0.0
    %1350 = vmatprep.subr.mxu0 0.0
    %1351 = vmatpush1.msra.mxu0 0.0
    %1352 = vmatprep.subr.mxu0 0.0
    %1353 = vmatpush1.msra.mxu0 %v958
    %1354 = vmatprep.subr.mxu0 0.0
    %1355 = vmatpush1.msra.mxu0 %v957
    %1356 = vmatprep.subr.mxu0 0.0
    %1357 = vmatpush1.msra.mxu0 %v956
    %1358 = vmatprep.subr.mxu0 0.0
    %1359 = vmatpush1.msra.mxu0 %v955
    %1360 = vmatprep.subr.mxu0 0.0
    %1361 = vmatpush2.msra.mxu0 0.0
    %1362 = vmatprep.subr.mxu0 0.0
    %1363 = vmatpush2.msra.mxu0 0.0
    %1364 = vmatprep.subr.mxu0 0.0
    %1365 = vmatpush2.msra.mxu0 0.0
    %1366 = vmatprep.subr.mxu0 0.0
    %1367 = vmatpush2.msra.mxu0 0.0
    %1368 = vmatprep.subr.mxu0 0.0
    %1369 = vmatpush2.msra.mxu0 0.0
    %1370 = vmatprep.subr.mxu0 0.0
    %1371 = vmatpush2.msra.mxu0 0.0
    %1372 = vmatprep.subr.mxu0 0.0
    %1373 = vmatpush2.msra.mxu0 0.0
    %1374 = vmatprep.subr.mxu0 0.0
    %1375 = vmatpush2.msra.mxu0 0.0
    %1376 = vmatprep.subr.mxu0 0.0
    %1377 = vmatpush2.msra.mxu0 0.0
    %1378 = vmatprep.subr.mxu0 0.0
    %1379 = vmatpush2.msra.mxu0 0.0
    %1380 = vmatprep.subr.mxu0 0.0
    %1381 = vmatpush2.msra.mxu0 0.0
    %1382 = vmatprep.subr.mxu0 0.0
    %1383 = vmatpush2.msra.mxu0 0.0
    %1384 = vmatprep.subr.mxu0 0.0
    %1385 = vmatpush2.msra.mxu0 0.0
    %1386 = vmatprep.subr.mxu0 0.0
    %1387 = vmatpush2.msra.mxu0 0.0
    %1388 = vmatprep.subr.mxu0 0.0
    %1389 = vmatpush2.msra.mxu0 0.0
    %1390 = vmatprep.subr.mxu0 0.0
    %1391 = vmatpush2.msra.mxu0 0.0
    %1392 = vmatprep.mubr.f32.mxu0 0.0
    %1393 = vmatmul.mubr.f32.gmra.mxu0 %v1323
    %v1394 = vpop.f32.mrf.mxu0
    %v1395 = vadd.f32 %v1319, %v1394
    %v1396 = vpop.f32.mrf.mxu0
    %1397 = vmatprep.mubr.f32.mxu0 0.0
    %1398 = vmatmul.mubr.f32.gmra.mxu0 %v1326
    %v1399 = vpop.f32.mrf.mxu0
    %v1400 = vadd.f32 %v1319, %v1399
    %v1401 = vpop.f32.mrf.mxu0
    %1402 = vdwg.mxu0
    %v1403 = vmax.f32 %v1395, 0.0
    %v1404 = vmax.f32 %v1400, 0.0
    %v1405 = vld [vmem:[#allocation21] sm:$0xf]
    %v1406 = vld [vmem:[#allocation23] sm:$0x1]
    %v1407 = vld [vmem:[%s45] sm:$0xff]
    %v1408 = vld [vmem:[%s45 + $0x8] sm:$0xff]
    %v1409 = vld [vmem:[%s45 + $0x10] sm:$0xff]
    %v1410 = vld [vmem:[%s45 + $0x18] sm:$0xff]
    %v1411 = vld [vmem:[#allocation29] sm:$0x1]
    %v1412 = vld [vmem:[%s49] sm:$0xff]
    %v1413 = vld [vmem:[%s49 + $0x8] sm:$0xff]
    %v1414 = vld [vmem:[%s49 + $0x10] sm:$0xff]
    %v1415 = vld [vmem:[%s49 + $0x18] sm:$0xff]
    %v1416 = vld [vmem:[#allocation30] sm:$0x1]
    %v1418 = vlaneseq
    %v1419 = vshrl.u32 %v1418, 7
    %v1420 = vsub.s32 0, %v1419
    %v1421 = vrot.slane %v1406, %v1420
    %v1424 = vsel %vm869, %v1405, 0
    %1426 = vmatprep.subr.mxu0 0.0
    %1427 = vmatpush1.msra.mxu0 0.0
    %1428 = vmatprep.subr.mxu0 0.0
    %1429 = vmatpush1.msra.mxu0 0.0
    %1430 = vmatprep.subr.mxu0 0.0
    %1431 = vmatpush1.msra.mxu0 0.0
    %1432 = vmatprep.subr.mxu0 0.0
    %1433 = vmatpush1.msra.mxu0 0.0
    %1434 = vmatprep.subr.mxu0 0.0
    %1435 = vmatpush1.msra.mxu0 0.0
    %1436 = vmatprep.subr.mxu0 0.0
    %1437 = vmatpush1.msra.mxu0 0.0
    %1438 = vmatprep.subr.mxu0 0.0
    %1439 = vmatpush1.msra.mxu0 0.0
    %1440 = vmatprep.subr.mxu0 0.0
    %1441 = vmatpush1.msra.mxu0 0.0
    %1442 = vmatprep.subr.mxu0 0.0
    %1443 = vmatpush1.msra.mxu0 0.0
    %1444 = vmatprep.subr.mxu0 0.0
    %1445 = vmatpush1.msra.mxu0 0.0
    %1446 = vmatprep.subr.mxu0 0.0
    %1447 = vmatpush1.msra.mxu0 0.0
    %1448 = vmatprep.subr.mxu0 0.0
    %1449 = vmatpush1.msra.mxu0 0.0
    %1450 = vmatprep.subr.mxu0 0.0
    %1451 = vmatpush1.msra.mxu0 0.0
    %1452 = vmatprep.subr.mxu0 0.0
    %1453 = vmatpush1.msra.mxu0 0.0
    %1454 = vmatprep.subr.mxu0 0.0
    %1455 = vmatpush1.msra.mxu0 0.0
    %1456 = vmatprep.subr.mxu0 0.0
    %1457 = vmatpush1.msra.mxu0 %v1424
    %1458 = vmatprep.subr.mxu0 0.0
    %1459 = vmatpush2.msra.mxu0 0.0
    %1460 = vmatprep.subr.mxu0 0.0
    %1461 = vmatpush2.msra.mxu0 0.0
    %1462 = vmatprep.subr.mxu0 0.0
    %1463 = vmatpush2.msra.mxu0 0.0
    %1464 = vmatprep.subr.mxu0 0.0
    %1465 = vmatpush2.msra.mxu0 0.0
    %1466 = vmatprep.subr.mxu0 0.0
    %1467 = vmatpush2.msra.mxu0 0.0
    %1468 = vmatprep.subr.mxu0 0.0
    %1469 = vmatpush2.msra.mxu0 0.0
    %1470 = vmatprep.subr.mxu0 0.0
    %1471 = vmatpush2.msra.mxu0 0.0
    %1472 = vmatprep.subr.mxu0 0.0
    %1473 = vmatpush2.msra.mxu0 0.0
    %1474 = vmatprep.subr.mxu0 0.0
    %1475 = vmatpush2.msra.mxu0 0.0
    %1476 = vmatprep.subr.mxu0 0.0
    %1477 = vmatpush2.msra.mxu0 0.0
    %1478 = vmatprep.subr.mxu0 0.0
    %1479 = vmatpush2.msra.mxu0 0.0
    %1480 = vmatprep.subr.mxu0 0.0
    %1481 = vmatpush2.msra.mxu0 0.0
    %1482 = vmatprep.subr.mxu0 0.0
    %1483 = vmatpush2.msra.mxu0 0.0
    %1484 = vmatprep.subr.mxu0 0.0
    %1485 = vmatpush2.msra.mxu0 0.0
    %1486 = vmatprep.subr.mxu0 0.0
    %1487 = vmatpush2.msra.mxu0 0.0
    %1488 = vmatprep.subr.mxu0 0.0
    %1489 = vmatpush2.msra.mxu0 0.0
    %1490 = vmatprep.mubr.f32.mxu0 0.0
    %1491 = vmatmul.mubr.f32.gmra.mxu0 %v968
    %v1492 = vpop.f32.mrf.mxu0
    %v1493 = vadd.f32 %v1421, %v1492
    %v1494 = vpop.f32.mrf.mxu0
    %1495 = vmatprep.mubr.f32.mxu0 0.0
    %1496 = vmatmul.mubr.f32.gmra.mxu0 %v971
    %v1497 = vpop.f32.mrf.mxu0
    %v1498 = vadd.f32 %v1421, %v1497
    %v1499 = vpop.f32.mrf.mxu0
    %1500 = vdwg.mxu0
    %v1502 = vsel %vm869, %v1404, 0
    %1504 = vmatprep.subr.mxu0 0.0
    %1505 = vmatpush1.msra.mxu0 0.0
    %1506 = vmatprep.subr.mxu0 0.0
    %1507 = vmatpush1.msra.mxu0 0.0
    %1508 = vmatprep.subr.mxu0 0.0
    %1509 = vmatpush1.msra.mxu0 0.0
    %1510 = vmatprep.subr.mxu0 0.0
    %1511 = vmatpush1.msra.mxu0 0.0
    %1512 = vmatprep.subr.mxu0 0.0
    %1513 = vmatpush1.msra.mxu0 0.0
    %1514 = vmatprep.subr.mxu0 0.0
    %1515 = vmatpush1.msra.mxu0 0.0
    %1516 = vmatprep.subr.mxu0 0.0
    %1517 = vmatpush1.msra.mxu0 0.0
    %1518 = vmatprep.subr.mxu0 0.0
    %1519 = vmatpush1.msra.mxu0 0.0
    %1520 = vmatprep.subr.mxu0 0.0
    %1521 = vmatpush1.msra.mxu0 0.0
    %1522 = vmatprep.subr.mxu0 0.0
    %1523 = vmatpush1.msra.mxu0 0.0
    %1524 = vmatprep.subr.mxu0 0.0
    %1525 = vmatpush1.msra.mxu0 0.0
    %1526 = vmatprep.subr.mxu0 0.0
    %1527 = vmatpush1.msra.mxu0 0.0
    %1528 = vmatprep.subr.mxu0 0.0
    %1529 = vmatpush1.msra.mxu0 0.0
    %1530 = vmatprep.subr.mxu0 0.0
    %1531 = vmatpush1.msra.mxu0 0.0
    %1532 = vmatprep.subr.mxu0 0.0
    %1533 = vmatpush1.msra.mxu0 %v1502
    %1534 = vmatprep.subr.mxu0 0.0
    %1535 = vmatpush1.msra.mxu0 %v1403
    %1536 = vmatprep.subr.mxu0 0.0
    %1537 = vmatpush2.msra.mxu0 0.0
    %1538 = vmatprep.subr.mxu0 0.0
    %1539 = vmatpush2.msra.mxu0 0.0
    %1540 = vmatprep.subr.mxu0 0.0
    %1541 = vmatpush2.msra.mxu0 0.0
    %1542 = vmatprep.subr.mxu0 0.0
    %1543 = vmatpush2.msra.mxu0 0.0
    %1544 = vmatprep.subr.mxu0 0.0
    %1545 = vmatpush2.msra.mxu0 0.0
    %1546 = vmatprep.subr.mxu0 0.0
    %1547 = vmatpush2.msra.mxu0 0.0
    %1548 = vmatprep.subr.mxu0 0.0
    %1549 = vmatpush2.msra.mxu0 0.0
    %1550 = vmatprep.subr.mxu0 0.0
    %1551 = vmatpush2.msra.mxu0 0.0
    %1552 = vmatprep.subr.mxu0 0.0
    %1553 = vmatpush2.msra.mxu0 0.0
    %1554 = vmatprep.subr.mxu0 0.0
    %1555 = vmatpush2.msra.mxu0 0.0
    %1556 = vmatprep.subr.mxu0 0.0
    %1557 = vmatpush2.msra.mxu0 0.0
    %1558 = vmatprep.subr.mxu0 0.0
    %1559 = vmatpush2.msra.mxu0 0.0
    %1560 = vmatprep.subr.mxu0 0.0
    %1561 = vmatpush2.msra.mxu0 0.0
    %1562 = vmatprep.subr.mxu0 0.0
    %1563 = vmatpush2.msra.mxu0 0.0
    %1564 = vmatprep.subr.mxu0 0.0
    %1565 = vmatpush2.msra.mxu0 0.0
    %1566 = vmatprep.subr.mxu0 0.0
    %1567 = vmatpush2.msra.mxu0 0.0
    %1568 = vmatprep.mubr.f32.mxu0 0.0
    %1569 = vmatmul.mubr.f32.gmra.mxu0 %v1052
    %v1570 = vpop.f32.mrf.mxu0
    %v1571 = vadd.f32 %v1493, %v1570
    %v1572 = vpop.f32.mrf.mxu0
    %1573 = vmatprep.mubr.f32.mxu0 0.0
    %1574 = vmatmul.mubr.f32.gmra.mxu0 %v1055
    %v1575 = vpop.f32.mrf.mxu0
    %v1576 = vadd.f32 %v1498, %v1575
    %v1577 = vpop.f32.mrf.mxu0
    %1578 = vdwg.mxu0
    %v1579 = vmax.f32 %v1571, 0.0
    %v1580 = vmax.f32 %v1576, 0.0
    %v1582 = vsel %vm1144, %v1580, 0
    %1584 = vmatprep.subr.mxu0 0.0
    %1585 = vmatpush1.msra.mxu0 0.0
    %1586 = vmatprep.subr.mxu0 0.0
    %1587 = vmatpush1.msra.mxu0 0.0
    %1588 = vmatprep.subr.mxu0 0.0
    %1589 = vmatpush1.msra.mxu0 0.0
    %1590 = vmatprep.subr.mxu0 0.0
    %1591 = vmatpush1.msra.mxu0 0.0
    %1592 = vmatprep.subr.mxu0 0.0
    %1593 = vmatpush1.msra.mxu0 0.0
    %1594 = vmatprep.subr.mxu0 0.0
    %1595 = vmatpush1.msra.mxu0 0.0
    %1596 = vmatprep.subr.mxu0 0.0
    %1597 = vmatpush1.msra.mxu0 0.0
    %1598 = vmatprep.subr.mxu0 0.0
    %1599 = vmatpush1.msra.mxu0 0.0
    %1600 = vmatprep.subr.mxu0 0.0
    %1601 = vmatpush1.msra.mxu0 0.0
    %1602 = vmatprep.subr.mxu0 0.0
    %1603 = vmatpush1.msra.mxu0 0.0
    %1604 = vmatprep.subr.mxu0 0.0
    %1605 = vmatpush1.msra.mxu0 0.0
    %1606 = vmatprep.subr.mxu0 0.0
    %1607 = vmatpush1.msra.mxu0 0.0
    %1608 = vmatprep.subr.mxu0 0.0
    %1609 = vmatpush1.msra.mxu0 0.0
    %1610 = vmatprep.subr.mxu0 0.0
    %1611 = vmatpush1.msra.mxu0 0.0
    %1612 = vmatprep.subr.mxu0 0.0
    %1613 = vmatpush1.msra.mxu0 %v1582
    %1614 = vmatprep.subr.mxu0 0.0
    %1615 = vmatpush1.msra.mxu0 %v1579
    %1616 = vmatprep.subr.mxu0 0.0
    %1617 = vmatpush2.msra.mxu0 0.0
    %1618 = vmatprep.subr.mxu0 0.0
    %1619 = vmatpush2.msra.mxu0 0.0
    %1620 = vmatprep.subr.mxu0 0.0
    %1621 = vmatpush2.msra.mxu0 0.0
    %1622 = vmatprep.subr.mxu0 0.0
    %1623 = vmatpush2.msra.mxu0 0.0
    %1624 = vmatprep.subr.mxu0 0.0
    %1625 = vmatpush2.msra.mxu0 0.0
    %1626 = vmatprep.subr.mxu0 0.0
    %1627 = vmatpush2.msra.mxu0 0.0
    %1628 = vmatprep.subr.mxu0 0.0
    %1629 = vmatpush2.msra.mxu0 0.0
    %1630 = vmatprep.subr.mxu0 0.0
    %1631 = vmatpush2.msra.mxu0 0.0
    %1632 = vmatprep.subr.mxu0 0.0
    %1633 = vmatpush2.msra.mxu0 0.0
    %1634 = vmatprep.subr.mxu0 0.0
    %1635 = vmatpush2.msra.mxu0 0.0
    %1636 = vmatprep.subr.mxu0 0.0
    %1637 = vmatpush2.msra.mxu0 0.0
    %1638 = vmatprep.subr.mxu0 0.0
    %1639 = vmatpush2.msra.mxu0 0.0
    %1640 = vmatprep.subr.mxu0 0.0
    %1641 = vmatpush2.msra.mxu0 0.0
    %1642 = vmatprep.subr.mxu0 0.0
    %1643 = vmatpush2.msra.mxu0 0.0
    %1644 = vmatprep.subr.mxu0 0.0
    %1645 = vmatpush2.msra.mxu0 0.0
    %1646 = vmatprep.subr.mxu0 0.0
    %1647 = vmatpush2.msra.mxu0 0.0
    %1648 = vmatprep.mubr.f32.mxu0 0.0
    %1649 = vmatmul.mubr.f32.gmra.mxu0 %v1139
    %v1650 = vpop.f32.mrf.mxu0
    %v1651 = vadd.f32 0.0, %v1650
    %v1652 = vpop.f32.mrf.mxu0
    %1653 = vmatprep.mubr.f32.mxu0 0.0
    %1654 = vmatmul.mubr.f32.gmra.mxu0 %v1142
    %v1655 = vpop.f32.mrf.mxu0
    %v1656 = vadd.f32 0.0, %v1655
    %v1657 = vpop.f32.mrf.mxu0
    %1658 = vdwg.mxu0
    %v1659 = vadd.f32 %v1403, %v1651
    %v1660 = vadd.f32 %v1404, %v1656
    %v1662 = vlaneseq
    %v1663 = vshrl.u32 %v1662, 7
    %v1664 = vsub.s32 0, %v1663
    %v1665 = vrot.slane %v1411, %v1664
    %v1668 = vsel %vm1321, %v1659, 0
    %v1671 = vsel %vm1321, %v1660, 0
    %1673 = vmatprep.subr.mxu0 0.0
    %1674 = vmatpush1.msra.mxu0 0.0
    %1675 = vmatprep.subr.mxu0 0.0
    %1676 = vmatpush1.msra.mxu0 0.0
    %1677 = vmatprep.subr.mxu0 0.0
    %1678 = vmatpush1.msra.mxu0 0.0
    %1679 = vmatprep.subr.mxu0 0.0
    %1680 = vmatpush1.msra.mxu0 0.0
    %1681 = vmatprep.subr.mxu0 0.0
    %1682 = vmatpush1.msra.mxu0 0.0
    %1683 = vmatprep.subr.mxu0 0.0
    %1684 = vmatpush1.msra.mxu0 0.0
    %1685 = vmatprep.subr.mxu0 0.0
    %1686 = vmatpush1.msra.mxu0 0.0
    %1687 = vmatprep.subr.mxu0 0.0
    %1688 = vmatpush1.msra.mxu0 0.0
    %1689 = vmatprep.subr.mxu0 0.0
    %1690 = vmatpush1.msra.mxu0 0.0
    %1691 = vmatprep.subr.mxu0 0.0
    %1692 = vmatpush1.msra.mxu0 0.0
    %1693 = vmatprep.subr.mxu0 0.0
    %1694 = vmatpush1.msra.mxu0 0.0
    %1695 = vmatprep.subr.mxu0 0.0
    %1696 = vmatpush1.msra.mxu0 0.0
    %1697 = vmatprep.subr.mxu0 0.0
    %1698 = vmatpush1.msra.mxu0 %v1410
    %1699 = vmatprep.subr.mxu0 0.0
    %1700 = vmatpush1.msra.mxu0 %v1409
    %1701 = vmatprep.subr.mxu0 0.0
    %1702 = vmatpush1.msra.mxu0 %v1408
    %1703 = vmatprep.subr.mxu0 0.0
    %1704 = vmatpush1.msra.mxu0 %v1407
    %1705 = vmatprep.subr.mxu0 0.0
    %1706 = vmatpush2.msra.mxu0 0.0
    %1707 = vmatprep.subr.mxu0 0.0
    %1708 = vmatpush2.msra.mxu0 0.0
    %1709 = vmatprep.subr.mxu0 0.0
    %1710 = vmatpush2.msra.mxu0 0.0
    %1711 = vmatprep.subr.mxu0 0.0
    %1712 = vmatpush2.msra.mxu0 0.0
    %1713 = vmatprep.subr.mxu0 0.0
    %1714 = vmatpush2.msra.mxu0 0.0
    %1715 = vmatprep.subr.mxu0 0.0
    %1716 = vmatpush2.msra.mxu0 0.0
    %1717 = vmatprep.subr.mxu0 0.0
    %1718 = vmatpush2.msra.mxu0 0.0
    %1719 = vmatprep.subr.mxu0 0.0
    %1720 = vmatpush2.msra.mxu0 0.0
    %1721 = vmatprep.subr.mxu0 0.0
    %1722 = vmatpush2.msra.mxu0 0.0
    %1723 = vmatprep.subr.mxu0 0.0
    %1724 = vmatpush2.msra.mxu0 0.0
    %1725 = vmatprep.subr.mxu0 0.0
    %1726 = vmatpush2.msra.mxu0 0.0
    %1727 = vmatprep.subr.mxu0 0.0
    %1728 = vmatpush2.msra.mxu0 0.0
    %1729 = vmatprep.subr.mxu0 0.0
    %1730 = vmatpush2.msra.mxu0 0.0
    %1731 = vmatprep.subr.mxu0 0.0
    %1732 = vmatpush2.msra.mxu0 0.0
    %1733 = vmatprep.subr.mxu0 0.0
    %1734 = vmatpush2.msra.mxu0 0.0
    %1735 = vmatprep.subr.mxu0 0.0
    %1736 = vmatpush2.msra.mxu0 0.0
    %1737 = vmatprep.mubr.f32.mxu0 0.0
    %1738 = vmatmul.mubr.f32.gmra.mxu0 %v1668
    %v1739 = vpop.f32.mrf.mxu0
    %v1740 = vadd.f32 %v1665, %v1739
    %v1741 = vpop.f32.mrf.mxu0
    %1742 = vmatprep.mubr.f32.mxu0 0.0
    %1743 = vmatmul.mubr.f32.gmra.mxu0 %v1671
    %v1744 = vpop.f32.mrf.mxu0
    %v1745 = vadd.f32 %v1665, %v1744
    %v1746 = vpop.f32.mrf.mxu0
    %1747 = vdwg.mxu0
    %v1748 = vmax.f32 %v1740, 0.0
    %v1749 = vmax.f32 %v1745, 0.0
    %v1751 = vlaneseq
    %v1752 = vshrl.u32 %v1751, 7
    %v1753 = vsub.s32 0, %v1752
    %v1754 = vrot.slane %v1416, %v1753
    %v1757 = vsel %vm1321, %v1748, 0
    %v1760 = vsel %vm1321, %v1749, 0
    %1762 = vmatprep.subr.mxu0 0.0
    %1763 = vmatpush1.msra.mxu0 0.0
    %1764 = vmatprep.subr.mxu0 0.0
    %1765 = vmatpush1.msra.mxu0 0.0
    %1766 = vmatprep.subr.mxu0 0.0
    %1767 = vmatpush1.msra.mxu0 0.0
    %1768 = vmatprep.subr.mxu0 0.0
    %1769 = vmatpush1.msra.mxu0 0.0
    %1770 = vmatprep.subr.mxu0 0.0
    %1771 = vmatpush1.msra.mxu0 0.0
    %1772 = vmatprep.subr.mxu0 0.0
    %1773 = vmatpush1.msra.mxu0 0.0
    %1774 = vmatprep.subr.mxu0 0.0
    %1775 = vmatpush1.msra.mxu0 0.0
    %1776 = vmatprep.subr.mxu0 0.0
    %1777 = vmatpush1.msra.mxu0 0.0
    %1778 = vmatprep.subr.mxu0 0.0
    %1779 = vmatpush1.msra.mxu0 0.0
    %1780 = vmatprep.subr.mxu0 0.0
    %1781 = vmatpush1.msra.mxu0 0.0
    %1782 = vmatprep.subr.mxu0 0.0
    %1783 = vmatpush1.msra.mxu0 0.0
    %1784 = vmatprep.subr.mxu0 0.0
    %1785 = vmatpush1.msra.mxu0 0.0
    %1786 = vmatprep.subr.mxu0 0.0
    %1787 = vmatpush1.msra.mxu0 %v1415
    %1788 = vmatprep.subr.mxu0 0.0
    %1789 = vmatpush1.msra.mxu0 %v1414
    %1790 = vmatprep.subr.mxu0 0.0
    %1791 = vmatpush1.msra.mxu0 %v1413
    %1792 = vmatprep.subr.mxu0 0.0
    %1793 = vmatpush1.msra.mxu0 %v1412
    %1794 = vmatprep.subr.mxu0 0.0
    %1795 = vmatpush2.msra.mxu0 0.0
    %1796 = vmatprep.subr.mxu0 0.0
    %1797 = vmatpush2.msra.mxu0 0.0
    %1798 = vmatprep.subr.mxu0 0.0
    %1799 = vmatpush2.msra.mxu0 0.0
    %1800 = vmatprep.subr.mxu0 0.0
    %1801 = vmatpush2.msra.mxu0 0.0
    %1802 = vmatprep.subr.mxu0 0.0
    %1803 = vmatpush2.msra.mxu0 0.0
    %1804 = vmatprep.subr.mxu0 0.0
    %1805 = vmatpush2.msra.mxu0 0.0
    %1806 = vmatprep.subr.mxu0 0.0
    %1807 = vmatpush2.msra.mxu0 0.0
    %1808 = vmatprep.subr.mxu0 0.0
    %1809 = vmatpush2.msra.mxu0 0.0
    %1810 = vmatprep.subr.mxu0 0.0
    %1811 = vmatpush2.msra.mxu0 0.0
    %1812 = vmatprep.subr.mxu0 0.0
    %1813 = vmatpush2.msra.mxu0 0.0
    %1814 = vmatprep.subr.mxu0 0.0
    %1815 = vmatpush2.msra.mxu0 0.0
    %1816 = vmatprep.subr.mxu0 0.0
    %1817 = vmatpush2.msra.mxu0 0.0
    %1818 = vmatprep.subr.mxu0 0.0
    %1819 = vmatpush2.msra.mxu0 0.0
    %1820 = vmatprep.subr.mxu0 0.0
    %1821 = vmatpush2.msra.mxu0 0.0
    %1822 = vmatprep.subr.mxu0 0.0
    %1823 = vmatpush2.msra.mxu0 0.0
    %1824 = vmatprep.subr.mxu0 0.0
    %1825 = vmatpush2.msra.mxu0 0.0
    %1826 = vmatprep.mubr.f32.mxu0 0.0
    %1827 = vmatmul.mubr.f32.gmra.mxu0 %v1757
    %v1828 = vpop.f32.mrf.mxu0
    %v1829 = vadd.f32 %v1754, %v1828
    %v1830 = vpop.f32.mrf.mxu0
    %1831 = vmatprep.mubr.f32.mxu0 0.0
    %1832 = vmatmul.mubr.f32.gmra.mxu0 %v1760
    %v1833 = vpop.f32.mrf.mxu0
    %v1834 = vadd.f32 %v1754, %v1833
    %v1835 = vpop.f32.mrf.mxu0
    %1836 = vdwg.mxu0
    %v1837 = vmax.f32 %v1829, 0.0
    %v1838 = vmax.f32 %v1834, 0.0
    %v1839 = vld [vmem:[#allocation9] sm:$0x1f]
    %v1841 = vsel %vm865, %v1839, 0
    %v1844 = vsel %vm869, %v1838, 0
    %1846 = vmatprep.subr.mxu0 0.0
    %1847 = vmatpush1.msra.mxu0 0.0
    %1848 = vmatprep.subr.mxu0 0.0
    %1849 = vmatpush1.msra.mxu0 0.0
    %1850 = vmatprep.subr.mxu0 0.0
    %1851 = vmatpush1.msra.mxu0 0.0
    %1852 = vmatprep.subr.mxu0 0.0
    %1853 = vmatpush1.msra.mxu0 0.0
    %1854 = vmatprep.subr.mxu0 0.0
    %1855 = vmatpush1.msra.mxu0 0.0
    %1856 = vmatprep.subr.mxu0 0.0
    %1857 = vmatpush1.msra.mxu0 0.0
    %1858 = vmatprep.subr.mxu0 0.0
    %1859 = vmatpush1.msra.mxu0 0.0
    %1860 = vmatprep.subr.mxu0 0.0
    %1861 = vmatpush1.msra.mxu0 0.0
    %1862 = vmatprep.subr.mxu0 0.0
    %1863 = vmatpush1.msra.mxu0 0.0
    %1864 = vmatprep.subr.mxu0 0.0
    %1865 = vmatpush1.msra.mxu0 0.0
    %1866 = vmatprep.subr.mxu0 0.0
    %1867 = vmatpush1.msra.mxu0 0.0
    %1868 = vmatprep.subr.mxu0 0.0
    %1869 = vmatpush1.msra.mxu0 0.0
    %1870 = vmatprep.subr.mxu0 0.0
    %1871 = vmatpush1.msra.mxu0 0.0
    %1872 = vmatprep.subr.mxu0 0.0
    %1873 = vmatpush1.msra.mxu0 0.0
    %1874 = vmatprep.subr.mxu0 0.0
    %1875 = vmatpush1.msra.mxu0 %v1844
    %1876 = vmatprep.subr.mxu0 0.0
    %1877 = vmatpush1.msra.mxu0 %v1837
    %1878 = vmatprep.subr.mxu0 0.0
    %1879 = vmatpush2.msra.mxu0 0.0
    %1880 = vmatprep.subr.mxu0 0.0
    %1881 = vmatpush2.msra.mxu0 0.0
    %1882 = vmatprep.subr.mxu0 0.0
    %1883 = vmatpush2.msra.mxu0 0.0
    %1884 = vmatprep.subr.mxu0 0.0
    %1885 = vmatpush2.msra.mxu0 0.0
    %1886 = vmatprep.subr.mxu0 0.0
    %1887 = vmatpush2.msra.mxu0 0.0
    %1888 = vmatprep.subr.mxu0 0.0
    %1889 = vmatpush2.msra.mxu0 0.0
    %1890 = vmatprep.subr.mxu0 0.0
    %1891 = vmatpush2.msra.mxu0 0.0
    %1892 = vmatprep.subr.mxu0 0.0
    %1893 = vmatpush2.msra.mxu0 0.0
    %1894 = vmatprep.subr.mxu0 0.0
    %1895 = vmatpush2.msra.mxu0 0.0
    %1896 = vmatprep.subr.mxu0 0.0
    %1897 = vmatpush2.msra.mxu0 0.0
    %1898 = vmatprep.subr.mxu0 0.0
    %1899 = vmatpush2.msra.mxu0 0.0
    %1900 = vmatprep.subr.mxu0 0.0
    %1901 = vmatpush2.msra.mxu0 0.0
    %1902 = vmatprep.subr.mxu0 0.0
    %1903 = vmatpush2.msra.mxu0 0.0
    %1904 = vmatprep.subr.mxu0 0.0
    %1905 = vmatpush2.msra.mxu0 0.0
    %1906 = vmatprep.subr.mxu0 0.0
    %1907 = vmatpush2.msra.mxu0 0.0
    %1908 = vmatprep.subr.mxu0 0.0
    %1909 = vmatpush2.msra.mxu0 0.0
    %1910 = vmatprep.mubr.f32.mxu0 0.0
    %1911 = vmatmul.mubr.f32.gmra.mxu0 %v1841
    %v1912 = vpop.f32.mrf.mxu0
    %v1913 = vadd.f32 0.0, %v1912
    %v1914 = vpop.f32.mrf.mxu0
    %1915 = vdwg.mxu0
    %v1916 = vld [vmem:[%s53] sm:$0xff]
    %v1917 = vld [vmem:[%s53 + $0x8] sm:$0xff]
    %v1918 = vld [vmem:[%s53 + $0x10] sm:$0xff]
    %v1919 = vld [vmem:[%s53 + $0x18] sm:$0xff]
    %v1920 = vld [vmem:[%s55] sm:$0x1]
    %v1922 = vlaneseq
    %v1923 = vshrl.u32 %v1922, 7
    %v1924 = vsub.s32 0, %v1923
    %v1925 = vrot.slane %v1920, %v1924
    %v1928 = vsel %vm1321, %v1913, 0
    %1930 = vmatprep.subr.mxu0 0.0
    %1931 = vmatpush1.msra.mxu0 0.0
    %1932 = vmatprep.subr.mxu0 0.0
    %1933 = vmatpush1.msra.mxu0 0.0
    %1934 = vmatprep.subr.mxu0 0.0
    %1935 = vmatpush1.msra.mxu0 0.0
    %1936 = vmatprep.subr.mxu0 0.0
    %1937 = vmatpush1.msra.mxu0 0.0
    %1938 = vmatprep.subr.mxu0 0.0
    %1939 = vmatpush1.msra.mxu0 0.0
    %1940 = vmatprep.subr.mxu0 0.0
    %1941 = vmatpush1.msra.mxu0 0.0
    %1942 = vmatprep.subr.mxu0 0.0
    %1943 = vmatpush1.msra.mxu0 0.0
    %1944 = vmatprep.subr.mxu0 0.0
    %1945 = vmatpush1.msra.mxu0 0.0
    %1946 = vmatprep.subr.mxu0 0.0
    %1947 = vmatpush1.msra.mxu0 0.0
    %1948 = vmatprep.subr.mxu0 0.0
    %1949 = vmatpush1.msra.mxu0 0.0
    %1950 = vmatprep.subr.mxu0 0.0
    %1951 = vmatpush1.msra.mxu0 0.0
    %1952 = vmatprep.subr.mxu0 0.0
    %1953 = vmatpush1.msra.mxu0 0.0
    %1954 = vmatprep.subr.mxu0 0.0
    %1955 = vmatpush1.msra.mxu0 %v1919
    %1956 = vmatprep.subr.mxu0 0.0
    %1957 = vmatpush1.msra.mxu0 %v1918
    %1958 = vmatprep.subr.mxu0 0.0
    %1959 = vmatpush1.msra.mxu0 %v1917
    %1960 = vmatprep.subr.mxu0 0.0
    %1961 = vmatpush1.msra.mxu0 %v1916
    %1962 = vmatprep.subr.mxu0 0.0
    %1963 = vmatpush2.msra.mxu0 0.0
    %1964 = vmatprep.subr.mxu0 0.0
    %1965 = vmatpush2.msra.mxu0 0.0
    %1966 = vmatprep.subr.mxu0 0.0
    %1967 = vmatpush2.msra.mxu0 0.0
    %1968 = vmatprep.subr.mxu0 0.0
    %1969 = vmatpush2.msra.mxu0 0.0
    %1970 = vmatprep.subr.mxu0 0.0
    %1971 = vmatpush2.msra.mxu0 0.0
    %1972 = vmatprep.subr.mxu0 0.0
    %1973 = vmatpush2.msra.mxu0 0.0
    %1974 = vmatprep.subr.mxu0 0.0
    %1975 = vmatpush2.msra.mxu0 0.0
    %1976 = vmatprep.subr.mxu0 0.0
    %1977 = vmatpush2.msra.mxu0 0.0
    %1978 = vmatprep.subr.mxu0 0.0
    %1979 = vmatpush2.msra.mxu0 0.0
    %1980 = vmatprep.subr.mxu0 0.0
    %1981 = vmatpush2.msra.mxu0 0.0
    %1982 = vmatprep.subr.mxu0 0.0
    %1983 = vmatpush2.msra.mxu0 0.0
    %1984 = vmatprep.subr.mxu0 0.0
    %1985 = vmatpush2.msra.mxu0 0.0
    %1986 = vmatprep.subr.mxu0 0.0
    %1987 = vmatpush2.msra.mxu0 0.0
    %1988 = vmatprep.subr.mxu0 0.0
    %1989 = vmatpush2.msra.mxu0 0.0
    %1990 = vmatprep.subr.mxu0 0.0
    %1991 = vmatpush2.msra.mxu0 0.0
    %1992 = vmatprep.subr.mxu0 0.0
    %1993 = vmatpush2.msra.mxu0 0.0
    %1994 = vmatprep.mubr.f32.mxu0 0.0
    %1995 = vmatmul.mubr.f32.gmra.mxu0 %v1928
    %v1996 = vpop.f32.mrf.mxu0
    %v1997 = vadd.f32 %v1925, %v1996
    %v1998 = vpop.f32.mrf.mxu0
    %1999 = vdwg.mxu0
    %v2000 = vmax.f32 %v1997, 0.0
    %v2001 = vld [vmem:[#allocation32] sm:$0xff]
    %v2002 = vld [vmem:[#allocation32 + $0x8] sm:$0xff]
    %v2003 = vld [vmem:[#allocation33] sm:$0x1]
    %v2005 = vlaneseq
    %v2006 = vshrl.u32 %v2005, 7
    %v2007 = vsub.s32 0, %v2006
    %v2008 = vrot.slane %v2003, %v2007
    %vm2010 = vcmask 130048
    %v2012 = vsel %vm2010, %v2000, 0
    %2014 = vmatprep.subr.mxu0 0.0
    %2015 = vmatpush1.msra.mxu0 0.0
    %2016 = vmatprep.subr.mxu0 0.0
    %2017 = vmatpush1.msra.mxu0 0.0
    %2018 = vmatprep.subr.mxu0 0.0
    %2019 = vmatpush1.msra.mxu0 0.0
    %2020 = vmatprep.subr.mxu0 0.0
    %2021 = vmatpush1.msra.mxu0 0.0
    %2022 = vmatprep.subr.mxu0 0.0
    %2023 = vmatpush1.msra.mxu0 0.0
    %2024 = vmatprep.subr.mxu0 0.0
    %2025 = vmatpush1.msra.mxu0 0.0
    %2026 = vmatprep.subr.mxu0 0.0
    %2027 = vmatpush1.msra.mxu0 0.0
    %2028 = vmatprep.subr.mxu0 0.0
    %2029 = vmatpush1.msra.mxu0 0.0
    %2030 = vmatprep.subr.mxu0 0.0
    %2031 = vmatpush1.msra.mxu0 0.0
    %2032 = vmatprep.subr.mxu0 0.0
    %2033 = vmatpush1.msra.mxu0 0.0
    %2034 = vmatprep.subr.mxu0 0.0
    %2035 = vmatpush1.msra.mxu0 0.0
    %2036 = vmatprep.subr.mxu0 0.0
    %2037 = vmatpush1.msra.mxu0 0.0
    %2038 = vmatprep.subr.mxu0 0.0
    %2039 = vmatpush1.msra.mxu0 0.0
    %2040 = vmatprep.subr.mxu0 0.0
    %2041 = vmatpush1.msra.mxu0 0.0
    %2042 = vmatprep.subr.mxu0 0.0
    %2043 = vmatpush1.msra.mxu0 %v2002
    %2044 = vmatprep.subr.mxu0 0.0
    %2045 = vmatpush1.msra.mxu0 %v2001
    %2046 = vmatprep.subr.mxu0 0.0
    %2047 = vmatpush2.msra.mxu0 0.0
    %2048 = vmatprep.subr.mxu0 0.0
    %2049 = vmatpush2.msra.mxu0 0.0
    %2050 = vmatprep.subr.mxu0 0.0
    %2051 = vmatpush2.msra.mxu0 0.0
    %2052 = vmatprep.subr.mxu0 0.0
    %2053 = vmatpush2.msra.mxu0 0.0
    %2054 = vmatprep.subr.mxu0 0.0
    %2055 = vmatpush2.msra.mxu0 0.0
    %2056 = vmatprep.subr.mxu0 0.0
    %2057 = vmatpush2.msra.mxu0 0.0
    %2058 = vmatprep.subr.mxu0 0.0
    %2059 = vmatpush2.msra.mxu0 0.0
    %2060 = vmatprep.subr.mxu0 0.0
    %2061 = vmatpush2.msra.mxu0 0.0
    %2062 = vmatprep.subr.mxu0 0.0
    %2063 = vmatpush2.msra.mxu0 0.0
    %2064 = vmatprep.subr.mxu0 0.0
    %2065 = vmatpush2.msra.mxu0 0.0
    %2066 = vmatprep.subr.mxu0 0.0
    %2067 = vmatpush2.msra.mxu0 0.0
    %2068 = vmatprep.subr.mxu0 0.0
    %2069 = vmatpush2.msra.mxu0 0.0
    %2070 = vmatprep.subr.mxu0 0.0
    %2071 = vmatpush2.msra.mxu0 0.0
    %2072 = vmatprep.subr.mxu0 0.0
    %2073 = vmatpush2.msra.mxu0 0.0
    %2074 = vmatprep.subr.mxu0 0.0
    %2075 = vmatpush2.msra.mxu0 0.0
    %2076 = vmatprep.subr.mxu0 0.0
    %2077 = vmatpush2.msra.mxu0 0.0
    %2078 = vmatprep.mubr.f32.mxu0 0.0
    %2079 = vmatmul.mubr.f32.gmra.mxu0 %v2012
    %v2080 = vpop.f32.mrf.mxu0
    %v2081 = vadd.f32 %v2008, %v2080
    %v2082 = vpop.f32.mrf.mxu0
    %2083 = vdwg.mxu0
    %v2084 = vld [vmem:[%s13] sm:$0xff]
    %v2085 = vld [vmem:[%s13 + $0x8] sm:$0x3]
    %vm2086 = vcmask 39936
    %v2088 = vsel %vm2086, %v2084, 0
    %v2091 = vsel %vm2086, %v2085, 0
    %vm2093 = vcmask 1044480
    %v2095 = vsel %vm2093, %v2081, 0
    %2097 = vmatprep.subr.mxu0 0.0
    %2098 = vmatpush1.msra.mxu0 0.0
    %2099 = vmatprep.subr.mxu0 0.0
    %2100 = vmatpush1.msra.mxu0 0.0
    %2101 = vmatprep.subr.mxu0 0.0
    %2102 = vmatpush1.msra.mxu0 0.0
    %2103 = vmatprep.subr.mxu0 0.0
    %2104 = vmatpush1.msra.mxu0 0.0
    %2105 = vmatprep.subr.mxu0 0.0
    %2106 = vmatpush1.msra.mxu0 0.0
    %2107 = vmatprep.subr.mxu0 0.0
    %2108 = vmatpush1.msra.mxu0 0.0
    %2109 = vmatprep.subr.mxu0 0.0
    %2110 = vmatpush1.msra.mxu0 0.0
    %2111 = vmatprep.subr.mxu0 0.0
    %2112 = vmatpush1.msra.mxu0 0.0
    %2113 = vmatprep.subr.mxu0 0.0
    %2114 = vmatpush1.msra.mxu0 0.0
    %2115 = vmatprep.subr.mxu0 0.0
    %2116 = vmatpush1.msra.mxu0 0.0
    %2117 = vmatprep.subr.mxu0 0.0
    %2118 = vmatpush1.msra.mxu0 0.0
    %2119 = vmatprep.subr.mxu0 0.0
    %2120 = vmatpush1.msra.mxu0 0.0
    %2121 = vmatprep.subr.mxu0 0.0
    %2122 = vmatpush1.msra.mxu0 0.0
    %2123 = vmatprep.subr.mxu0 0.0
    %2124 = vmatpush1.msra.mxu0 0.0
    %2125 = vmatprep.subr.mxu0 0.0
    %2126 = vmatpush1.msra.mxu0 0.0
    %2127 = vmatprep.subr.mxu0 0.0
    %2128 = vmatpush1.msra.mxu0 %v2095
    %2129 = vmatprep.subr.mxu0 0.0
    %2130 = vmatpush2.msra.mxu0 0.0
    %2131 = vmatprep.subr.mxu0 0.0
    %2132 = vmatpush2.msra.mxu0 0.0
    %2133 = vmatprep.subr.mxu0 0.0
    %2134 = vmatpush2.msra.mxu0 0.0
    %2135 = vmatprep.subr.mxu0 0.0
    %2136 = vmatpush2.msra.mxu0 0.0
    %2137 = vmatprep.subr.mxu0 0.0
    %2138 = vmatpush2.msra.mxu0 0.0
    %2139 = vmatprep.subr.mxu0 0.0
    %2140 = vmatpush2.msra.mxu0 0.0
    %2141 = vmatprep.subr.mxu0 0.0
    %2142 = vmatpush2.msra.mxu0 0.0
    %2143 = vmatprep.subr.mxu0 0.0
    %2144 = vmatpush2.msra.mxu0 0.0
    %2145 = vmatprep.subr.mxu0 0.0
    %2146 = vmatpush2.msra.mxu0 0.0
    %2147 = vmatprep.subr.mxu0 0.0
    %2148 = vmatpush2.msra.mxu0 0.0
    %2149 = vmatprep.subr.mxu0 0.0
    %2150 = vmatpush2.msra.mxu0 0.0
    %2151 = vmatprep.subr.mxu0 0.0
    %2152 = vmatpush2.msra.mxu0 0.0
    %2153 = vmatprep.subr.mxu0 0.0
    %2154 = vmatpush2.msra.mxu0 0.0
    %2155 = vmatprep.subr.mxu0 0.0
    %2156 = vmatpush2.msra.mxu0 0.0
    %2157 = vmatprep.subr.mxu0 0.0
    %2158 = vmatpush2.msra.mxu0 0.0
    %2159 = vmatprep.subr.mxu0 0.0
    %2160 = vmatpush2.msra.mxu0 0.0
    %2161 = vmatprep.mubr.f32.mxu0 0.0
    %2162 = vmatmul.mubr.f32.gmra.mxu0 %v2088
    %v2163 = vpop.f32.mrf.mxu0
    %v2164 = vadd.f32 0.0, %v2163
    %v2165 = vpop.f32.mrf.mxu0
    %2166 = vmatprep.mubr.f32.mxu0 0.0
    %2167 = vmatmul.mubr.f32.gmra.mxu0 %v2091
    %v2168 = vpop.f32.mrf.mxu0
    %v2169 = vadd.f32 0.0, %v2168
    %v2170 = vpop.f32.mrf.mxu0
    %2171 = vdwg.mxu0
    %v2172 = vld [vmem:[#allocation35] sm:$0xff]
    %v2173 = vld [vmem:[#allocation35 + $0x8] sm:$0xff]
    %v2175 = vsel %vm2010, %v2164, 0
    %v2178 = vsel %vm2010, %v2169, 0
    %2180 = vmatprep.subr.mxu0 0.0
    %2181 = vmatpush1.msra.mxu0 0.0
    %2182 = vmatprep.subr.mxu0 0.0
    %2183 = vmatpush1.msra.mxu0 0.0
    %2184 = vmatprep.subr.mxu0 0.0
    %2185 = vmatpush1.msra.mxu0 0.0
    %2186 = vmatprep.subr.mxu0 0.0
    %2187 = vmatpush1.msra.mxu0 0.0
    %2188 = vmatprep.subr.mxu0 0.0
    %2189 = vmatpush1.msra.mxu0 0.0
    %2190 = vmatprep.subr.mxu0 0.0
    %2191 = vmatpush1.msra.mxu0 0.0
    %2192 = vmatprep.subr.mxu0 0.0
    %2193 = vmatpush1.msra.mxu0 0.0
    %2194 = vmatprep.subr.mxu0 0.0
    %2195 = vmatpush1.msra.mxu0 0.0
    %2196 = vmatprep.subr.mxu0 0.0
    %2197 = vmatpush1.msra.mxu0 0.0
    %2198 = vmatprep.subr.mxu0 0.0
    %2199 = vmatpush1.msra.mxu0 0.0
    %2200 = vmatprep.subr.mxu0 0.0
    %2201 = vmatpush1.msra.mxu0 0.0
    %2202 = vmatprep.subr.mxu0 0.0
    %2203 = vmatpush1.msra.mxu0 0.0
    %2204 = vmatprep.subr.mxu0 0.0
    %2205 = vmatpush1.msra.mxu0 0.0
    %2206 = vmatprep.subr.mxu0 0.0
    %2207 = vmatpush1.msra.mxu0 0.0
    %2208 = vmatprep.subr.mxu0 0.0
    %2209 = vmatpush1.msra.mxu0 %v2173
    %2210 = vmatprep.subr.mxu0 0.0
    %2211 = vmatpush1.msra.mxu0 %v2172
    %2212 = vmatprep.subr.mxu0 0.0
    %2213 = vmatpush2.msra.mxu0 0.0
    %2214 = vmatprep.subr.mxu0 0.0
    %2215 = vmatpush2.msra.mxu0 0.0
    %2216 = vmatprep.subr.mxu0 0.0
    %2217 = vmatpush2.msra.mxu0 0.0
    %2218 = vmatprep.subr.mxu0 0.0
    %2219 = vmatpush2.msra.mxu0 0.0
    %2220 = vmatprep.subr.mxu0 0.0
    %2221 = vmatpush2.msra.mxu0 0.0
    %2222 = vmatprep.subr.mxu0 0.0
    %2223 = vmatpush2.msra.mxu0 0.0
    %2224 = vmatprep.subr.mxu0 0.0
    %2225 = vmatpush2.msra.mxu0 0.0
    %2226 = vmatprep.subr.mxu0 0.0
    %2227 = vmatpush2.msra.mxu0 0.0
    %2228 = vmatprep.subr.mxu0 0.0
    %2229 = vmatpush2.msra.mxu0 0.0
    %2230 = vmatprep.subr.mxu0 0.0
    %2231 = vmatpush2.msra.mxu0 0.0
    %2232 = vmatprep.subr.mxu0 0.0
    %2233 = vmatpush2.msra.mxu0 0.0
    %2234 = vmatprep.subr.mxu0 0.0
    %2235 = vmatpush2.msra.mxu0 0.0
    %2236 = vmatprep.subr.mxu0 0.0
    %2237 = vmatpush2.msra.mxu0 0.0
    %2238 = vmatprep.subr.mxu0 0.0
    %2239 = vmatpush2.msra.mxu0 0.0
    %2240 = vmatprep.subr.mxu0 0.0
    %2241 = vmatpush2.msra.mxu0 0.0
    %2242 = vmatprep.subr.mxu0 0.0
    %2243 = vmatpush2.msra.mxu0 0.0
    %2244 = vmatprep.mubr.f32.mxu0 0.0
    %2245 = vmatmul.mubr.f32.gmra.mxu0 %v2175
    %v2246 = vpop.f32.mrf.mxu0
    %v2247 = vadd.f32 0.0, %v2246
    %v2248 = vpop.f32.mrf.mxu0
    %2249 = vmatprep.mubr.f32.mxu0 0.0
    %2250 = vmatmul.mubr.f32.gmra.mxu0 %v2178
    %v2251 = vpop.f32.mrf.mxu0
    %v2252 = vadd.f32 0.0, %v2251
    %v2253 = vpop.f32.mrf.mxu0
    %2254 = vdwg.mxu0
    %v2255 = vld [vmem:[#allocation36] sm:$0xff]
    %v2256 = vld [vmem:[#allocation36 + $0x8] sm:$0xff]
    %2257 = vmatprep.subr.mxu0 0.0
    %2258 = vmatpush1.msra.mxu0 0.0
    %2259 = vmatprep.subr.mxu0 0.0
    %2260 = vmatpush1.msra.mxu0 0.0
    %2261 = vmatprep.subr.mxu0 0.0
    %2262 = vmatpush1.msra.mxu0 0.0
    %2263 = vmatprep.subr.mxu0 0.0
    %2264 = vmatpush1.msra.mxu0 0.0
    %2265 = vmatprep.subr.mxu0 0.0
    %2266 = vmatpush1.msra.mxu0 0.0
    %2267 = vmatprep.subr.mxu0 0.0
    %2268 = vmatpush1.msra.mxu0 0.0
    %2269 = vmatprep.subr.mxu0 0.0
    %2270 = vmatpush1.msra.mxu0 0.0
    %2271 = vmatprep.subr.mxu0 0.0
    %2272 = vmatpush1.msra.mxu0 0.0
    %2273 = vmatprep.subr.mxu0 0.0
    %2274 = vmatpush1.msra.mxu0 0.0
    %2275 = vmatprep.subr.mxu0 0.0
    %2276 = vmatpush1.msra.mxu0 0.0
    %2277 = vmatprep.subr.mxu0 0.0
    %2278 = vmatpush1.msra.mxu0 0.0
    %2279 = vmatprep.subr.mxu0 0.0
    %2280 = vmatpush1.msra.mxu0 0.0
    %2281 = vmatprep.subr.mxu0 0.0
    %2282 = vmatpush1.msra.mxu0 0.0
    %2283 = vmatprep.subr.mxu0 0.0
    %2284 = vmatpush1.msra.mxu0 0.0
    %2285 = vmatprep.subr.mxu0 0.0
    %2286 = vmatpush1.msra.mxu0 %v2256
    %2287 = vmatprep.subr.mxu0 0.0
    %2288 = vmatpush1.msra.mxu0 %v2255
    %2289 = vmatprep.subr.mxu0 0.0
    %2290 = vmatpush2.msra.mxu0 0.0
    %2291 = vmatprep.subr.mxu0 0.0
    %2292 = vmatpush2.msra.mxu0 0.0
    %2293 = vmatprep.subr.mxu0 0.0
    %2294 = vmatpush2.msra.mxu0 0.0
    %2295 = vmatprep.subr.mxu0 0.0
    %2296 = vmatpush2.msra.mxu0 0.0
    %2297 = vmatprep.subr.mxu0 0.0
    %2298 = vmatpush2.msra.mxu0 0.0
    %2299 = vmatprep.subr.mxu0 0.0
    %2300 = vmatpush2.msra.mxu0 0.0
    %2301 = vmatprep.subr.mxu0 0.0
    %2302 = vmatpush2.msra.mxu0 0.0
    %2303 = vmatprep.subr.mxu0 0.0
    %2304 = vmatpush2.msra.mxu0 0.0
    %2305 = vmatprep.subr.mxu0 0.0
    %2306 = vmatpush2.msra.mxu0 0.0
    %2307 = vmatprep.subr.mxu0 0.0
    %2308 = vmatpush2.msra.mxu0 0.0
    %2309 = vmatprep.subr.mxu0 0.0
    %2310 = vmatpush2.msra.mxu0 0.0
    %2311 = vmatprep.subr.mxu0 0.0
    %2312 = vmatpush2.msra.mxu0 0.0
    %2313 = vmatprep.subr.mxu0 0.0
    %2314 = vmatpush2.msra.mxu0 0.0
    %2315 = vmatprep.subr.mxu0 0.0
    %2316 = vmatpush2.msra.mxu0 0.0
    %2317 = vmatprep.subr.mxu0 0.0
    %2318 = vmatpush2.msra.mxu0 0.0
    %2319 = vmatprep.subr.mxu0 0.0
    %2320 = vmatpush2.msra.mxu0 0.0
    %2321 = vmatprep.mubr.f32.mxu0 0.0
    %2322 = vmatmul.mubr.f32.gmra.mxu0 %v2175
    %v2323 = vpop.f32.mrf.mxu0
    %v2324 = vadd.f32 0.0, %v2323
    %v2325 = vpop.f32.mrf.mxu0
    %2326 = vmatprep.mubr.f32.mxu0 0.0
    %2327 = vmatmul.mubr.f32.gmra.mxu0 %v2178
    %v2328 = vpop.f32.mrf.mxu0
    %v2329 = vadd.f32 0.0, %v2328
    %v2330 = vpop.f32.mrf.mxu0
    %2331 = vdwg.mxu0
    %v2332 = vld [vmem:[#allocation38] sm:$0xff]
    %v2333 = vld [vmem:[#allocation38 + $0x8] sm:$0xff]
    %2334 = vmatprep.subr.mxu0 0.0
    %2335 = vmatpush1.msra.mxu0 0.0
    %2336 = vmatprep.subr.mxu0 0.0
    %2337 = vmatpush1.msra.mxu0 0.0
    %2338 = vmatprep.subr.mxu0 0.0
    %2339 = vmatpush1.msra.mxu0 0.0
    %2340 = vmatprep.subr.mxu0 0.0
    %2341 = vmatpush1.msra.mxu0 0.0
    %2342 = vmatprep.subr.mxu0 0.0
    %2343 = vmatpush1.msra.mxu0 0.0
    %2344 = vmatprep.subr.mxu0 0.0
    %2345 = vmatpush1.msra.mxu0 0.0
    %2346 = vmatprep.subr.mxu0 0.0
    %2347 = vmatpush1.msra.mxu0 0.0
    %2348 = vmatprep.subr.mxu0 0.0
    %2349 = vmatpush1.msra.mxu0 0.0
    %2350 = vmatprep.subr.mxu0 0.0
    %2351 = vmatpush1.msra.mxu0 0.0
    %2352 = vmatprep.subr.mxu0 0.0
    %2353 = vmatpush1.msra.mxu0 0.0
    %2354 = vmatprep.subr.mxu0 0.0
    %2355 = vmatpush1.msra.mxu0 0.0
    %2356 = vmatprep.subr.mxu0 0.0
    %2357 = vmatpush1.msra.mxu0 0.0
    %2358 = vmatprep.subr.mxu0 0.0
    %2359 = vmatpush1.msra.mxu0 0.0
    %2360 = vmatprep.subr.mxu0 0.0
    %2361 = vmatpush1.msra.mxu0 0.0
    %2362 = vmatprep.subr.mxu0 0.0
    %2363 = vmatpush1.msra.mxu0 %v2333
    %2364 = vmatprep.subr.mxu0 0.0
    %2365 = vmatpush1.msra.mxu0 %v2332
    %2366 = vmatprep.subr.mxu0 0.0
    %2367 = vmatpush2.msra.mxu0 0.0
    %2368 = vmatprep.subr.mxu0 0.0
    %2369 = vmatpush2.msra.mxu0 0.0
    %2370 = vmatprep.subr.mxu0 0.0
    %2371 = vmatpush2.msra.mxu0 0.0
    %2372 = vmatprep.subr.mxu0 0.0
    %2373 = vmatpush2.msra.mxu0 0.0
    %2374 = vmatprep.subr.mxu0 0.0
    %2375 = vmatpush2.msra.mxu0 0.0
    %2376 = vmatprep.subr.mxu0 0.0
    %2377 = vmatpush2.msra.mxu0 0.0
    %2378 = vmatprep.subr.mxu0 0.0
    %2379 = vmatpush2.msra.mxu0 0.0
    %2380 = vmatprep.subr.mxu0 0.0
    %2381 = vmatpush2.msra.mxu0 0.0
    %2382 = vmatprep.subr.mxu0 0.0
    %2383 = vmatpush2.msra.mxu0 0.0
    %2384 = vmatprep.subr.mxu0 0.0
    %2385 = vmatpush2.msra.mxu0 0.0
    %2386 = vmatprep.subr.mxu0 0.0
    %2387 = vmatpush2.msra.mxu0 0.0
    %2388 = vmatprep.subr.mxu0 0.0
    %2389 = vmatpush2.msra.mxu0 0.0
    %2390 = vmatprep.subr.mxu0 0.0
    %2391 = vmatpush2.msra.mxu0 0.0
    %2392 = vmatprep.subr.mxu0 0.0
    %2393 = vmatpush2.msra.mxu0 0.0
    %2394 = vmatprep.subr.mxu0 0.0
    %2395 = vmatpush2.msra.mxu0 0.0
    %2396 = vmatprep.subr.mxu0 0.0
    %2397 = vmatpush2.msra.mxu0 0.0
    %2398 = vmatprep.mubr.f32.mxu0 0.0
    %2399 = vmatmul.mubr.f32.gmra.mxu0 %v2175
    %v2400 = vpop.f32.mrf.mxu0
    %v2401 = vadd.f32 0.0, %v2400
    %v2402 = vpop.f32.mrf.mxu0
    %2403 = vmatprep.mubr.f32.mxu0 0.0
    %2404 = vmatmul.mubr.f32.gmra.mxu0 %v2178
    %v2405 = vpop.f32.mrf.mxu0
    %v2406 = vadd.f32 0.0, %v2405
    %v2407 = vpop.f32.mrf.mxu0
    %2408 = vdwg.mxu0
    %v2409 = vld [vmem:[#allocation39] sm:$0xff]
    %v2410 = vld [vmem:[#allocation39 + $0x8] sm:$0xf]
    %v2411 = vld [vmem:[#allocation44] sm:$0x1]
    %v2413 = vlaneseq
    %v2414 = vshrl.u32 %v2413, 7
    %v2415 = vsub.s32 0, %v2414
    %v2416 = vrot.slane %v2411, %v2415
    %v2419 = vsel %vm869, %v2410, 0
    %2421 = vmatprep.subr.mxu0 0.0
    %2422 = vmatpush1.msra.mxu0 0.0
    %2423 = vmatprep.subr.mxu0 0.0
    %2424 = vmatpush1.msra.mxu0 0.0
    %2425 = vmatprep.subr.mxu0 0.0
    %2426 = vmatpush1.msra.mxu0 0.0
    %2427 = vmatprep.subr.mxu0 0.0
    %2428 = vmatpush1.msra.mxu0 0.0
    %2429 = vmatprep.subr.mxu0 0.0
    %2430 = vmatpush1.msra.mxu0 0.0
    %2431 = vmatprep.subr.mxu0 0.0
    %2432 = vmatpush1.msra.mxu0 0.0
    %2433 = vmatprep.subr.mxu0 0.0
    %2434 = vmatpush1.msra.mxu0 0.0
    %2435 = vmatprep.subr.mxu0 0.0
    %2436 = vmatpush1.msra.mxu0 0.0
    %2437 = vmatprep.subr.mxu0 0.0
    %2438 = vmatpush1.msra.mxu0 0.0
    %2439 = vmatprep.subr.mxu0 0.0
    %2440 = vmatpush1.msra.mxu0 0.0
    %2441 = vmatprep.subr.mxu0 0.0
    %2442 = vmatpush1.msra.mxu0 0.0
    %2443 = vmatprep.subr.mxu0 0.0
    %2444 = vmatpush1.msra.mxu0 0.0
    %2445 = vmatprep.subr.mxu0 0.0
    %2446 = vmatpush1.msra.mxu0 0.0
    %2447 = vmatprep.subr.mxu0 0.0
    %2448 = vmatpush1.msra.mxu0 0.0
    %2449 = vmatprep.subr.mxu0 0.0
    %2450 = vmatpush1.msra.mxu0 %v2419
    %2451 = vmatprep.subr.mxu0 0.0
    %2452 = vmatpush1.msra.mxu0 %v2409
    %2453 = vmatprep.subr.mxu0 0.0
    %2454 = vmatpush2.msra.mxu0 0.0
    %2455 = vmatprep.subr.mxu0 0.0
    %2456 = vmatpush2.msra.mxu0 0.0
    %2457 = vmatprep.subr.mxu0 0.0
    %2458 = vmatpush2.msra.mxu0 0.0
    %2459 = vmatprep.subr.mxu0 0.0
    %2460 = vmatpush2.msra.mxu0 0.0
    %2461 = vmatprep.subr.mxu0 0.0
    %2462 = vmatpush2.msra.mxu0 0.0
    %2463 = vmatprep.subr.mxu0 0.0
    %2464 = vmatpush2.msra.mxu0 0.0
    %2465 = vmatprep.subr.mxu0 0.0
    %2466 = vmatpush2.msra.mxu0 0.0
    %2467 = vmatprep.subr.mxu0 0.0
    %2468 = vmatpush2.msra.mxu0 0.0
    %2469 = vmatprep.subr.mxu0 0.0
    %2470 = vmatpush2.msra.mxu0 0.0
    %2471 = vmatprep.subr.mxu0 0.0
    %2472 = vmatpush2.msra.mxu0 0.0
    %2473 = vmatprep.subr.mxu0 0.0
    %2474 = vmatpush2.msra.mxu0 0.0
    %2475 = vmatprep.subr.mxu0 0.0
    %2476 = vmatpush2.msra.mxu0 0.0
    %2477 = vmatprep.subr.mxu0 0.0
    %2478 = vmatpush2.msra.mxu0 0.0
    %2479 = vmatprep.subr.mxu0 0.0
    %2480 = vmatpush2.msra.mxu0 0.0
    %2481 = vmatprep.subr.mxu0 0.0
    %2482 = vmatpush2.msra.mxu0 0.0
    %2483 = vmatprep.subr.mxu0 0.0
    %2484 = vmatpush2.msra.mxu0 0.0
    %2485 = vmatprep.mubr.f32.mxu0 0.0
    %2486 = vmatmul.mubr.f32.gmra.mxu0 %v867
    %v2487 = vpop.f32.mrf.mxu0
    %v2488 = vadd.f32 %v2416, %v2487
    %v2489 = vpop.f32.mrf.mxu0
    %2490 = vdwg.mxu0
    %v2491 = vld [vmem:[#allocation41] sm:$0xff]
    %v2492 = vld [vmem:[#allocation41 + $0x8] sm:$0xf]
    %v2493 = vld [vmem:[#allocation45] sm:$0x1]
    %v2495 = vlaneseq
    %v2496 = vshrl.u32 %v2495, 7
    %v2497 = vsub.s32 0, %v2496
    %v2498 = vrot.slane %v2493, %v2497
    %v2501 = vsel %vm869, %v2492, 0
    %2503 = vmatprep.subr.mxu0 0.0
    %2504 = vmatpush1.msra.mxu0 0.0
    %2505 = vmatprep.subr.mxu0 0.0
    %2506 = vmatpush1.msra.mxu0 0.0
    %2507 = vmatprep.subr.mxu0 0.0
    %2508 = vmatpush1.msra.mxu0 0.0
    %2509 = vmatprep.subr.mxu0 0.0
    %2510 = vmatpush1.msra.mxu0 0.0
    %2511 = vmatprep.subr.mxu0 0.0
    %2512 = vmatpush1.msra.mxu0 0.0
    %2513 = vmatprep.subr.mxu0 0.0
    %2514 = vmatpush1.msra.mxu0 0.0
    %2515 = vmatprep.subr.mxu0 0.0
    %2516 = vmatpush1.msra.mxu0 0.0
    %2517 = vmatprep.subr.mxu0 0.0
    %2518 = vmatpush1.msra.mxu0 0.0
    %2519 = vmatprep.subr.mxu0 0.0
    %2520 = vmatpush1.msra.mxu0 0.0
    %2521 = vmatprep.subr.mxu0 0.0
    %2522 = vmatpush1.msra.mxu0 0.0
    %2523 = vmatprep.subr.mxu0 0.0
    %2524 = vmatpush1.msra.mxu0 0.0
    %2525 = vmatprep.subr.mxu0 0.0
    %2526 = vmatpush1.msra.mxu0 0.0
    %2527 = vmatprep.subr.mxu0 0.0
    %2528 = vmatpush1.msra.mxu0 0.0
    %2529 = vmatprep.subr.mxu0 0.0
    %2530 = vmatpush1.msra.mxu0 0.0
    %2531 = vmatprep.subr.mxu0 0.0
    %2532 = vmatpush1.msra.mxu0 %v2501
    %2533 = vmatprep.subr.mxu0 0.0
    %2534 = vmatpush1.msra.mxu0 %v2491
    %2535 = vmatprep.subr.mxu0 0.0
    %2536 = vmatpush2.msra.mxu0 0.0
    %2537 = vmatprep.subr.mxu0 0.0
    %2538 = vmatpush2.msra.mxu0 0.0
    %2539 = vmatprep.subr.mxu0 0.0
    %2540 = vmatpush2.msra.mxu0 0.0
    %2541 = vmatprep.subr.mxu0 0.0
    %2542 = vmatpush2.msra.mxu0 0.0
    %2543 = vmatprep.subr.mxu0 0.0
    %2544 = vmatpush2.msra.mxu0 0.0
    %2545 = vmatprep.subr.mxu0 0.0
    %2546 = vmatpush2.msra.mxu0 0.0
    %2547 = vmatprep.subr.mxu0 0.0
    %2548 = vmatpush2.msra.mxu0 0.0
    %2549 = vmatprep.subr.mxu0 0.0
    %2550 = vmatpush2.msra.mxu0 0.0
    %2551 = vmatprep.subr.mxu0 0.0
    %2552 = vmatpush2.msra.mxu0 0.0
    %2553 = vmatprep.subr.mxu0 0.0
    %2554 = vmatpush2.msra.mxu0 0.0
    %2555 = vmatprep.subr.mxu0 0.0
    %2556 = vmatpush2.msra.mxu0 0.0
    %2557 = vmatprep.subr.mxu0 0.0
    %2558 = vmatpush2.msra.mxu0 0.0
    %2559 = vmatprep.subr.mxu0 0.0
    %2560 = vmatpush2.msra.mxu0 0.0
    %2561 = vmatprep.subr.mxu0 0.0
    %2562 = vmatpush2.msra.mxu0 0.0
    %2563 = vmatprep.subr.mxu0 0.0
    %2564 = vmatpush2.msra.mxu0 0.0
    %2565 = vmatprep.subr.mxu0 0.0
    %2566 = vmatpush2.msra.mxu0 0.0
    %2567 = vmatprep.mubr.f32.mxu0 0.0
    %2568 = vmatmul.mubr.f32.gmra.mxu0 %v867
    %v2569 = vpop.f32.mrf.mxu0
    %v2570 = vadd.f32 %v2498, %v2569
    %v2571 = vpop.f32.mrf.mxu0
    %2572 = vdwg.mxu0
    %v2573 = vld [vmem:[#allocation42] sm:$0xff]
    %v2574 = vld [vmem:[#allocation42 + $0x8] sm:$0xf]
    %v2575 = vld [vmem:[#allocation47] sm:$0x1]
    %v2577 = vlaneseq
    %v2578 = vshrl.u32 %v2577, 7
    %v2579 = vsub.s32 0, %v2578
    %v2580 = vrot.slane %v2575, %v2579
    %v2583 = vsel %vm869, %v2574, 0
    %2585 = vmatprep.subr.mxu0 0.0
    %2586 = vmatpush1.msra.mxu0 0.0
    %2587 = vmatprep.subr.mxu0 0.0
    %2588 = vmatpush1.msra.mxu0 0.0
    %2589 = vmatprep.subr.mxu0 0.0
    %2590 = vmatpush1.msra.mxu0 0.0
    %2591 = vmatprep.subr.mxu0 0.0
    %2592 = vmatpush1.msra.mxu0 0.0
    %2593 = vmatprep.subr.mxu0 0.0
    %2594 = vmatpush1.msra.mxu0 0.0
    %2595 = vmatprep.subr.mxu0 0.0
    %2596 = vmatpush1.msra.mxu0 0.0
    %2597 = vmatprep.subr.mxu0 0.0
    %2598 = vmatpush1.msra.mxu0 0.0
    %2599 = vmatprep.subr.mxu0 0.0
    %2600 = vmatpush1.msra.mxu0 0.0
    %2601 = vmatprep.subr.mxu0 0.0
    %2602 = vmatpush1.msra.mxu0 0.0
    %2603 = vmatprep.subr.mxu0 0.0
    %2604 = vmatpush1.msra.mxu0 0.0
    %2605 = vmatprep.subr.mxu0 0.0
    %2606 = vmatpush1.msra.mxu0 0.0
    %2607 = vmatprep.subr.mxu0 0.0
    %2608 = vmatpush1.msra.mxu0 0.0
    %2609 = vmatprep.subr.mxu0 0.0
    %2610 = vmatpush1.msra.mxu0 0.0
    %2611 = vmatprep.subr.mxu0 0.0
    %2612 = vmatpush1.msra.mxu0 0.0
    %2613 = vmatprep.subr.mxu0 0.0
    %2614 = vmatpush1.msra.mxu0 %v2583
    %2615 = vmatprep.subr.mxu0 0.0
    %2616 = vmatpush1.msra.mxu0 %v2573
    %2617 = vmatprep.subr.mxu0 0.0
    %2618 = vmatpush2.msra.mxu0 0.0
    %2619 = vmatprep.subr.mxu0 0.0
    %2620 = vmatpush2.msra.mxu0 0.0
    %2621 = vmatprep.subr.mxu0 0.0
    %2622 = vmatpush2.msra.mxu0 0.0
    %2623 = vmatprep.subr.mxu0 0.0
    %2624 = vmatpush2.msra.mxu0 0.0
    %2625 = vmatprep.subr.mxu0 0.0
    %2626 = vmatpush2.msra.mxu0 0.0
    %2627 = vmatprep.subr.mxu0 0.0
    %2628 = vmatpush2.msra.mxu0 0.0
    %2629 = vmatprep.subr.mxu0 0.0
    %2630 = vmatpush2.msra.mxu0 0.0
    %2631 = vmatprep.subr.mxu0 0.0
    %2632 = vmatpush2.msra.mxu0 0.0
    %2633 = vmatprep.subr.mxu0 0.0
    %2634 = vmatpush2.msra.mxu0 0.0
    %2635 = vmatprep.subr.mxu0 0.0
    %2636 = vmatpush2.msra.mxu0 0.0
    %2637 = vmatprep.subr.mxu0 0.0
    %2638 = vmatpush2.msra.mxu0 0.0
    %2639 = vmatprep.subr.mxu0 0.0
    %2640 = vmatpush2.msra.mxu0 0.0
    %2641 = vmatprep.subr.mxu0 0.0
    %2642 = vmatpush2.msra.mxu0 0.0
    %2643 = vmatprep.subr.mxu0 0.0
    %2644 = vmatpush2.msra.mxu0 0.0
    %2645 = vmatprep.subr.mxu0 0.0
    %2646 = vmatpush2.msra.mxu0 0.0
    %2647 = vmatprep.subr.mxu0 0.0
    %2648 = vmatpush2.msra.mxu0 0.0
    %2649 = vmatprep.mubr.f32.mxu0 0.0
    %2650 = vmatmul.mubr.f32.gmra.mxu0 %v867
    %v2651 = vpop.f32.mrf.mxu0
    %v2652 = vadd.f32 %v2580, %v2651
    %v2653 = vpop.f32.mrf.mxu0
    %2654 = vdwg.mxu0
    %v2655 = vld [vmem:[%s79] sm:$0xff]
    %v2656 = vld [vmem:[%s79 + $0x8] sm:$0xff]
    %v2657 = vld [vmem:[%s79 + $0x10] sm:$0xff]
    %v2658 = vld [vmem:[%s79 + $0x18] sm:$0xff]
    %v2659 = vld [vmem:[%s81] sm:$0xff]
    %v2660 = vld [vmem:[%s81 + $0x8] sm:$0xff]
    %v2661 = vld [vmem:[%s81 + $0x10] sm:$0xff]
    %v2662 = vld [vmem:[%s81 + $0x18] sm:$0xff]
    %v2663 = vld [vmem:[%s83] sm:$0xff]
    %v2664 = vld [vmem:[%s83 + $0x8] sm:$0xff]
    %v2665 = vld [vmem:[%s83 + $0x10] sm:$0xff]
    %v2666 = vld [vmem:[%s83 + $0x18] sm:$0xff]
    %v2667 = vld [vmem:[#allocation48] sm:$0x1]
    %v2668 = vld [vmem:[#allocation50] sm:$0x1]
    %v2669 = vld [vmem:[%s89] sm:$0x1]
    %v2670 = vld [vmem:[%s91] sm:$0xff]
    %v2671 = vld [vmem:[%s91 + $0x8] sm:$0xff]
    %v2672 = vld [vmem:[%s91 + $0x10] sm:$0xff]
    %v2673 = vld [vmem:[%s91 + $0x18] sm:$0xff]
    %v2674 = vld [vmem:[%s93] sm:$0xff]
    %v2675 = vld [vmem:[%s93 + $0x8] sm:$0xff]
    %v2676 = vld [vmem:[%s93 + $0x10] sm:$0xff]
    %v2677 = vld [vmem:[%s93 + $0x18] sm:$0xff]
    %v2678 = vld [vmem:[%s95] sm:$0xff]
    %v2679 = vld [vmem:[%s95 + $0x8] sm:$0xff]
    %v2680 = vld [vmem:[%s95 + $0x10] sm:$0xff]
    %v2681 = vld [vmem:[%s95 + $0x18] sm:$0xff]
    %v2682 = vld [vmem:[%s97] sm:$0x1]
    %v2683 = vld [vmem:[%s99] sm:$0x1]
    %v2684 = vld [vmem:[%s101] sm:$0x1]
    %v2685 = vld [vmem:[#allocation51] sm:$0xff]
    %v2686 = vld [vmem:[#allocation51 + $0x8] sm:$0xff]
    %v2687 = vld [vmem:[#allocation51 + $0x10] sm:$0xff]
    %v2688 = vld [vmem:[#allocation51 + $0x18] sm:$0xff]
    %v2689 = vld [vmem:[#allocation53] sm:$0xff]
    %v2690 = vld [vmem:[#allocation53 + $0x8] sm:$0xff]
    %v2691 = vld [vmem:[#allocation53 + $0x10] sm:$0xff]
    %v2692 = vld [vmem:[#allocation53 + $0x18] sm:$0xff]
    %v2693 = vld [vmem:[#allocation54] sm:$0xff]
    %v2694 = vld [vmem:[#allocation54 + $0x8] sm:$0xff]
    %v2695 = vld [vmem:[#allocation54 + $0x10] sm:$0xff]
    %v2696 = vld [vmem:[#allocation54 + $0x18] sm:$0xff]
    %v2697 = vld [vmem:[%s109] sm:$0x1]
    %v2698 = vld [vmem:[%s111] sm:$0x1]
    %v2699 = vld [vmem:[%s113] sm:$0x1]
    %v2700 = vld [vmem:[%s15] sm:$0xff]
    %v2701 = vld [vmem:[%s15 + $0x8] sm:$0x3]
    %v2702 = vadd.f32 %v2247, %v2488
    %v2703 = vadd.f32 %v2324, %v2570
    %v2704 = vadd.f32 %v2401, %v2652
    %v2706 = vsel %vm1321, %v940, 0
    %2708 = vmatprep.subr.mxu0 0.0
    %2709 = vmatpush1.msra.mxu0 0.0
    %2710 = vmatprep.subr.mxu0 0.0
    %2711 = vmatpush1.msra.mxu0 0.0
    %2712 = vmatprep.subr.mxu0 0.0
    %2713 = vmatpush1.msra.mxu0 0.0
    %2714 = vmatprep.subr.mxu0 0.0
    %2715 = vmatpush1.msra.mxu0 0.0
    %2716 = vmatprep.subr.mxu0 0.0
    %2717 = vmatpush1.msra.mxu0 0.0
    %2718 = vmatprep.subr.mxu0 0.0
    %2719 = vmatpush1.msra.mxu0 0.0
    %2720 = vmatprep.subr.mxu0 0.0
    %2721 = vmatpush1.msra.mxu0 0.0
    %2722 = vmatprep.subr.mxu0 0.0
    %2723 = vmatpush1.msra.mxu0 0.0
    %2724 = vmatprep.subr.mxu0 0.0
    %2725 = vmatpush1.msra.mxu0 0.0
    %2726 = vmatprep.subr.mxu0 0.0
    %2727 = vmatpush1.msra.mxu0 0.0
    %2728 = vmatprep.subr.mxu0 0.0
    %2729 = vmatpush1.msra.mxu0 0.0
    %2730 = vmatprep.subr.mxu0 0.0
    %2731 = vmatpush1.msra.mxu0 0.0
    %2732 = vmatprep.subr.mxu0 0.0
    %2733 = vmatpush1.msra.mxu0 %v2658
    %2734 = vmatprep.subr.mxu0 0.0
    %2735 = vmatpush1.msra.mxu0 %v2657
    %2736 = vmatprep.subr.mxu0 0.0
    %2737 = vmatpush1.msra.mxu0 %v2656
    %2738 = vmatprep.subr.mxu0 0.0
    %2739 = vmatpush1.msra.mxu0 %v2655
    %2740 = vmatprep.subr.mxu0 0.0
    %2741 = vmatpush2.msra.mxu0 0.0
    %2742 = vmatprep.subr.mxu0 0.0
    %2743 = vmatpush2.msra.mxu0 0.0
    %2744 = vmatprep.subr.mxu0 0.0
    %2745 = vmatpush2.msra.mxu0 0.0
    %2746 = vmatprep.subr.mxu0 0.0
    %2747 = vmatpush2.msra.mxu0 0.0
    %2748 = vmatprep.subr.mxu0 0.0
    %2749 = vmatpush2.msra.mxu0 0.0
    %2750 = vmatprep.subr.mxu0 0.0
    %2751 = vmatpush2.msra.mxu0 0.0
    %2752 = vmatprep.subr.mxu0 0.0
    %2753 = vmatpush2.msra.mxu0 0.0
    %2754 = vmatprep.subr.mxu0 0.0
    %2755 = vmatpush2.msra.mxu0 0.0
    %2756 = vmatprep.subr.mxu0 0.0
    %2757 = vmatpush2.msra.mxu0 0.0
    %2758 = vmatprep.subr.mxu0 0.0
    %2759 = vmatpush2.msra.mxu0 0.0
    %2760 = vmatprep.subr.mxu0 0.0
    %2761 = vmatpush2.msra.mxu0 0.0
    %2762 = vmatprep.subr.mxu0 0.0
    %2763 = vmatpush2.msra.mxu0 0.0
    %2764 = vmatprep.subr.mxu0 0.0
    %2765 = vmatpush2.msra.mxu0 0.0
    %2766 = vmatprep.subr.mxu0 0.0
    %2767 = vmatpush2.msra.mxu0 0.0
    %2768 = vmatprep.subr.mxu0 0.0
    %2769 = vmatpush2.msra.mxu0 0.0
    %2770 = vmatprep.subr.mxu0 0.0
    %2771 = vmatpush2.msra.mxu0 0.0
    %2772 = vmatprep.mubr.f32.mxu0 0.0
    %2773 = vmatmul.mubr.f32.gmra.mxu0 %v2706
    %v2774 = vpop.f32.mrf.mxu0
    %v2775 = vadd.f32 0.0, %v2774
    %v2776 = vpop.f32.mrf.mxu0
    %2777 = vdwg.mxu0
    %v2778 = vadd.f32 %v2702, %v2775
    %v2780 = vlaneseq
    %v2781 = vshrl.u32 %v2780, 7
    %v2782 = vsub.s32 0, %v2781
    %v2783 = vrot.slane %v2667, %v2782
    %v2785 = vadd.f32 %v2778, %v2783
    %v2786 = vxor.u32 %v2785, 2147483648
    %v2787 = vmul.f32 %v2786, 1.442695
    %v2788 = vpow.pop %v2787
    %v2789 = vadd.f32 %v2788, 1.0
    %v2790 = vrcp.pop %v2789
    %v2791 = vmul.f32 1.0, %v2790
    %2792 = vmatprep.subr.mxu0 0.0
    %2793 = vmatpush1.msra.mxu0 0.0
    %2794 = vmatprep.subr.mxu0 0.0
    %2795 = vmatpush1.msra.mxu0 0.0
    %2796 = vmatprep.subr.mxu0 0.0
    %2797 = vmatpush1.msra.mxu0 0.0
    %2798 = vmatprep.subr.mxu0 0.0
    %2799 = vmatpush1.msra.mxu0 0.0
    %2800 = vmatprep.subr.mxu0 0.0
    %2801 = vmatpush1.msra.mxu0 0.0
    %2802 = vmatprep.subr.mxu0 0.0
    %2803 = vmatpush1.msra.mxu0 0.0
    %2804 = vmatprep.subr.mxu0 0.0
    %2805 = vmatpush1.msra.mxu0 0.0
    %2806 = vmatprep.subr.mxu0 0.0
    %2807 = vmatpush1.msra.mxu0 0.0
    %2808 = vmatprep.subr.mxu0 0.0
    %2809 = vmatpush1.msra.mxu0 0.0
    %2810 = vmatprep.subr.mxu0 0.0
    %2811 = vmatpush1.msra.mxu0 0.0
    %2812 = vmatprep.subr.mxu0 0.0
    %2813 = vmatpush1.msra.mxu0 0.0
    %2814 = vmatprep.subr.mxu0 0.0
    %2815 = vmatpush1.msra.mxu0 0.0
    %2816 = vmatprep.subr.mxu0 0.0
    %2817 = vmatpush1.msra.mxu0 %v2662
    %2818 = vmatprep.subr.mxu0 0.0
    %2819 = vmatpush1.msra.mxu0 %v2661
    %2820 = vmatprep.subr.mxu0 0.0
    %2821 = vmatpush1.msra.mxu0 %v2660
    %2822 = vmatprep.subr.mxu0 0.0
    %2823 = vmatpush1.msra.mxu0 %v2659
    %2824 = vmatprep.subr.mxu0 0.0
    %2825 = vmatpush2.msra.mxu0 0.0
    %2826 = vmatprep.subr.mxu0 0.0
    %2827 = vmatpush2.msra.mxu0 0.0
    %2828 = vmatprep.subr.mxu0 0.0
    %2829 = vmatpush2.msra.mxu0 0.0
    %2830 = vmatprep.subr.mxu0 0.0
    %2831 = vmatpush2.msra.mxu0 0.0
    %2832 = vmatprep.subr.mxu0 0.0
    %2833 = vmatpush2.msra.mxu0 0.0
    %2834 = vmatprep.subr.mxu0 0.0
    %2835 = vmatpush2.msra.mxu0 0.0
    %2836 = vmatprep.subr.mxu0 0.0
    %2837 = vmatpush2.msra.mxu0 0.0
    %2838 = vmatprep.subr.mxu0 0.0
    %2839 = vmatpush2.msra.mxu0 0.0
    %2840 = vmatprep.subr.mxu0 0.0
    %2841 = vmatpush2.msra.mxu0 0.0
    %2842 = vmatprep.subr.mxu0 0.0
    %2843 = vmatpush2.msra.mxu0 0.0
    %2844 = vmatprep.subr.mxu0 0.0
    %2845 = vmatpush2.msra.mxu0 0.0
    %2846 = vmatprep.subr.mxu0 0.0
    %2847 = vmatpush2.msra.mxu0 0.0
    %2848 = vmatprep.subr.mxu0 0.0
    %2849 = vmatpush2.msra.mxu0 0.0
    %2850 = vmatprep.subr.mxu0 0.0
    %2851 = vmatpush2.msra.mxu0 0.0
    %2852 = vmatprep.subr.mxu0 0.0
    %2853 = vmatpush2.msra.mxu0 0.0
    %2854 = vmatprep.subr.mxu0 0.0
    %2855 = vmatpush2.msra.mxu0 0.0
    %2856 = vmatprep.mubr.f32.mxu0 0.0
    %2857 = vmatmul.mubr.f32.gmra.mxu0 %v2706
    %v2858 = vpop.f32.mrf.mxu0
    %v2859 = vadd.f32 0.0, %v2858
    %v2860 = vpop.f32.mrf.mxu0
    %2861 = vdwg.mxu0
    %v2862 = vadd.f32 %v2703, %v2859
    %v2864 = vlaneseq
    %v2865 = vshrl.u32 %v2864, 7
    %v2866 = vsub.s32 0, %v2865
    %v2867 = vrot.slane %v2668, %v2866
    %v2869 = vadd.f32 %v2862, %v2867
    %v2870 = vxor.u32 %v2869, 2147483648
    %v2871 = vmul.f32 %v2870, 1.442695
    %v2872 = vpow.pop %v2871
    %v2873 = vadd.f32 %v2872, 1.0
    %v2874 = vrcp.pop %v2873
    %v2875 = vmul.f32 1.0, %v2874
    %v2877 = vlaneseq
    %v2878 = vshrl.u32 %v2877, 7
    %v2879 = vsub.s32 0, %v2878
    %v2880 = vrot.slane %v2669, %v2879
    %2882 = vmatprep.subr.mxu0 0.0
    %2883 = vmatpush1.msra.mxu0 0.0
    %2884 = vmatprep.subr.mxu0 0.0
    %2885 = vmatpush1.msra.mxu0 0.0
    %2886 = vmatprep.subr.mxu0 0.0
    %2887 = vmatpush1.msra.mxu0 0.0
    %2888 = vmatprep.subr.mxu0 0.0
    %2889 = vmatpush1.msra.mxu0 0.0
    %2890 = vmatprep.subr.mxu0 0.0
    %2891 = vmatpush1.msra.mxu0 0.0
    %2892 = vmatprep.subr.mxu0 0.0
    %2893 = vmatpush1.msra.mxu0 0.0
    %2894 = vmatprep.subr.mxu0 0.0
    %2895 = vmatpush1.msra.mxu0 0.0
    %2896 = vmatprep.subr.mxu0 0.0
    %2897 = vmatpush1.msra.mxu0 0.0
    %2898 = vmatprep.subr.mxu0 0.0
    %2899 = vmatpush1.msra.mxu0 0.0
    %2900 = vmatprep.subr.mxu0 0.0
    %2901 = vmatpush1.msra.mxu0 0.0
    %2902 = vmatprep.subr.mxu0 0.0
    %2903 = vmatpush1.msra.mxu0 0.0
    %2904 = vmatprep.subr.mxu0 0.0
    %2905 = vmatpush1.msra.mxu0 0.0
    %2906 = vmatprep.subr.mxu0 0.0
    %2907 = vmatpush1.msra.mxu0 %v2666
    %2908 = vmatprep.subr.mxu0 0.0
    %2909 = vmatpush1.msra.mxu0 %v2665
    %2910 = vmatprep.subr.mxu0 0.0
    %2911 = vmatpush1.msra.mxu0 %v2664
    %2912 = vmatprep.subr.mxu0 0.0
    %2913 = vmatpush1.msra.mxu0 %v2663
    %2914 = vmatprep.subr.mxu0 0.0
    %2915 = vmatpush2.msra.mxu0 0.0
    %2916 = vmatprep.subr.mxu0 0.0
    %2917 = vmatpush2.msra.mxu0 0.0
    %2918 = vmatprep.subr.mxu0 0.0
    %2919 = vmatpush2.msra.mxu0 0.0
    %2920 = vmatprep.subr.mxu0 0.0
    %2921 = vmatpush2.msra.mxu0 0.0
    %2922 = vmatprep.subr.mxu0 0.0
    %2923 = vmatpush2.msra.mxu0 0.0
    %2924 = vmatprep.subr.mxu0 0.0
    %2925 = vmatpush2.msra.mxu0 0.0
    %2926 = vmatprep.subr.mxu0 0.0
    %2927 = vmatpush2.msra.mxu0 0.0
    %2928 = vmatprep.subr.mxu0 0.0
    %2929 = vmatpush2.msra.mxu0 0.0
    %2930 = vmatprep.subr.mxu0 0.0
    %2931 = vmatpush2.msra.mxu0 0.0
    %2932 = vmatprep.subr.mxu0 0.0
    %2933 = vmatpush2.msra.mxu0 0.0
    %2934 = vmatprep.subr.mxu0 0.0
    %2935 = vmatpush2.msra.mxu0 0.0
    %2936 = vmatprep.subr.mxu0 0.0
    %2937 = vmatpush2.msra.mxu0 0.0
    %2938 = vmatprep.subr.mxu0 0.0
    %2939 = vmatpush2.msra.mxu0 0.0
    %2940 = vmatprep.subr.mxu0 0.0
    %2941 = vmatpush2.msra.mxu0 0.0
    %2942 = vmatprep.subr.mxu0 0.0
    %2943 = vmatpush2.msra.mxu0 0.0
    %2944 = vmatprep.subr.mxu0 0.0
    %2945 = vmatpush2.msra.mxu0 0.0
    %2946 = vmatprep.mubr.f32.mxu0 0.0
    %2947 = vmatmul.mubr.f32.gmra.mxu0 %v2706
    %v2948 = vpop.f32.mrf.mxu0
    %v2949 = vadd.f32 %v2880, %v2948
    %v2950 = vpop.f32.mrf.mxu0
    %2951 = vdwg.mxu0
    %v2952 = vmul.f32 %v2791, %v2949
    %v2953 = vadd.f32 %v2704, %v2952
    %v2954 = vtanh.pop %v2953
    %v2955 = vsub.f32 1.0, %v2875
    %v2956 = vmul.f32 %v2955, %v2954
    %v2957 = vmul.f32 %v2875, %v940
    %v2958 = vadd.f32 %v2956, %v2957
    %v2960 = vlaneseq
    %v2961 = vshrl.u32 %v2960, 7
    %v2962 = vsub.s32 0, %v2961
    %v2963 = vrot.slane %v2682, %v2962
    %v2966 = vsel %vm1321, %v2958, 0
    %2968 = vmatprep.subr.mxu0 0.0
    %2969 = vmatpush1.msra.mxu0 0.0
    %2970 = vmatprep.subr.mxu0 0.0
    %2971 = vmatpush1.msra.mxu0 0.0
    %2972 = vmatprep.subr.mxu0 0.0
    %2973 = vmatpush1.msra.mxu0 0.0
    %2974 = vmatprep.subr.mxu0 0.0
    %2975 = vmatpush1.msra.mxu0 0.0
    %2976 = vmatprep.subr.mxu0 0.0
    %2977 = vmatpush1.msra.mxu0 0.0
    %2978 = vmatprep.subr.mxu0 0.0
    %2979 = vmatpush1.msra.mxu0 0.0
    %2980 = vmatprep.subr.mxu0 0.0
    %2981 = vmatpush1.msra.mxu0 0.0
    %2982 = vmatprep.subr.mxu0 0.0
    %2983 = vmatpush1.msra.mxu0 0.0
    %2984 = vmatprep.subr.mxu0 0.0
    %2985 = vmatpush1.msra.mxu0 0.0
    %2986 = vmatprep.subr.mxu0 0.0
    %2987 = vmatpush1.msra.mxu0 0.0
    %2988 = vmatprep.subr.mxu0 0.0
    %2989 = vmatpush1.msra.mxu0 0.0
    %2990 = vmatprep.subr.mxu0 0.0
    %2991 = vmatpush1.msra.mxu0 0.0
    %2992 = vmatprep.subr.mxu0 0.0
    %2993 = vmatpush1.msra.mxu0 %v2673
    %2994 = vmatprep.subr.mxu0 0.0
    %2995 = vmatpush1.msra.mxu0 %v2672
    %2996 = vmatprep.subr.mxu0 0.0
    %2997 = vmatpush1.msra.mxu0 %v2671
    %2998 = vmatprep.subr.mxu0 0.0
    %2999 = vmatpush1.msra.mxu0 %v2670
    %3000 = vmatprep.subr.mxu0 0.0
    %3001 = vmatpush2.msra.mxu0 0.0
    %3002 = vmatprep.subr.mxu0 0.0
    %3003 = vmatpush2.msra.mxu0 0.0
    %3004 = vmatprep.subr.mxu0 0.0
    %3005 = vmatpush2.msra.mxu0 0.0
    %3006 = vmatprep.subr.mxu0 0.0
    %3007 = vmatpush2.msra.mxu0 0.0
    %3008 = vmatprep.subr.mxu0 0.0
    %3009 = vmatpush2.msra.mxu0 0.0
    %3010 = vmatprep.subr.mxu0 0.0
    %3011 = vmatpush2.msra.mxu0 0.0
    %3012 = vmatprep.subr.mxu0 0.0
    %3013 = vmatpush2.msra.mxu0 0.0
    %3014 = vmatprep.subr.mxu0 0.0
    %3015 = vmatpush2.msra.mxu0 0.0
    %3016 = vmatprep.subr.mxu0 0.0
    %3017 = vmatpush2.msra.mxu0 0.0
    %3018 = vmatprep.subr.mxu0 0.0
    %3019 = vmatpush2.msra.mxu0 0.0
    %3020 = vmatprep.subr.mxu0 0.0
    %3021 = vmatpush2.msra.mxu0 0.0
    %3022 = vmatprep.subr.mxu0 0.0
    %3023 = vmatpush2.msra.mxu0 0.0
    %3024 = vmatprep.subr.mxu0 0.0
    %3025 = vmatpush2.msra.mxu0 0.0
    %3026 = vmatprep.subr.mxu0 0.0
    %3027 = vmatpush2.msra.mxu0 0.0
    %3028 = vmatprep.subr.mxu0 0.0
    %3029 = vmatpush2.msra.mxu0 0.0
    %3030 = vmatprep.subr.mxu0 0.0
    %3031 = vmatpush2.msra.mxu0 0.0
    %3032 = vmatprep.mubr.f32.mxu0 0.0
    %3033 = vmatmul.mubr.f32.gmra.mxu0 %v2966
    %v3034 = vpop.f32.mrf.mxu0
    %v3035 = vadd.f32 %v2963, %v3034
    %v3036 = vpop.f32.mrf.mxu0
    %3037 = vdwg.mxu0
    %v3039 = vlaneseq
    %v3040 = vshrl.u32 %v3039, 7
    %v3041 = vsub.s32 0, %v3040
    %v3042 = vrot.slane %v2683, %v3041
    %3044 = vmatprep.subr.mxu0 0.0
    %3045 = vmatpush1.msra.mxu0 0.0
    %3046 = vmatprep.subr.mxu0 0.0
    %3047 = vmatpush1.msra.mxu0 0.0
    %3048 = vmatprep.subr.mxu0 0.0
    %3049 = vmatpush1.msra.mxu0 0.0
    %3050 = vmatprep.subr.mxu0 0.0
    %3051 = vmatpush1.msra.mxu0 0.0
    %3052 = vmatprep.subr.mxu0 0.0
    %3053 = vmatpush1.msra.mxu0 0.0
    %3054 = vmatprep.subr.mxu0 0.0
    %3055 = vmatpush1.msra.mxu0 0.0
    %3056 = vmatprep.subr.mxu0 0.0
    %3057 = vmatpush1.msra.mxu0 0.0
    %3058 = vmatprep.subr.mxu0 0.0
    %3059 = vmatpush1.msra.mxu0 0.0
    %3060 = vmatprep.subr.mxu0 0.0
    %3061 = vmatpush1.msra.mxu0 0.0
    %3062 = vmatprep.subr.mxu0 0.0
    %3063 = vmatpush1.msra.mxu0 0.0
    %3064 = vmatprep.subr.mxu0 0.0
    %3065 = vmatpush1.msra.mxu0 0.0
    %3066 = vmatprep.subr.mxu0 0.0
    %3067 = vmatpush1.msra.mxu0 0.0
    %3068 = vmatprep.subr.mxu0 0.0
    %3069 = vmatpush1.msra.mxu0 %v2677
    %3070 = vmatprep.subr.mxu0 0.0
    %3071 = vmatpush1.msra.mxu0 %v2676
    %3072 = vmatprep.subr.mxu0 0.0
    %3073 = vmatpush1.msra.mxu0 %v2675
    %3074 = vmatprep.subr.mxu0 0.0
    %3075 = vmatpush1.msra.mxu0 %v2674
    %3076 = vmatprep.subr.mxu0 0.0
    %3077 = vmatpush2.msra.mxu0 0.0
    %3078 = vmatprep.subr.mxu0 0.0
    %3079 = vmatpush2.msra.mxu0 0.0
    %3080 = vmatprep.subr.mxu0 0.0
    %3081 = vmatpush2.msra.mxu0 0.0
    %3082 = vmatprep.subr.mxu0 0.0
    %3083 = vmatpush2.msra.mxu0 0.0
    %3084 = vmatprep.subr.mxu0 0.0
    %3085 = vmatpush2.msra.mxu0 0.0
    %3086 = vmatprep.subr.mxu0 0.0
    %3087 = vmatpush2.msra.mxu0 0.0
    %3088 = vmatprep.subr.mxu0 0.0
    %3089 = vmatpush2.msra.mxu0 0.0
    %3090 = vmatprep.subr.mxu0 0.0
    %3091 = vmatpush2.msra.mxu0 0.0
    %3092 = vmatprep.subr.mxu0 0.0
    %3093 = vmatpush2.msra.mxu0 0.0
    %3094 = vmatprep.subr.mxu0 0.0
    %3095 = vmatpush2.msra.mxu0 0.0
    %3096 = vmatprep.subr.mxu0 0.0
    %3097 = vmatpush2.msra.mxu0 0.0
    %3098 = vmatprep.subr.mxu0 0.0
    %3099 = vmatpush2.msra.mxu0 0.0
    %3100 = vmatprep.subr.mxu0 0.0
    %3101 = vmatpush2.msra.mxu0 0.0
    %3102 = vmatprep.subr.mxu0 0.0
    %3103 = vmatpush2.msra.mxu0 0.0
    %3104 = vmatprep.subr.mxu0 0.0
    %3105 = vmatpush2.msra.mxu0 0.0
    %3106 = vmatprep.subr.mxu0 0.0
    %3107 = vmatpush2.msra.mxu0 0.0
    %3108 = vmatprep.mubr.f32.mxu0 0.0
    %3109 = vmatmul.mubr.f32.gmra.mxu0 %v2966
    %v3110 = vpop.f32.mrf.mxu0
    %v3111 = vadd.f32 %v3042, %v3110
    %v3112 = vpop.f32.mrf.mxu0
    %3113 = vdwg.mxu0
    %v3115 = vlaneseq
    %v3116 = vshrl.u32 %v3115, 7
    %v3117 = vsub.s32 0, %v3116
    %v3118 = vrot.slane %v2684, %v3117
    %3120 = vmatprep.subr.mxu0 0.0
    %3121 = vmatpush1.msra.mxu0 0.0
    %3122 = vmatprep.subr.mxu0 0.0
    %3123 = vmatpush1.msra.mxu0 0.0
    %3124 = vmatprep.subr.mxu0 0.0
    %3125 = vmatpush1.msra.mxu0 0.0
    %3126 = vmatprep.subr.mxu0 0.0
    %3127 = vmatpush1.msra.mxu0 0.0
    %3128 = vmatprep.subr.mxu0 0.0
    %3129 = vmatpush1.msra.mxu0 0.0
    %3130 = vmatprep.subr.mxu0 0.0
    %3131 = vmatpush1.msra.mxu0 0.0
    %3132 = vmatprep.subr.mxu0 0.0
    %3133 = vmatpush1.msra.mxu0 0.0
    %3134 = vmatprep.subr.mxu0 0.0
    %3135 = vmatpush1.msra.mxu0 0.0
    %3136 = vmatprep.subr.mxu0 0.0
    %3137 = vmatpush1.msra.mxu0 0.0
    %3138 = vmatprep.subr.mxu0 0.0
    %3139 = vmatpush1.msra.mxu0 0.0
    %3140 = vmatprep.subr.mxu0 0.0
    %3141 = vmatpush1.msra.mxu0 0.0
    %3142 = vmatprep.subr.mxu0 0.0
    %3143 = vmatpush1.msra.mxu0 0.0
    %3144 = vmatprep.subr.mxu0 0.0
    %3145 = vmatpush1.msra.mxu0 %v2681
    %3146 = vmatprep.subr.mxu0 0.0
    %3147 = vmatpush1.msra.mxu0 %v2680
    %3148 = vmatprep.subr.mxu0 0.0
    %3149 = vmatpush1.msra.mxu0 %v2679
    %3150 = vmatprep.subr.mxu0 0.0
    %3151 = vmatpush1.msra.mxu0 %v2678
    %3152 = vmatprep.subr.mxu0 0.0
    %3153 = vmatpush2.msra.mxu0 0.0
    %3154 = vmatprep.subr.mxu0 0.0
    %3155 = vmatpush2.msra.mxu0 0.0
    %3156 = vmatprep.subr.mxu0 0.0
    %3157 = vmatpush2.msra.mxu0 0.0
    %3158 = vmatprep.subr.mxu0 0.0
    %3159 = vmatpush2.msra.mxu0 0.0
    %3160 = vmatprep.subr.mxu0 0.0
    %3161 = vmatpush2.msra.mxu0 0.0
    %3162 = vmatprep.subr.mxu0 0.0
    %3163 = vmatpush2.msra.mxu0 0.0
    %3164 = vmatprep.subr.mxu0 0.0
    %3165 = vmatpush2.msra.mxu0 0.0
    %3166 = vmatprep.subr.mxu0 0.0
    %3167 = vmatpush2.msra.mxu0 0.0
    %3168 = vmatprep.subr.mxu0 0.0
    %3169 = vmatpush2.msra.mxu0 0.0
    %3170 = vmatprep.subr.mxu0 0.0
    %3171 = vmatpush2.msra.mxu0 0.0
    %3172 = vmatprep.subr.mxu0 0.0
    %3173 = vmatpush2.msra.mxu0 0.0
    %3174 = vmatprep.subr.mxu0 0.0
    %3175 = vmatpush2.msra.mxu0 0.0
    %3176 = vmatprep.subr.mxu0 0.0
    %3177 = vmatpush2.msra.mxu0 0.0
    %3178 = vmatprep.subr.mxu0 0.0
    %3179 = vmatpush2.msra.mxu0 0.0
    %3180 = vmatprep.subr.mxu0 0.0
    %3181 = vmatpush2.msra.mxu0 0.0
    %3182 = vmatprep.subr.mxu0 0.0
    %3183 = vmatpush2.msra.mxu0 0.0
    %3184 = vmatprep.mubr.f32.mxu0 0.0
    %3185 = vmatmul.mubr.f32.gmra.mxu0 %v2966
    %v3186 = vpop.f32.mrf.mxu0
    %v3187 = vadd.f32 %v3118, %v3186
    %v3188 = vpop.f32.mrf.mxu0
    %3189 = vdwg.mxu0
    %3190 = vmatprep.subr.mxu0 0.0
    %3191 = vmatpush1.msra.mxu0 0.0
    %3192 = vmatprep.subr.mxu0 0.0
    %3193 = vmatpush1.msra.mxu0 0.0
    %3194 = vmatprep.subr.mxu0 0.0
    %3195 = vmatpush1.msra.mxu0 0.0
    %3196 = vmatprep.subr.mxu0 0.0
    %3197 = vmatpush1.msra.mxu0 0.0
    %3198 = vmatprep.subr.mxu0 0.0
    %3199 = vmatpush1.msra.mxu0 0.0
    %3200 = vmatprep.subr.mxu0 0.0
    %3201 = vmatpush1.msra.mxu0 0.0
    %3202 = vmatprep.subr.mxu0 0.0
    %3203 = vmatpush1.msra.mxu0 0.0
    %3204 = vmatprep.subr.mxu0 0.0
    %3205 = vmatpush1.msra.mxu0 0.0
    %3206 = vmatprep.subr.mxu0 0.0
    %3207 = vmatpush1.msra.mxu0 0.0
    %3208 = vmatprep.subr.mxu0 0.0
    %3209 = vmatpush1.msra.mxu0 0.0
    %3210 = vmatprep.subr.mxu0 0.0
    %3211 = vmatpush1.msra.mxu0 0.0
    %3212 = vmatprep.subr.mxu0 0.0
    %3213 = vmatpush1.msra.mxu0 0.0
    %3214 = vmatprep.subr.mxu0 0.0
    %3215 = vmatpush1.msra.mxu0 %v2688
    %3216 = vmatprep.subr.mxu0 0.0
    %3217 = vmatpush1.msra.mxu0 %v2687
    %3218 = vmatprep.subr.mxu0 0.0
    %3219 = vmatpush1.msra.mxu0 %v2686
    %3220 = vmatprep.subr.mxu0 0.0
    %3221 = vmatpush1.msra.mxu0 %v2685
    %3222 = vmatprep.subr.mxu0 0.0
    %3223 = vmatpush2.msra.mxu0 0.0
    %3224 = vmatprep.subr.mxu0 0.0
    %3225 = vmatpush2.msra.mxu0 0.0
    %3226 = vmatprep.subr.mxu0 0.0
    %3227 = vmatpush2.msra.mxu0 0.0
    %3228 = vmatprep.subr.mxu0 0.0
    %3229 = vmatpush2.msra.mxu0 0.0
    %3230 = vmatprep.subr.mxu0 0.0
    %3231 = vmatpush2.msra.mxu0 0.0
    %3232 = vmatprep.subr.mxu0 0.0
    %3233 = vmatpush2.msra.mxu0 0.0
    %3234 = vmatprep.subr.mxu0 0.0
    %3235 = vmatpush2.msra.mxu0 0.0
    %3236 = vmatprep.subr.mxu0 0.0
    %3237 = vmatpush2.msra.mxu0 0.0
    %3238 = vmatprep.subr.mxu0 0.0
    %3239 = vmatpush2.msra.mxu0 0.0
    %3240 = vmatprep.subr.mxu0 0.0
    %3241 = vmatpush2.msra.mxu0 0.0
    %3242 = vmatprep.subr.mxu0 0.0
    %3243 = vmatpush2.msra.mxu0 0.0
    %3244 = vmatprep.subr.mxu0 0.0
    %3245 = vmatpush2.msra.mxu0 0.0
    %3246 = vmatprep.subr.mxu0 0.0
    %3247 = vmatpush2.msra.mxu0 0.0
    %3248 = vmatprep.subr.mxu0 0.0
    %3249 = vmatpush2.msra.mxu0 0.0
    %3250 = vmatprep.subr.mxu0 0.0
    %3251 = vmatpush2.msra.mxu0 0.0
    %3252 = vmatprep.subr.mxu0 0.0
    %3253 = vmatpush2.msra.mxu0 0.0
    %3254 = vmatprep.mubr.f32.mxu0 0.0
    %3255 = vmatmul.mubr.f32.gmra.mxu0 %v2706
    %v3256 = vpop.f32.mrf.mxu0
    %v3257 = vadd.f32 0.0, %v3256
    %v3258 = vpop.f32.mrf.mxu0
    %3259 = vdwg.mxu0
    %v3260 = vadd.f32 %v3035, %v3257
    %v3262 = vlaneseq
    %v3263 = vshrl.u32 %v3262, 7
    %v3264 = vsub.s32 0, %v3263
    %v3265 = vrot.slane %v2697, %v3264
    %v3267 = vadd.f32 %v3260, %v3265
    %v3268 = vxor.u32 %v3267, 2147483648
    %v3269 = vmul.f32 %v3268, 1.442695
    %v3270 = vpow.pop %v3269
    %v3271 = vadd.f32 %v3270, 1.0
    %v3272 = vrcp.pop %v3271
    %v3273 = vmul.f32 1.0, %v3272
    %3274 = vmatprep.subr.mxu0 0.0
    %3275 = vmatpush1.msra.mxu0 0.0
    %3276 = vmatprep.subr.mxu0 0.0
    %3277 = vmatpush1.msra.mxu0 0.0
    %3278 = vmatprep.subr.mxu0 0.0
    %3279 = vmatpush1.msra.mxu0 0.0
    %3280 = vmatprep.subr.mxu0 0.0
    %3281 = vmatpush1.msra.mxu0 0.0
    %3282 = vmatprep.subr.mxu0 0.0
    %3283 = vmatpush1.msra.mxu0 0.0
    %3284 = vmatprep.subr.mxu0 0.0
    %3285 = vmatpush1.msra.mxu0 0.0
    %3286 = vmatprep.subr.mxu0 0.0
    %3287 = vmatpush1.msra.mxu0 0.0
    %3288 = vmatprep.subr.mxu0 0.0
    %3289 = vmatpush1.msra.mxu0 0.0
    %3290 = vmatprep.subr.mxu0 0.0
    %3291 = vmatpush1.msra.mxu0 0.0
    %3292 = vmatprep.subr.mxu0 0.0
    %3293 = vmatpush1.msra.mxu0 0.0
    %3294 = vmatprep.subr.mxu0 0.0
    %3295 = vmatpush1.msra.mxu0 0.0
    %3296 = vmatprep.subr.mxu0 0.0
    %3297 = vmatpush1.msra.mxu0 0.0
    %3298 = vmatprep.subr.mxu0 0.0
    %3299 = vmatpush1.msra.mxu0 %v2692
    %3300 = vmatprep.subr.mxu0 0.0
    %3301 = vmatpush1.msra.mxu0 %v2691
    %3302 = vmatprep.subr.mxu0 0.0
    %3303 = vmatpush1.msra.mxu0 %v2690
    %3304 = vmatprep.subr.mxu0 0.0
    %3305 = vmatpush1.msra.mxu0 %v2689
    %3306 = vmatprep.subr.mxu0 0.0
    %3307 = vmatpush2.msra.mxu0 0.0
    %3308 = vmatprep.subr.mxu0 0.0
    %3309 = vmatpush2.msra.mxu0 0.0
    %3310 = vmatprep.subr.mxu0 0.0
    %3311 = vmatpush2.msra.mxu0 0.0
    %3312 = vmatprep.subr.mxu0 0.0
    %3313 = vmatpush2.msra.mxu0 0.0
    %3314 = vmatprep.subr.mxu0 0.0
    %3315 = vmatpush2.msra.mxu0 0.0
    %3316 = vmatprep.subr.mxu0 0.0
    %3317 = vmatpush2.msra.mxu0 0.0
    %3318 = vmatprep.subr.mxu0 0.0
    %3319 = vmatpush2.msra.mxu0 0.0
    %3320 = vmatprep.subr.mxu0 0.0
    %3321 = vmatpush2.msra.mxu0 0.0
    %3322 = vmatprep.subr.mxu0 0.0
    %3323 = vmatpush2.msra.mxu0 0.0
    %3324 = vmatprep.subr.mxu0 0.0
    %3325 = vmatpush2.msra.mxu0 0.0
    %3326 = vmatprep.subr.mxu0 0.0
    %3327 = vmatpush2.msra.mxu0 0.0
    %3328 = vmatprep.subr.mxu0 0.0
    %3329 = vmatpush2.msra.mxu0 0.0
    %3330 = vmatprep.subr.mxu0 0.0
    %3331 = vmatpush2.msra.mxu0 0.0
    %3332 = vmatprep.subr.mxu0 0.0
    %3333 = vmatpush2.msra.mxu0 0.0
    %3334 = vmatprep.subr.mxu0 0.0
    %3335 = vmatpush2.msra.mxu0 0.0
    %3336 = vmatprep.subr.mxu0 0.0
    %3337 = vmatpush2.msra.mxu0 0.0
    %3338 = vmatprep.mubr.f32.mxu0 0.0
    %3339 = vmatmul.mubr.f32.gmra.mxu0 %v2706
    %v3340 = vpop.f32.mrf.mxu0
    %v3341 = vadd.f32 0.0, %v3340
    %v3342 = vpop.f32.mrf.mxu0
    %3343 = vdwg.mxu0
    %v3344 = vadd.f32 %v3111, %v3341
    %v3346 = vlaneseq
    %v3347 = vshrl.u32 %v3346, 7
    %v3348 = vsub.s32 0, %v3347
    %v3349 = vrot.slane %v2698, %v3348
    %v3351 = vadd.f32 %v3344, %v3349
    %v3352 = vxor.u32 %v3351, 2147483648
    %v3353 = vmul.f32 %v3352, 1.442695
    %v3354 = vpow.pop %v3353
    %v3355 = vadd.f32 %v3354, 1.0
    %v3356 = vrcp.pop %v3355
    %v3357 = vmul.f32 1.0, %v3356
    %v3359 = vlaneseq
    %v3360 = vshrl.u32 %v3359, 7
    %v3361 = vsub.s32 0, %v3360
    %v3362 = vrot.slane %v2699, %v3361
    %3364 = vmatprep.subr.mxu0 0.0
    %3365 = vmatpush1.msra.mxu0 0.0
    %3366 = vmatprep.subr.mxu0 0.0
    %3367 = vmatpush1.msra.mxu0 0.0
    %3368 = vmatprep.subr.mxu0 0.0
    %3369 = vmatpush1.msra.mxu0 0.0
    %3370 = vmatprep.subr.mxu0 0.0
    %3371 = vmatpush1.msra.mxu0 0.0
    %3372 = vmatprep.subr.mxu0 0.0
    %3373 = vmatpush1.msra.mxu0 0.0
    %3374 = vmatprep.subr.mxu0 0.0
    %3375 = vmatpush1.msra.mxu0 0.0
    %3376 = vmatprep.subr.mxu0 0.0
    %3377 = vmatpush1.msra.mxu0 0.0
    %3378 = vmatprep.subr.mxu0 0.0
    %3379 = vmatpush1.msra.mxu0 0.0
    %3380 = vmatprep.subr.mxu0 0.0
    %3381 = vmatpush1.msra.mxu0 0.0
    %3382 = vmatprep.subr.mxu0 0.0
    %3383 = vmatpush1.msra.mxu0 0.0
    %3384 = vmatprep.subr.mxu0 0.0
    %3385 = vmatpush1.msra.mxu0 0.0
    %3386 = vmatprep.subr.mxu0 0.0
    %3387 = vmatpush1.msra.mxu0 0.0
    %3388 = vmatprep.subr.mxu0 0.0
    %3389 = vmatpush1.msra.mxu0 %v2696
    %3390 = vmatprep.subr.mxu0 0.0
    %3391 = vmatpush1.msra.mxu0 %v2695
    %3392 = vmatprep.subr.mxu0 0.0
    %3393 = vmatpush1.msra.mxu0 %v2694
    %3394 = vmatprep.subr.mxu0 0.0
    %3395 = vmatpush1.msra.mxu0 %v2693
    %3396 = vmatprep.subr.mxu0 0.0
    %3397 = vmatpush2.msra.mxu0 0.0
    %3398 = vmatprep.subr.mxu0 0.0
    %3399 = vmatpush2.msra.mxu0 0.0
    %3400 = vmatprep.subr.mxu0 0.0
    %3401 = vmatpush2.msra.mxu0 0.0
    %3402 = vmatprep.subr.mxu0 0.0
    %3403 = vmatpush2.msra.mxu0 0.0
    %3404 = vmatprep.subr.mxu0 0.0
    %3405 = vmatpush2.msra.mxu0 0.0
    %3406 = vmatprep.subr.mxu0 0.0
    %3407 = vmatpush2.msra.mxu0 0.0
    %3408 = vmatprep.subr.mxu0 0.0
    %3409 = vmatpush2.msra.mxu0 0.0
    %3410 = vmatprep.subr.mxu0 0.0
    %3411 = vmatpush2.msra.mxu0 0.0
    %3412 = vmatprep.subr.mxu0 0.0
    %3413 = vmatpush2.msra.mxu0 0.0
    %3414 = vmatprep.subr.mxu0 0.0
    %3415 = vmatpush2.msra.mxu0 0.0
    %3416 = vmatprep.subr.mxu0 0.0
    %3417 = vmatpush2.msra.mxu0 0.0
    %3418 = vmatprep.subr.mxu0 0.0
    %3419 = vmatpush2.msra.mxu0 0.0
    %3420 = vmatprep.subr.mxu0 0.0
    %3421 = vmatpush2.msra.mxu0 0.0
    %3422 = vmatprep.subr.mxu0 0.0
    %3423 = vmatpush2.msra.mxu0 0.0
    %3424 = vmatprep.subr.mxu0 0.0
    %3425 = vmatpush2.msra.mxu0 0.0
    %3426 = vmatprep.subr.mxu0 0.0
    %3427 = vmatpush2.msra.mxu0 0.0
    %3428 = vmatprep.mubr.f32.mxu0 0.0
    %3429 = vmatmul.mubr.f32.gmra.mxu0 %v2706
    %v3430 = vpop.f32.mrf.mxu0
    %v3431 = vadd.f32 %v3362, %v3430
    %v3432 = vpop.f32.mrf.mxu0
    %3433 = vdwg.mxu0
    %v3434 = vmul.f32 %v3273, %v3431
    %v3435 = vadd.f32 %v3187, %v3434
    %v3436 = vtanh.pop %v3435
    %v3437 = vsub.f32 1.0, %v3357
    %v3438 = vmul.f32 %v3437, %v3436
    %v3439 = vmul.f32 %v3357, %v940
    %v3440 = vadd.f32 %v3438, %v3439
    %3442 = vset.pattern.permute.xlu0 0
    %3443 = vperm.xlu0 %3442, %v2700
    %v3444 = vpop.permute.xlu0 %3443
    %v3446 = vmul.f32 %v3440, %v3444
    %vm3447 = vcmask 254976
    %3448 = vst.msk [vmem:[#allocation2] sm:$0x3] %vm3447, %v3446
    %v3450 = vrot.slane %v2488, 6
    %v3452 = vadd.f32 %v2247, %v3450
    %v3454 = vrot.slane %v2570, 6
    %v3456 = vadd.f32 %v2324, %v3454
    %v3458 = vrot.slane %v2652, 6
    %v3460 = vadd.f32 %v2401, %v3458
    %3461 = vmatprep.subr.mxu0 0.0
    %3462 = vmatpush1.msra.mxu0 0.0
    %3463 = vmatprep.subr.mxu0 0.0
    %3464 = vmatpush1.msra.mxu0 0.0
    %3465 = vmatprep.subr.mxu0 0.0
    %3466 = vmatpush1.msra.mxu0 0.0
    %3467 = vmatprep.subr.mxu0 0.0
    %3468 = vmatpush1.msra.mxu0 0.0
    %3469 = vmatprep.subr.mxu0 0.0
    %3470 = vmatpush1.msra.mxu0 0.0
    %3471 = vmatprep.subr.mxu0 0.0
    %3472 = vmatpush1.msra.mxu0 0.0
    %3473 = vmatprep.subr.mxu0 0.0
    %3474 = vmatpush1.msra.mxu0 0.0
    %3475 = vmatprep.subr.mxu0 0.0
    %3476 = vmatpush1.msra.mxu0 0.0
    %3477 = vmatprep.subr.mxu0 0.0
    %3478 = vmatpush1.msra.mxu0 0.0
    %3479 = vmatprep.subr.mxu0 0.0
    %3480 = vmatpush1.msra.mxu0 0.0
    %3481 = vmatprep.subr.mxu0 0.0
    %3482 = vmatpush1.msra.mxu0 0.0
    %3483 = vmatprep.subr.mxu0 0.0
    %3484 = vmatpush1.msra.mxu0 0.0
    %3485 = vmatprep.subr.mxu0 0.0
    %3486 = vmatpush1.msra.mxu0 %v2658
    %3487 = vmatprep.subr.mxu0 0.0
    %3488 = vmatpush1.msra.mxu0 %v2657
    %3489 = vmatprep.subr.mxu0 0.0
    %3490 = vmatpush1.msra.mxu0 %v2656
    %3491 = vmatprep.subr.mxu0 0.0
    %3492 = vmatpush1.msra.mxu0 %v2655
    %3493 = vmatprep.subr.mxu0 0.0
    %3494 = vmatpush2.msra.mxu0 0.0
    %3495 = vmatprep.subr.mxu0 0.0
    %3496 = vmatpush2.msra.mxu0 0.0
    %3497 = vmatprep.subr.mxu0 0.0
    %3498 = vmatpush2.msra.mxu0 0.0
    %3499 = vmatprep.subr.mxu0 0.0
    %3500 = vmatpush2.msra.mxu0 0.0
    %3501 = vmatprep.subr.mxu0 0.0
    %3502 = vmatpush2.msra.mxu0 0.0
    %3503 = vmatprep.subr.mxu0 0.0
    %3504 = vmatpush2.msra.mxu0 0.0
    %3505 = vmatprep.subr.mxu0 0.0
    %3506 = vmatpush2.msra.mxu0 0.0
    %3507 = vmatprep.subr.mxu0 0.0
    %3508 = vmatpush2.msra.mxu0 0.0
    %3509 = vmatprep.subr.mxu0 0.0
    %3510 = vmatpush2.msra.mxu0 0.0
    %3511 = vmatprep.subr.mxu0 0.0
    %3512 = vmatpush2.msra.mxu0 0.0
    %3513 = vmatprep.subr.mxu0 0.0
    %3514 = vmatpush2.msra.mxu0 0.0
    %3515 = vmatprep.subr.mxu0 0.0
    %3516 = vmatpush2.msra.mxu0 0.0
    %3517 = vmatprep.subr.mxu0 0.0
    %3518 = vmatpush2.msra.mxu0 0.0
    %3519 = vmatprep.subr.mxu0 0.0
    %3520 = vmatpush2.msra.mxu0 0.0
    %3521 = vmatprep.subr.mxu0 0.0
    %3522 = vmatpush2.msra.mxu0 0.0
    %3523 = vmatprep.subr.mxu0 0.0
    %3524 = vmatpush2.msra.mxu0 0.0
    %3525 = vmatprep.mubr.f32.mxu0 0.0
    %3526 = vmatmul.mubr.f32.gmra.mxu0 %v2966
    %v3527 = vpop.f32.mrf.mxu0
    %v3528 = vadd.f32 0.0, %v3527
    %v3529 = vpop.f32.mrf.mxu0
    %3530 = vdwg.mxu0
    %v3532 = vrot.slane %v3528, 6
    %v3534 = vadd.f32 %v3452, %v3532
    %v3535 = vadd.f32 %v3534, %v2783
    %v3536 = vxor.u32 %v3535, 2147483648
    %v3537 = vmul.f32 %v3536, 1.442695
    %v3538 = vpow.pop %v3537
    %v3539 = vadd.f32 %v3538, 1.0
    %v3540 = vrcp.pop %v3539
    %v3541 = vmul.f32 1.0, %v3540
    %3542 = vmatprep.subr.mxu0 0.0
    %3543 = vmatpush1.msra.mxu0 0.0
    %3544 = vmatprep.subr.mxu0 0.0
    %3545 = vmatpush1.msra.mxu0 0.0
    %3546 = vmatprep.subr.mxu0 0.0
    %3547 = vmatpush1.msra.mxu0 0.0
    %3548 = vmatprep.subr.mxu0 0.0
    %3549 = vmatpush1.msra.mxu0 0.0
    %3550 = vmatprep.subr.mxu0 0.0
    %3551 = vmatpush1.msra.mxu0 0.0
    %3552 = vmatprep.subr.mxu0 0.0
    %3553 = vmatpush1.msra.mxu0 0.0
    %3554 = vmatprep.subr.mxu0 0.0
    %3555 = vmatpush1.msra.mxu0 0.0
    %3556 = vmatprep.subr.mxu0 0.0
    %3557 = vmatpush1.msra.mxu0 0.0
    %3558 = vmatprep.subr.mxu0 0.0
    %3559 = vmatpush1.msra.mxu0 0.0
    %3560 = vmatprep.subr.mxu0 0.0
    %3561 = vmatpush1.msra.mxu0 0.0
    %3562 = vmatprep.subr.mxu0 0.0
    %3563 = vmatpush1.msra.mxu0 0.0
    %3564 = vmatprep.subr.mxu0 0.0
    %3565 = vmatpush1.msra.mxu0 0.0
    %3566 = vmatprep.subr.mxu0 0.0
    %3567 = vmatpush1.msra.mxu0 %v2662
    %3568 = vmatprep.subr.mxu0 0.0
    %3569 = vmatpush1.msra.mxu0 %v2661
    %3570 = vmatprep.subr.mxu0 0.0
    %3571 = vmatpush1.msra.mxu0 %v2660
    %3572 = vmatprep.subr.mxu0 0.0
    %3573 = vmatpush1.msra.mxu0 %v2659
    %3574 = vmatprep.subr.mxu0 0.0
    %3575 = vmatpush2.msra.mxu0 0.0
    %3576 = vmatprep.subr.mxu0 0.0
    %3577 = vmatpush2.msra.mxu0 0.0
    %3578 = vmatprep.subr.mxu0 0.0
    %3579 = vmatpush2.msra.mxu0 0.0
    %3580 = vmatprep.subr.mxu0 0.0
    %3581 = vmatpush2.msra.mxu0 0.0
    %3582 = vmatprep.subr.mxu0 0.0
    %3583 = vmatpush2.msra.mxu0 0.0
    %3584 = vmatprep.subr.mxu0 0.0
    %3585 = vmatpush2.msra.mxu0 0.0
    %3586 = vmatprep.subr.mxu0 0.0
    %3587 = vmatpush2.msra.mxu0 0.0
    %3588 = vmatprep.subr.mxu0 0.0
    %3589 = vmatpush2.msra.mxu0 0.0
    %3590 = vmatprep.subr.mxu0 0.0
    %3591 = vmatpush2.msra.mxu0 0.0
    %3592 = vmatprep.subr.mxu0 0.0
    %3593 = vmatpush2.msra.mxu0 0.0
    %3594 = vmatprep.subr.mxu0 0.0
    %3595 = vmatpush2.msra.mxu0 0.0
    %3596 = vmatprep.subr.mxu0 0.0
    %3597 = vmatpush2.msra.mxu0 0.0
    %3598 = vmatprep.subr.mxu0 0.0
    %3599 = vmatpush2.msra.mxu0 0.0
    %3600 = vmatprep.subr.mxu0 0.0
    %3601 = vmatpush2.msra.mxu0 0.0
    %3602 = vmatprep.subr.mxu0 0.0
    %3603 = vmatpush2.msra.mxu0 0.0
    %3604 = vmatprep.subr.mxu0 0.0
    %3605 = vmatpush2.msra.mxu0 0.0
    %3606 = vmatprep.mubr.f32.mxu0 0.0
    %3607 = vmatmul.mubr.f32.gmra.mxu0 %v2966
    %v3608 = vpop.f32.mrf.mxu0
    %v3609 = vadd.f32 0.0, %v3608
    %v3610 = vpop.f32.mrf.mxu0
    %3611 = vdwg.mxu0
    %v3613 = vrot.slane %v3609, 6
    %v3615 = vadd.f32 %v3456, %v3613
    %v3616 = vadd.f32 %v3615, %v2867
    %v3617 = vxor.u32 %v3616, 2147483648
    %v3618 = vmul.f32 %v3617, 1.442695
    %v3619 = vpow.pop %v3618
    %v3620 = vadd.f32 %v3619, 1.0
    %v3621 = vrcp.pop %v3620
    %v3622 = vmul.f32 1.0, %v3621
    %3623 = vmatprep.subr.mxu0 0.0
    %3624 = vmatpush1.msra.mxu0 0.0
    %3625 = vmatprep.subr.mxu0 0.0
    %3626 = vmatpush1.msra.mxu0 0.0
    %3627 = vmatprep.subr.mxu0 0.0
    %3628 = vmatpush1.msra.mxu0 0.0
    %3629 = vmatprep.subr.mxu0 0.0
    %3630 = vmatpush1.msra.mxu0 0.0
    %3631 = vmatprep.subr.mxu0 0.0
    %3632 = vmatpush1.msra.mxu0 0.0
    %3633 = vmatprep.subr.mxu0 0.0
    %3634 = vmatpush1.msra.mxu0 0.0
    %3635 = vmatprep.subr.mxu0 0.0
    %3636 = vmatpush1.msra.mxu0 0.0
    %3637 = vmatprep.subr.mxu0 0.0
    %3638 = vmatpush1.msra.mxu0 0.0
    %3639 = vmatprep.subr.mxu0 0.0
    %3640 = vmatpush1.msra.mxu0 0.0
    %3641 = vmatprep.subr.mxu0 0.0
    %3642 = vmatpush1.msra.mxu0 0.0
    %3643 = vmatprep.subr.mxu0 0.0
    %3644 = vmatpush1.msra.mxu0 0.0
    %3645 = vmatprep.subr.mxu0 0.0
    %3646 = vmatpush1.msra.mxu0 0.0
    %3647 = vmatprep.subr.mxu0 0.0
    %3648 = vmatpush1.msra.mxu0 %v2666
    %3649 = vmatprep.subr.mxu0 0.0
    %3650 = vmatpush1.msra.mxu0 %v2665
    %3651 = vmatprep.subr.mxu0 0.0
    %3652 = vmatpush1.msra.mxu0 %v2664
    %3653 = vmatprep.subr.mxu0 0.0
    %3654 = vmatpush1.msra.mxu0 %v2663
    %3655 = vmatprep.subr.mxu0 0.0
    %3656 = vmatpush2.msra.mxu0 0.0
    %3657 = vmatprep.subr.mxu0 0.0
    %3658 = vmatpush2.msra.mxu0 0.0
    %3659 = vmatprep.subr.mxu0 0.0
    %3660 = vmatpush2.msra.mxu0 0.0
    %3661 = vmatprep.subr.mxu0 0.0
    %3662 = vmatpush2.msra.mxu0 0.0
    %3663 = vmatprep.subr.mxu0 0.0
    %3664 = vmatpush2.msra.mxu0 0.0
    %3665 = vmatprep.subr.mxu0 0.0
    %3666 = vmatpush2.msra.mxu0 0.0
    %3667 = vmatprep.subr.mxu0 0.0
    %3668 = vmatpush2.msra.mxu0 0.0
    %3669 = vmatprep.subr.mxu0 0.0
    %3670 = vmatpush2.msra.mxu0 0.0
    %3671 = vmatprep.subr.mxu0 0.0
    %3672 = vmatpush2.msra.mxu0 0.0
    %3673 = vmatprep.subr.mxu0 0.0
    %3674 = vmatpush2.msra.mxu0 0.0
    %3675 = vmatprep.subr.mxu0 0.0
    %3676 = vmatpush2.msra.mxu0 0.0
    %3677 = vmatprep.subr.mxu0 0.0
    %3678 = vmatpush2.msra.mxu0 0.0
    %3679 = vmatprep.subr.mxu0 0.0
    %3680 = vmatpush2.msra.mxu0 0.0
    %3681 = vmatprep.subr.mxu0 0.0
    %3682 = vmatpush2.msra.mxu0 0.0
    %3683 = vmatprep.subr.mxu0 0.0
    %3684 = vmatpush2.msra.mxu0 0.0
    %3685 = vmatprep.subr.mxu0 0.0
    %3686 = vmatpush2.msra.mxu0 0.0
    %3687 = vmatprep.mubr.f32.mxu0 0.0
    %3688 = vmatmul.mubr.f32.gmra.mxu0 %v2966
    %v3689 = vpop.f32.mrf.mxu0
    %v3690 = vadd.f32 %v2880, %v3689
    %v3691 = vpop.f32.mrf.mxu0
    %3692 = vdwg.mxu0
    %v3694 = vrot.slane %v3690, 6
    %v3696 = vmul.f32 %v3541, %v3694
    %v3697 = vadd.f32 %v3460, %v3696
    %v3698 = vtanh.pop %v3697
    %v3699 = vsub.f32 1.0, %v3622
    %v3700 = vmul.f32 %v3699, %v3698
    %v3701 = vrot.slane %v2958, 6
    %v3703 = vmul.f32 %v3622, %v3701
    %v3704 = vadd.f32 %v3700, %v3703
    %v3706 = vrot.slane %v3704, 2
    %v3707 = vsel %vm1321, %v3706, 0
    %3709 = vmatprep.subr.mxu0 0.0
    %3710 = vmatpush1.msra.mxu0 0.0
    %3711 = vmatprep.subr.mxu0 0.0
    %3712 = vmatpush1.msra.mxu0 0.0
    %3713 = vmatprep.subr.mxu0 0.0
    %3714 = vmatpush1.msra.mxu0 0.0
    %3715 = vmatprep.subr.mxu0 0.0
    %3716 = vmatpush1.msra.mxu0 0.0
    %3717 = vmatprep.subr.mxu0 0.0
    %3718 = vmatpush1.msra.mxu0 0.0
    %3719 = vmatprep.subr.mxu0 0.0
    %3720 = vmatpush1.msra.mxu0 0.0
    %3721 = vmatprep.subr.mxu0 0.0
    %3722 = vmatpush1.msra.mxu0 0.0
    %3723 = vmatprep.subr.mxu0 0.0
    %3724 = vmatpush1.msra.mxu0 0.0
    %3725 = vmatprep.subr.mxu0 0.0
    %3726 = vmatpush1.msra.mxu0 0.0
    %3727 = vmatprep.subr.mxu0 0.0
    %3728 = vmatpush1.msra.mxu0 0.0
    %3729 = vmatprep.subr.mxu0 0.0
    %3730 = vmatpush1.msra.mxu0 0.0
    %3731 = vmatprep.subr.mxu0 0.0
    %3732 = vmatpush1.msra.mxu0 0.0
    %3733 = vmatprep.subr.mxu0 0.0
    %3734 = vmatpush1.msra.mxu0 %v2673
    %3735 = vmatprep.subr.mxu0 0.0
    %3736 = vmatpush1.msra.mxu0 %v2672
    %3737 = vmatprep.subr.mxu0 0.0
    %3738 = vmatpush1.msra.mxu0 %v2671
    %3739 = vmatprep.subr.mxu0 0.0
    %3740 = vmatpush1.msra.mxu0 %v2670
    %3741 = vmatprep.subr.mxu0 0.0
    %3742 = vmatpush2.msra.mxu0 0.0
    %3743 = vmatprep.subr.mxu0 0.0
    %3744 = vmatpush2.msra.mxu0 0.0
    %3745 = vmatprep.subr.mxu0 0.0
    %3746 = vmatpush2.msra.mxu0 0.0
    %3747 = vmatprep.subr.mxu0 0.0
    %3748 = vmatpush2.msra.mxu0 0.0
    %3749 = vmatprep.subr.mxu0 0.0
    %3750 = vmatpush2.msra.mxu0 0.0
    %3751 = vmatprep.subr.mxu0 0.0
    %3752 = vmatpush2.msra.mxu0 0.0
    %3753 = vmatprep.subr.mxu0 0.0
    %3754 = vmatpush2.msra.mxu0 0.0
    %3755 = vmatprep.subr.mxu0 0.0
    %3756 = vmatpush2.msra.mxu0 0.0
    %3757 = vmatprep.subr.mxu0 0.0
    %3758 = vmatpush2.msra.mxu0 0.0
    %3759 = vmatprep.subr.mxu0 0.0
    %3760 = vmatpush2.msra.mxu0 0.0
    %3761 = vmatprep.subr.mxu0 0.0
    %3762 = vmatpush2.msra.mxu0 0.0
    %3763 = vmatprep.subr.mxu0 0.0
    %3764 = vmatpush2.msra.mxu0 0.0
    %3765 = vmatprep.subr.mxu0 0.0
    %3766 = vmatpush2.msra.mxu0 0.0
    %3767 = vmatprep.subr.mxu0 0.0
    %3768 = vmatpush2.msra.mxu0 0.0
    %3769 = vmatprep.subr.mxu0 0.0
    %3770 = vmatpush2.msra.mxu0 0.0
    %3771 = vmatprep.subr.mxu0 0.0
    %3772 = vmatpush2.msra.mxu0 0.0
    %3773 = vmatprep.mubr.f32.mxu0 0.0
    %3774 = vmatmul.mubr.f32.gmra.mxu0 %v3707
    %v3775 = vpop.f32.mrf.mxu0
    %v3776 = vadd.f32 %v2963, %v3775
    %v3777 = vpop.f32.mrf.mxu0
    %3778 = vdwg.mxu0
    %3779 = vmatprep.subr.mxu0 0.0
    %3780 = vmatpush1.msra.mxu0 0.0
    %3781 = vmatprep.subr.mxu0 0.0
    %3782 = vmatpush1.msra.mxu0 0.0
    %3783 = vmatprep.subr.mxu0 0.0
    %3784 = vmatpush1.msra.mxu0 0.0
    %3785 = vmatprep.subr.mxu0 0.0
    %3786 = vmatpush1.msra.mxu0 0.0
    %3787 = vmatprep.subr.mxu0 0.0
    %3788 = vmatpush1.msra.mxu0 0.0
    %3789 = vmatprep.subr.mxu0 0.0
    %3790 = vmatpush1.msra.mxu0 0.0
    %3791 = vmatprep.subr.mxu0 0.0
    %3792 = vmatpush1.msra.mxu0 0.0
    %3793 = vmatprep.subr.mxu0 0.0
    %3794 = vmatpush1.msra.mxu0 0.0
    %3795 = vmatprep.subr.mxu0 0.0
    %3796 = vmatpush1.msra.mxu0 0.0
    %3797 = vmatprep.subr.mxu0 0.0
    %3798 = vmatpush1.msra.mxu0 0.0
    %3799 = vmatprep.subr.mxu0 0.0
    %3800 = vmatpush1.msra.mxu0 0.0
    %3801 = vmatprep.subr.mxu0 0.0
    %3802 = vmatpush1.msra.mxu0 0.0
    %3803 = vmatprep.subr.mxu0 0.0
    %3804 = vmatpush1.msra.mxu0 %v2677
    %3805 = vmatprep.subr.mxu0 0.0
    %3806 = vmatpush1.msra.mxu0 %v2676
    %3807 = vmatprep.subr.mxu0 0.0
    %3808 = vmatpush1.msra.mxu0 %v2675
    %3809 = vmatprep.subr.mxu0 0.0
    %3810 = vmatpush1.msra.mxu0 %v2674
    %3811 = vmatprep.subr.mxu0 0.0
    %3812 = vmatpush2.msra.mxu0 0.0
    %3813 = vmatprep.subr.mxu0 0.0
    %3814 = vmatpush2.msra.mxu0 0.0
    %3815 = vmatprep.subr.mxu0 0.0
    %3816 = vmatpush2.msra.mxu0 0.0
    %3817 = vmatprep.subr.mxu0 0.0
    %3818 = vmatpush2.msra.mxu0 0.0
    %3819 = vmatprep.subr.mxu0 0.0
    %3820 = vmatpush2.msra.mxu0 0.0
    %3821 = vmatprep.subr.mxu0 0.0
    %3822 = vmatpush2.msra.mxu0 0.0
    %3823 = vmatprep.subr.mxu0 0.0
    %3824 = vmatpush2.msra.mxu0 0.0
    %3825 = vmatprep.subr.mxu0 0.0
    %3826 = vmatpush2.msra.mxu0 0.0
    %3827 = vmatprep.subr.mxu0 0.0
    %3828 = vmatpush2.msra.mxu0 0.0
    %3829 = vmatprep.subr.mxu0 0.0
    %3830 = vmatpush2.msra.mxu0 0.0
    %3831 = vmatprep.subr.mxu0 0.0
    %3832 = vmatpush2.msra.mxu0 0.0
    %3833 = vmatprep.subr.mxu0 0.0
    %3834 = vmatpush2.msra.mxu0 0.0
    %3835 = vmatprep.subr.mxu0 0.0
    %3836 = vmatpush2.msra.mxu0 0.0
    %3837 = vmatprep.subr.mxu0 0.0
    %3838 = vmatpush2.msra.mxu0 0.0
    %3839 = vmatprep.subr.mxu0 0.0
    %3840 = vmatpush2.msra.mxu0 0.0
    %3841 = vmatprep.subr.mxu0 0.0
    %3842 = vmatpush2.msra.mxu0 0.0
    %3843 = vmatprep.mubr.f32.mxu0 0.0
    %3844 = vmatmul.mubr.f32.gmra.mxu0 %v3707
    %v3845 = vpop.f32.mrf.mxu0
    %v3846 = vadd.f32 %v3042, %v3845
    %v3847 = vpop.f32.mrf.mxu0
    %3848 = vdwg.mxu0
    %3849 = vmatprep.subr.mxu0 0.0
    %3850 = vmatpush1.msra.mxu0 0.0
    %3851 = vmatprep.subr.mxu0 0.0
    %3852 = vmatpush1.msra.mxu0 0.0
    %3853 = vmatprep.subr.mxu0 0.0
    %3854 = vmatpush1.msra.mxu0 0.0
    %3855 = vmatprep.subr.mxu0 0.0
    %3856 = vmatpush1.msra.mxu0 0.0
    %3857 = vmatprep.subr.mxu0 0.0
    %3858 = vmatpush1.msra.mxu0 0.0
    %3859 = vmatprep.subr.mxu0 0.0
    %3860 = vmatpush1.msra.mxu0 0.0
    %3861 = vmatprep.subr.mxu0 0.0
    %3862 = vmatpush1.msra.mxu0 0.0
    %3863 = vmatprep.subr.mxu0 0.0
    %3864 = vmatpush1.msra.mxu0 0.0
    %3865 = vmatprep.subr.mxu0 0.0
    %3866 = vmatpush1.msra.mxu0 0.0
    %3867 = vmatprep.subr.mxu0 0.0
    %3868 = vmatpush1.msra.mxu0 0.0
    %3869 = vmatprep.subr.mxu0 0.0
    %3870 = vmatpush1.msra.mxu0 0.0
    %3871 = vmatprep.subr.mxu0 0.0
    %3872 = vmatpush1.msra.mxu0 0.0
    %3873 = vmatprep.subr.mxu0 0.0
    %3874 = vmatpush1.msra.mxu0 %v2681
    %3875 = vmatprep.subr.mxu0 0.0
    %3876 = vmatpush1.msra.mxu0 %v2680
    %3877 = vmatprep.subr.mxu0 0.0
    %3878 = vmatpush1.msra.mxu0 %v2679
    %3879 = vmatprep.subr.mxu0 0.0
    %3880 = vmatpush1.msra.mxu0 %v2678
    %3881 = vmatprep.subr.mxu0 0.0
    %3882 = vmatpush2.msra.mxu0 0.0
    %3883 = vmatprep.subr.mxu0 0.0
    %3884 = vmatpush2.msra.mxu0 0.0
    %3885 = vmatprep.subr.mxu0 0.0
    %3886 = vmatpush2.msra.mxu0 0.0
    %3887 = vmatprep.subr.mxu0 0.0
    %3888 = vmatpush2.msra.mxu0 0.0
    %3889 = vmatprep.subr.mxu0 0.0
    %3890 = vmatpush2.msra.mxu0 0.0
    %3891 = vmatprep.subr.mxu0 0.0
    %3892 = vmatpush2.msra.mxu0 0.0
    %3893 = vmatprep.subr.mxu0 0.0
    %3894 = vmatpush2.msra.mxu0 0.0
    %3895 = vmatprep.subr.mxu0 0.0
    %3896 = vmatpush2.msra.mxu0 0.0
    %3897 = vmatprep.subr.mxu0 0.0
    %3898 = vmatpush2.msra.mxu0 0.0
    %3899 = vmatprep.subr.mxu0 0.0
    %3900 = vmatpush2.msra.mxu0 0.0
    %3901 = vmatprep.subr.mxu0 0.0
    %3902 = vmatpush2.msra.mxu0 0.0
    %3903 = vmatprep.subr.mxu0 0.0
    %3904 = vmatpush2.msra.mxu0 0.0
    %3905 = vmatprep.subr.mxu0 0.0
    %3906 = vmatpush2.msra.mxu0 0.0
    %3907 = vmatprep.subr.mxu0 0.0
    %3908 = vmatpush2.msra.mxu0 0.0
    %3909 = vmatprep.subr.mxu0 0.0
    %3910 = vmatpush2.msra.mxu0 0.0
    %3911 = vmatprep.subr.mxu0 0.0
    %3912 = vmatpush2.msra.mxu0 0.0
    %3913 = vmatprep.mubr.f32.mxu0 0.0
    %3914 = vmatmul.mubr.f32.gmra.mxu0 %v3707
    %v3915 = vpop.f32.mrf.mxu0
    %v3916 = vadd.f32 %v3118, %v3915
    %v3917 = vpop.f32.mrf.mxu0
    %3918 = vdwg.mxu0
    %v3920 = vsel %vm1321, %v3440, 0
    %3922 = vmatprep.subr.mxu0 0.0
    %3923 = vmatpush1.msra.mxu0 0.0
    %3924 = vmatprep.subr.mxu0 0.0
    %3925 = vmatpush1.msra.mxu0 0.0
    %3926 = vmatprep.subr.mxu0 0.0
    %3927 = vmatpush1.msra.mxu0 0.0
    %3928 = vmatprep.subr.mxu0 0.0
    %3929 = vmatpush1.msra.mxu0 0.0
    %3930 = vmatprep.subr.mxu0 0.0
    %3931 = vmatpush1.msra.mxu0 0.0
    %3932 = vmatprep.subr.mxu0 0.0
    %3933 = vmatpush1.msra.mxu0 0.0
    %3934 = vmatprep.subr.mxu0 0.0
    %3935 = vmatpush1.msra.mxu0 0.0
    %3936 = vmatprep.subr.mxu0 0.0
    %3937 = vmatpush1.msra.mxu0 0.0
    %3938 = vmatprep.subr.mxu0 0.0
    %3939 = vmatpush1.msra.mxu0 0.0
    %3940 = vmatprep.subr.mxu0 0.0
    %3941 = vmatpush1.msra.mxu0 0.0
    %3942 = vmatprep.subr.mxu0 0.0
    %3943 = vmatpush1.msra.mxu0 0.0
    %3944 = vmatprep.subr.mxu0 0.0
    %3945 = vmatpush1.msra.mxu0 0.0
    %3946 = vmatprep.subr.mxu0 0.0
    %3947 = vmatpush1.msra.mxu0 %v2688
    %3948 = vmatprep.subr.mxu0 0.0
    %3949 = vmatpush1.msra.mxu0 %v2687
    %3950 = vmatprep.subr.mxu0 0.0
    %3951 = vmatpush1.msra.mxu0 %v2686
    %3952 = vmatprep.subr.mxu0 0.0
    %3953 = vmatpush1.msra.mxu0 %v2685
    %3954 = vmatprep.subr.mxu0 0.0
    %3955 = vmatpush2.msra.mxu0 0.0
    %3956 = vmatprep.subr.mxu0 0.0
    %3957 = vmatpush2.msra.mxu0 0.0
    %3958 = vmatprep.subr.mxu0 0.0
    %3959 = vmatpush2.msra.mxu0 0.0
    %3960 = vmatprep.subr.mxu0 0.0
    %3961 = vmatpush2.msra.mxu0 0.0
    %3962 = vmatprep.subr.mxu0 0.0
    %3963 = vmatpush2.msra.mxu0 0.0
    %3964 = vmatprep.subr.mxu0 0.0
    %3965 = vmatpush2.msra.mxu0 0.0
    %3966 = vmatprep.subr.mxu0 0.0
    %3967 = vmatpush2.msra.mxu0 0.0
    %3968 = vmatprep.subr.mxu0 0.0
    %3969 = vmatpush2.msra.mxu0 0.0
    %3970 = vmatprep.subr.mxu0 0.0
    %3971 = vmatpush2.msra.mxu0 0.0
    %3972 = vmatprep.subr.mxu0 0.0
    %3973 = vmatpush2.msra.mxu0 0.0
    %3974 = vmatprep.subr.mxu0 0.0
    %3975 = vmatpush2.msra.mxu0 0.0
    %3976 = vmatprep.subr.mxu0 0.0
    %3977 = vmatpush2.msra.mxu0 0.0
    %3978 = vmatprep.subr.mxu0 0.0
    %3979 = vmatpush2.msra.mxu0 0.0
    %3980 = vmatprep.subr.mxu0 0.0
    %3981 = vmatpush2.msra.mxu0 0.0
    %3982 = vmatprep.subr.mxu0 0.0
    %3983 = vmatpush2.msra.mxu0 0.0
    %3984 = vmatprep.subr.mxu0 0.0
    %3985 = vmatpush2.msra.mxu0 0.0
    %3986 = vmatprep.mubr.f32.mxu0 0.0
    %3987 = vmatmul.mubr.f32.gmra.mxu0 %v3920
    %v3988 = vpop.f32.mrf.mxu0
    %v3989 = vadd.f32 0.0, %v3988
    %v3990 = vpop.f32.mrf.mxu0
    %3991 = vdwg.mxu0
    %v3992 = vadd.f32 %v3776, %v3989
    %v3993 = vadd.f32 %v3992, %v3265
    %v3994 = vxor.u32 %v3993, 2147483648
    %v3995 = vmul.f32 %v3994, 1.442695
    %v3996 = vpow.pop %v3995
    %v3997 = vadd.f32 %v3996, 1.0
    %v3998 = vrcp.pop %v3997
    %v3999 = vmul.f32 1.0, %v3998
    %4000 = vmatprep.subr.mxu0 0.0
    %4001 = vmatpush1.msra.mxu0 0.0
    %4002 = vmatprep.subr.mxu0 0.0
    %4003 = vmatpush1.msra.mxu0 0.0
    %4004 = vmatprep.subr.mxu0 0.0
    %4005 = vmatpush1.msra.mxu0 0.0
    %4006 = vmatprep.subr.mxu0 0.0
    %4007 = vmatpush1.msra.mxu0 0.0
    %4008 = vmatprep.subr.mxu0 0.0
    %4009 = vmatpush1.msra.mxu0 0.0
    %4010 = vmatprep.subr.mxu0 0.0
    %4011 = vmatpush1.msra.mxu0 0.0
    %4012 = vmatprep.subr.mxu0 0.0
    %4013 = vmatpush1.msra.mxu0 0.0
    %4014 = vmatprep.subr.mxu0 0.0
    %4015 = vmatpush1.msra.mxu0 0.0
    %4016 = vmatprep.subr.mxu0 0.0
    %4017 = vmatpush1.msra.mxu0 0.0
    %4018 = vmatprep.subr.mxu0 0.0
    %4019 = vmatpush1.msra.mxu0 0.0
    %4020 = vmatprep.subr.mxu0 0.0
    %4021 = vmatpush1.msra.mxu0 0.0
    %4022 = vmatprep.subr.mxu0 0.0
    %4023 = vmatpush1.msra.mxu0 0.0
    %4024 = vmatprep.subr.mxu0 0.0
    %4025 = vmatpush1.msra.mxu0 %v2692
    %4026 = vmatprep.subr.mxu0 0.0
    %4027 = vmatpush1.msra.mxu0 %v2691
    %4028 = vmatprep.subr.mxu0 0.0
    %4029 = vmatpush1.msra.mxu0 %v2690
    %4030 = vmatprep.subr.mxu0 0.0
    %4031 = vmatpush1.msra.mxu0 %v2689
    %4032 = vmatprep.subr.mxu0 0.0
    %4033 = vmatpush2.msra.mxu0 0.0
    %4034 = vmatprep.subr.mxu0 0.0
    %4035 = vmatpush2.msra.mxu0 0.0
    %4036 = vmatprep.subr.mxu0 0.0
    %4037 = vmatpush2.msra.mxu0 0.0
    %4038 = vmatprep.subr.mxu0 0.0
    %4039 = vmatpush2.msra.mxu0 0.0
    %4040 = vmatprep.subr.mxu0 0.0
    %4041 = vmatpush2.msra.mxu0 0.0
    %4042 = vmatprep.subr.mxu0 0.0
    %4043 = vmatpush2.msra.mxu0 0.0
    %4044 = vmatprep.subr.mxu0 0.0
    %4045 = vmatpush2.msra.mxu0 0.0
    %4046 = vmatprep.subr.mxu0 0.0
    %4047 = vmatpush2.msra.mxu0 0.0
    %4048 = vmatprep.subr.mxu0 0.0
    %4049 = vmatpush2.msra.mxu0 0.0
    %4050 = vmatprep.subr.mxu0 0.0
    %4051 = vmatpush2.msra.mxu0 0.0
    %4052 = vmatprep.subr.mxu0 0.0
    %4053 = vmatpush2.msra.mxu0 0.0
    %4054 = vmatprep.subr.mxu0 0.0
    %4055 = vmatpush2.msra.mxu0 0.0
    %4056 = vmatprep.subr.mxu0 0.0
    %4057 = vmatpush2.msra.mxu0 0.0
    %4058 = vmatprep.subr.mxu0 0.0
    %4059 = vmatpush2.msra.mxu0 0.0
    %4060 = vmatprep.subr.mxu0 0.0
    %4061 = vmatpush2.msra.mxu0 0.0
    %4062 = vmatprep.subr.mxu0 0.0
    %4063 = vmatpush2.msra.mxu0 0.0
    %4064 = vmatprep.mubr.f32.mxu0 0.0
    %4065 = vmatmul.mubr.f32.gmra.mxu0 %v3920
    %v4066 = vpop.f32.mrf.mxu0
    %v4067 = vadd.f32 0.0, %v4066
    %v4068 = vpop.f32.mrf.mxu0
    %4069 = vdwg.mxu0
    %v4070 = vadd.f32 %v3846, %v4067
    %v4071 = vadd.f32 %v4070, %v3349
    %v4072 = vxor.u32 %v4071, 2147483648
    %v4073 = vmul.f32 %v4072, 1.442695
    %v4074 = vpow.pop %v4073
    %v4075 = vadd.f32 %v4074, 1.0
    %v4076 = vrcp.pop %v4075
    %v4077 = vmul.f32 1.0, %v4076
    %4078 = vmatprep.subr.mxu0 0.0
    %4079 = vmatpush1.msra.mxu0 0.0
    %4080 = vmatprep.subr.mxu0 0.0
    %4081 = vmatpush1.msra.mxu0 0.0
    %4082 = vmatprep.subr.mxu0 0.0
    %4083 = vmatpush1.msra.mxu0 0.0
    %4084 = vmatprep.subr.mxu0 0.0
    %4085 = vmatpush1.msra.mxu0 0.0
    %4086 = vmatprep.subr.mxu0 0.0
    %4087 = vmatpush1.msra.mxu0 0.0
    %4088 = vmatprep.subr.mxu0 0.0
    %4089 = vmatpush1.msra.mxu0 0.0
    %4090 = vmatprep.subr.mxu0 0.0
    %4091 = vmatpush1.msra.mxu0 0.0
    %4092 = vmatprep.subr.mxu0 0.0
    %4093 = vmatpush1.msra.mxu0 0.0
    %4094 = vmatprep.subr.mxu0 0.0
    %4095 = vmatpush1.msra.mxu0 0.0
    %4096 = vmatprep.subr.mxu0 0.0
    %4097 = vmatpush1.msra.mxu0 0.0
    %4098 = vmatprep.subr.mxu0 0.0
    %4099 = vmatpush1.msra.mxu0 0.0
    %4100 = vmatprep.subr.mxu0 0.0
    %4101 = vmatpush1.msra.mxu0 0.0
    %4102 = vmatprep.subr.mxu0 0.0
    %4103 = vmatpush1.msra.mxu0 %v2696
    %4104 = vmatprep.subr.mxu0 0.0
    %4105 = vmatpush1.msra.mxu0 %v2695
    %4106 = vmatprep.subr.mxu0 0.0
    %4107 = vmatpush1.msra.mxu0 %v2694
    %4108 = vmatprep.subr.mxu0 0.0
    %4109 = vmatpush1.msra.mxu0 %v2693
    %4110 = vmatprep.subr.mxu0 0.0
    %4111 = vmatpush2.msra.mxu0 0.0
    %4112 = vmatprep.subr.mxu0 0.0
    %4113 = vmatpush2.msra.mxu0 0.0
    %4114 = vmatprep.subr.mxu0 0.0
    %4115 = vmatpush2.msra.mxu0 0.0
    %4116 = vmatprep.subr.mxu0 0.0
    %4117 = vmatpush2.msra.mxu0 0.0
    %4118 = vmatprep.subr.mxu0 0.0
    %4119 = vmatpush2.msra.mxu0 0.0
    %4120 = vmatprep.subr.mxu0 0.0
    %4121 = vmatpush2.msra.mxu0 0.0
    %4122 = vmatprep.subr.mxu0 0.0
    %4123 = vmatpush2.msra.mxu0 0.0
    %4124 = vmatprep.subr.mxu0 0.0
    %4125 = vmatpush2.msra.mxu0 0.0
    %4126 = vmatprep.subr.mxu0 0.0
    %4127 = vmatpush2.msra.mxu0 0.0
    %4128 = vmatprep.subr.mxu0 0.0
    %4129 = vmatpush2.msra.mxu0 0.0
    %4130 = vmatprep.subr.mxu0 0.0
    %4131 = vmatpush2.msra.mxu0 0.0
    %4132 = vmatprep.subr.mxu0 0.0
    %4133 = vmatpush2.msra.mxu0 0.0
    %4134 = vmatprep.subr.mxu0 0.0
    %4135 = vmatpush2.msra.mxu0 0.0
    %4136 = vmatprep.subr.mxu0 0.0
    %4137 = vmatpush2.msra.mxu0 0.0
    %4138 = vmatprep.subr.mxu0 0.0
    %4139 = vmatpush2.msra.mxu0 0.0
    %4140 = vmatprep.subr.mxu0 0.0
    %4141 = vmatpush2.msra.mxu0 0.0
    %4142 = vmatprep.mubr.f32.mxu0 0.0
    %4143 = vmatmul.mubr.f32.gmra.mxu0 %v3920
    %v4144 = vpop.f32.mrf.mxu0
    %v4145 = vadd.f32 %v3362, %v4144
    %v4146 = vpop.f32.mrf.mxu0
    %4147 = vdwg.mxu0
    %v4148 = vmul.f32 %v3999, %v4145
    %v4149 = vadd.f32 %v3916, %v4148
    %v4150 = vtanh.pop %v4149
    %v4151 = vsub.f32 1.0, %v4077
    %v4152 = vmul.f32 %v4151, %v4150
    %v4153 = vmul.f32 %v4077, %v3440
    %v4154 = vadd.f32 %v4152, %v4153
    %v4155 = vrot.slane %v3444, 2
    %v4157 = vmul.f32 %v4154, %v4155
    %4158 = vst.msk [vmem:[#allocation2 + $0x2] sm:$0x3] %vm3447, %v4157
    %v4159 = vrot.slane %v2488, 4
    %v4161 = vadd.f32 %v2247, %v4159
    %v4162 = vrot.slane %v2570, 4
    %v4164 = vadd.f32 %v2324, %v4162
    %v4165 = vrot.slane %v2652, 4
    %v4167 = vadd.f32 %v2401, %v4165
    %4168 = vmatprep.subr.mxu0 0.0
    %4169 = vmatpush1.msra.mxu0 0.0
    %4170 = vmatprep.subr.mxu0 0.0
    %4171 = vmatpush1.msra.mxu0 0.0
    %4172 = vmatprep.subr.mxu0 0.0
    %4173 = vmatpush1.msra.mxu0 0.0
    %4174 = vmatprep.subr.mxu0 0.0
    %4175 = vmatpush1.msra.mxu0 0.0
    %4176 = vmatprep.subr.mxu0 0.0
    %4177 = vmatpush1.msra.mxu0 0.0
    %4178 = vmatprep.subr.mxu0 0.0
    %4179 = vmatpush1.msra.mxu0 0.0
    %4180 = vmatprep.subr.mxu0 0.0
    %4181 = vmatpush1.msra.mxu0 0.0
    %4182 = vmatprep.subr.mxu0 0.0
    %4183 = vmatpush1.msra.mxu0 0.0
    %4184 = vmatprep.subr.mxu0 0.0
    %4185 = vmatpush1.msra.mxu0 0.0
    %4186 = vmatprep.subr.mxu0 0.0
    %4187 = vmatpush1.msra.mxu0 0.0
    %4188 = vmatprep.subr.mxu0 0.0
    %4189 = vmatpush1.msra.mxu0 0.0
    %4190 = vmatprep.subr.mxu0 0.0
    %4191 = vmatpush1.msra.mxu0 0.0
    %4192 = vmatprep.subr.mxu0 0.0
    %4193 = vmatpush1.msra.mxu0 %v2658
    %4194 = vmatprep.subr.mxu0 0.0
    %4195 = vmatpush1.msra.mxu0 %v2657
    %4196 = vmatprep.subr.mxu0 0.0
    %4197 = vmatpush1.msra.mxu0 %v2656
    %4198 = vmatprep.subr.mxu0 0.0
    %4199 = vmatpush1.msra.mxu0 %v2655
    %4200 = vmatprep.subr.mxu0 0.0
    %4201 = vmatpush2.msra.mxu0 0.0
    %4202 = vmatprep.subr.mxu0 0.0
    %4203 = vmatpush2.msra.mxu0 0.0
    %4204 = vmatprep.subr.mxu0 0.0
    %4205 = vmatpush2.msra.mxu0 0.0
    %4206 = vmatprep.subr.mxu0 0.0
    %4207 = vmatpush2.msra.mxu0 0.0
    %4208 = vmatprep.subr.mxu0 0.0
    %4209 = vmatpush2.msra.mxu0 0.0
    %4210 = vmatprep.subr.mxu0 0.0
    %4211 = vmatpush2.msra.mxu0 0.0
    %4212 = vmatprep.subr.mxu0 0.0
    %4213 = vmatpush2.msra.mxu0 0.0
    %4214 = vmatprep.subr.mxu0 0.0
    %4215 = vmatpush2.msra.mxu0 0.0
    %4216 = vmatprep.subr.mxu0 0.0
    %4217 = vmatpush2.msra.mxu0 0.0
    %4218 = vmatprep.subr.mxu0 0.0
    %4219 = vmatpush2.msra.mxu0 0.0
    %4220 = vmatprep.subr.mxu0 0.0
    %4221 = vmatpush2.msra.mxu0 0.0
    %4222 = vmatprep.subr.mxu0 0.0
    %4223 = vmatpush2.msra.mxu0 0.0
    %4224 = vmatprep.subr.mxu0 0.0
    %4225 = vmatpush2.msra.mxu0 0.0
    %4226 = vmatprep.subr.mxu0 0.0
    %4227 = vmatpush2.msra.mxu0 0.0
    %4228 = vmatprep.subr.mxu0 0.0
    %4229 = vmatpush2.msra.mxu0 0.0
    %4230 = vmatprep.subr.mxu0 0.0
    %4231 = vmatpush2.msra.mxu0 0.0
    %4232 = vmatprep.mubr.f32.mxu0 0.0
    %4233 = vmatmul.mubr.f32.gmra.mxu0 %v3707
    %v4234 = vpop.f32.mrf.mxu0
    %v4235 = vadd.f32 0.0, %v4234
    %v4236 = vpop.f32.mrf.mxu0
    %4237 = vdwg.mxu0
    %v4239 = vrot.slane %v4235, 4
    %v4241 = vadd.f32 %v4161, %v4239
    %v4242 = vadd.f32 %v4241, %v2783
    %v4243 = vxor.u32 %v4242, 2147483648
    %v4244 = vmul.f32 %v4243, 1.442695
    %v4245 = vpow.pop %v4244
    %v4246 = vadd.f32 %v4245, 1.0
    %v4247 = vrcp.pop %v4246
    %v4248 = vmul.f32 1.0, %v4247
    %4249 = vmatprep.subr.mxu0 0.0
    %4250 = vmatpush1.msra.mxu0 0.0
    %4251 = vmatprep.subr.mxu0 0.0
    %4252 = vmatpush1.msra.mxu0 0.0
    %4253 = vmatprep.subr.mxu0 0.0
    %4254 = vmatpush1.msra.mxu0 0.0
    %4255 = vmatprep.subr.mxu0 0.0
    %4256 = vmatpush1.msra.mxu0 0.0
    %4257 = vmatprep.subr.mxu0 0.0
    %4258 = vmatpush1.msra.mxu0 0.0
    %4259 = vmatprep.subr.mxu0 0.0
    %4260 = vmatpush1.msra.mxu0 0.0
    %4261 = vmatprep.subr.mxu0 0.0
    %4262 = vmatpush1.msra.mxu0 0.0
    %4263 = vmatprep.subr.mxu0 0.0
    %4264 = vmatpush1.msra.mxu0 0.0
    %4265 = vmatprep.subr.mxu0 0.0
    %4266 = vmatpush1.msra.mxu0 0.0
    %4267 = vmatprep.subr.mxu0 0.0
    %4268 = vmatpush1.msra.mxu0 0.0
    %4269 = vmatprep.subr.mxu0 0.0
    %4270 = vmatpush1.msra.mxu0 0.0
    %4271 = vmatprep.subr.mxu0 0.0
    %4272 = vmatpush1.msra.mxu0 0.0
    %4273 = vmatprep.subr.mxu0 0.0
    %4274 = vmatpush1.msra.mxu0 %v2662
    %4275 = vmatprep.subr.mxu0 0.0
    %4276 = vmatpush1.msra.mxu0 %v2661
    %4277 = vmatprep.subr.mxu0 0.0
    %4278 = vmatpush1.msra.mxu0 %v2660
    %4279 = vmatprep.subr.mxu0 0.0
    %4280 = vmatpush1.msra.mxu0 %v2659
    %4281 = vmatprep.subr.mxu0 0.0
    %4282 = vmatpush2.msra.mxu0 0.0
    %4283 = vmatprep.subr.mxu0 0.0
    %4284 = vmatpush2.msra.mxu0 0.0
    %4285 = vmatprep.subr.mxu0 0.0
    %4286 = vmatpush2.msra.mxu0 0.0
    %4287 = vmatprep.subr.mxu0 0.0
    %4288 = vmatpush2.msra.mxu0 0.0
    %4289 = vmatprep.subr.mxu0 0.0
    %4290 = vmatpush2.msra.mxu0 0.0
    %4291 = vmatprep.subr.mxu0 0.0
    %4292 = vmatpush2.msra.mxu0 0.0
    %4293 = vmatprep.subr.mxu0 0.0
    %4294 = vmatpush2.msra.mxu0 0.0
    %4295 = vmatprep.subr.mxu0 0.0
    %4296 = vmatpush2.msra.mxu0 0.0
    %4297 = vmatprep.subr.mxu0 0.0
    %4298 = vmatpush2.msra.mxu0 0.0
    %4299 = vmatprep.subr.mxu0 0.0
    %4300 = vmatpush2.msra.mxu0 0.0
    %4301 = vmatprep.subr.mxu0 0.0
    %4302 = vmatpush2.msra.mxu0 0.0
    %4303 = vmatprep.subr.mxu0 0.0
    %4304 = vmatpush2.msra.mxu0 0.0
    %4305 = vmatprep.subr.mxu0 0.0
    %4306 = vmatpush2.msra.mxu0 0.0
    %4307 = vmatprep.subr.mxu0 0.0
    %4308 = vmatpush2.msra.mxu0 0.0
    %4309 = vmatprep.subr.mxu0 0.0
    %4310 = vmatpush2.msra.mxu0 0.0
    %4311 = vmatprep.subr.mxu0 0.0
    %4312 = vmatpush2.msra.mxu0 0.0
    %4313 = vmatprep.mubr.f32.mxu0 0.0
    %4314 = vmatmul.mubr.f32.gmra.mxu0 %v3707
    %v4315 = vpop.f32.mrf.mxu0
    %v4316 = vadd.f32 0.0, %v4315
    %v4317 = vpop.f32.mrf.mxu0
    %4318 = vdwg.mxu0
    %v4320 = vrot.slane %v4316, 4
    %v4322 = vadd.f32 %v4164, %v4320
    %v4323 = vadd.f32 %v4322, %v2867
    %v4324 = vxor.u32 %v4323, 2147483648
    %v4325 = vmul.f32 %v4324, 1.442695
    %v4326 = vpow.pop %v4325
    %v4327 = vadd.f32 %v4326, 1.0
    %v4328 = vrcp.pop %v4327
    %v4329 = vmul.f32 1.0, %v4328
    %4330 = vmatprep.subr.mxu0 0.0
    %4331 = vmatpush1.msra.mxu0 0.0
    %4332 = vmatprep.subr.mxu0 0.0
    %4333 = vmatpush1.msra.mxu0 0.0
    %4334 = vmatprep.subr.mxu0 0.0
    %4335 = vmatpush1.msra.mxu0 0.0
    %4336 = vmatprep.subr.mxu0 0.0
    %4337 = vmatpush1.msra.mxu0 0.0
    %4338 = vmatprep.subr.mxu0 0.0
    %4339 = vmatpush1.msra.mxu0 0.0
    %4340 = vmatprep.subr.mxu0 0.0
    %4341 = vmatpush1.msra.mxu0 0.0
    %4342 = vmatprep.subr.mxu0 0.0
    %4343 = vmatpush1.msra.mxu0 0.0
    %4344 = vmatprep.subr.mxu0 0.0
    %4345 = vmatpush1.msra.mxu0 0.0
    %4346 = vmatprep.subr.mxu0 0.0
    %4347 = vmatpush1.msra.mxu0 0.0
    %4348 = vmatprep.subr.mxu0 0.0
    %4349 = vmatpush1.msra.mxu0 0.0
    %4350 = vmatprep.subr.mxu0 0.0
    %4351 = vmatpush1.msra.mxu0 0.0
    %4352 = vmatprep.subr.mxu0 0.0
    %4353 = vmatpush1.msra.mxu0 0.0
    %4354 = vmatprep.subr.mxu0 0.0
    %4355 = vmatpush1.msra.mxu0 %v2666
    %4356 = vmatprep.subr.mxu0 0.0
    %4357 = vmatpush1.msra.mxu0 %v2665
    %4358 = vmatprep.subr.mxu0 0.0
    %4359 = vmatpush1.msra.mxu0 %v2664
    %4360 = vmatprep.subr.mxu0 0.0
    %4361 = vmatpush1.msra.mxu0 %v2663
    %4362 = vmatprep.subr.mxu0 0.0
    %4363 = vmatpush2.msra.mxu0 0.0
    %4364 = vmatprep.subr.mxu0 0.0
    %4365 = vmatpush2.msra.mxu0 0.0
    %4366 = vmatprep.subr.mxu0 0.0
    %4367 = vmatpush2.msra.mxu0 0.0
    %4368 = vmatprep.subr.mxu0 0.0
    %4369 = vmatpush2.msra.mxu0 0.0
    %4370 = vmatprep.subr.mxu0 0.0
    %4371 = vmatpush2.msra.mxu0 0.0
    %4372 = vmatprep.subr.mxu0 0.0
    %4373 = vmatpush2.msra.mxu0 0.0
    %4374 = vmatprep.subr.mxu0 0.0
    %4375 = vmatpush2.msra.mxu0 0.0
    %4376 = vmatprep.subr.mxu0 0.0
    %4377 = vmatpush2.msra.mxu0 0.0
    %4378 = vmatprep.subr.mxu0 0.0
    %4379 = vmatpush2.msra.mxu0 0.0
    %4380 = vmatprep.subr.mxu0 0.0
    %4381 = vmatpush2.msra.mxu0 0.0
    %4382 = vmatprep.subr.mxu0 0.0
    %4383 = vmatpush2.msra.mxu0 0.0
    %4384 = vmatprep.subr.mxu0 0.0
    %4385 = vmatpush2.msra.mxu0 0.0
    %4386 = vmatprep.subr.mxu0 0.0
    %4387 = vmatpush2.msra.mxu0 0.0
    %4388 = vmatprep.subr.mxu0 0.0
    %4389 = vmatpush2.msra.mxu0 0.0
    %4390 = vmatprep.subr.mxu0 0.0
    %4391 = vmatpush2.msra.mxu0 0.0
    %4392 = vmatprep.subr.mxu0 0.0
    %4393 = vmatpush2.msra.mxu0 0.0
    %4394 = vmatprep.mubr.f32.mxu0 0.0
    %4395 = vmatmul.mubr.f32.gmra.mxu0 %v3707
    %v4396 = vpop.f32.mrf.mxu0
    %v4397 = vadd.f32 %v2880, %v4396
    %v4398 = vpop.f32.mrf.mxu0
    %4399 = vdwg.mxu0
    %v4401 = vrot.slane %v4397, 4
    %v4403 = vmul.f32 %v4248, %v4401
    %v4404 = vadd.f32 %v4167, %v4403
    %v4405 = vtanh.pop %v4404
    %v4406 = vsub.f32 1.0, %v4329
    %v4407 = vmul.f32 %v4406, %v4405
    %v4408 = vrot.slane %v3704, 6
    %v4410 = vmul.f32 %v4329, %v4408
    %v4411 = vadd.f32 %v4407, %v4410
    %v4413 = vrot.slane %v4411, 4
    %v4414 = vsel %vm1321, %v4413, 0
    %4416 = vmatprep.subr.mxu0 0.0
    %4417 = vmatpush1.msra.mxu0 0.0
    %4418 = vmatprep.subr.mxu0 0.0
    %4419 = vmatpush1.msra.mxu0 0.0
    %4420 = vmatprep.subr.mxu0 0.0
    %4421 = vmatpush1.msra.mxu0 0.0
    %4422 = vmatprep.subr.mxu0 0.0
    %4423 = vmatpush1.msra.mxu0 0.0
    %4424 = vmatprep.subr.mxu0 0.0
    %4425 = vmatpush1.msra.mxu0 0.0
    %4426 = vmatprep.subr.mxu0 0.0
    %4427 = vmatpush1.msra.mxu0 0.0
    %4428 = vmatprep.subr.mxu0 0.0
    %4429 = vmatpush1.msra.mxu0 0.0
    %4430 = vmatprep.subr.mxu0 0.0
    %4431 = vmatpush1.msra.mxu0 0.0
    %4432 = vmatprep.subr.mxu0 0.0
    %4433 = vmatpush1.msra.mxu0 0.0
    %4434 = vmatprep.subr.mxu0 0.0
    %4435 = vmatpush1.msra.mxu0 0.0
    %4436 = vmatprep.subr.mxu0 0.0
    %4437 = vmatpush1.msra.mxu0 0.0
    %4438 = vmatprep.subr.mxu0 0.0
    %4439 = vmatpush1.msra.mxu0 0.0
    %4440 = vmatprep.subr.mxu0 0.0
    %4441 = vmatpush1.msra.mxu0 %v2673
    %4442 = vmatprep.subr.mxu0 0.0
    %4443 = vmatpush1.msra.mxu0 %v2672
    %4444 = vmatprep.subr.mxu0 0.0
    %4445 = vmatpush1.msra.mxu0 %v2671
    %4446 = vmatprep.subr.mxu0 0.0
    %4447 = vmatpush1.msra.mxu0 %v2670
    %4448 = vmatprep.subr.mxu0 0.0
    %4449 = vmatpush2.msra.mxu0 0.0
    %4450 = vmatprep.subr.mxu0 0.0
    %4451 = vmatpush2.msra.mxu0 0.0
    %4452 = vmatprep.subr.mxu0 0.0
    %4453 = vmatpush2.msra.mxu0 0.0
    %4454 = vmatprep.subr.mxu0 0.0
    %4455 = vmatpush2.msra.mxu0 0.0
    %4456 = vmatprep.subr.mxu0 0.0
    %4457 = vmatpush2.msra.mxu0 0.0
    %4458 = vmatprep.subr.mxu0 0.0
    %4459 = vmatpush2.msra.mxu0 0.0
    %4460 = vmatprep.subr.mxu0 0.0
    %4461 = vmatpush2.msra.mxu0 0.0
    %4462 = vmatprep.subr.mxu0 0.0
    %4463 = vmatpush2.msra.mxu0 0.0
    %4464 = vmatprep.subr.mxu0 0.0
    %4465 = vmatpush2.msra.mxu0 0.0
    %4466 = vmatprep.subr.mxu0 0.0
    %4467 = vmatpush2.msra.mxu0 0.0
    %4468 = vmatprep.subr.mxu0 0.0
    %4469 = vmatpush2.msra.mxu0 0.0
    %4470 = vmatprep.subr.mxu0 0.0
    %4471 = vmatpush2.msra.mxu0 0.0
    %4472 = vmatprep.subr.mxu0 0.0
    %4473 = vmatpush2.msra.mxu0 0.0
    %4474 = vmatprep.subr.mxu0 0.0
    %4475 = vmatpush2.msra.mxu0 0.0
    %4476 = vmatprep.subr.mxu0 0.0
    %4477 = vmatpush2.msra.mxu0 0.0
    %4478 = vmatprep.subr.mxu0 0.0
    %4479 = vmatpush2.msra.mxu0 0.0
    %4480 = vmatprep.mubr.f32.mxu0 0.0
    %4481 = vmatmul.mubr.f32.gmra.mxu0 %v4414
    %v4482 = vpop.f32.mrf.mxu0
    %v4483 = vadd.f32 %v2963, %v4482
    %v4484 = vpop.f32.mrf.mxu0
    %4485 = vdwg.mxu0
    %4486 = vmatprep.subr.mxu0 0.0
    %4487 = vmatpush1.msra.mxu0 0.0
    %4488 = vmatprep.subr.mxu0 0.0
    %4489 = vmatpush1.msra.mxu0 0.0
    %4490 = vmatprep.subr.mxu0 0.0
    %4491 = vmatpush1.msra.mxu0 0.0
    %4492 = vmatprep.subr.mxu0 0.0
    %4493 = vmatpush1.msra.mxu0 0.0
    %4494 = vmatprep.subr.mxu0 0.0
    %4495 = vmatpush1.msra.mxu0 0.0
    %4496 = vmatprep.subr.mxu0 0.0
    %4497 = vmatpush1.msra.mxu0 0.0
    %4498 = vmatprep.subr.mxu0 0.0
    %4499 = vmatpush1.msra.mxu0 0.0
    %4500 = vmatprep.subr.mxu0 0.0
    %4501 = vmatpush1.msra.mxu0 0.0
    %4502 = vmatprep.subr.mxu0 0.0
    %4503 = vmatpush1.msra.mxu0 0.0
    %4504 = vmatprep.subr.mxu0 0.0
    %4505 = vmatpush1.msra.mxu0 0.0
    %4506 = vmatprep.subr.mxu0 0.0
    %4507 = vmatpush1.msra.mxu0 0.0
    %4508 = vmatprep.subr.mxu0 0.0
    %4509 = vmatpush1.msra.mxu0 0.0
    %4510 = vmatprep.subr.mxu0 0.0
    %4511 = vmatpush1.msra.mxu0 %v2677
    %4512 = vmatprep.subr.mxu0 0.0
    %4513 = vmatpush1.msra.mxu0 %v2676
    %4514 = vmatprep.subr.mxu0 0.0
    %4515 = vmatpush1.msra.mxu0 %v2675
    %4516 = vmatprep.subr.mxu0 0.0
    %4517 = vmatpush1.msra.mxu0 %v2674
    %4518 = vmatprep.subr.mxu0 0.0
    %4519 = vmatpush2.msra.mxu0 0.0
    %4520 = vmatprep.subr.mxu0 0.0
    %4521 = vmatpush2.msra.mxu0 0.0
    %4522 = vmatprep.subr.mxu0 0.0
    %4523 = vmatpush2.msra.mxu0 0.0
    %4524 = vmatprep.subr.mxu0 0.0
    %4525 = vmatpush2.msra.mxu0 0.0
    %4526 = vmatprep.subr.mxu0 0.0
    %4527 = vmatpush2.msra.mxu0 0.0
    %4528 = vmatprep.subr.mxu0 0.0
    %4529 = vmatpush2.msra.mxu0 0.0
    %4530 = vmatprep.subr.mxu0 0.0
    %4531 = vmatpush2.msra.mxu0 0.0
    %4532 = vmatprep.subr.mxu0 0.0
    %4533 = vmatpush2.msra.mxu0 0.0
    %4534 = vmatprep.subr.mxu0 0.0
    %4535 = vmatpush2.msra.mxu0 0.0
    %4536 = vmatprep.subr.mxu0 0.0
    %4537 = vmatpush2.msra.mxu0 0.0
    %4538 = vmatprep.subr.mxu0 0.0
    %4539 = vmatpush2.msra.mxu0 0.0
    %4540 = vmatprep.subr.mxu0 0.0
    %4541 = vmatpush2.msra.mxu0 0.0
    %4542 = vmatprep.subr.mxu0 0.0
    %4543 = vmatpush2.msra.mxu0 0.0
    %4544 = vmatprep.subr.mxu0 0.0
    %4545 = vmatpush2.msra.mxu0 0.0
    %4546 = vmatprep.subr.mxu0 0.0
    %4547 = vmatpush2.msra.mxu0 0.0
    %4548 = vmatprep.subr.mxu0 0.0
    %4549 = vmatpush2.msra.mxu0 0.0
    %4550 = vmatprep.mubr.f32.mxu0 0.0
    %4551 = vmatmul.mubr.f32.gmra.mxu0 %v4414
    %v4552 = vpop.f32.mrf.mxu0
    %v4553 = vadd.f32 %v3042, %v4552
    %v4554 = vpop.f32.mrf.mxu0
    %4555 = vdwg.mxu0
    %4556 = vmatprep.subr.mxu0 0.0
    %4557 = vmatpush1.msra.mxu0 0.0
    %4558 = vmatprep.subr.mxu0 0.0
    %4559 = vmatpush1.msra.mxu0 0.0
    %4560 = vmatprep.subr.mxu0 0.0
    %4561 = vmatpush1.msra.mxu0 0.0
    %4562 = vmatprep.subr.mxu0 0.0
    %4563 = vmatpush1.msra.mxu0 0.0
    %4564 = vmatprep.subr.mxu0 0.0
    %4565 = vmatpush1.msra.mxu0 0.0
    %4566 = vmatprep.subr.mxu0 0.0
    %4567 = vmatpush1.msra.mxu0 0.0
    %4568 = vmatprep.subr.mxu0 0.0
    %4569 = vmatpush1.msra.mxu0 0.0
    %4570 = vmatprep.subr.mxu0 0.0
    %4571 = vmatpush1.msra.mxu0 0.0
    %4572 = vmatprep.subr.mxu0 0.0
    %4573 = vmatpush1.msra.mxu0 0.0
    %4574 = vmatprep.subr.mxu0 0.0
    %4575 = vmatpush1.msra.mxu0 0.0
    %4576 = vmatprep.subr.mxu0 0.0
    %4577 = vmatpush1.msra.mxu0 0.0
    %4578 = vmatprep.subr.mxu0 0.0
    %4579 = vmatpush1.msra.mxu0 0.0
    %4580 = vmatprep.subr.mxu0 0.0
    %4581 = vmatpush1.msra.mxu0 %v2681
    %4582 = vmatprep.subr.mxu0 0.0
    %4583 = vmatpush1.msra.mxu0 %v2680
    %4584 = vmatprep.subr.mxu0 0.0
    %4585 = vmatpush1.msra.mxu0 %v2679
    %4586 = vmatprep.subr.mxu0 0.0
    %4587 = vmatpush1.msra.mxu0 %v2678
    %4588 = vmatprep.subr.mxu0 0.0
    %4589 = vmatpush2.msra.mxu0 0.0
    %4590 = vmatprep.subr.mxu0 0.0
    %4591 = vmatpush2.msra.mxu0 0.0
    %4592 = vmatprep.subr.mxu0 0.0
    %4593 = vmatpush2.msra.mxu0 0.0
    %4594 = vmatprep.subr.mxu0 0.0
    %4595 = vmatpush2.msra.mxu0 0.0
    %4596 = vmatprep.subr.mxu0 0.0
    %4597 = vmatpush2.msra.mxu0 0.0
    %4598 = vmatprep.subr.mxu0 0.0
    %4599 = vmatpush2.msra.mxu0 0.0
    %4600 = vmatprep.subr.mxu0 0.0
    %4601 = vmatpush2.msra.mxu0 0.0
    %4602 = vmatprep.subr.mxu0 0.0
    %4603 = vmatpush2.msra.mxu0 0.0
    %4604 = vmatprep.subr.mxu0 0.0
    %4605 = vmatpush2.msra.mxu0 0.0
    %4606 = vmatprep.subr.mxu0 0.0
    %4607 = vmatpush2.msra.mxu0 0.0
    %4608 = vmatprep.subr.mxu0 0.0
    %4609 = vmatpush2.msra.mxu0 0.0
    %4610 = vmatprep.subr.mxu0 0.0
    %4611 = vmatpush2.msra.mxu0 0.0
    %4612 = vmatprep.subr.mxu0 0.0
    %4613 = vmatpush2.msra.mxu0 0.0
    %4614 = vmatprep.subr.mxu0 0.0
    %4615 = vmatpush2.msra.mxu0 0.0
    %4616 = vmatprep.subr.mxu0 0.0
    %4617 = vmatpush2.msra.mxu0 0.0
    %4618 = vmatprep.subr.mxu0 0.0
    %4619 = vmatpush2.msra.mxu0 0.0
    %4620 = vmatprep.mubr.f32.mxu0 0.0
    %4621 = vmatmul.mubr.f32.gmra.mxu0 %v4414
    %v4622 = vpop.f32.mrf.mxu0
    %v4623 = vadd.f32 %v3118, %v4622
    %v4624 = vpop.f32.mrf.mxu0
    %4625 = vdwg.mxu0
    %v4627 = vsel %vm1321, %v4154, 0
    %4629 = vmatprep.subr.mxu0 0.0
    %4630 = vmatpush1.msra.mxu0 0.0
    %4631 = vmatprep.subr.mxu0 0.0
    %4632 = vmatpush1.msra.mxu0 0.0
    %4633 = vmatprep.subr.mxu0 0.0
    %4634 = vmatpush1.msra.mxu0 0.0
    %4635 = vmatprep.subr.mxu0 0.0
    %4636 = vmatpush1.msra.mxu0 0.0
    %4637 = vmatprep.subr.mxu0 0.0
    %4638 = vmatpush1.msra.mxu0 0.0
    %4639 = vmatprep.subr.mxu0 0.0
    %4640 = vmatpush1.msra.mxu0 0.0
    %4641 = vmatprep.subr.mxu0 0.0
    %4642 = vmatpush1.msra.mxu0 0.0
    %4643 = vmatprep.subr.mxu0 0.0
    %4644 = vmatpush1.msra.mxu0 0.0
    %4645 = vmatprep.subr.mxu0 0.0
    %4646 = vmatpush1.msra.mxu0 0.0
    %4647 = vmatprep.subr.mxu0 0.0
    %4648 = vmatpush1.msra.mxu0 0.0
    %4649 = vmatprep.subr.mxu0 0.0
    %4650 = vmatpush1.msra.mxu0 0.0
    %4651 = vmatprep.subr.mxu0 0.0
    %4652 = vmatpush1.msra.mxu0 0.0
    %4653 = vmatprep.subr.mxu0 0.0
    %4654 = vmatpush1.msra.mxu0 %v2688
    %4655 = vmatprep.subr.mxu0 0.0
    %4656 = vmatpush1.msra.mxu0 %v2687
    %4657 = vmatprep.subr.mxu0 0.0
    %4658 = vmatpush1.msra.mxu0 %v2686
    %4659 = vmatprep.subr.mxu0 0.0
    %4660 = vmatpush1.msra.mxu0 %v2685
    %4661 = vmatprep.subr.mxu0 0.0
    %4662 = vmatpush2.msra.mxu0 0.0
    %4663 = vmatprep.subr.mxu0 0.0
    %4664 = vmatpush2.msra.mxu0 0.0
    %4665 = vmatprep.subr.mxu0 0.0
    %4666 = vmatpush2.msra.mxu0 0.0
    %4667 = vmatprep.subr.mxu0 0.0
    %4668 = vmatpush2.msra.mxu0 0.0
    %4669 = vmatprep.subr.mxu0 0.0
    %4670 = vmatpush2.msra.mxu0 0.0
    %4671 = vmatprep.subr.mxu0 0.0
    %4672 = vmatpush2.msra.mxu0 0.0
    %4673 = vmatprep.subr.mxu0 0.0
    %4674 = vmatpush2.msra.mxu0 0.0
    %4675 = vmatprep.subr.mxu0 0.0
    %4676 = vmatpush2.msra.mxu0 0.0
    %4677 = vmatprep.subr.mxu0 0.0
    %4678 = vmatpush2.msra.mxu0 0.0
    %4679 = vmatprep.subr.mxu0 0.0
    %4680 = vmatpush2.msra.mxu0 0.0
    %4681 = vmatprep.subr.mxu0 0.0
    %4682 = vmatpush2.msra.mxu0 0.0
    %4683 = vmatprep.subr.mxu0 0.0
    %4684 = vmatpush2.msra.mxu0 0.0
    %4685 = vmatprep.subr.mxu0 0.0
    %4686 = vmatpush2.msra.mxu0 0.0
    %4687 = vmatprep.subr.mxu0 0.0
    %4688 = vmatpush2.msra.mxu0 0.0
    %4689 = vmatprep.subr.mxu0 0.0
    %4690 = vmatpush2.msra.mxu0 0.0
    %4691 = vmatprep.subr.mxu0 0.0
    %4692 = vmatpush2.msra.mxu0 0.0
    %4693 = vmatprep.mubr.f32.mxu0 0.0
    %4694 = vmatmul.mubr.f32.gmra.mxu0 %v4627
    %v4695 = vpop.f32.mrf.mxu0
    %v4696 = vadd.f32 0.0, %v4695
    %v4697 = vpop.f32.mrf.mxu0
    %4698 = vdwg.mxu0
    %v4699 = vadd.f32 %v4483, %v4696
    %v4700 = vadd.f32 %v4699, %v3265
    %v4701 = vxor.u32 %v4700, 2147483648
    %v4702 = vmul.f32 %v4701, 1.442695
    %v4703 = vpow.pop %v4702
    %v4704 = vadd.f32 %v4703, 1.0
    %v4705 = vrcp.pop %v4704
    %v4706 = vmul.f32 1.0, %v4705
    %4707 = vmatprep.subr.mxu0 0.0
    %4708 = vmatpush1.msra.mxu0 0.0
    %4709 = vmatprep.subr.mxu0 0.0
    %4710 = vmatpush1.msra.mxu0 0.0
    %4711 = vmatprep.subr.mxu0 0.0
    %4712 = vmatpush1.msra.mxu0 0.0
    %4713 = vmatprep.subr.mxu0 0.0
    %4714 = vmatpush1.msra.mxu0 0.0
    %4715 = vmatprep.subr.mxu0 0.0
    %4716 = vmatpush1.msra.mxu0 0.0
    %4717 = vmatprep.subr.mxu0 0.0
    %4718 = vmatpush1.msra.mxu0 0.0
    %4719 = vmatprep.subr.mxu0 0.0
    %4720 = vmatpush1.msra.mxu0 0.0
    %4721 = vmatprep.subr.mxu0 0.0
    %4722 = vmatpush1.msra.mxu0 0.0
    %4723 = vmatprep.subr.mxu0 0.0
    %4724 = vmatpush1.msra.mxu0 0.0
    %4725 = vmatprep.subr.mxu0 0.0
    %4726 = vmatpush1.msra.mxu0 0.0
    %4727 = vmatprep.subr.mxu0 0.0
    %4728 = vmatpush1.msra.mxu0 0.0
    %4729 = vmatprep.subr.mxu0 0.0
    %4730 = vmatpush1.msra.mxu0 0.0
    %4731 = vmatprep.subr.mxu0 0.0
    %4732 = vmatpush1.msra.mxu0 %v2692
    %4733 = vmatprep.subr.mxu0 0.0
    %4734 = vmatpush1.msra.mxu0 %v2691
    %4735 = vmatprep.subr.mxu0 0.0
    %4736 = vmatpush1.msra.mxu0 %v2690
    %4737 = vmatprep.subr.mxu0 0.0
    %4738 = vmatpush1.msra.mxu0 %v2689
    %4739 = vmatprep.subr.mxu0 0.0
    %4740 = vmatpush2.msra.mxu0 0.0
    %4741 = vmatprep.subr.mxu0 0.0
    %4742 = vmatpush2.msra.mxu0 0.0
    %4743 = vmatprep.subr.mxu0 0.0
    %4744 = vmatpush2.msra.mxu0 0.0
    %4745 = vmatprep.subr.mxu0 0.0
    %4746 = vmatpush2.msra.mxu0 0.0
    %4747 = vmatprep.subr.mxu0 0.0
    %4748 = vmatpush2.msra.mxu0 0.0
    %4749 = vmatprep.subr.mxu0 0.0
    %4750 = vmatpush2.msra.mxu0 0.0
    %4751 = vmatprep.subr.mxu0 0.0
    %4752 = vmatpush2.msra.mxu0 0.0
    %4753 = vmatprep.subr.mxu0 0.0
    %4754 = vmatpush2.msra.mxu0 0.0
    %4755 = vmatprep.subr.mxu0 0.0
    %4756 = vmatpush2.msra.mxu0 0.0
    %4757 = vmatprep.subr.mxu0 0.0
    %4758 = vmatpush2.msra.mxu0 0.0
    %4759 = vmatprep.subr.mxu0 0.0
    %4760 = vmatpush2.msra.mxu0 0.0
    %4761 = vmatprep.subr.mxu0 0.0
    %4762 = vmatpush2.msra.mxu0 0.0
    %4763 = vmatprep.subr.mxu0 0.0
    %4764 = vmatpush2.msra.mxu0 0.0
    %4765 = vmatprep.subr.mxu0 0.0
    %4766 = vmatpush2.msra.mxu0 0.0
    %4767 = vmatprep.subr.mxu0 0.0
    %4768 = vmatpush2.msra.mxu0 0.0
    %4769 = vmatprep.subr.mxu0 0.0
    %4770 = vmatpush2.msra.mxu0 0.0
    %4771 = vmatprep.mubr.f32.mxu0 0.0
    %4772 = vmatmul.mubr.f32.gmra.mxu0 %v4627
    %v4773 = vpop.f32.mrf.mxu0
    %v4774 = vadd.f32 0.0, %v4773
    %v4775 = vpop.f32.mrf.mxu0
    %4776 = vdwg.mxu0
    %v4777 = vadd.f32 %v4553, %v4774
    %v4778 = vadd.f32 %v4777, %v3349
    %v4779 = vxor.u32 %v4778, 2147483648
    %v4780 = vmul.f32 %v4779, 1.442695
    %v4781 = vpow.pop %v4780
    %v4782 = vadd.f32 %v4781, 1.0
    %v4783 = vrcp.pop %v4782
    %v4784 = vmul.f32 1.0, %v4783
    %4785 = vmatprep.subr.mxu0 0.0
    %4786 = vmatpush1.msra.mxu0 0.0
    %4787 = vmatprep.subr.mxu0 0.0
    %4788 = vmatpush1.msra.mxu0 0.0
    %4789 = vmatprep.subr.mxu0 0.0
    %4790 = vmatpush1.msra.mxu0 0.0
    %4791 = vmatprep.subr.mxu0 0.0
    %4792 = vmatpush1.msra.mxu0 0.0
    %4793 = vmatprep.subr.mxu0 0.0
    %4794 = vmatpush1.msra.mxu0 0.0
    %4795 = vmatprep.subr.mxu0 0.0
    %4796 = vmatpush1.msra.mxu0 0.0
    %4797 = vmatprep.subr.mxu0 0.0
    %4798 = vmatpush1.msra.mxu0 0.0
    %4799 = vmatprep.subr.mxu0 0.0
    %4800 = vmatpush1.msra.mxu0 0.0
    %4801 = vmatprep.subr.mxu0 0.0
    %4802 = vmatpush1.msra.mxu0 0.0
    %4803 = vmatprep.subr.mxu0 0.0
    %4804 = vmatpush1.msra.mxu0 0.0
    %4805 = vmatprep.subr.mxu0 0.0
    %4806 = vmatpush1.msra.mxu0 0.0
    %4807 = vmatprep.subr.mxu0 0.0
    %4808 = vmatpush1.msra.mxu0 0.0
    %4809 = vmatprep.subr.mxu0 0.0
    %4810 = vmatpush1.msra.mxu0 %v2696
    %4811 = vmatprep.subr.mxu0 0.0
    %4812 = vmatpush1.msra.mxu0 %v2695
    %4813 = vmatprep.subr.mxu0 0.0
    %4814 = vmatpush1.msra.mxu0 %v2694
    %4815 = vmatprep.subr.mxu0 0.0
    %4816 = vmatpush1.msra.mxu0 %v2693
    %4817 = vmatprep.subr.mxu0 0.0
    %4818 = vmatpush2.msra.mxu0 0.0
    %4819 = vmatprep.subr.mxu0 0.0
    %4820 = vmatpush2.msra.mxu0 0.0
    %4821 = vmatprep.subr.mxu0 0.0
    %4822 = vmatpush2.msra.mxu0 0.0
    %4823 = vmatprep.subr.mxu0 0.0
    %4824 = vmatpush2.msra.mxu0 0.0
    %4825 = vmatprep.subr.mxu0 0.0
    %4826 = vmatpush2.msra.mxu0 0.0
    %4827 = vmatprep.subr.mxu0 0.0
    %4828 = vmatpush2.msra.mxu0 0.0
    %4829 = vmatprep.subr.mxu0 0.0
    %4830 = vmatpush2.msra.mxu0 0.0
    %4831 = vmatprep.subr.mxu0 0.0
    %4832 = vmatpush2.msra.mxu0 0.0
    %4833 = vmatprep.subr.mxu0 0.0
    %4834 = vmatpush2.msra.mxu0 0.0
    %4835 = vmatprep.subr.mxu0 0.0
    %4836 = vmatpush2.msra.mxu0 0.0
    %4837 = vmatprep.subr.mxu0 0.0
    %4838 = vmatpush2.msra.mxu0 0.0
    %4839 = vmatprep.subr.mxu0 0.0
    %4840 = vmatpush2.msra.mxu0 0.0
    %4841 = vmatprep.subr.mxu0 0.0
    %4842 = vmatpush2.msra.mxu0 0.0
    %4843 = vmatprep.subr.mxu0 0.0
    %4844 = vmatpush2.msra.mxu0 0.0
    %4845 = vmatprep.subr.mxu0 0.0
    %4846 = vmatpush2.msra.mxu0 0.0
    %4847 = vmatprep.subr.mxu0 0.0
    %4848 = vmatpush2.msra.mxu0 0.0
    %4849 = vmatprep.mubr.f32.mxu0 0.0
    %4850 = vmatmul.mubr.f32.gmra.mxu0 %v4627
    %v4851 = vpop.f32.mrf.mxu0
    %v4852 = vadd.f32 %v3362, %v4851
    %v4853 = vpop.f32.mrf.mxu0
    %4854 = vdwg.mxu0
    %v4855 = vmul.f32 %v4706, %v4852
    %v4856 = vadd.f32 %v4623, %v4855
    %v4857 = vtanh.pop %v4856
    %v4858 = vsub.f32 1.0, %v4784
    %v4859 = vmul.f32 %v4858, %v4857
    %v4860 = vmul.f32 %v4784, %v4154
    %v4861 = vadd.f32 %v4859, %v4860
    %v4862 = vrot.slane %v3444, 4
    %v4864 = vmul.f32 %v4861, %v4862
    %4865 = vst.msk [vmem:[#allocation2 + $0x4] sm:$0x3] %vm3447, %v4864
    %v4866 = vrot.slane %v2488, 2
    %v4868 = vadd.f32 %v2247, %v4866
    %v4869 = vrot.slane %v2570, 2
    %v4871 = vadd.f32 %v2324, %v4869
    %v4872 = vrot.slane %v2652, 2
    %v4874 = vadd.f32 %v2401, %v4872
    %4875 = vmatprep.subr.mxu0 0.0
    %4876 = vmatpush1.msra.mxu0 0.0
    %4877 = vmatprep.subr.mxu0 0.0
    %4878 = vmatpush1.msra.mxu0 0.0
    %4879 = vmatprep.subr.mxu0 0.0
    %4880 = vmatpush1.msra.mxu0 0.0
    %4881 = vmatprep.subr.mxu0 0.0
    %4882 = vmatpush1.msra.mxu0 0.0
    %4883 = vmatprep.subr.mxu0 0.0
    %4884 = vmatpush1.msra.mxu0 0.0
    %4885 = vmatprep.subr.mxu0 0.0
    %4886 = vmatpush1.msra.mxu0 0.0
    %4887 = vmatprep.subr.mxu0 0.0
    %4888 = vmatpush1.msra.mxu0 0.0
    %4889 = vmatprep.subr.mxu0 0.0
    %4890 = vmatpush1.msra.mxu0 0.0
    %4891 = vmatprep.subr.mxu0 0.0
    %4892 = vmatpush1.msra.mxu0 0.0
    %4893 = vmatprep.subr.mxu0 0.0
    %4894 = vmatpush1.msra.mxu0 0.0
    %4895 = vmatprep.subr.mxu0 0.0
    %4896 = vmatpush1.msra.mxu0 0.0
    %4897 = vmatprep.subr.mxu0 0.0
    %4898 = vmatpush1.msra.mxu0 0.0
    %4899 = vmatprep.subr.mxu0 0.0
    %4900 = vmatpush1.msra.mxu0 %v2658
    %4901 = vmatprep.subr.mxu0 0.0
    %4902 = vmatpush1.msra.mxu0 %v2657
    %4903 = vmatprep.subr.mxu0 0.0
    %4904 = vmatpush1.msra.mxu0 %v2656
    %4905 = vmatprep.subr.mxu0 0.0
    %4906 = vmatpush1.msra.mxu0 %v2655
    %4907 = vmatprep.subr.mxu0 0.0
    %4908 = vmatpush2.msra.mxu0 0.0
    %4909 = vmatprep.subr.mxu0 0.0
    %4910 = vmatpush2.msra.mxu0 0.0
    %4911 = vmatprep.subr.mxu0 0.0
    %4912 = vmatpush2.msra.mxu0 0.0
    %4913 = vmatprep.subr.mxu0 0.0
    %4914 = vmatpush2.msra.mxu0 0.0
    %4915 = vmatprep.subr.mxu0 0.0
    %4916 = vmatpush2.msra.mxu0 0.0
    %4917 = vmatprep.subr.mxu0 0.0
    %4918 = vmatpush2.msra.mxu0 0.0
    %4919 = vmatprep.subr.mxu0 0.0
    %4920 = vmatpush2.msra.mxu0 0.0
    %4921 = vmatprep.subr.mxu0 0.0
    %4922 = vmatpush2.msra.mxu0 0.0
    %4923 = vmatprep.subr.mxu0 0.0
    %4924 = vmatpush2.msra.mxu0 0.0
    %4925 = vmatprep.subr.mxu0 0.0
    %4926 = vmatpush2.msra.mxu0 0.0
    %4927 = vmatprep.subr.mxu0 0.0
    %4928 = vmatpush2.msra.mxu0 0.0
    %4929 = vmatprep.subr.mxu0 0.0
    %4930 = vmatpush2.msra.mxu0 0.0
    %4931 = vmatprep.subr.mxu0 0.0
    %4932 = vmatpush2.msra.mxu0 0.0
    %4933 = vmatprep.subr.mxu0 0.0
    %4934 = vmatpush2.msra.mxu0 0.0
    %4935 = vmatprep.subr.mxu0 0.0
    %4936 = vmatpush2.msra.mxu0 0.0
    %4937 = vmatprep.subr.mxu0 0.0
    %4938 = vmatpush2.msra.mxu0 0.0
    %4939 = vmatprep.mubr.f32.mxu0 0.0
    %4940 = vmatmul.mubr.f32.gmra.mxu0 %v4414
    %v4941 = vpop.f32.mrf.mxu0
    %v4942 = vadd.f32 0.0, %v4941
    %v4943 = vpop.f32.mrf.mxu0
    %4944 = vdwg.mxu0
    %v4946 = vrot.slane %v4942, 2
    %v4948 = vadd.f32 %v4868, %v4946
    %v4949 = vadd.f32 %v4948, %v2783
    %v4950 = vxor.u32 %v4949, 2147483648
    %v4951 = vmul.f32 %v4950, 1.442695
    %v4952 = vpow.pop %v4951
    %v4953 = vadd.f32 %v4952, 1.0
    %v4954 = vrcp.pop %v4953
    %v4955 = vmul.f32 1.0, %v4954
    %4956 = vmatprep.subr.mxu0 0.0
    %4957 = vmatpush1.msra.mxu0 0.0
    %4958 = vmatprep.subr.mxu0 0.0
    %4959 = vmatpush1.msra.mxu0 0.0
    %4960 = vmatprep.subr.mxu0 0.0
    %4961 = vmatpush1.msra.mxu0 0.0
    %4962 = vmatprep.subr.mxu0 0.0
    %4963 = vmatpush1.msra.mxu0 0.0
    %4964 = vmatprep.subr.mxu0 0.0
    %4965 = vmatpush1.msra.mxu0 0.0
    %4966 = vmatprep.subr.mxu0 0.0
    %4967 = vmatpush1.msra.mxu0 0.0
    %4968 = vmatprep.subr.mxu0 0.0
    %4969 = vmatpush1.msra.mxu0 0.0
    %4970 = vmatprep.subr.mxu0 0.0
    %4971 = vmatpush1.msra.mxu0 0.0
    %4972 = vmatprep.subr.mxu0 0.0
    %4973 = vmatpush1.msra.mxu0 0.0
    %4974 = vmatprep.subr.mxu0 0.0
    %4975 = vmatpush1.msra.mxu0 0.0
    %4976 = vmatprep.subr.mxu0 0.0
    %4977 = vmatpush1.msra.mxu0 0.0
    %4978 = vmatprep.subr.mxu0 0.0
    %4979 = vmatpush1.msra.mxu0 0.0
    %4980 = vmatprep.subr.mxu0 0.0
    %4981 = vmatpush1.msra.mxu0 %v2662
    %4982 = vmatprep.subr.mxu0 0.0
    %4983 = vmatpush1.msra.mxu0 %v2661
    %4984 = vmatprep.subr.mxu0 0.0
    %4985 = vmatpush1.msra.mxu0 %v2660
    %4986 = vmatprep.subr.mxu0 0.0
    %4987 = vmatpush1.msra.mxu0 %v2659
    %4988 = vmatprep.subr.mxu0 0.0
    %4989 = vmatpush2.msra.mxu0 0.0
    %4990 = vmatprep.subr.mxu0 0.0
    %4991 = vmatpush2.msra.mxu0 0.0
    %4992 = vmatprep.subr.mxu0 0.0
    %4993 = vmatpush2.msra.mxu0 0.0
    %4994 = vmatprep.subr.mxu0 0.0
    %4995 = vmatpush2.msra.mxu0 0.0
    %4996 = vmatprep.subr.mxu0 0.0
    %4997 = vmatpush2.msra.mxu0 0.0
    %4998 = vmatprep.subr.mxu0 0.0
    %4999 = vmatpush2.msra.mxu0 0.0
    %5000 = vmatprep.subr.mxu0 0.0
    %5001 = vmatpush2.msra.mxu0 0.0
    %5002 = vmatprep.subr.mxu0 0.0
    %5003 = vmatpush2.msra.mxu0 0.0
    %5004 = vmatprep.subr.mxu0 0.0
    %5005 = vmatpush2.msra.mxu0 0.0
    %5006 = vmatprep.subr.mxu0 0.0
    %5007 = vmatpush2.msra.mxu0 0.0
    %5008 = vmatprep.subr.mxu0 0.0
    %5009 = vmatpush2.msra.mxu0 0.0
    %5010 = vmatprep.subr.mxu0 0.0
    %5011 = vmatpush2.msra.mxu0 0.0
    %5012 = vmatprep.subr.mxu0 0.0
    %5013 = vmatpush2.msra.mxu0 0.0
    %5014 = vmatprep.subr.mxu0 0.0
    %5015 = vmatpush2.msra.mxu0 0.0
    %5016 = vmatprep.subr.mxu0 0.0
    %5017 = vmatpush2.msra.mxu0 0.0
    %5018 = vmatprep.subr.mxu0 0.0
    %5019 = vmatpush2.msra.mxu0 0.0
    %5020 = vmatprep.mubr.f32.mxu0 0.0
    %5021 = vmatmul.mubr.f32.gmra.mxu0 %v4414
    %v5022 = vpop.f32.mrf.mxu0
    %v5023 = vadd.f32 0.0, %v5022
    %v5024 = vpop.f32.mrf.mxu0
    %5025 = vdwg.mxu0
    %v5027 = vrot.slane %v5023, 2
    %v5029 = vadd.f32 %v4871, %v5027
    %v5030 = vadd.f32 %v5029, %v2867
    %v5031 = vxor.u32 %v5030, 2147483648
    %v5032 = vmul.f32 %v5031, 1.442695
    %v5033 = vpow.pop %v5032
    %v5034 = vadd.f32 %v5033, 1.0
    %v5035 = vrcp.pop %v5034
    %v5036 = vmul.f32 1.0, %v5035
    %5037 = vmatprep.subr.mxu0 0.0
    %5038 = vmatpush1.msra.mxu0 0.0
    %5039 = vmatprep.subr.mxu0 0.0
    %5040 = vmatpush1.msra.mxu0 0.0
    %5041 = vmatprep.subr.mxu0 0.0
    %5042 = vmatpush1.msra.mxu0 0.0
    %5043 = vmatprep.subr.mxu0 0.0
    %5044 = vmatpush1.msra.mxu0 0.0
    %5045 = vmatprep.subr.mxu0 0.0
    %5046 = vmatpush1.msra.mxu0 0.0
    %5047 = vmatprep.subr.mxu0 0.0
    %5048 = vmatpush1.msra.mxu0 0.0
    %5049 = vmatprep.subr.mxu0 0.0
    %5050 = vmatpush1.msra.mxu0 0.0
    %5051 = vmatprep.subr.mxu0 0.0
    %5052 = vmatpush1.msra.mxu0 0.0
    %5053 = vmatprep.subr.mxu0 0.0
    %5054 = vmatpush1.msra.mxu0 0.0
    %5055 = vmatprep.subr.mxu0 0.0
    %5056 = vmatpush1.msra.mxu0 0.0
    %5057 = vmatprep.subr.mxu0 0.0
    %5058 = vmatpush1.msra.mxu0 0.0
    %5059 = vmatprep.subr.mxu0 0.0
    %5060 = vmatpush1.msra.mxu0 0.0
    %5061 = vmatprep.subr.mxu0 0.0
    %5062 = vmatpush1.msra.mxu0 %v2666
    %5063 = vmatprep.subr.mxu0 0.0
    %5064 = vmatpush1.msra.mxu0 %v2665
    %5065 = vmatprep.subr.mxu0 0.0
    %5066 = vmatpush1.msra.mxu0 %v2664
    %5067 = vmatprep.subr.mxu0 0.0
    %5068 = vmatpush1.msra.mxu0 %v2663
    %5069 = vmatprep.subr.mxu0 0.0
    %5070 = vmatpush2.msra.mxu0 0.0
    %5071 = vmatprep.subr.mxu0 0.0
    %5072 = vmatpush2.msra.mxu0 0.0
    %5073 = vmatprep.subr.mxu0 0.0
    %5074 = vmatpush2.msra.mxu0 0.0
    %5075 = vmatprep.subr.mxu0 0.0
    %5076 = vmatpush2.msra.mxu0 0.0
    %5077 = vmatprep.subr.mxu0 0.0
    %5078 = vmatpush2.msra.mxu0 0.0
    %5079 = vmatprep.subr.mxu0 0.0
    %5080 = vmatpush2.msra.mxu0 0.0
    %5081 = vmatprep.subr.mxu0 0.0
    %5082 = vmatpush2.msra.mxu0 0.0
    %5083 = vmatprep.subr.mxu0 0.0
    %5084 = vmatpush2.msra.mxu0 0.0
    %5085 = vmatprep.subr.mxu0 0.0
    %5086 = vmatpush2.msra.mxu0 0.0
    %5087 = vmatprep.subr.mxu0 0.0
    %5088 = vmatpush2.msra.mxu0 0.0
    %5089 = vmatprep.subr.mxu0 0.0
    %5090 = vmatpush2.msra.mxu0 0.0
    %5091 = vmatprep.subr.mxu0 0.0
    %5092 = vmatpush2.msra.mxu0 0.0
    %5093 = vmatprep.subr.mxu0 0.0
    %5094 = vmatpush2.msra.mxu0 0.0
    %5095 = vmatprep.subr.mxu0 0.0
    %5096 = vmatpush2.msra.mxu0 0.0
    %5097 = vmatprep.subr.mxu0 0.0
    %5098 = vmatpush2.msra.mxu0 0.0
    %5099 = vmatprep.subr.mxu0 0.0
    %5100 = vmatpush2.msra.mxu0 0.0
    %5101 = vmatprep.mubr.f32.mxu0 0.0
    %5102 = vmatmul.mubr.f32.gmra.mxu0 %v4414
    %v5103 = vpop.f32.mrf.mxu0
    %v5104 = vadd.f32 %v2880, %v5103
    %v5105 = vpop.f32.mrf.mxu0
    %5106 = vdwg.mxu0
    %v5108 = vrot.slane %v5104, 2
    %v5110 = vmul.f32 %v4955, %v5108
    %v5111 = vadd.f32 %v4874, %v5110
    %v5112 = vtanh.pop %v5111
    %v5113 = vsub.f32 1.0, %v5036
    %v5114 = vmul.f32 %v5113, %v5112
    %v5115 = vrot.slane %v4411, 6
    %v5117 = vmul.f32 %v5036, %v5115
    %v5118 = vadd.f32 %v5114, %v5117
    %v5120 = vrot.slane %v5118, 6
    %v5121 = vsel %vm1321, %v5120, 0
    %5123 = vmatprep.subr.mxu0 0.0
    %5124 = vmatpush1.msra.mxu0 0.0
    %5125 = vmatprep.subr.mxu0 0.0
    %5126 = vmatpush1.msra.mxu0 0.0
    %5127 = vmatprep.subr.mxu0 0.0
    %5128 = vmatpush1.msra.mxu0 0.0
    %5129 = vmatprep.subr.mxu0 0.0
    %5130 = vmatpush1.msra.mxu0 0.0
    %5131 = vmatprep.subr.mxu0 0.0
    %5132 = vmatpush1.msra.mxu0 0.0
    %5133 = vmatprep.subr.mxu0 0.0
    %5134 = vmatpush1.msra.mxu0 0.0
    %5135 = vmatprep.subr.mxu0 0.0
    %5136 = vmatpush1.msra.mxu0 0.0
    %5137 = vmatprep.subr.mxu0 0.0
    %5138 = vmatpush1.msra.mxu0 0.0
    %5139 = vmatprep.subr.mxu0 0.0
    %5140 = vmatpush1.msra.mxu0 0.0
    %5141 = vmatprep.subr.mxu0 0.0
    %5142 = vmatpush1.msra.mxu0 0.0
    %5143 = vmatprep.subr.mxu0 0.0
    %5144 = vmatpush1.msra.mxu0 0.0
    %5145 = vmatprep.subr.mxu0 0.0
    %5146 = vmatpush1.msra.mxu0 0.0
    %5147 = vmatprep.subr.mxu0 0.0
    %5148 = vmatpush1.msra.mxu0 %v2673
    %5149 = vmatprep.subr.mxu0 0.0
    %5150 = vmatpush1.msra.mxu0 %v2672
    %5151 = vmatprep.subr.mxu0 0.0
    %5152 = vmatpush1.msra.mxu0 %v2671
    %5153 = vmatprep.subr.mxu0 0.0
    %5154 = vmatpush1.msra.mxu0 %v2670
    %5155 = vmatprep.subr.mxu0 0.0
    %5156 = vmatpush2.msra.mxu0 0.0
    %5157 = vmatprep.subr.mxu0 0.0
    %5158 = vmatpush2.msra.mxu0 0.0
    %5159 = vmatprep.subr.mxu0 0.0
    %5160 = vmatpush2.msra.mxu0 0.0
    %5161 = vmatprep.subr.mxu0 0.0
    %5162 = vmatpush2.msra.mxu0 0.0
    %5163 = vmatprep.subr.mxu0 0.0
    %5164 = vmatpush2.msra.mxu0 0.0
    %5165 = vmatprep.subr.mxu0 0.0
    %5166 = vmatpush2.msra.mxu0 0.0
    %5167 = vmatprep.subr.mxu0 0.0
    %5168 = vmatpush2.msra.mxu0 0.0
    %5169 = vmatprep.subr.mxu0 0.0
    %5170 = vmatpush2.msra.mxu0 0.0
    %5171 = vmatprep.subr.mxu0 0.0
    %5172 = vmatpush2.msra.mxu0 0.0
    %5173 = vmatprep.subr.mxu0 0.0
    %5174 = vmatpush2.msra.mxu0 0.0
    %5175 = vmatprep.subr.mxu0 0.0
    %5176 = vmatpush2.msra.mxu0 0.0
    %5177 = vmatprep.subr.mxu0 0.0
    %5178 = vmatpush2.msra.mxu0 0.0
    %5179 = vmatprep.subr.mxu0 0.0
    %5180 = vmatpush2.msra.mxu0 0.0
    %5181 = vmatprep.subr.mxu0 0.0
    %5182 = vmatpush2.msra.mxu0 0.0
    %5183 = vmatprep.subr.mxu0 0.0
    %5184 = vmatpush2.msra.mxu0 0.0
    %5185 = vmatprep.subr.mxu0 0.0
    %5186 = vmatpush2.msra.mxu0 0.0
    %5187 = vmatprep.mubr.f32.mxu0 0.0
    %5188 = vmatmul.mubr.f32.gmra.mxu0 %v5121
    %v5189 = vpop.f32.mrf.mxu0
    %v5190 = vadd.f32 %v2963, %v5189
    %v5191 = vpop.f32.mrf.mxu0
    %5192 = vdwg.mxu0
    %5193 = vmatprep.subr.mxu0 0.0
    %5194 = vmatpush1.msra.mxu0 0.0
    %5195 = vmatprep.subr.mxu0 0.0
    %5196 = vmatpush1.msra.mxu0 0.0
    %5197 = vmatprep.subr.mxu0 0.0
    %5198 = vmatpush1.msra.mxu0 0.0
    %5199 = vmatprep.subr.mxu0 0.0
    %5200 = vmatpush1.msra.mxu0 0.0
    %5201 = vmatprep.subr.mxu0 0.0
    %5202 = vmatpush1.msra.mxu0 0.0
    %5203 = vmatprep.subr.mxu0 0.0
    %5204 = vmatpush1.msra.mxu0 0.0
    %5205 = vmatprep.subr.mxu0 0.0
    %5206 = vmatpush1.msra.mxu0 0.0
    %5207 = vmatprep.subr.mxu0 0.0
    %5208 = vmatpush1.msra.mxu0 0.0
    %5209 = vmatprep.subr.mxu0 0.0
    %5210 = vmatpush1.msra.mxu0 0.0
    %5211 = vmatprep.subr.mxu0 0.0
    %5212 = vmatpush1.msra.mxu0 0.0
    %5213 = vmatprep.subr.mxu0 0.0
    %5214 = vmatpush1.msra.mxu0 0.0
    %5215 = vmatprep.subr.mxu0 0.0
    %5216 = vmatpush1.msra.mxu0 0.0
    %5217 = vmatprep.subr.mxu0 0.0
    %5218 = vmatpush1.msra.mxu0 %v2677
    %5219 = vmatprep.subr.mxu0 0.0
    %5220 = vmatpush1.msra.mxu0 %v2676
    %5221 = vmatprep.subr.mxu0 0.0
    %5222 = vmatpush1.msra.mxu0 %v2675
    %5223 = vmatprep.subr.mxu0 0.0
    %5224 = vmatpush1.msra.mxu0 %v2674
    %5225 = vmatprep.subr.mxu0 0.0
    %5226 = vmatpush2.msra.mxu0 0.0
    %5227 = vmatprep.subr.mxu0 0.0
    %5228 = vmatpush2.msra.mxu0 0.0
    %5229 = vmatprep.subr.mxu0 0.0
    %5230 = vmatpush2.msra.mxu0 0.0
    %5231 = vmatprep.subr.mxu0 0.0
    %5232 = vmatpush2.msra.mxu0 0.0
    %5233 = vmatprep.subr.mxu0 0.0
    %5234 = vmatpush2.msra.mxu0 0.0
    %5235 = vmatprep.subr.mxu0 0.0
    %5236 = vmatpush2.msra.mxu0 0.0
    %5237 = vmatprep.subr.mxu0 0.0
    %5238 = vmatpush2.msra.mxu0 0.0
    %5239 = vmatprep.subr.mxu0 0.0
    %5240 = vmatpush2.msra.mxu0 0.0
    %5241 = vmatprep.subr.mxu0 0.0
    %5242 = vmatpush2.msra.mxu0 0.0
    %5243 = vmatprep.subr.mxu0 0.0
    %5244 = vmatpush2.msra.mxu0 0.0
    %5245 = vmatprep.subr.mxu0 0.0
    %5246 = vmatpush2.msra.mxu0 0.0
    %5247 = vmatprep.subr.mxu0 0.0
    %5248 = vmatpush2.msra.mxu0 0.0
    %5249 = vmatprep.subr.mxu0 0.0
    %5250 = vmatpush2.msra.mxu0 0.0
    %5251 = vmatprep.subr.mxu0 0.0
    %5252 = vmatpush2.msra.mxu0 0.0
    %5253 = vmatprep.subr.mxu0 0.0
    %5254 = vmatpush2.msra.mxu0 0.0
    %5255 = vmatprep.subr.mxu0 0.0
    %5256 = vmatpush2.msra.mxu0 0.0
    %5257 = vmatprep.mubr.f32.mxu0 0.0
    %5258 = vmatmul.mubr.f32.gmra.mxu0 %v5121
    %v5259 = vpop.f32.mrf.mxu0
    %v5260 = vadd.f32 %v3042, %v5259
    %v5261 = vpop.f32.mrf.mxu0
    %5262 = vdwg.mxu0
    %5263 = vmatprep.subr.mxu0 0.0
    %5264 = vmatpush1.msra.mxu0 0.0
    %5265 = vmatprep.subr.mxu0 0.0
    %5266 = vmatpush1.msra.mxu0 0.0
    %5267 = vmatprep.subr.mxu0 0.0
    %5268 = vmatpush1.msra.mxu0 0.0
    %5269 = vmatprep.subr.mxu0 0.0
    %5270 = vmatpush1.msra.mxu0 0.0
    %5271 = vmatprep.subr.mxu0 0.0
    %5272 = vmatpush1.msra.mxu0 0.0
    %5273 = vmatprep.subr.mxu0 0.0
    %5274 = vmatpush1.msra.mxu0 0.0
    %5275 = vmatprep.subr.mxu0 0.0
    %5276 = vmatpush1.msra.mxu0 0.0
    %5277 = vmatprep.subr.mxu0 0.0
    %5278 = vmatpush1.msra.mxu0 0.0
    %5279 = vmatprep.subr.mxu0 0.0
    %5280 = vmatpush1.msra.mxu0 0.0
    %5281 = vmatprep.subr.mxu0 0.0
    %5282 = vmatpush1.msra.mxu0 0.0
    %5283 = vmatprep.subr.mxu0 0.0
    %5284 = vmatpush1.msra.mxu0 0.0
    %5285 = vmatprep.subr.mxu0 0.0
    %5286 = vmatpush1.msra.mxu0 0.0
    %5287 = vmatprep.subr.mxu0 0.0
    %5288 = vmatpush1.msra.mxu0 %v2681
    %5289 = vmatprep.subr.mxu0 0.0
    %5290 = vmatpush1.msra.mxu0 %v2680
    %5291 = vmatprep.subr.mxu0 0.0
    %5292 = vmatpush1.msra.mxu0 %v2679
    %5293 = vmatprep.subr.mxu0 0.0
    %5294 = vmatpush1.msra.mxu0 %v2678
    %5295 = vmatprep.subr.mxu0 0.0
    %5296 = vmatpush2.msra.mxu0 0.0
    %5297 = vmatprep.subr.mxu0 0.0
    %5298 = vmatpush2.msra.mxu0 0.0
    %5299 = vmatprep.subr.mxu0 0.0
    %5300 = vmatpush2.msra.mxu0 0.0
    %5301 = vmatprep.subr.mxu0 0.0
    %5302 = vmatpush2.msra.mxu0 0.0
    %5303 = vmatprep.subr.mxu0 0.0
    %5304 = vmatpush2.msra.mxu0 0.0
    %5305 = vmatprep.subr.mxu0 0.0
    %5306 = vmatpush2.msra.mxu0 0.0
    %5307 = vmatprep.subr.mxu0 0.0
    %5308 = vmatpush2.msra.mxu0 0.0
    %5309 = vmatprep.subr.mxu0 0.0
    %5310 = vmatpush2.msra.mxu0 0.0
    %5311 = vmatprep.subr.mxu0 0.0
    %5312 = vmatpush2.msra.mxu0 0.0
    %5313 = vmatprep.subr.mxu0 0.0
    %5314 = vmatpush2.msra.mxu0 0.0
    %5315 = vmatprep.subr.mxu0 0.0
    %5316 = vmatpush2.msra.mxu0 0.0
    %5317 = vmatprep.subr.mxu0 0.0
    %5318 = vmatpush2.msra.mxu0 0.0
    %5319 = vmatprep.subr.mxu0 0.0
    %5320 = vmatpush2.msra.mxu0 0.0
    %5321 = vmatprep.subr.mxu0 0.0
    %5322 = vmatpush2.msra.mxu0 0.0
    %5323 = vmatprep.subr.mxu0 0.0
    %5324 = vmatpush2.msra.mxu0 0.0
    %5325 = vmatprep.subr.mxu0 0.0
    %5326 = vmatpush2.msra.mxu0 0.0
    %5327 = vmatprep.mubr.f32.mxu0 0.0
    %5328 = vmatmul.mubr.f32.gmra.mxu0 %v5121
    %v5329 = vpop.f32.mrf.mxu0
    %v5330 = vadd.f32 %v3118, %v5329
    %v5331 = vpop.f32.mrf.mxu0
    %5332 = vdwg.mxu0
    %v5334 = vsel %vm1321, %v4861, 0
    %5336 = vmatprep.subr.mxu0 0.0
    %5337 = vmatpush1.msra.mxu0 0.0
    %5338 = vmatprep.subr.mxu0 0.0
    %5339 = vmatpush1.msra.mxu0 0.0
    %5340 = vmatprep.subr.mxu0 0.0
    %5341 = vmatpush1.msra.mxu0 0.0
    %5342 = vmatprep.subr.mxu0 0.0
    %5343 = vmatpush1.msra.mxu0 0.0
    %5344 = vmatprep.subr.mxu0 0.0
    %5345 = vmatpush1.msra.mxu0 0.0
    %5346 = vmatprep.subr.mxu0 0.0
    %5347 = vmatpush1.msra.mxu0 0.0
    %5348 = vmatprep.subr.mxu0 0.0
    %5349 = vmatpush1.msra.mxu0 0.0
    %5350 = vmatprep.subr.mxu0 0.0
    %5351 = vmatpush1.msra.mxu0 0.0
    %5352 = vmatprep.subr.mxu0 0.0
    %5353 = vmatpush1.msra.mxu0 0.0
    %5354 = vmatprep.subr.mxu0 0.0
    %5355 = vmatpush1.msra.mxu0 0.0
    %5356 = vmatprep.subr.mxu0 0.0
    %5357 = vmatpush1.msra.mxu0 0.0
    %5358 = vmatprep.subr.mxu0 0.0
    %5359 = vmatpush1.msra.mxu0 0.0
    %5360 = vmatprep.subr.mxu0 0.0
    %5361 = vmatpush1.msra.mxu0 %v2688
    %5362 = vmatprep.subr.mxu0 0.0
    %5363 = vmatpush1.msra.mxu0 %v2687
    %5364 = vmatprep.subr.mxu0 0.0
    %5365 = vmatpush1.msra.mxu0 %v2686
    %5366 = vmatprep.subr.mxu0 0.0
    %5367 = vmatpush1.msra.mxu0 %v2685
    %5368 = vmatprep.subr.mxu0 0.0
    %5369 = vmatpush2.msra.mxu0 0.0
    %5370 = vmatprep.subr.mxu0 0.0
    %5371 = vmatpush2.msra.mxu0 0.0
    %5372 = vmatprep.subr.mxu0 0.0
    %5373 = vmatpush2.msra.mxu0 0.0
    %5374 = vmatprep.subr.mxu0 0.0
    %5375 = vmatpush2.msra.mxu0 0.0
    %5376 = vmatprep.subr.mxu0 0.0
    %5377 = vmatpush2.msra.mxu0 0.0
    %5378 = vmatprep.subr.mxu0 0.0
    %5379 = vmatpush2.msra.mxu0 0.0
    %5380 = vmatprep.subr.mxu0 0.0
    %5381 = vmatpush2.msra.mxu0 0.0
    %5382 = vmatprep.subr.mxu0 0.0
    %5383 = vmatpush2.msra.mxu0 0.0
    %5384 = vmatprep.subr.mxu0 0.0
    %5385 = vmatpush2.msra.mxu0 0.0
    %5386 = vmatprep.subr.mxu0 0.0
    %5387 = vmatpush2.msra.mxu0 0.0
    %5388 = vmatprep.subr.mxu0 0.0
    %5389 = vmatpush2.msra.mxu0 0.0
    %5390 = vmatprep.subr.mxu0 0.0
    %5391 = vmatpush2.msra.mxu0 0.0
    %5392 = vmatprep.subr.mxu0 0.0
    %5393 = vmatpush2.msra.mxu0 0.0
    %5394 = vmatprep.subr.mxu0 0.0
    %5395 = vmatpush2.msra.mxu0 0.0
    %5396 = vmatprep.subr.mxu0 0.0
    %5397 = vmatpush2.msra.mxu0 0.0
    %5398 = vmatprep.subr.mxu0 0.0
    %5399 = vmatpush2.msra.mxu0 0.0
    %5400 = vmatprep.mubr.f32.mxu0 0.0
    %5401 = vmatmul.mubr.f32.gmra.mxu0 %v5334
    %v5402 = vpop.f32.mrf.mxu0
    %v5403 = vadd.f32 0.0, %v5402
    %v5404 = vpop.f32.mrf.mxu0
    %5405 = vdwg.mxu0
    %v5406 = vadd.f32 %v5190, %v5403
    %v5407 = vadd.f32 %v5406, %v3265
    %v5408 = vxor.u32 %v5407, 2147483648
    %v5409 = vmul.f32 %v5408, 1.442695
    %v5410 = vpow.pop %v5409
    %v5411 = vadd.f32 %v5410, 1.0
    %v5412 = vrcp.pop %v5411
    %v5413 = vmul.f32 1.0, %v5412
    %5414 = vmatprep.subr.mxu0 0.0
    %5415 = vmatpush1.msra.mxu0 0.0
    %5416 = vmatprep.subr.mxu0 0.0
    %5417 = vmatpush1.msra.mxu0 0.0
    %5418 = vmatprep.subr.mxu0 0.0
    %5419 = vmatpush1.msra.mxu0 0.0
    %5420 = vmatprep.subr.mxu0 0.0
    %5421 = vmatpush1.msra.mxu0 0.0
    %5422 = vmatprep.subr.mxu0 0.0
    %5423 = vmatpush1.msra.mxu0 0.0
    %5424 = vmatprep.subr.mxu0 0.0
    %5425 = vmatpush1.msra.mxu0 0.0
    %5426 = vmatprep.subr.mxu0 0.0
    %5427 = vmatpush1.msra.mxu0 0.0
    %5428 = vmatprep.subr.mxu0 0.0
    %5429 = vmatpush1.msra.mxu0 0.0
    %5430 = vmatprep.subr.mxu0 0.0
    %5431 = vmatpush1.msra.mxu0 0.0
    %5432 = vmatprep.subr.mxu0 0.0
    %5433 = vmatpush1.msra.mxu0 0.0
    %5434 = vmatprep.subr.mxu0 0.0
    %5435 = vmatpush1.msra.mxu0 0.0
    %5436 = vmatprep.subr.mxu0 0.0
    %5437 = vmatpush1.msra.mxu0 0.0
    %5438 = vmatprep.subr.mxu0 0.0
    %5439 = vmatpush1.msra.mxu0 %v2692
    %5440 = vmatprep.subr.mxu0 0.0
    %5441 = vmatpush1.msra.mxu0 %v2691
    %5442 = vmatprep.subr.mxu0 0.0
    %5443 = vmatpush1.msra.mxu0 %v2690
    %5444 = vmatprep.subr.mxu0 0.0
    %5445 = vmatpush1.msra.mxu0 %v2689
    %5446 = vmatprep.subr.mxu0 0.0
    %5447 = vmatpush2.msra.mxu0 0.0
    %5448 = vmatprep.subr.mxu0 0.0
    %5449 = vmatpush2.msra.mxu0 0.0
    %5450 = vmatprep.subr.mxu0 0.0
    %5451 = vmatpush2.msra.mxu0 0.0
    %5452 = vmatprep.subr.mxu0 0.0
    %5453 = vmatpush2.msra.mxu0 0.0
    %5454 = vmatprep.subr.mxu0 0.0
    %5455 = vmatpush2.msra.mxu0 0.0
    %5456 = vmatprep.subr.mxu0 0.0
    %5457 = vmatpush2.msra.mxu0 0.0
    %5458 = vmatprep.subr.mxu0 0.0
    %5459 = vmatpush2.msra.mxu0 0.0
    %5460 = vmatprep.subr.mxu0 0.0
    %5461 = vmatpush2.msra.mxu0 0.0
    %5462 = vmatprep.subr.mxu0 0.0
    %5463 = vmatpush2.msra.mxu0 0.0
    %5464 = vmatprep.subr.mxu0 0.0
    %5465 = vmatpush2.msra.mxu0 0.0
    %5466 = vmatprep.subr.mxu0 0.0
    %5467 = vmatpush2.msra.mxu0 0.0
    %5468 = vmatprep.subr.mxu0 0.0
    %5469 = vmatpush2.msra.mxu0 0.0
    %5470 = vmatprep.subr.mxu0 0.0
    %5471 = vmatpush2.msra.mxu0 0.0
    %5472 = vmatprep.subr.mxu0 0.0
    %5473 = vmatpush2.msra.mxu0 0.0
    %5474 = vmatprep.subr.mxu0 0.0
    %5475 = vmatpush2.msra.mxu0 0.0
    %5476 = vmatprep.subr.mxu0 0.0
    %5477 = vmatpush2.msra.mxu0 0.0
    %5478 = vmatprep.mubr.f32.mxu0 0.0
    %5479 = vmatmul.mubr.f32.gmra.mxu0 %v5334
    %v5480 = vpop.f32.mrf.mxu0
    %v5481 = vadd.f32 0.0, %v5480
    %v5482 = vpop.f32.mrf.mxu0
    %5483 = vdwg.mxu0
    %v5484 = vadd.f32 %v5260, %v5481
    %v5485 = vadd.f32 %v5484, %v3349
    %v5486 = vxor.u32 %v5485, 2147483648
    %v5487 = vmul.f32 %v5486, 1.442695
    %v5488 = vpow.pop %v5487
    %v5489 = vadd.f32 %v5488, 1.0
    %v5490 = vrcp.pop %v5489
    %v5491 = vmul.f32 1.0, %v5490
    %5492 = vmatprep.subr.mxu0 0.0
    %5493 = vmatpush1.msra.mxu0 0.0
    %5494 = vmatprep.subr.mxu0 0.0
    %5495 = vmatpush1.msra.mxu0 0.0
    %5496 = vmatprep.subr.mxu0 0.0
    %5497 = vmatpush1.msra.mxu0 0.0
    %5498 = vmatprep.subr.mxu0 0.0
    %5499 = vmatpush1.msra.mxu0 0.0
    %5500 = vmatprep.subr.mxu0 0.0
    %5501 = vmatpush1.msra.mxu0 0.0
    %5502 = vmatprep.subr.mxu0 0.0
    %5503 = vmatpush1.msra.mxu0 0.0
    %5504 = vmatprep.subr.mxu0 0.0
    %5505 = vmatpush1.msra.mxu0 0.0
    %5506 = vmatprep.subr.mxu0 0.0
    %5507 = vmatpush1.msra.mxu0 0.0
    %5508 = vmatprep.subr.mxu0 0.0
    %5509 = vmatpush1.msra.mxu0 0.0
    %5510 = vmatprep.subr.mxu0 0.0
    %5511 = vmatpush1.msra.mxu0 0.0
    %5512 = vmatprep.subr.mxu0 0.0
    %5513 = vmatpush1.msra.mxu0 0.0
    %5514 = vmatprep.subr.mxu0 0.0
    %5515 = vmatpush1.msra.mxu0 0.0
    %5516 = vmatprep.subr.mxu0 0.0
    %5517 = vmatpush1.msra.mxu0 %v2696
    %5518 = vmatprep.subr.mxu0 0.0
    %5519 = vmatpush1.msra.mxu0 %v2695
    %5520 = vmatprep.subr.mxu0 0.0
    %5521 = vmatpush1.msra.mxu0 %v2694
    %5522 = vmatprep.subr.mxu0 0.0
    %5523 = vmatpush1.msra.mxu0 %v2693
    %5524 = vmatprep.subr.mxu0 0.0
    %5525 = vmatpush2.msra.mxu0 0.0
    %5526 = vmatprep.subr.mxu0 0.0
    %5527 = vmatpush2.msra.mxu0 0.0
    %5528 = vmatprep.subr.mxu0 0.0
    %5529 = vmatpush2.msra.mxu0 0.0
    %5530 = vmatprep.subr.mxu0 0.0
    %5531 = vmatpush2.msra.mxu0 0.0
    %5532 = vmatprep.subr.mxu0 0.0
    %5533 = vmatpush2.msra.mxu0 0.0
    %5534 = vmatprep.subr.mxu0 0.0
    %5535 = vmatpush2.msra.mxu0 0.0
    %5536 = vmatprep.subr.mxu0 0.0
    %5537 = vmatpush2.msra.mxu0 0.0
    %5538 = vmatprep.subr.mxu0 0.0
    %5539 = vmatpush2.msra.mxu0 0.0
    %5540 = vmatprep.subr.mxu0 0.0
    %5541 = vmatpush2.msra.mxu0 0.0
    %5542 = vmatprep.subr.mxu0 0.0
    %5543 = vmatpush2.msra.mxu0 0.0
    %5544 = vmatprep.subr.mxu0 0.0
    %5545 = vmatpush2.msra.mxu0 0.0
    %5546 = vmatprep.subr.mxu0 0.0
    %5547 = vmatpush2.msra.mxu0 0.0
    %5548 = vmatprep.subr.mxu0 0.0
    %5549 = vmatpush2.msra.mxu0 0.0
    %5550 = vmatprep.subr.mxu0 0.0
    %5551 = vmatpush2.msra.mxu0 0.0
    %5552 = vmatprep.subr.mxu0 0.0
    %5553 = vmatpush2.msra.mxu0 0.0
    %5554 = vmatprep.subr.mxu0 0.0
    %5555 = vmatpush2.msra.mxu0 0.0
    %5556 = vmatprep.mubr.f32.mxu0 0.0
    %5557 = vmatmul.mubr.f32.gmra.mxu0 %v5334
    %v5558 = vpop.f32.mrf.mxu0
    %v5559 = vadd.f32 %v3362, %v5558
    %v5560 = vpop.f32.mrf.mxu0
    %5561 = vdwg.mxu0
    %v5562 = vmul.f32 %v5413, %v5559
    %v5563 = vadd.f32 %v5330, %v5562
    %v5564 = vtanh.pop %v5563
    %v5565 = vsub.f32 1.0, %v5491
    %v5566 = vmul.f32 %v5565, %v5564
    %v5567 = vmul.f32 %v5491, %v4861
    %v5568 = vadd.f32 %v5566, %v5567
    %v5569 = vrot.slane %v3444, 6
    %v5571 = vmul.f32 %v5568, %v5569
    %5572 = vst.msk [vmem:[#allocation2 + $0x6] sm:$0x3] %vm3447, %v5571
    %v5573 = vadd.f32 %v2252, %v2488
    %v5574 = vadd.f32 %v2329, %v2570
    %v5575 = vadd.f32 %v2406, %v2652
    %5576 = vmatprep.subr.mxu0 0.0
    %5577 = vmatpush1.msra.mxu0 0.0
    %5578 = vmatprep.subr.mxu0 0.0
    %5579 = vmatpush1.msra.mxu0 0.0
    %5580 = vmatprep.subr.mxu0 0.0
    %5581 = vmatpush1.msra.mxu0 0.0
    %5582 = vmatprep.subr.mxu0 0.0
    %5583 = vmatpush1.msra.mxu0 0.0
    %5584 = vmatprep.subr.mxu0 0.0
    %5585 = vmatpush1.msra.mxu0 0.0
    %5586 = vmatprep.subr.mxu0 0.0
    %5587 = vmatpush1.msra.mxu0 0.0
    %5588 = vmatprep.subr.mxu0 0.0
    %5589 = vmatpush1.msra.mxu0 0.0
    %5590 = vmatprep.subr.mxu0 0.0
    %5591 = vmatpush1.msra.mxu0 0.0
    %5592 = vmatprep.subr.mxu0 0.0
    %5593 = vmatpush1.msra.mxu0 0.0
    %5594 = vmatprep.subr.mxu0 0.0
    %5595 = vmatpush1.msra.mxu0 0.0
    %5596 = vmatprep.subr.mxu0 0.0
    %5597 = vmatpush1.msra.mxu0 0.0
    %5598 = vmatprep.subr.mxu0 0.0
    %5599 = vmatpush1.msra.mxu0 0.0
    %5600 = vmatprep.subr.mxu0 0.0
    %5601 = vmatpush1.msra.mxu0 %v2658
    %5602 = vmatprep.subr.mxu0 0.0
    %5603 = vmatpush1.msra.mxu0 %v2657
    %5604 = vmatprep.subr.mxu0 0.0
    %5605 = vmatpush1.msra.mxu0 %v2656
    %5606 = vmatprep.subr.mxu0 0.0
    %5607 = vmatpush1.msra.mxu0 %v2655
    %5608 = vmatprep.subr.mxu0 0.0
    %5609 = vmatpush2.msra.mxu0 0.0
    %5610 = vmatprep.subr.mxu0 0.0
    %5611 = vmatpush2.msra.mxu0 0.0
    %5612 = vmatprep.subr.mxu0 0.0
    %5613 = vmatpush2.msra.mxu0 0.0
    %5614 = vmatprep.subr.mxu0 0.0
    %5615 = vmatpush2.msra.mxu0 0.0
    %5616 = vmatprep.subr.mxu0 0.0
    %5617 = vmatpush2.msra.mxu0 0.0
    %5618 = vmatprep.subr.mxu0 0.0
    %5619 = vmatpush2.msra.mxu0 0.0
    %5620 = vmatprep.subr.mxu0 0.0
    %5621 = vmatpush2.msra.mxu0 0.0
    %5622 = vmatprep.subr.mxu0 0.0
    %5623 = vmatpush2.msra.mxu0 0.0
    %5624 = vmatprep.subr.mxu0 0.0
    %5625 = vmatpush2.msra.mxu0 0.0
    %5626 = vmatprep.subr.mxu0 0.0
    %5627 = vmatpush2.msra.mxu0 0.0
    %5628 = vmatprep.subr.mxu0 0.0
    %5629 = vmatpush2.msra.mxu0 0.0
    %5630 = vmatprep.subr.mxu0 0.0
    %5631 = vmatpush2.msra.mxu0 0.0
    %5632 = vmatprep.subr.mxu0 0.0
    %5633 = vmatpush2.msra.mxu0 0.0
    %5634 = vmatprep.subr.mxu0 0.0
    %5635 = vmatpush2.msra.mxu0 0.0
    %5636 = vmatprep.subr.mxu0 0.0
    %5637 = vmatpush2.msra.mxu0 0.0
    %5638 = vmatprep.subr.mxu0 0.0
    %5639 = vmatpush2.msra.mxu0 0.0
    %5640 = vmatprep.mubr.f32.mxu0 0.0
    %5641 = vmatmul.mubr.f32.gmra.mxu0 %v5121
    %v5642 = vpop.f32.mrf.mxu0
    %v5643 = vadd.f32 0.0, %v5642
    %v5644 = vpop.f32.mrf.mxu0
    %5645 = vdwg.mxu0
    %v5646 = vadd.f32 %v5573, %v5643
    %v5647 = vadd.f32 %v5646, %v2783
    %v5648 = vxor.u32 %v5647, 2147483648
    %v5649 = vmul.f32 %v5648, 1.442695
    %v5650 = vpow.pop %v5649
    %v5651 = vadd.f32 %v5650, 1.0
    %v5652 = vrcp.pop %v5651
    %v5653 = vmul.f32 1.0, %v5652
    %5654 = vmatprep.subr.mxu0 0.0
    %5655 = vmatpush1.msra.mxu0 0.0
    %5656 = vmatprep.subr.mxu0 0.0
    %5657 = vmatpush1.msra.mxu0 0.0
    %5658 = vmatprep.subr.mxu0 0.0
    %5659 = vmatpush1.msra.mxu0 0.0
    %5660 = vmatprep.subr.mxu0 0.0
    %5661 = vmatpush1.msra.mxu0 0.0
    %5662 = vmatprep.subr.mxu0 0.0
    %5663 = vmatpush1.msra.mxu0 0.0
    %5664 = vmatprep.subr.mxu0 0.0
    %5665 = vmatpush1.msra.mxu0 0.0
    %5666 = vmatprep.subr.mxu0 0.0
    %5667 = vmatpush1.msra.mxu0 0.0
    %5668 = vmatprep.subr.mxu0 0.0
    %5669 = vmatpush1.msra.mxu0 0.0
    %5670 = vmatprep.subr.mxu0 0.0
    %5671 = vmatpush1.msra.mxu0 0.0
    %5672 = vmatprep.subr.mxu0 0.0
    %5673 = vmatpush1.msra.mxu0 0.0
    %5674 = vmatprep.subr.mxu0 0.0
    %5675 = vmatpush1.msra.mxu0 0.0
    %5676 = vmatprep.subr.mxu0 0.0
    %5677 = vmatpush1.msra.mxu0 0.0
    %5678 = vmatprep.subr.mxu0 0.0
    %5679 = vmatpush1.msra.mxu0 %v2662
    %5680 = vmatprep.subr.mxu0 0.0
    %5681 = vmatpush1.msra.mxu0 %v2661
    %5682 = vmatprep.subr.mxu0 0.0
    %5683 = vmatpush1.msra.mxu0 %v2660
    %5684 = vmatprep.subr.mxu0 0.0
    %5685 = vmatpush1.msra.mxu0 %v2659
    %5686 = vmatprep.subr.mxu0 0.0
    %5687 = vmatpush2.msra.mxu0 0.0
    %5688 = vmatprep.subr.mxu0 0.0
    %5689 = vmatpush2.msra.mxu0 0.0
    %5690 = vmatprep.subr.mxu0 0.0
    %5691 = vmatpush2.msra.mxu0 0.0
    %5692 = vmatprep.subr.mxu0 0.0
    %5693 = vmatpush2.msra.mxu0 0.0
    %5694 = vmatprep.subr.mxu0 0.0
    %5695 = vmatpush2.msra.mxu0 0.0
    %5696 = vmatprep.subr.mxu0 0.0
    %5697 = vmatpush2.msra.mxu0 0.0
    %5698 = vmatprep.subr.mxu0 0.0
    %5699 = vmatpush2.msra.mxu0 0.0
    %5700 = vmatprep.subr.mxu0 0.0
    %5701 = vmatpush2.msra.mxu0 0.0
    %5702 = vmatprep.subr.mxu0 0.0
    %5703 = vmatpush2.msra.mxu0 0.0
    %5704 = vmatprep.subr.mxu0 0.0
    %5705 = vmatpush2.msra.mxu0 0.0
    %5706 = vmatprep.subr.mxu0 0.0
    %5707 = vmatpush2.msra.mxu0 0.0
    %5708 = vmatprep.subr.mxu0 0.0
    %5709 = vmatpush2.msra.mxu0 0.0
    %5710 = vmatprep.subr.mxu0 0.0
    %5711 = vmatpush2.msra.mxu0 0.0
    %5712 = vmatprep.subr.mxu0 0.0
    %5713 = vmatpush2.msra.mxu0 0.0
    %5714 = vmatprep.subr.mxu0 0.0
    %5715 = vmatpush2.msra.mxu0 0.0
    %5716 = vmatprep.subr.mxu0 0.0
    %5717 = vmatpush2.msra.mxu0 0.0
    %5718 = vmatprep.mubr.f32.mxu0 0.0
    %5719 = vmatmul.mubr.f32.gmra.mxu0 %v5121
    %v5720 = vpop.f32.mrf.mxu0
    %v5721 = vadd.f32 0.0, %v5720
    %v5722 = vpop.f32.mrf.mxu0
    %5723 = vdwg.mxu0
    %v5724 = vadd.f32 %v5574, %v5721
    %v5725 = vadd.f32 %v5724, %v2867
    %v5726 = vxor.u32 %v5725, 2147483648
    %v5727 = vmul.f32 %v5726, 1.442695
    %v5728 = vpow.pop %v5727
    %v5729 = vadd.f32 %v5728, 1.0
    %v5730 = vrcp.pop %v5729
    %v5731 = vmul.f32 1.0, %v5730
    %5732 = vmatprep.subr.mxu0 0.0
    %5733 = vmatpush1.msra.mxu0 0.0
    %5734 = vmatprep.subr.mxu0 0.0
    %5735 = vmatpush1.msra.mxu0 0.0
    %5736 = vmatprep.subr.mxu0 0.0
    %5737 = vmatpush1.msra.mxu0 0.0
    %5738 = vmatprep.subr.mxu0 0.0
    %5739 = vmatpush1.msra.mxu0 0.0
    %5740 = vmatprep.subr.mxu0 0.0
    %5741 = vmatpush1.msra.mxu0 0.0
    %5742 = vmatprep.subr.mxu0 0.0
    %5743 = vmatpush1.msra.mxu0 0.0
    %5744 = vmatprep.subr.mxu0 0.0
    %5745 = vmatpush1.msra.mxu0 0.0
    %5746 = vmatprep.subr.mxu0 0.0
    %5747 = vmatpush1.msra.mxu0 0.0
    %5748 = vmatprep.subr.mxu0 0.0
    %5749 = vmatpush1.msra.mxu0 0.0
    %5750 = vmatprep.subr.mxu0 0.0
    %5751 = vmatpush1.msra.mxu0 0.0
    %5752 = vmatprep.subr.mxu0 0.0
    %5753 = vmatpush1.msra.mxu0 0.0
    %5754 = vmatprep.subr.mxu0 0.0
    %5755 = vmatpush1.msra.mxu0 0.0
    %5756 = vmatprep.subr.mxu0 0.0
    %5757 = vmatpush1.msra.mxu0 %v2666
    %5758 = vmatprep.subr.mxu0 0.0
    %5759 = vmatpush1.msra.mxu0 %v2665
    %5760 = vmatprep.subr.mxu0 0.0
    %5761 = vmatpush1.msra.mxu0 %v2664
    %5762 = vmatprep.subr.mxu0 0.0
    %5763 = vmatpush1.msra.mxu0 %v2663
    %5764 = vmatprep.subr.mxu0 0.0
    %5765 = vmatpush2.msra.mxu0 0.0
    %5766 = vmatprep.subr.mxu0 0.0
    %5767 = vmatpush2.msra.mxu0 0.0
    %5768 = vmatprep.subr.mxu0 0.0
    %5769 = vmatpush2.msra.mxu0 0.0
    %5770 = vmatprep.subr.mxu0 0.0
    %5771 = vmatpush2.msra.mxu0 0.0
    %5772 = vmatprep.subr.mxu0 0.0
    %5773 = vmatpush2.msra.mxu0 0.0
    %5774 = vmatprep.subr.mxu0 0.0
    %5775 = vmatpush2.msra.mxu0 0.0
    %5776 = vmatprep.subr.mxu0 0.0
    %5777 = vmatpush2.msra.mxu0 0.0
    %5778 = vmatprep.subr.mxu0 0.0
    %5779 = vmatpush2.msra.mxu0 0.0
    %5780 = vmatprep.subr.mxu0 0.0
    %5781 = vmatpush2.msra.mxu0 0.0
    %5782 = vmatprep.subr.mxu0 0.0
    %5783 = vmatpush2.msra.mxu0 0.0
    %5784 = vmatprep.subr.mxu0 0.0
    %5785 = vmatpush2.msra.mxu0 0.0
    %5786 = vmatprep.subr.mxu0 0.0
    %5787 = vmatpush2.msra.mxu0 0.0
    %5788 = vmatprep.subr.mxu0 0.0
    %5789 = vmatpush2.msra.mxu0 0.0
    %5790 = vmatprep.subr.mxu0 0.0
    %5791 = vmatpush2.msra.mxu0 0.0
    %5792 = vmatprep.subr.mxu0 0.0
    %5793 = vmatpush2.msra.mxu0 0.0
    %5794 = vmatprep.subr.mxu0 0.0
    %5795 = vmatpush2.msra.mxu0 0.0
    %5796 = vmatprep.mubr.f32.mxu0 0.0
    %5797 = vmatmul.mubr.f32.gmra.mxu0 %v5121
    %v5798 = vpop.f32.mrf.mxu0
    %v5799 = vadd.f32 %v2880, %v5798
    %v5800 = vpop.f32.mrf.mxu0
    %5801 = vdwg.mxu0
    %v5802 = vmul.f32 %v5653, %v5799
    %v5803 = vadd.f32 %v5575, %v5802
    %v5804 = vtanh.pop %v5803
    %v5805 = vsub.f32 1.0, %v5731
    %v5806 = vmul.f32 %v5805, %v5804
    %v5808 = vmul.f32 %v5731, %v5120
    %v5809 = vadd.f32 %v5806, %v5808
    %v5811 = vsel %vm1321, %v5809, 0
    %5813 = vmatprep.subr.mxu0 0.0
    %5814 = vmatpush1.msra.mxu0 0.0
    %5815 = vmatprep.subr.mxu0 0.0
    %5816 = vmatpush1.msra.mxu0 0.0
    %5817 = vmatprep.subr.mxu0 0.0
    %5818 = vmatpush1.msra.mxu0 0.0
    %5819 = vmatprep.subr.mxu0 0.0
    %5820 = vmatpush1.msra.mxu0 0.0
    %5821 = vmatprep.subr.mxu0 0.0
    %5822 = vmatpush1.msra.mxu0 0.0
    %5823 = vmatprep.subr.mxu0 0.0
    %5824 = vmatpush1.msra.mxu0 0.0
    %5825 = vmatprep.subr.mxu0 0.0
    %5826 = vmatpush1.msra.mxu0 0.0
    %5827 = vmatprep.subr.mxu0 0.0
    %5828 = vmatpush1.msra.mxu0 0.0
    %5829 = vmatprep.subr.mxu0 0.0
    %5830 = vmatpush1.msra.mxu0 0.0
    %5831 = vmatprep.subr.mxu0 0.0
    %5832 = vmatpush1.msra.mxu0 0.0
    %5833 = vmatprep.subr.mxu0 0.0
    %5834 = vmatpush1.msra.mxu0 0.0
    %5835 = vmatprep.subr.mxu0 0.0
    %5836 = vmatpush1.msra.mxu0 0.0
    %5837 = vmatprep.subr.mxu0 0.0
    %5838 = vmatpush1.msra.mxu0 %v2673
    %5839 = vmatprep.subr.mxu0 0.0
    %5840 = vmatpush1.msra.mxu0 %v2672
    %5841 = vmatprep.subr.mxu0 0.0
    %5842 = vmatpush1.msra.mxu0 %v2671
    %5843 = vmatprep.subr.mxu0 0.0
    %5844 = vmatpush1.msra.mxu0 %v2670
    %5845 = vmatprep.subr.mxu0 0.0
    %5846 = vmatpush2.msra.mxu0 0.0
    %5847 = vmatprep.subr.mxu0 0.0
    %5848 = vmatpush2.msra.mxu0 0.0
    %5849 = vmatprep.subr.mxu0 0.0
    %5850 = vmatpush2.msra.mxu0 0.0
    %5851 = vmatprep.subr.mxu0 0.0
    %5852 = vmatpush2.msra.mxu0 0.0
    %5853 = vmatprep.subr.mxu0 0.0
    %5854 = vmatpush2.msra.mxu0 0.0
    %5855 = vmatprep.subr.mxu0 0.0
    %5856 = vmatpush2.msra.mxu0 0.0
    %5857 = vmatprep.subr.mxu0 0.0
    %5858 = vmatpush2.msra.mxu0 0.0
    %5859 = vmatprep.subr.mxu0 0.0
    %5860 = vmatpush2.msra.mxu0 0.0
    %5861 = vmatprep.subr.mxu0 0.0
    %5862 = vmatpush2.msra.mxu0 0.0
    %5863 = vmatprep.subr.mxu0 0.0
    %5864 = vmatpush2.msra.mxu0 0.0
    %5865 = vmatprep.subr.mxu0 0.0
    %5866 = vmatpush2.msra.mxu0 0.0
    %5867 = vmatprep.subr.mxu0 0.0
    %5868 = vmatpush2.msra.mxu0 0.0
    %5869 = vmatprep.subr.mxu0 0.0
    %5870 = vmatpush2.msra.mxu0 0.0
    %5871 = vmatprep.subr.mxu0 0.0
    %5872 = vmatpush2.msra.mxu0 0.0
    %5873 = vmatprep.subr.mxu0 0.0
    %5874 = vmatpush2.msra.mxu0 0.0
    %5875 = vmatprep.subr.mxu0 0.0
    %5876 = vmatpush2.msra.mxu0 0.0
    %5877 = vmatprep.mubr.f32.mxu0 0.0
    %5878 = vmatmul.mubr.f32.gmra.mxu0 %v5811
    %v5879 = vpop.f32.mrf.mxu0
    %v5880 = vadd.f32 %v2963, %v5879
    %v5881 = vpop.f32.mrf.mxu0
    %5882 = vdwg.mxu0
    %5883 = vmatprep.subr.mxu0 0.0
    %5884 = vmatpush1.msra.mxu0 0.0
    %5885 = vmatprep.subr.mxu0 0.0
    %5886 = vmatpush1.msra.mxu0 0.0
    %5887 = vmatprep.subr.mxu0 0.0
    %5888 = vmatpush1.msra.mxu0 0.0
    %5889 = vmatprep.subr.mxu0 0.0
    %5890 = vmatpush1.msra.mxu0 0.0
    %5891 = vmatprep.subr.mxu0 0.0
    %5892 = vmatpush1.msra.mxu0 0.0
    %5893 = vmatprep.subr.mxu0 0.0
    %5894 = vmatpush1.msra.mxu0 0.0
    %5895 = vmatprep.subr.mxu0 0.0
    %5896 = vmatpush1.msra.mxu0 0.0
    %5897 = vmatprep.subr.mxu0 0.0
    %5898 = vmatpush1.msra.mxu0 0.0
    %5899 = vmatprep.subr.mxu0 0.0
    %5900 = vmatpush1.msra.mxu0 0.0
    %5901 = vmatprep.subr.mxu0 0.0
    %5902 = vmatpush1.msra.mxu0 0.0
    %5903 = vmatprep.subr.mxu0 0.0
    %5904 = vmatpush1.msra.mxu0 0.0
    %5905 = vmatprep.subr.mxu0 0.0
    %5906 = vmatpush1.msra.mxu0 0.0
    %5907 = vmatprep.subr.mxu0 0.0
    %5908 = vmatpush1.msra.mxu0 %v2677
    %5909 = vmatprep.subr.mxu0 0.0
    %5910 = vmatpush1.msra.mxu0 %v2676
    %5911 = vmatprep.subr.mxu0 0.0
    %5912 = vmatpush1.msra.mxu0 %v2675
    %5913 = vmatprep.subr.mxu0 0.0
    %5914 = vmatpush1.msra.mxu0 %v2674
    %5915 = vmatprep.subr.mxu0 0.0
    %5916 = vmatpush2.msra.mxu0 0.0
    %5917 = vmatprep.subr.mxu0 0.0
    %5918 = vmatpush2.msra.mxu0 0.0
    %5919 = vmatprep.subr.mxu0 0.0
    %5920 = vmatpush2.msra.mxu0 0.0
    %5921 = vmatprep.subr.mxu0 0.0
    %5922 = vmatpush2.msra.mxu0 0.0
    %5923 = vmatprep.subr.mxu0 0.0
    %5924 = vmatpush2.msra.mxu0 0.0
    %5925 = vmatprep.subr.mxu0 0.0
    %5926 = vmatpush2.msra.mxu0 0.0
    %5927 = vmatprep.subr.mxu0 0.0
    %5928 = vmatpush2.msra.mxu0 0.0
    %5929 = vmatprep.subr.mxu0 0.0
    %5930 = vmatpush2.msra.mxu0 0.0
    %5931 = vmatprep.subr.mxu0 0.0
    %5932 = vmatpush2.msra.mxu0 0.0
    %5933 = vmatprep.subr.mxu0 0.0
    %5934 = vmatpush2.msra.mxu0 0.0
    %5935 = vmatprep.subr.mxu0 0.0
    %5936 = vmatpush2.msra.mxu0 0.0
    %5937 = vmatprep.subr.mxu0 0.0
    %5938 = vmatpush2.msra.mxu0 0.0
    %5939 = vmatprep.subr.mxu0 0.0
    %5940 = vmatpush2.msra.mxu0 0.0
    %5941 = vmatprep.subr.mxu0 0.0
    %5942 = vmatpush2.msra.mxu0 0.0
    %5943 = vmatprep.subr.mxu0 0.0
    %5944 = vmatpush2.msra.mxu0 0.0
    %5945 = vmatprep.subr.mxu0 0.0
    %5946 = vmatpush2.msra.mxu0 0.0
    %5947 = vmatprep.mubr.f32.mxu0 0.0
    %5948 = vmatmul.mubr.f32.gmra.mxu0 %v5811
    %v5949 = vpop.f32.mrf.mxu0
    %v5950 = vadd.f32 %v3042, %v5949
    %v5951 = vpop.f32.mrf.mxu0
    %5952 = vdwg.mxu0
    %5953 = vmatprep.subr.mxu0 0.0
    %5954 = vmatpush1.msra.mxu0 0.0
    %5955 = vmatprep.subr.mxu0 0.0
    %5956 = vmatpush1.msra.mxu0 0.0
    %5957 = vmatprep.subr.mxu0 0.0
    %5958 = vmatpush1.msra.mxu0 0.0
    %5959 = vmatprep.subr.mxu0 0.0
    %5960 = vmatpush1.msra.mxu0 0.0
    %5961 = vmatprep.subr.mxu0 0.0
    %5962 = vmatpush1.msra.mxu0 0.0
    %5963 = vmatprep.subr.mxu0 0.0
    %5964 = vmatpush1.msra.mxu0 0.0
    %5965 = vmatprep.subr.mxu0 0.0
    %5966 = vmatpush1.msra.mxu0 0.0
    %5967 = vmatprep.subr.mxu0 0.0
    %5968 = vmatpush1.msra.mxu0 0.0
    %5969 = vmatprep.subr.mxu0 0.0
    %5970 = vmatpush1.msra.mxu0 0.0
    %5971 = vmatprep.subr.mxu0 0.0
    %5972 = vmatpush1.msra.mxu0 0.0
    %5973 = vmatprep.subr.mxu0 0.0
    %5974 = vmatpush1.msra.mxu0 0.0
    %5975 = vmatprep.subr.mxu0 0.0
    %5976 = vmatpush1.msra.mxu0 0.0
    %5977 = vmatprep.subr.mxu0 0.0
    %5978 = vmatpush1.msra.mxu0 %v2681
    %5979 = vmatprep.subr.mxu0 0.0
    %5980 = vmatpush1.msra.mxu0 %v2680
    %5981 = vmatprep.subr.mxu0 0.0
    %5982 = vmatpush1.msra.mxu0 %v2679
    %5983 = vmatprep.subr.mxu0 0.0
    %5984 = vmatpush1.msra.mxu0 %v2678
    %5985 = vmatprep.subr.mxu0 0.0
    %5986 = vmatpush2.msra.mxu0 0.0
    %5987 = vmatprep.subr.mxu0 0.0
    %5988 = vmatpush2.msra.mxu0 0.0
    %5989 = vmatprep.subr.mxu0 0.0
    %5990 = vmatpush2.msra.mxu0 0.0
    %5991 = vmatprep.subr.mxu0 0.0
    %5992 = vmatpush2.msra.mxu0 0.0
    %5993 = vmatprep.subr.mxu0 0.0
    %5994 = vmatpush2.msra.mxu0 0.0
    %5995 = vmatprep.subr.mxu0 0.0
    %5996 = vmatpush2.msra.mxu0 0.0
    %5997 = vmatprep.subr.mxu0 0.0
    %5998 = vmatpush2.msra.mxu0 0.0
    %5999 = vmatprep.subr.mxu0 0.0
    %6000 = vmatpush2.msra.mxu0 0.0
    %6001 = vmatprep.subr.mxu0 0.0
    %6002 = vmatpush2.msra.mxu0 0.0
    %6003 = vmatprep.subr.mxu0 0.0
    %6004 = vmatpush2.msra.mxu0 0.0
    %6005 = vmatprep.subr.mxu0 0.0
    %6006 = vmatpush2.msra.mxu0 0.0
    %6007 = vmatprep.subr.mxu0 0.0
    %6008 = vmatpush2.msra.mxu0 0.0
    %6009 = vmatprep.subr.mxu0 0.0
    %6010 = vmatpush2.msra.mxu0 0.0
    %6011 = vmatprep.subr.mxu0 0.0
    %6012 = vmatpush2.msra.mxu0 0.0
    %6013 = vmatprep.subr.mxu0 0.0
    %6014 = vmatpush2.msra.mxu0 0.0
    %6015 = vmatprep.subr.mxu0 0.0
    %6016 = vmatpush2.msra.mxu0 0.0
    %6017 = vmatprep.mubr.f32.mxu0 0.0
    %6018 = vmatmul.mubr.f32.gmra.mxu0 %v5811
    %v6019 = vpop.f32.mrf.mxu0
    %v6020 = vadd.f32 %v3118, %v6019
    %v6021 = vpop.f32.mrf.mxu0
    %6022 = vdwg.mxu0
    %v6024 = vsel %vm1321, %v5568, 0
    %6026 = vmatprep.subr.mxu0 0.0
    %6027 = vmatpush1.msra.mxu0 0.0
    %6028 = vmatprep.subr.mxu0 0.0
    %6029 = vmatpush1.msra.mxu0 0.0
    %6030 = vmatprep.subr.mxu0 0.0
    %6031 = vmatpush1.msra.mxu0 0.0
    %6032 = vmatprep.subr.mxu0 0.0
    %6033 = vmatpush1.msra.mxu0 0.0
    %6034 = vmatprep.subr.mxu0 0.0
    %6035 = vmatpush1.msra.mxu0 0.0
    %6036 = vmatprep.subr.mxu0 0.0
    %6037 = vmatpush1.msra.mxu0 0.0
    %6038 = vmatprep.subr.mxu0 0.0
    %6039 = vmatpush1.msra.mxu0 0.0
    %6040 = vmatprep.subr.mxu0 0.0
    %6041 = vmatpush1.msra.mxu0 0.0
    %6042 = vmatprep.subr.mxu0 0.0
    %6043 = vmatpush1.msra.mxu0 0.0
    %6044 = vmatprep.subr.mxu0 0.0
    %6045 = vmatpush1.msra.mxu0 0.0
    %6046 = vmatprep.subr.mxu0 0.0
    %6047 = vmatpush1.msra.mxu0 0.0
    %6048 = vmatprep.subr.mxu0 0.0
    %6049 = vmatpush1.msra.mxu0 0.0
    %6050 = vmatprep.subr.mxu0 0.0
    %6051 = vmatpush1.msra.mxu0 %v2688
    %6052 = vmatprep.subr.mxu0 0.0
    %6053 = vmatpush1.msra.mxu0 %v2687
    %6054 = vmatprep.subr.mxu0 0.0
    %6055 = vmatpush1.msra.mxu0 %v2686
    %6056 = vmatprep.subr.mxu0 0.0
    %6057 = vmatpush1.msra.mxu0 %v2685
    %6058 = vmatprep.subr.mxu0 0.0
    %6059 = vmatpush2.msra.mxu0 0.0
    %6060 = vmatprep.subr.mxu0 0.0
    %6061 = vmatpush2.msra.mxu0 0.0
    %6062 = vmatprep.subr.mxu0 0.0
    %6063 = vmatpush2.msra.mxu0 0.0
    %6064 = vmatprep.subr.mxu0 0.0
    %6065 = vmatpush2.msra.mxu0 0.0
    %6066 = vmatprep.subr.mxu0 0.0
    %6067 = vmatpush2.msra.mxu0 0.0
    %6068 = vmatprep.subr.mxu0 0.0
    %6069 = vmatpush2.msra.mxu0 0.0
    %6070 = vmatprep.subr.mxu0 0.0
    %6071 = vmatpush2.msra.mxu0 0.0
    %6072 = vmatprep.subr.mxu0 0.0
    %6073 = vmatpush2.msra.mxu0 0.0
    %6074 = vmatprep.subr.mxu0 0.0
    %6075 = vmatpush2.msra.mxu0 0.0
    %6076 = vmatprep.subr.mxu0 0.0
    %6077 = vmatpush2.msra.mxu0 0.0
    %6078 = vmatprep.subr.mxu0 0.0
    %6079 = vmatpush2.msra.mxu0 0.0
    %6080 = vmatprep.subr.mxu0 0.0
    %6081 = vmatpush2.msra.mxu0 0.0
    %6082 = vmatprep.subr.mxu0 0.0
    %6083 = vmatpush2.msra.mxu0 0.0
    %6084 = vmatprep.subr.mxu0 0.0
    %6085 = vmatpush2.msra.mxu0 0.0
    %6086 = vmatprep.subr.mxu0 0.0
    %6087 = vmatpush2.msra.mxu0 0.0
    %6088 = vmatprep.subr.mxu0 0.0
    %6089 = vmatpush2.msra.mxu0 0.0
    %6090 = vmatprep.mubr.f32.mxu0 0.0
    %6091 = vmatmul.mubr.f32.gmra.mxu0 %v6024
    %v6092 = vpop.f32.mrf.mxu0
    %v6093 = vadd.f32 0.0, %v6092
    %v6094 = vpop.f32.mrf.mxu0
    %6095 = vdwg.mxu0
    %v6096 = vadd.f32 %v5880, %v6093
    %v6097 = vadd.f32 %v6096, %v3265
    %v6098 = vxor.u32 %v6097, 2147483648
    %v6099 = vmul.f32 %v6098, 1.442695
    %v6100 = vpow.pop %v6099
    %v6101 = vadd.f32 %v6100, 1.0
    %v6102 = vrcp.pop %v6101
    %v6103 = vmul.f32 1.0, %v6102
    %6104 = vmatprep.subr.mxu0 0.0
    %6105 = vmatpush1.msra.mxu0 0.0
    %6106 = vmatprep.subr.mxu0 0.0
    %6107 = vmatpush1.msra.mxu0 0.0
    %6108 = vmatprep.subr.mxu0 0.0
    %6109 = vmatpush1.msra.mxu0 0.0
    %6110 = vmatprep.subr.mxu0 0.0
    %6111 = vmatpush1.msra.mxu0 0.0
    %6112 = vmatprep.subr.mxu0 0.0
    %6113 = vmatpush1.msra.mxu0 0.0
    %6114 = vmatprep.subr.mxu0 0.0
    %6115 = vmatpush1.msra.mxu0 0.0
    %6116 = vmatprep.subr.mxu0 0.0
    %6117 = vmatpush1.msra.mxu0 0.0
    %6118 = vmatprep.subr.mxu0 0.0
    %6119 = vmatpush1.msra.mxu0 0.0
    %6120 = vmatprep.subr.mxu0 0.0
    %6121 = vmatpush1.msra.mxu0 0.0
    %6122 = vmatprep.subr.mxu0 0.0
    %6123 = vmatpush1.msra.mxu0 0.0
    %6124 = vmatprep.subr.mxu0 0.0
    %6125 = vmatpush1.msra.mxu0 0.0
    %6126 = vmatprep.subr.mxu0 0.0
    %6127 = vmatpush1.msra.mxu0 0.0
    %6128 = vmatprep.subr.mxu0 0.0
    %6129 = vmatpush1.msra.mxu0 %v2692
    %6130 = vmatprep.subr.mxu0 0.0
    %6131 = vmatpush1.msra.mxu0 %v2691
    %6132 = vmatprep.subr.mxu0 0.0
    %6133 = vmatpush1.msra.mxu0 %v2690
    %6134 = vmatprep.subr.mxu0 0.0
    %6135 = vmatpush1.msra.mxu0 %v2689
    %6136 = vmatprep.subr.mxu0 0.0
    %6137 = vmatpush2.msra.mxu0 0.0
    %6138 = vmatprep.subr.mxu0 0.0
    %6139 = vmatpush2.msra.mxu0 0.0
    %6140 = vmatprep.subr.mxu0 0.0
    %6141 = vmatpush2.msra.mxu0 0.0
    %6142 = vmatprep.subr.mxu0 0.0
    %6143 = vmatpush2.msra.mxu0 0.0
    %6144 = vmatprep.subr.mxu0 0.0
    %6145 = vmatpush2.msra.mxu0 0.0
    %6146 = vmatprep.subr.mxu0 0.0
    %6147 = vmatpush2.msra.mxu0 0.0
    %6148 = vmatprep.subr.mxu0 0.0
    %6149 = vmatpush2.msra.mxu0 0.0
    %6150 = vmatprep.subr.mxu0 0.0
    %6151 = vmatpush2.msra.mxu0 0.0
    %6152 = vmatprep.subr.mxu0 0.0
    %6153 = vmatpush2.msra.mxu0 0.0
    %6154 = vmatprep.subr.mxu0 0.0
    %6155 = vmatpush2.msra.mxu0 0.0
    %6156 = vmatprep.subr.mxu0 0.0
    %6157 = vmatpush2.msra.mxu0 0.0
    %6158 = vmatprep.subr.mxu0 0.0
    %6159 = vmatpush2.msra.mxu0 0.0
    %6160 = vmatprep.subr.mxu0 0.0
    %6161 = vmatpush2.msra.mxu0 0.0
    %6162 = vmatprep.subr.mxu0 0.0
    %6163 = vmatpush2.msra.mxu0 0.0
    %6164 = vmatprep.subr.mxu0 0.0
    %6165 = vmatpush2.msra.mxu0 0.0
    %6166 = vmatprep.subr.mxu0 0.0
    %6167 = vmatpush2.msra.mxu0 0.0
    %6168 = vmatprep.mubr.f32.mxu0 0.0
    %6169 = vmatmul.mubr.f32.gmra.mxu0 %v6024
    %v6170 = vpop.f32.mrf.mxu0
    %v6171 = vadd.f32 0.0, %v6170
    %v6172 = vpop.f32.mrf.mxu0
    %6173 = vdwg.mxu0
    %v6174 = vadd.f32 %v5950, %v6171
    %v6175 = vadd.f32 %v6174, %v3349
    %v6176 = vxor.u32 %v6175, 2147483648
    %v6177 = vmul.f32 %v6176, 1.442695
    %v6178 = vpow.pop %v6177
    %v6179 = vadd.f32 %v6178, 1.0
    %v6180 = vrcp.pop %v6179
    %v6181 = vmul.f32 1.0, %v6180
    %6182 = vmatprep.subr.mxu0 0.0
    %6183 = vmatpush1.msra.mxu0 0.0
    %6184 = vmatprep.subr.mxu0 0.0
    %6185 = vmatpush1.msra.mxu0 0.0
    %6186 = vmatprep.subr.mxu0 0.0
    %6187 = vmatpush1.msra.mxu0 0.0
    %6188 = vmatprep.subr.mxu0 0.0
    %6189 = vmatpush1.msra.mxu0 0.0
    %6190 = vmatprep.subr.mxu0 0.0
    %6191 = vmatpush1.msra.mxu0 0.0
    %6192 = vmatprep.subr.mxu0 0.0
    %6193 = vmatpush1.msra.mxu0 0.0
    %6194 = vmatprep.subr.mxu0 0.0
    %6195 = vmatpush1.msra.mxu0 0.0
    %6196 = vmatprep.subr.mxu0 0.0
    %6197 = vmatpush1.msra.mxu0 0.0
    %6198 = vmatprep.subr.mxu0 0.0
    %6199 = vmatpush1.msra.mxu0 0.0
    %6200 = vmatprep.subr.mxu0 0.0
    %6201 = vmatpush1.msra.mxu0 0.0
    %6202 = vmatprep.subr.mxu0 0.0
    %6203 = vmatpush1.msra.mxu0 0.0
    %6204 = vmatprep.subr.mxu0 0.0
    %6205 = vmatpush1.msra.mxu0 0.0
    %6206 = vmatprep.subr.mxu0 0.0
    %6207 = vmatpush1.msra.mxu0 %v2696
    %6208 = vmatprep.subr.mxu0 0.0
    %6209 = vmatpush1.msra.mxu0 %v2695
    %6210 = vmatprep.subr.mxu0 0.0
    %6211 = vmatpush1.msra.mxu0 %v2694
    %6212 = vmatprep.subr.mxu0 0.0
    %6213 = vmatpush1.msra.mxu0 %v2693
    %6214 = vmatprep.subr.mxu0 0.0
    %6215 = vmatpush2.msra.mxu0 0.0
    %6216 = vmatprep.subr.mxu0 0.0
    %6217 = vmatpush2.msra.mxu0 0.0
    %6218 = vmatprep.subr.mxu0 0.0
    %6219 = vmatpush2.msra.mxu0 0.0
    %6220 = vmatprep.subr.mxu0 0.0
    %6221 = vmatpush2.msra.mxu0 0.0
    %6222 = vmatprep.subr.mxu0 0.0
    %6223 = vmatpush2.msra.mxu0 0.0
    %6224 = vmatprep.subr.mxu0 0.0
    %6225 = vmatpush2.msra.mxu0 0.0
    %6226 = vmatprep.subr.mxu0 0.0
    %6227 = vmatpush2.msra.mxu0 0.0
    %6228 = vmatprep.subr.mxu0 0.0
    %6229 = vmatpush2.msra.mxu0 0.0
    %6230 = vmatprep.subr.mxu0 0.0
    %6231 = vmatpush2.msra.mxu0 0.0
    %6232 = vmatprep.subr.mxu0 0.0
    %6233 = vmatpush2.msra.mxu0 0.0
    %6234 = vmatprep.subr.mxu0 0.0
    %6235 = vmatpush2.msra.mxu0 0.0
    %6236 = vmatprep.subr.mxu0 0.0
    %6237 = vmatpush2.msra.mxu0 0.0
    %6238 = vmatprep.subr.mxu0 0.0
    %6239 = vmatpush2.msra.mxu0 0.0
    %6240 = vmatprep.subr.mxu0 0.0
    %6241 = vmatpush2.msra.mxu0 0.0
    %6242 = vmatprep.subr.mxu0 0.0
    %6243 = vmatpush2.msra.mxu0 0.0
    %6244 = vmatprep.subr.mxu0 0.0
    %6245 = vmatpush2.msra.mxu0 0.0
    %6246 = vmatprep.mubr.f32.mxu0 0.0
    %6247 = vmatmul.mubr.f32.gmra.mxu0 %v6024
    %v6248 = vpop.f32.mrf.mxu0
    %v6249 = vadd.f32 %v3362, %v6248
    %v6250 = vpop.f32.mrf.mxu0
    %6251 = vdwg.mxu0
    %v6252 = vmul.f32 %v6103, %v6249
    %v6253 = vadd.f32 %v6020, %v6252
    %v6254 = vtanh.pop %v6253
    %v6255 = vsub.f32 1.0, %v6181
    %v6256 = vmul.f32 %v6255, %v6254
    %v6257 = vmul.f32 %v6181, %v5568
    %v6258 = vadd.f32 %v6256, %v6257
    %6260 = vset.pattern.permute.xlu0 0
    %6261 = vperm.xlu0 %6260, %v2701
    %v6262 = vpop.permute.xlu0 %6261
    %v6264 = vmul.f32 %v6258, %v6262
    %6265 = vst.msk [vmem:[#allocation2 + $0x8] sm:$0x3] %vm3447, %v6264
    %v6266 = vld [vmem:[#allocation2] sm:$0xff]
    %v6267 = vld [vmem:[#allocation2 + $0x8] sm:$0x3]
    %v6268 = vld [vmem:[#allocation56] sm:$0xff]
    %v6269 = vld [vmem:[#allocation56 + $0x8] sm:$0xff]
    %v6270 = vld [vmem:[#allocation56 + $0x10] sm:$0xff]
    %v6271 = vld [vmem:[#allocation56 + $0x18] sm:$0xff]
    %v6272 = vld [vmem:[%s117] sm:$0x1]
    %v6274 = vlaneseq
    %v6275 = vshrl.u32 %v6274, 7
    %v6276 = vsub.s32 0, %v6275
    %v6277 = vrot.slane %v6272, %v6276
    %v6280 = vsel %vm1321, %v6266, 0
    %v6283 = vsel %vm1321, %v6267, 0
    %6285 = vmatprep.subr.mxu0 0.0
    %6286 = vmatpush1.msra.mxu0 0.0
    %6287 = vmatprep.subr.mxu0 0.0
    %6288 = vmatpush1.msra.mxu0 0.0
    %6289 = vmatprep.subr.mxu0 0.0
    %6290 = vmatpush1.msra.mxu0 0.0
    %6291 = vmatprep.subr.mxu0 0.0
    %6292 = vmatpush1.msra.mxu0 0.0
    %6293 = vmatprep.subr.mxu0 0.0
    %6294 = vmatpush1.msra.mxu0 0.0
    %6295 = vmatprep.subr.mxu0 0.0
    %6296 = vmatpush1.msra.mxu0 0.0
    %6297 = vmatprep.subr.mxu0 0.0
    %6298 = vmatpush1.msra.mxu0 0.0
    %6299 = vmatprep.subr.mxu0 0.0
    %6300 = vmatpush1.msra.mxu0 0.0
    %6301 = vmatprep.subr.mxu0 0.0
    %6302 = vmatpush1.msra.mxu0 0.0
    %6303 = vmatprep.subr.mxu0 0.0
    %6304 = vmatpush1.msra.mxu0 0.0
    %6305 = vmatprep.subr.mxu0 0.0
    %6306 = vmatpush1.msra.mxu0 0.0
    %6307 = vmatprep.subr.mxu0 0.0
    %6308 = vmatpush1.msra.mxu0 0.0
    %6309 = vmatprep.subr.mxu0 0.0
    %6310 = vmatpush1.msra.mxu0 %v6271
    %6311 = vmatprep.subr.mxu0 0.0
    %6312 = vmatpush1.msra.mxu0 %v6270
    %6313 = vmatprep.subr.mxu0 0.0
    %6314 = vmatpush1.msra.mxu0 %v6269
    %6315 = vmatprep.subr.mxu0 0.0
    %6316 = vmatpush1.msra.mxu0 %v6268
    %6317 = vmatprep.subr.mxu0 0.0
    %6318 = vmatpush2.msra.mxu0 0.0
    %6319 = vmatprep.subr.mxu0 0.0
    %6320 = vmatpush2.msra.mxu0 0.0
    %6321 = vmatprep.subr.mxu0 0.0
    %6322 = vmatpush2.msra.mxu0 0.0
    %6323 = vmatprep.subr.mxu0 0.0
    %6324 = vmatpush2.msra.mxu0 0.0
    %6325 = vmatprep.subr.mxu0 0.0
    %6326 = vmatpush2.msra.mxu0 0.0
    %6327 = vmatprep.subr.mxu0 0.0
    %6328 = vmatpush2.msra.mxu0 0.0
    %6329 = vmatprep.subr.mxu0 0.0
    %6330 = vmatpush2.msra.mxu0 0.0
    %6331 = vmatprep.subr.mxu0 0.0
    %6332 = vmatpush2.msra.mxu0 0.0
    %6333 = vmatprep.subr.mxu0 0.0
    %6334 = vmatpush2.msra.mxu0 0.0
    %6335 = vmatprep.subr.mxu0 0.0
    %6336 = vmatpush2.msra.mxu0 0.0
    %6337 = vmatprep.subr.mxu0 0.0
    %6338 = vmatpush2.msra.mxu0 0.0
    %6339 = vmatprep.subr.mxu0 0.0
    %6340 = vmatpush2.msra.mxu0 0.0
    %6341 = vmatprep.subr.mxu0 0.0
    %6342 = vmatpush2.msra.mxu0 0.0
    %6343 = vmatprep.subr.mxu0 0.0
    %6344 = vmatpush2.msra.mxu0 0.0
    %6345 = vmatprep.subr.mxu0 0.0
    %6346 = vmatpush2.msra.mxu0 0.0
    %6347 = vmatprep.subr.mxu0 0.0
    %6348 = vmatpush2.msra.mxu0 0.0
    %6349 = vmatprep.mubr.f32.mxu0 0.0
    %6350 = vmatmul.mubr.f32.gmra.mxu0 %v6280
    %v6351 = vpop.f32.mrf.mxu0
    %v6352 = vadd.f32 %v6277, %v6351
    %v6353 = vpop.f32.mrf.mxu0
    %6354 = vmatprep.mubr.f32.mxu0 0.0
    %6355 = vmatmul.mubr.f32.gmra.mxu0 %v6283
    %v6356 = vpop.f32.mrf.mxu0
    %v6357 = vadd.f32 %v6277, %v6356
    %v6358 = vpop.f32.mrf.mxu0
    %6359 = vdwg.mxu0
    %6360 = vst [vmem:[#allocation57] sm:$0xff] %v6352
    %6361 = vst [vmem:[#allocation57 + $0x8] sm:$0x3] %v6357
    // Predicated region
    $region378: #{tpu_custom_call.1} parent=1 // pred_check
      _
    $region379: #{tpu_custom_call.1} parent=1 // pred_check_branch
      %6363 = sbr.rel (0) target = $region381
    $region380: #{tpu_custom_call.1} parent=1 // pred_region
      %s6365 = ssub.s32 256, 256
      %6366 = vsyncadd [#allocation5], %s6365
      %s6367 = sshll.u32 [#allocation57], 4
      %s6368 = int_to_ptr.vmem [resolvable:$true] %s6367
      %6373 = dma.vmem_to_hbm [thread:$0]  %s6368, 256, %s119, [#allocation5], 128, 128, 8
    $region381: #{tpu_custom_call.1} parent=1 // pred_fallthru
      _
    // Predicated region
    $region382: #{tpu_custom_call.1} parent=1 // pred_check
      _
    $region383: #{tpu_custom_call.1} parent=1 // pred_check_branch
      %6375 = sbr.rel (0) target = $region385
    $region384: #{tpu_custom_call.1} parent=1 // pred_region
      %6376 = dma.done [#allocation5], 256
    $region385: #{tpu_custom_call.1} parent=1 // pred_fallthru
      _
    %6377 = vsyncpa [#allocation4], 1
    %6378 = vsyncpa [#allocation7], 1
    %6379 = vsyncpa [#allocation10], 1
    %6380 = vsyncpa [#allocation13], 1
    %6381 = vsyncpa [#allocation16], 1
    %6382 = vsyncpa [#allocation19], 1
    %6383 = vsyncpa [#allocation22], 1
    %6384 = vsyncpa [#allocation25], 1
    %6385 = vsyncpa [#allocation28], 1
    %6386 = vsyncpa [#allocation31], 1
    %6387 = vsyncpa [#allocation34], 1
    %6388 = vsyncpa [#allocation37], 1
    %6389 = vsyncpa [#allocation40], 1
    %6390 = vsyncpa [#allocation43], 1
    %6391 = vsyncpa [#allocation46], 1
    %6392 = vsyncpa [#allocation49], 1
    %6393 = vsyncpa [#allocation52], 1
    %6394 = vsyncpa [#allocation55], 1
    %6395 = vsyncpa [#allocation5], 1

</llo_original>
